<compile_context>
chip_gen: v7x
topology: tpu7x:2x2x1
jax: 0.10.0
libtpu: 0.0.40
codegen_flags: <defaults>
</compile_context>

<pallas_src>
import jax
import jax.numpy as jnp
from jax.experimental import pallas as pl
from jax.experimental.pallas import tpu as pltpu

NEG_SLOPE = 0.01   # nn.LeakyReLU() default
BN_EPS = 1e-5      # nn.BatchNorm2d default

H_IN = 2           # EEG electrodes (height)
W_IN = 750         # time samples (width)
WC = [746, 369, 180, 86, 39]     # conv output widths per block
WP = [373, 184, 90, 43, 19]      # pooled widths per block
CHANNELS = [25, 50, 100, 200, 330]


def _even_selection(wc):
    """(wc-1, wc//2) 0/1 matrix; column j selects row 2j (pool compaction)."""
    wp = wc // 2
    i = jax.lax.broadcasted_iota(jnp.int32, (wc - 1, wp), 0)
    j = jax.lax.broadcasted_iota(jnp.int32, (wc - 1, wp), 1)
    return (i == 2 * j).astype(jnp.float32)


# ---------------------------------------------------------------------------
# In-kernel helpers (operate on values + resident weight refs)
# ---------------------------------------------------------------------------
def _bn_act_pool(y, s_ref, t_ref, se_ref, slope):
    # BN (eval, bias pre-folded into shift) -> LeakyReLU/ReLU -> MaxPool(1,2).
    y = y * s_ref[...] + t_ref[...]
    y = jnp.where(y > 0, y, slope * y)
    m = jnp.maximum(y[:, :-1], y[:, 1:])          # adjacent-pair max (VPU)
    # compact even lanes with one precomputed 0/1 matmul (exact floor pooling)
    return jnp.dot(m, se_ref[...], preferred_element_type=jnp.float32)


def _conv_block(x, w_ref, s_ref, t_ref, se_ref, slope):
    # Conv2d(Cin,Cout,(1,5)) as ONE stacked-K matmul: (Cout,5Cin)@(5Cin,Wc).
    cin, win = x.shape
    wc = win - 4
    xs = jnp.concatenate([x[:, k:k + wc] for k in range(5)], axis=0)  # (5*Cin, Wc)
    y = jnp.dot(w_ref[...], xs, preferred_element_type=jnp.float32)   # (Cout, Wc)
    return _bn_act_pool(y, s_ref, t_ref, se_ref, slope)


# ---------------------------------------------------------------------------
# Fully fused forward kernel (one sample per grid step)
# ---------------------------------------------------------------------------
def fused_kernel(x_ref,
                 w1_ref, s1_ref, t1_ref, se1_ref,
                 w3_ref, s2_ref, t2_ref, se2_ref,
                 w4_ref, s3_ref, t3_ref, se3_ref,
                 w5_ref, s4_ref, t4_ref, se4_ref,
                 w6_ref, s5_ref, t5_ref, se5_ref,
                 fcw_ref, fcb_ref,
                 o_ref):
    x = x_ref[0]                     # (2, 750)
    wc1 = x.shape[1] - 4             # 746

    # ---- Block 1: Conv(1,25,(1,5)) ∘ Conv(25,25,(2,1)) composed into 10 taps.
    w1 = w1_ref[...]                 # (25, 10), column = h*5 + k
    acc = w1[:, 0:1] * x[0:1, 0:wc1]
    for idx in range(1, 10):
        h, k = divmod(idx, 5)
        acc = acc + w1[:, idx:idx + 1] * x[h:h + 1, k:k + wc1]
    a = _bn_act_pool(acc, s1_ref, t1_ref, se1_ref, NEG_SLOPE)          # (25, 373)

    # ---- Blocks 2-5
    a = _conv_block(a, w3_ref, s2_ref, t2_ref, se2_ref, NEG_SLOPE)     # (50, 184)
    a = _conv_block(a, w4_ref, s3_ref, t3_ref, se3_ref, NEG_SLOPE)     # (100, 90)
    a = _conv_block(a, w5_ref, s4_ref, t4_ref, se4_ref, NEG_SLOPE)     # (200, 43)
    a = _conv_block(a, w6_ref, s5_ref, t5_ref, se5_ref, 0.0)           # (330, 19) ReLU

    # ---- Linear(6270, 2) on the flattened (c*19 + w) activation, fused here.
    l0 = jnp.sum(fcw_ref[0] * a, axis=1, keepdims=True)   # (330, 1)
    l0 = jnp.sum(l0, axis=0, keepdims=True)               # (1, 1)
    l1 = jnp.sum(fcw_ref[1] * a, axis=1, keepdims=True)
    l1 = jnp.sum(l1, axis=0, keepdims=True)
    o_ref[0] = jnp.concatenate([l0, l1], axis=1) + fcb_ref[...]        # (1, 2)
    # TODO(synk): nn.Dropout is identity here (eval mode); stochastic train-mode
    # dropout is intentionally not implemented.


def deepconvnet_forward(x, p):
    # x: (N, 1, 2, 750) NCHW
    n = x.shape[0]
    x3 = x[:, 0]                                   # (N, 2, 750); C_in == 1

    args = [x3,
            p["w1"], p["s1"], p["t1"], p["se1"],
            p["w3"], p["s2"], p["t2"], p["se2"],
            p["w4"], p["s3"], p["t3"], p["se3"],
            p["w5"], p["s4"], p["t4"], p["se4"],
            p["w6"], p["s5"], p["t5"], p["se5"],
            p["fcw"], p["fcb"]]

    in_specs = [pl.BlockSpec((1, H_IN, W_IN), lambda i: (i, 0, 0))]
    for a in args[1:]:   # weights / BN affines / pool matrices: VMEM-resident
        in_specs.append(pl.BlockSpec(a.shape, lambda i, nd=a.ndim: (0,) * nd))

    out = pl.pallas_call(
        fused_kernel,
        out_shape=jax.ShapeDtypeStruct((n, 1, 2), jnp.float32),
        grid=(n,),
        in_specs=in_specs,
        out_specs=pl.BlockSpec((1, 1, 2), lambda i: (i, 0, 0)),
        compiler_params=pltpu.CompilerParams(
            dimension_semantics=("parallel",),
            vmem_limit_bytes=32 * 1024 * 1024),
    )(*args)
    return out[:, 0, :]                            # (N, 2)


# ---------------------------------------------------------------------------
# Deterministic parameter initialization (shapes from the module's __init__)
# ---------------------------------------------------------------------------
def init_params(key):
    ks = jax.random.split(key, 12)

    def conv_init(k, co, ci, kh, kw):
        k1, k2 = jax.random.split(k)
        fan_in = ci * kh * kw
        w = jax.random.normal(k1, (co, ci, kh, kw), jnp.float32) / jnp.sqrt(fan_in)
        b = 0.1 * jax.random.normal(k2, (co,), jnp.float32)
        return w, b

    def bn_init(k, c):
        k1, k2, k3, k4 = jax.random.split(k, 4)
        gamma = 1.0 + 0.1 * jax.random.normal(k1, (c,), jnp.float32)
        beta = 0.1 * jax.random.normal(k2, (c,), jnp.float32)
        mean = 0.1 * jax.random.normal(k3, (c,), jnp.float32)
        var = jax.random.uniform(k4, (c,), jnp.float32, 0.5, 1.5)
        return gamma, beta, mean, var

    raw = {}
    raw["w1"], raw["b1"] = conv_init(ks[0], 25, 1, 1, 5)
    raw["w2"], raw["b2"] = conv_init(ks[1], 25, 25, 2, 1)
    raw["bn1"] = bn_init(ks[2], 25)
    raw["w3"], raw["b3"] = conv_init(ks[3], 50, 25, 1, 5)
    raw["bn2"] = bn_init(ks[4], 50)
    raw["w4"], raw["b4"] = conv_init(ks[5], 100, 50, 1, 5)
    raw["bn3"] = bn_init(ks[6], 100)
    raw["w5"], raw["b5"] = conv_init(ks[7], 200, 100, 1, 5)
    raw["bn4"] = bn_init(ks[8], 200)
    raw["w6"], raw["b6"] = conv_init(ks[9], 330, 200, 1, 5)
    raw["bn5"] = bn_init(ks[10], 330)
    k1, k2 = jax.random.split(ks[11])
    raw["fc_w"] = jax.random.normal(k1, (2, 6270), jnp.float32) / jnp.sqrt(6270.0)
    raw["fc_b"] = 0.1 * jax.random.normal(k2, (2,), jnp.float32)
    return raw


def pack_kernel_params(raw):
    def bn_affine(bn, bias):
        gamma, beta, mean, var = bn
        scale = gamma / jnp.sqrt(var + BN_EPS)
        shift = beta - mean * scale + scale * bias   # conv bias folded in
        return scale[:, None], shift[:, None]

    p = {}

    # Block 1: compose the two convs into one exact (25, 2, 5) effective weight.
    w1m = raw["w1"][:, 0, 0, :]                    # (25, 5)      [c1, k]
    w2m = raw["w2"][:, :, :, 0]                    # (25, 25, 2)  [co, c1, h]
    weff = jnp.einsum("och,ck->ohk", w2m, w1m)     # (25, 2, 5)
    p["w1"] = weff.reshape(25, 10)                 # column index = h*5 + k
    b_eff = jnp.einsum("och,c->o", w2m, raw["b1"]) + raw["b2"]
    p["s1"], p["t1"] = bn_affine(raw["bn1"], b_eff)

    # Blocks 2-5: stacked-K conv weights (col = k*Cin + ci), bias folded into BN.
    for blk, (wname, bname, bnname) in enumerate(
            [("w3", "b3", "bn2"), ("w4", "b4", "bn3"),
             ("w5", "b5", "bn4"), ("w6", "b6", "bn5")], start=2):
        w = raw[wname][:, :, 0, :]                 # (co, ci, 5)
        co, ci, _ = w.shape
        p[wname] = jnp.transpose(w, (0, 2, 1)).reshape(co, 5 * ci)
        p[f"s{blk}"], p[f"t{blk}"] = bn_affine(raw[bnname], raw[bname])

    # Precomputed max-pool even-lane compaction matrices (VMEM-resident inputs).
    for blk, wc in enumerate(WC, start=1):
        p[f"se{blk}"] = _even_selection(wc)

    # Linear(6270, 2): PyTorch flatten index is c*19 + w.
    p["fcw"] = raw["fc_w"].reshape(2, CHANNELS[-1], WP[-1])   # (2, 330, 19)
    p["fcb"] = raw["fc_b"][None, :]                           # (1, 2)
    return p


# ---------------------------------------------------------------------------
# Pure-JAX reference (NCHW, PyTorch eval-mode semantics)
# ---------------------------------------------------------------------------
def ref_forward(x, raw):
    def conv(x, w, b):
        y = jax.lax.conv_general_dilated(
            x, w, window_strides=(1, 1), padding="VALID",
            dimension_numbers=("NCHW", "OIHW", "NCHW"))
        return y + b.reshape(1, -1, 1, 1)

    def bn(x, stats):
        gamma, beta, mean, var = (s.reshape(1, -1, 1, 1) for s in stats)
        return (x - mean) / jnp.sqrt(var + BN_EPS) * gamma + beta

    def leaky(x):
        return jnp.where(x > 0, x, NEG_SLOPE * x)

    def pool(x):
        return jax.lax.reduce_window(x, -jnp.inf, jax.lax.max,
                                     (1, 1, 1, 2), (1, 1, 1, 2), "VALID")

    h = conv(x, raw["w1"], raw["b1"])
    h = conv(h, raw["w2"], raw["b2"])
    h = pool(leaky(bn(h, raw["bn1"])))
    h = pool(leaky(bn(conv(h, raw["w3"], raw["b3"]), raw["bn2"])))
    h = pool(leaky(bn(conv(h, raw["w4"], raw["b4"]), raw["bn3"])))
    h = pool(leaky(bn(conv(h, raw["w5"], raw["b5"]), raw["bn4"])))
    h = pool(jnp.maximum(bn(conv(h, raw["w6"], raw["b6"]), raw["bn5"]), 0.0))
    h = h.reshape(h.shape[0], -1)
    return h @ raw["fc_w"].T + raw["fc_b"]


if __name__ == "__main__":
    key = jax.random.PRNGKey(0)
    pkey, xkey = jax.random.split(key)
    raw = init_params(pkey)
    params = pack_kernel_params(raw)

    # The Linear(6270, 2) layer forces the EEG input shape (N, 1, 2, 750).
    x = jax.random.normal(xkey, (2, 1, 2, 750), jnp.float32)

    out = jax.jit(deepconvnet_forward)(x, params)
    out = jax.block_until_ready(out)
    assert out.shape == (2, 2), out.shape

    ref = ref_forward(x, raw)
    if not jnp.allclose(out, ref, rtol=5e-3, atol=5e-3):
        raise AssertionError(
            f"Pallas output mismatch vs reference:\n{out}\nvs\n{ref}")

    print("KERNEL_OK")
</pallas_src>

<mosaic_0001>
module attributes {stable_mosaic.version = 11 : i64} {
  func.func @fused_kernel(%arg0: i32, %arg1: memref<1x2x750xf32, #tpu.memory_space<vmem>>, %arg2: memref<25x10xf32, #tpu.memory_space<vmem>>, %arg3: memref<25x1xf32, #tpu.memory_space<vmem>>, %arg4: memref<25x1xf32, #tpu.memory_space<vmem>>, %arg5: memref<745x373xf32, #tpu.memory_space<vmem>>, %arg6: memref<50x125xf32, #tpu.memory_space<vmem>>, %arg7: memref<50x1xf32, #tpu.memory_space<vmem>>, %arg8: memref<50x1xf32, #tpu.memory_space<vmem>>, %arg9: memref<368x184xf32, #tpu.memory_space<vmem>>, %arg10: memref<100x250xf32, #tpu.memory_space<vmem>>, %arg11: memref<100x1xf32, #tpu.memory_space<vmem>>, %arg12: memref<100x1xf32, #tpu.memory_space<vmem>>, %arg13: memref<179x90xf32, #tpu.memory_space<vmem>>, %arg14: memref<200x500xf32, #tpu.memory_space<vmem>>, %arg15: memref<200x1xf32, #tpu.memory_space<vmem>>, %arg16: memref<200x1xf32, #tpu.memory_space<vmem>>, %arg17: memref<85x43xf32, #tpu.memory_space<vmem>>, %arg18: memref<330x1000xf32, #tpu.memory_space<vmem>>, %arg19: memref<330x1xf32, #tpu.memory_space<vmem>>, %arg20: memref<330x1xf32, #tpu.memory_space<vmem>>, %arg21: memref<38x19xf32, #tpu.memory_space<vmem>>, %arg22: memref<2x330x19xf32, #tpu.memory_space<vmem>>, %arg23: memref<1x2xf32, #tpu.memory_space<vmem>>, %arg24: memref<1x1x2xf32, #tpu.memory_space<vmem>>) attributes {dimension_semantics = [#tpu.dimension_semantics<parallel>], iteration_bounds = array<i64: 2>, scalar_prefetch = 0 : i64, scratch_operands = 0 : i64, tpu.core_type = #tpu.core_type<tc>, window_params = [{transform_indices = @transform_0, window_bounds = array<i64: 1, 2, 750>}, {pipeline_mode = #tpu.pipeline_mode<synchronous>, transform_indices = @transform_1, window_bounds = array<i64: 25, 10>}, {pipeline_mode = #tpu.pipeline_mode<synchronous>, transform_indices = @transform_2, window_bounds = array<i64: 25, 1>}, {pipeline_mode = #tpu.pipeline_mode<synchronous>, transform_indices = @transform_3, window_bounds = array<i64: 25, 1>}, {pipeline_mode = #tpu.pipeline_mode<synchronous>, transform_indices = @transform_4, window_bounds = array<i64: 745, 373>}, {pipeline_mode = #tpu.pipeline_mode<synchronous>, transform_indices = @transform_5, window_bounds = array<i64: 50, 125>}, {pipeline_mode = #tpu.pipeline_mode<synchronous>, transform_indices = @transform_6, window_bounds = array<i64: 50, 1>}, {pipeline_mode = #tpu.pipeline_mode<synchronous>, transform_indices = @transform_7, window_bounds = array<i64: 50, 1>}, {pipeline_mode = #tpu.pipeline_mode<synchronous>, transform_indices = @transform_8, window_bounds = array<i64: 368, 184>}, {pipeline_mode = #tpu.pipeline_mode<synchronous>, transform_indices = @transform_9, window_bounds = array<i64: 100, 250>}, {pipeline_mode = #tpu.pipeline_mode<synchronous>, transform_indices = @transform_10, window_bounds = array<i64: 100, 1>}, {pipeline_mode = #tpu.pipeline_mode<synchronous>, transform_indices = @transform_11, window_bounds = array<i64: 100, 1>}, {pipeline_mode = #tpu.pipeline_mode<synchronous>, transform_indices = @transform_12, window_bounds = array<i64: 179, 90>}, {pipeline_mode = #tpu.pipeline_mode<synchronous>, transform_indices = @transform_13, window_bounds = array<i64: 200, 500>}, {pipeline_mode = #tpu.pipeline_mode<synchronous>, transform_indices = @transform_14, window_bounds = array<i64: 200, 1>}, {pipeline_mode = #tpu.pipeline_mode<synchronous>, transform_indices = @transform_15, window_bounds = array<i64: 200, 1>}, {pipeline_mode = #tpu.pipeline_mode<synchronous>, transform_indices = @transform_16, window_bounds = array<i64: 85, 43>}, {pipeline_mode = #tpu.pipeline_mode<synchronous>, transform_indices = @transform_17, window_bounds = array<i64: 330, 1000>}, {pipeline_mode = #tpu.pipeline_mode<synchronous>, transform_indices = @transform_18, window_bounds = array<i64: 330, 1>}, {pipeline_mode = #tpu.pipeline_mode<synchronous>, transform_indices = @transform_19, window_bounds = array<i64: 330, 1>}, {pipeline_mode = #tpu.pipeline_mode<synchronous>, transform_indices = @transform_20, window_bounds = array<i64: 38, 19>}, {pipeline_mode = #tpu.pipeline_mode<synchronous>, transform_indices = @transform_21, window_bounds = array<i64: 2, 330, 19>}, {pipeline_mode = #tpu.pipeline_mode<synchronous>, transform_indices = @transform_22, window_bounds = array<i64: 1, 2>}, {transform_indices = @transform_23, window_bounds = array<i64: 1, 1, 2>}]} {
    %c0 = arith.constant 0 : index
    %c0_0 = arith.constant 0 : index
    %c0_1 = arith.constant 0 : index
    %0 = vector.load %arg1[%c0, %c0_0, %c0_1] : memref<1x2x750xf32, #tpu.memory_space<vmem>>, vector<1x2x750xf32>
    %1 = vector.shape_cast %0 : vector<1x2x750xf32> to vector<2x750xf32>
    %c0_2 = arith.constant 0 : index
    %c0_3 = arith.constant 0 : index
    %2 = vector.load %arg2[%c0_2, %c0_3] : memref<25x10xf32, #tpu.memory_space<vmem>>, vector<25x10xf32>
    %3 = vector.extract_strided_slice %2 {offsets = [0, 0], sizes = [25, 1], strides = [1, 1]} : vector<25x10xf32> to vector<25x1xf32>
    %4 = vector.extract_strided_slice %1 {offsets = [0, 0], sizes = [1, 746], strides = [1, 1]} : vector<2x750xf32> to vector<1x746xf32>
    %5 = vector.broadcast %3 : vector<25x1xf32> to vector<25x746xf32>
    %6 = vector.broadcast %4 : vector<1x746xf32> to vector<25x746xf32>
    %7 = arith.mulf %5, %6 : vector<25x746xf32>
    %8 = vector.extract_strided_slice %2 {offsets = [0, 1], sizes = [25, 1], strides = [1, 1]} : vector<25x10xf32> to vector<25x1xf32>
    %9 = vector.extract_strided_slice %1 {offsets = [0, 1], sizes = [1, 746], strides = [1, 1]} : vector<2x750xf32> to vector<1x746xf32>
    %10 = vector.broadcast %8 : vector<25x1xf32> to vector<25x746xf32>
    %11 = vector.broadcast %9 : vector<1x746xf32> to vector<25x746xf32>
    %12 = arith.mulf %10, %11 : vector<25x746xf32>
    %13 = arith.addf %7, %12 : vector<25x746xf32>
    %14 = vector.extract_strided_slice %2 {offsets = [0, 2], sizes = [25, 1], strides = [1, 1]} : vector<25x10xf32> to vector<25x1xf32>
    %15 = vector.extract_strided_slice %1 {offsets = [0, 2], sizes = [1, 746], strides = [1, 1]} : vector<2x750xf32> to vector<1x746xf32>
    %16 = vector.broadcast %14 : vector<25x1xf32> to vector<25x746xf32>
    %17 = vector.broadcast %15 : vector<1x746xf32> to vector<25x746xf32>
    %18 = arith.mulf %16, %17 : vector<25x746xf32>
    %19 = arith.addf %13, %18 : vector<25x746xf32>
    %20 = vector.extract_strided_slice %2 {offsets = [0, 3], sizes = [25, 1], strides = [1, 1]} : vector<25x10xf32> to vector<25x1xf32>
    %21 = vector.extract_strided_slice %1 {offsets = [0, 3], sizes = [1, 746], strides = [1, 1]} : vector<2x750xf32> to vector<1x746xf32>
    %22 = vector.broadcast %20 : vector<25x1xf32> to vector<25x746xf32>
    %23 = vector.broadcast %21 : vector<1x746xf32> to vector<25x746xf32>
    %24 = arith.mulf %22, %23 : vector<25x746xf32>
    %25 = arith.addf %19, %24 : vector<25x746xf32>
    %26 = vector.extract_strided_slice %2 {offsets = [0, 4], sizes = [25, 1], strides = [1, 1]} : vector<25x10xf32> to vector<25x1xf32>
    %27 = vector.extract_strided_slice %1 {offsets = [0, 4], sizes = [1, 746], strides = [1, 1]} : vector<2x750xf32> to vector<1x746xf32>
    %28 = vector.broadcast %26 : vector<25x1xf32> to vector<25x746xf32>
    %29 = vector.broadcast %27 : vector<1x746xf32> to vector<25x746xf32>
    %30 = arith.mulf %28, %29 : vector<25x746xf32>
    %31 = arith.addf %25, %30 : vector<25x746xf32>
    %32 = vector.extract_strided_slice %2 {offsets = [0, 5], sizes = [25, 1], strides = [1, 1]} : vector<25x10xf32> to vector<25x1xf32>
    %33 = vector.extract_strided_slice %1 {offsets = [1, 0], sizes = [1, 746], strides = [1, 1]} : vector<2x750xf32> to vector<1x746xf32>
    %34 = vector.broadcast %32 : vector<25x1xf32> to vector<25x746xf32>
    %35 = vector.broadcast %33 : vector<1x746xf32> to vector<25x746xf32>
    %36 = arith.mulf %34, %35 : vector<25x746xf32>
    %37 = arith.addf %31, %36 : vector<25x746xf32>
    %38 = vector.extract_strided_slice %2 {offsets = [0, 6], sizes = [25, 1], strides = [1, 1]} : vector<25x10xf32> to vector<25x1xf32>
    %39 = vector.extract_strided_slice %1 {offsets = [1, 1], sizes = [1, 746], strides = [1, 1]} : vector<2x750xf32> to vector<1x746xf32>
    %40 = vector.broadcast %38 : vector<25x1xf32> to vector<25x746xf32>
    %41 = vector.broadcast %39 : vector<1x746xf32> to vector<25x746xf32>
    %42 = arith.mulf %40, %41 : vector<25x746xf32>
    %43 = arith.addf %37, %42 : vector<25x746xf32>
    %44 = vector.extract_strided_slice %2 {offsets = [0, 7], sizes = [25, 1], strides = [1, 1]} : vector<25x10xf32> to vector<25x1xf32>
    %45 = vector.extract_strided_slice %1 {offsets = [1, 2], sizes = [1, 746], strides = [1, 1]} : vector<2x750xf32> to vector<1x746xf32>
    %46 = vector.broadcast %44 : vector<25x1xf32> to vector<25x746xf32>
    %47 = vector.broadcast %45 : vector<1x746xf32> to vector<25x746xf32>
    %48 = arith.mulf %46, %47 : vector<25x746xf32>
    %49 = arith.addf %43, %48 : vector<25x746xf32>
    %50 = vector.extract_strided_slice %2 {offsets = [0, 8], sizes = [25, 1], strides = [1, 1]} : vector<25x10xf32> to vector<25x1xf32>
    %51 = vector.extract_strided_slice %1 {offsets = [1, 3], sizes = [1, 746], strides = [1, 1]} : vector<2x750xf32> to vector<1x746xf32>
    %52 = vector.broadcast %50 : vector<25x1xf32> to vector<25x746xf32>
    %53 = vector.broadcast %51 : vector<1x746xf32> to vector<25x746xf32>
    %54 = arith.mulf %52, %53 : vector<25x746xf32>
    %55 = arith.addf %49, %54 : vector<25x746xf32>
    %56 = vector.extract_strided_slice %2 {offsets = [0, 9], sizes = [25, 1], strides = [1, 1]} : vector<25x10xf32> to vector<25x1xf32>
    %57 = vector.extract_strided_slice %1 {offsets = [1, 4], sizes = [1, 746], strides = [1, 1]} : vector<2x750xf32> to vector<1x746xf32>
    %58 = vector.broadcast %56 : vector<25x1xf32> to vector<25x746xf32>
    %59 = vector.broadcast %57 : vector<1x746xf32> to vector<25x746xf32>
    %60 = arith.mulf %58, %59 : vector<25x746xf32>
    %61 = arith.addf %55, %60 : vector<25x746xf32>
    %c0_4 = arith.constant 0 : index
    %c0_5 = arith.constant 0 : index
    %62 = vector.load %arg3[%c0_4, %c0_5] : memref<25x1xf32, #tpu.memory_space<vmem>>, vector<25x1xf32>
    %63 = vector.broadcast %62 : vector<25x1xf32> to vector<25x746xf32>
    %64 = arith.mulf %61, %63 : vector<25x746xf32>
    %c0_6 = arith.constant 0 : index
    %c0_7 = arith.constant 0 : index
    %65 = vector.load %arg4[%c0_6, %c0_7] : memref<25x1xf32, #tpu.memory_space<vmem>>, vector<25x1xf32>
    %66 = vector.broadcast %65 : vector<25x1xf32> to vector<25x746xf32>
    %67 = arith.addf %64, %66 : vector<25x746xf32>
    %cst = arith.constant 0.000000e+00 : f32
    %68 = vector.broadcast %cst : f32 to vector<25x746xf32>
    %69 = arith.cmpf ogt, %67, %68 : vector<25x746xf32>
    %cst_8 = arith.constant 0.00999999977 : f32
    %70 = vector.broadcast %cst_8 : f32 to vector<25x746xf32>
    %71 = arith.mulf %70, %67 : vector<25x746xf32>
    %72 = arith.select %69, %67, %71 : vector<25x746xi1>, vector<25x746xf32>
    %73 = vector.extract_strided_slice %72 {offsets = [0, 0], sizes = [25, 745], strides = [1, 1]} : vector<25x746xf32> to vector<25x745xf32>
    %74 = vector.extract_strided_slice %72 {offsets = [0, 1], sizes = [25, 745], strides = [1, 1]} : vector<25x746xf32> to vector<25x745xf32>
    %75 = arith.maximumf %73, %74 : vector<25x745xf32>
    %c0_9 = arith.constant 0 : index
    %c0_10 = arith.constant 0 : index
    %76 = vector.load %arg5[%c0_9, %c0_10] : memref<745x373xf32, #tpu.memory_space<vmem>>, vector<745x373xf32>
    %cst_11 = arith.constant dense<0.000000e+00> : vector<25x373xf32>
    %77 = tpu.matmul %75, %76, %cst_11 {dimension_numbers = #tpu.dot_dimension_numbers<[1], [0], [0], [1], [0, 0, 1, 1], [], []>} : vector<25x745xf32>, vector<745x373xf32>, vector<25x373xf32> -> vector<25x373xf32>
    %78 = vector.extract_strided_slice %77 {offsets = [0, 0], sizes = [25, 369], strides = [1, 1]} : vector<25x373xf32> to vector<25x369xf32>
    %79 = vector.extract_strided_slice %77 {offsets = [0, 1], sizes = [25, 369], strides = [1, 1]} : vector<25x373xf32> to vector<25x369xf32>
    %80 = vector.extract_strided_slice %77 {offsets = [0, 2], sizes = [25, 369], strides = [1, 1]} : vector<25x373xf32> to vector<25x369xf32>
    %81 = vector.extract_strided_slice %77 {offsets = [0, 3], sizes = [25, 369], strides = [1, 1]} : vector<25x373xf32> to vector<25x369xf32>
    %82 = vector.extract_strided_slice %77 {offsets = [0, 4], sizes = [25, 369], strides = [1, 1]} : vector<25x373xf32> to vector<25x369xf32>
    %83 = tpu.concatenate %78, %79, %80, %81, %82 in 0 : vector<25x369xf32>, vector<25x369xf32>, vector<25x369xf32>, vector<25x369xf32>, vector<25x369xf32> -> vector<125x369xf32>
    %c0_12 = arith.constant 0 : index
    %c0_13 = arith.constant 0 : index
    %84 = vector.load %arg6[%c0_12, %c0_13] : memref<50x125xf32, #tpu.memory_space<vmem>>, vector<50x125xf32>
    %cst_14 = arith.constant dense<0.000000e+00> : vector<50x369xf32>
    %85 = tpu.matmul %84, %83, %cst_14 {dimension_numbers = #tpu.dot_dimension_numbers<[1], [0], [0], [1], [0, 0, 1, 1], [], []>} : vector<50x125xf32>, vector<125x369xf32>, vector<50x369xf32> -> vector<50x369xf32>
    %c0_15 = arith.constant 0 : index
    %c0_16 = arith.constant 0 : index
    %86 = vector.load %arg7[%c0_15, %c0_16] : memref<50x1xf32, #tpu.memory_space<vmem>>, vector<50x1xf32>
    %87 = vector.broadcast %86 : vector<50x1xf32> to vector<50x369xf32>
    %88 = arith.mulf %85, %87 : vector<50x369xf32>
    %c0_17 = arith.constant 0 : index
    %c0_18 = arith.constant 0 : index
    %89 = vector.load %arg8[%c0_17, %c0_18] : memref<50x1xf32, #tpu.memory_space<vmem>>, vector<50x1xf32>
    %90 = vector.broadcast %89 : vector<50x1xf32> to vector<50x369xf32>
    %91 = arith.addf %88, %90 : vector<50x369xf32>
    %cst_19 = arith.constant 0.000000e+00 : f32
    %92 = vector.broadcast %cst_19 : f32 to vector<50x369xf32>
    %93 = arith.cmpf ogt, %91, %92 : vector<50x369xf32>
    %cst_20 = arith.constant 0.00999999977 : f32
    %94 = vector.broadcast %cst_20 : f32 to vector<50x369xf32>
    %95 = arith.mulf %94, %91 : vector<50x369xf32>
    %96 = arith.select %93, %91, %95 : vector<50x369xi1>, vector<50x369xf32>
    %97 = vector.extract_strided_slice %96 {offsets = [0, 0], sizes = [50, 368], strides = [1, 1]} : vector<50x369xf32> to vector<50x368xf32>
    %98 = vector.extract_strided_slice %96 {offsets = [0, 1], sizes = [50, 368], strides = [1, 1]} : vector<50x369xf32> to vector<50x368xf32>
    %99 = arith.maximumf %97, %98 : vector<50x368xf32>
    %c0_21 = arith.constant 0 : index
    %c0_22 = arith.constant 0 : index
    %100 = vector.load %arg9[%c0_21, %c0_22] : memref<368x184xf32, #tpu.memory_space<vmem>>, vector<368x184xf32>
    %cst_23 = arith.constant dense<0.000000e+00> : vector<50x184xf32>
    %101 = tpu.matmul %99, %100, %cst_23 {dimension_numbers = #tpu.dot_dimension_numbers<[1], [0], [0], [1], [0, 0, 1, 1], [], []>} : vector<50x368xf32>, vector<368x184xf32>, vector<50x184xf32> -> vector<50x184xf32>
    %102 = vector.extract_strided_slice %101 {offsets = [0, 0], sizes = [50, 180], strides = [1, 1]} : vector<50x184xf32> to vector<50x180xf32>
    %103 = vector.extract_strided_slice %101 {offsets = [0, 1], sizes = [50, 180], strides = [1, 1]} : vector<50x184xf32> to vector<50x180xf32>
    %104 = vector.extract_strided_slice %101 {offsets = [0, 2], sizes = [50, 180], strides = [1, 1]} : vector<50x184xf32> to vector<50x180xf32>
    %105 = vector.extract_strided_slice %101 {offsets = [0, 3], sizes = [50, 180], strides = [1, 1]} : vector<50x184xf32> to vector<50x180xf32>
    %106 = vector.extract_strided_slice %101 {offsets = [0, 4], sizes = [50, 180], strides = [1, 1]} : vector<50x184xf32> to vector<50x180xf32>
    %107 = tpu.concatenate %102, %103, %104, %105, %106 in 0 : vector<50x180xf32>, vector<50x180xf32>, vector<50x180xf32>, vector<50x180xf32>, vector<50x180xf32> -> vector<250x180xf32>
    %c0_24 = arith.constant 0 : index
    %c0_25 = arith.constant 0 : index
    %108 = vector.load %arg10[%c0_24, %c0_25] : memref<100x250xf32, #tpu.memory_space<vmem>>, vector<100x250xf32>
    %cst_26 = arith.constant dense<0.000000e+00> : vector<100x180xf32>
    %109 = tpu.matmul %108, %107, %cst_26 {dimension_numbers = #tpu.dot_dimension_numbers<[1], [0], [0], [1], [0, 0, 1, 1], [], []>} : vector<100x250xf32>, vector<250x180xf32>, vector<100x180xf32> -> vector<100x180xf32>
    %c0_27 = arith.constant 0 : index
    %c0_28 = arith.constant 0 : index
    %110 = vector.load %arg11[%c0_27, %c0_28] : memref<100x1xf32, #tpu.memory_space<vmem>>, vector<100x1xf32>
    %111 = vector.broadcast %110 : vector<100x1xf32> to vector<100x180xf32>
    %112 = arith.mulf %109, %111 : vector<100x180xf32>
    %c0_29 = arith.constant 0 : index
    %c0_30 = arith.constant 0 : index
    %113 = vector.load %arg12[%c0_29, %c0_30] : memref<100x1xf32, #tpu.memory_space<vmem>>, vector<100x1xf32>
    %114 = vector.broadcast %113 : vector<100x1xf32> to vector<100x180xf32>
    %115 = arith.addf %112, %114 : vector<100x180xf32>
    %cst_31 = arith.constant 0.000000e+00 : f32
    %116 = vector.broadcast %cst_31 : f32 to vector<100x180xf32>
    %117 = arith.cmpf ogt, %115, %116 : vector<100x180xf32>
    %cst_32 = arith.constant 0.00999999977 : f32
    %118 = vector.broadcast %cst_32 : f32 to vector<100x180xf32>
    %119 = arith.mulf %118, %115 : vector<100x180xf32>
    %120 = arith.select %117, %115, %119 : vector<100x180xi1>, vector<100x180xf32>
    %121 = vector.extract_strided_slice %120 {offsets = [0, 0], sizes = [100, 179], strides = [1, 1]} : vector<100x180xf32> to vector<100x179xf32>
    %122 = vector.extract_strided_slice %120 {offsets = [0, 1], sizes = [100, 179], strides = [1, 1]} : vector<100x180xf32> to vector<100x179xf32>
    %123 = arith.maximumf %121, %122 : vector<100x179xf32>
    %c0_33 = arith.constant 0 : index
    %c0_34 = arith.constant 0 : index
    %124 = vector.load %arg13[%c0_33, %c0_34] : memref<179x90xf32, #tpu.memory_space<vmem>>, vector<179x90xf32>
    %cst_35 = arith.constant dense<0.000000e+00> : vector<100x90xf32>
    %125 = tpu.matmul %123, %124, %cst_35 {dimension_numbers = #tpu.dot_dimension_numbers<[1], [0], [0], [1], [0, 0, 1, 1], [], []>} : vector<100x179xf32>, vector<179x90xf32>, vector<100x90xf32> -> vector<100x90xf32>
    %126 = vector.extract_strided_slice %125 {offsets = [0, 0], sizes = [100, 86], strides = [1, 1]} : vector<100x90xf32> to vector<100x86xf32>
    %127 = vector.extract_strided_slice %125 {offsets = [0, 1], sizes = [100, 86], strides = [1, 1]} : vector<100x90xf32> to vector<100x86xf32>
    %128 = vector.extract_strided_slice %125 {offsets = [0, 2], sizes = [100, 86], strides = [1, 1]} : vector<100x90xf32> to vector<100x86xf32>
    %129 = vector.extract_strided_slice %125 {offsets = [0, 3], sizes = [100, 86], strides = [1, 1]} : vector<100x90xf32> to vector<100x86xf32>
    %130 = vector.extract_strided_slice %125 {offsets = [0, 4], sizes = [100, 86], strides = [1, 1]} : vector<100x90xf32> to vector<100x86xf32>
    %131 = tpu.concatenate %126, %127, %128, %129, %130 in 0 : vector<100x86xf32>, vector<100x86xf32>, vector<100x86xf32>, vector<100x86xf32>, vector<100x86xf32> -> vector<500x86xf32>
    %c0_36 = arith.constant 0 : index
    %c0_37 = arith.constant 0 : index
    %132 = vector.load %arg14[%c0_36, %c0_37] : memref<200x500xf32, #tpu.memory_space<vmem>>, vector<200x500xf32>
    %cst_38 = arith.constant dense<0.000000e+00> : vector<200x86xf32>
    %133 = tpu.matmul %132, %131, %cst_38 {dimension_numbers = #tpu.dot_dimension_numbers<[1], [0], [0], [1], [0, 0, 1, 1], [], []>} : vector<200x500xf32>, vector<500x86xf32>, vector<200x86xf32> -> vector<200x86xf32>
    %c0_39 = arith.constant 0 : index
    %c0_40 = arith.constant 0 : index
    %134 = vector.load %arg15[%c0_39, %c0_40] : memref<200x1xf32, #tpu.memory_space<vmem>>, vector<200x1xf32>
    %135 = vector.broadcast %134 : vector<200x1xf32> to vector<200x86xf32>
    %136 = arith.mulf %133, %135 : vector<200x86xf32>
    %c0_41 = arith.constant 0 : index
    %c0_42 = arith.constant 0 : index
    %137 = vector.load %arg16[%c0_41, %c0_42] : memref<200x1xf32, #tpu.memory_space<vmem>>, vector<200x1xf32>
    %138 = vector.broadcast %137 : vector<200x1xf32> to vector<200x86xf32>
    %139 = arith.addf %136, %138 : vector<200x86xf32>
    %cst_43 = arith.constant 0.000000e+00 : f32
    %140 = vector.broadcast %cst_43 : f32 to vector<200x86xf32>
    %141 = arith.cmpf ogt, %139, %140 : vector<200x86xf32>
    %cst_44 = arith.constant 0.00999999977 : f32
    %142 = vector.broadcast %cst_44 : f32 to vector<200x86xf32>
    %143 = arith.mulf %142, %139 : vector<200x86xf32>
    %144 = arith.select %141, %139, %143 : vector<200x86xi1>, vector<200x86xf32>
    %145 = vector.extract_strided_slice %144 {offsets = [0, 0], sizes = [200, 85], strides = [1, 1]} : vector<200x86xf32> to vector<200x85xf32>
    %146 = vector.extract_strided_slice %144 {offsets = [0, 1], sizes = [200, 85], strides = [1, 1]} : vector<200x86xf32> to vector<200x85xf32>
    %147 = arith.maximumf %145, %146 : vector<200x85xf32>
    %c0_45 = arith.constant 0 : index
    %c0_46 = arith.constant 0 : index
    %148 = vector.load %arg17[%c0_45, %c0_46] : memref<85x43xf32, #tpu.memory_space<vmem>>, vector<85x43xf32>
    %cst_47 = arith.constant dense<0.000000e+00> : vector<200x43xf32>
    %149 = tpu.matmul %147, %148, %cst_47 {dimension_numbers = #tpu.dot_dimension_numbers<[1], [0], [0], [1], [0, 0, 1, 1], [], []>} : vector<200x85xf32>, vector<85x43xf32>, vector<200x43xf32> -> vector<200x43xf32>
    %150 = vector.extract_strided_slice %149 {offsets = [0, 0], sizes = [200, 39], strides = [1, 1]} : vector<200x43xf32> to vector<200x39xf32>
    %151 = vector.extract_strided_slice %149 {offsets = [0, 1], sizes = [200, 39], strides = [1, 1]} : vector<200x43xf32> to vector<200x39xf32>
    %152 = vector.extract_strided_slice %149 {offsets = [0, 2], sizes = [200, 39], strides = [1, 1]} : vector<200x43xf32> to vector<200x39xf32>
    %153 = vector.extract_strided_slice %149 {offsets = [0, 3], sizes = [200, 39], strides = [1, 1]} : vector<200x43xf32> to vector<200x39xf32>
    %154 = vector.extract_strided_slice %149 {offsets = [0, 4], sizes = [200, 39], strides = [1, 1]} : vector<200x43xf32> to vector<200x39xf32>
    %155 = tpu.concatenate %150, %151, %152, %153, %154 in 0 : vector<200x39xf32>, vector<200x39xf32>, vector<200x39xf32>, vector<200x39xf32>, vector<200x39xf32> -> vector<1000x39xf32>
    %c0_48 = arith.constant 0 : index
    %c0_49 = arith.constant 0 : index
    %156 = vector.load %arg18[%c0_48, %c0_49] : memref<330x1000xf32, #tpu.memory_space<vmem>>, vector<330x1000xf32>
    %cst_50 = arith.constant dense<0.000000e+00> : vector<330x39xf32>
    %157 = tpu.matmul %156, %155, %cst_50 {dimension_numbers = #tpu.dot_dimension_numbers<[1], [0], [0], [1], [0, 0, 1, 1], [], []>} : vector<330x1000xf32>, vector<1000x39xf32>, vector<330x39xf32> -> vector<330x39xf32>
    %c0_51 = arith.constant 0 : index
    %c0_52 = arith.constant 0 : index
    %158 = vector.load %arg19[%c0_51, %c0_52] : memref<330x1xf32, #tpu.memory_space<vmem>>, vector<330x1xf32>
    %159 = vector.broadcast %158 : vector<330x1xf32> to vector<330x39xf32>
    %160 = arith.mulf %157, %159 : vector<330x39xf32>
    %c0_53 = arith.constant 0 : index
    %c0_54 = arith.constant 0 : index
    %161 = vector.load %arg20[%c0_53, %c0_54] : memref<330x1xf32, #tpu.memory_space<vmem>>, vector<330x1xf32>
    %162 = vector.broadcast %161 : vector<330x1xf32> to vector<330x39xf32>
    %163 = arith.addf %160, %162 : vector<330x39xf32>
    %cst_55 = arith.constant 0.000000e+00 : f32
    %164 = vector.broadcast %cst_55 : f32 to vector<330x39xf32>
    %165 = arith.cmpf ogt, %163, %164 : vector<330x39xf32>
    %cst_56 = arith.constant 0.000000e+00 : f32
    %166 = vector.broadcast %cst_56 : f32 to vector<330x39xf32>
    %167 = arith.mulf %166, %163 : vector<330x39xf32>
    %168 = arith.select %165, %163, %167 : vector<330x39xi1>, vector<330x39xf32>
    %169 = vector.extract_strided_slice %168 {offsets = [0, 0], sizes = [330, 38], strides = [1, 1]} : vector<330x39xf32> to vector<330x38xf32>
    %170 = vector.extract_strided_slice %168 {offsets = [0, 1], sizes = [330, 38], strides = [1, 1]} : vector<330x39xf32> to vector<330x38xf32>
    %171 = arith.maximumf %169, %170 : vector<330x38xf32>
    %c0_57 = arith.constant 0 : index
    %c0_58 = arith.constant 0 : index
    %172 = vector.load %arg21[%c0_57, %c0_58] : memref<38x19xf32, #tpu.memory_space<vmem>>, vector<38x19xf32>
    %cst_59 = arith.constant dense<0.000000e+00> : vector<330x19xf32>
    %173 = tpu.matmul %171, %172, %cst_59 {dimension_numbers = #tpu.dot_dimension_numbers<[1], [0], [0], [1], [0, 0, 1, 1], [], []>} : vector<330x38xf32>, vector<38x19xf32>, vector<330x19xf32> -> vector<330x19xf32>
    %c0_60 = arith.constant 0 : index
    %c0_61 = arith.constant 0 : index
    %c0_62 = arith.constant 0 : index
    %174 = vector.load %arg22[%c0_60, %c0_61, %c0_62] : memref<2x330x19xf32, #tpu.memory_space<vmem>>, vector<1x330x19xf32>
    %175 = vector.shape_cast %174 : vector<1x330x19xf32> to vector<330x19xf32>
    %176 = arith.mulf %175, %173 : vector<330x19xf32>
    %cst_63 = arith.constant dense<0.000000e+00> : vector<330xf32>
    %177 = vector.multi_reduction <add>, %176, %cst_63 [1] : vector<330x19xf32> to vector<330xf32>
    %178 = vector.shape_cast %177 : vector<330xf32> to vector<330x1xf32>
    %cst_64 = arith.constant dense<0.000000e+00> : vector<1xf32>
    %179 = vector.multi_reduction <add>, %178, %cst_64 [0] : vector<330x1xf32> to vector<1xf32>
    %180 = vector.shape_cast %179 : vector<1xf32> to vector<1x1xf32>
    %c1 = arith.constant 1 : index
    %c0_65 = arith.constant 0 : index
    %c0_66 = arith.constant 0 : index
    %181 = vector.load %arg22[%c1, %c0_65, %c0_66] : memref<2x330x19xf32, #tpu.memory_space<vmem>>, vector<1x330x19xf32>
    %182 = vector.shape_cast %181 : vector<1x330x19xf32> to vector<330x19xf32>
    %183 = arith.mulf %182, %173 : vector<330x19xf32>
    %cst_67 = arith.constant dense<0.000000e+00> : vector<330xf32>
    %184 = vector.multi_reduction <add>, %183, %cst_67 [1] : vector<330x19xf32> to vector<330xf32>
    %185 = vector.shape_cast %184 : vector<330xf32> to vector<330x1xf32>
    %cst_68 = arith.constant dense<0.000000e+00> : vector<1xf32>
    %186 = vector.multi_reduction <add>, %185, %cst_68 [0] : vector<330x1xf32> to vector<1xf32>
    %187 = vector.shape_cast %186 : vector<1xf32> to vector<1x1xf32>
    %188 = tpu.concatenate %180, %187 in 1 : vector<1x1xf32>, vector<1x1xf32> -> vector<1x2xf32>
    %c0_69 = arith.constant 0 : index
    %c0_70 = arith.constant 0 : index
    %189 = vector.load %arg23[%c0_69, %c0_70] : memref<1x2xf32, #tpu.memory_space<vmem>>, vector<1x2xf32>
    %190 = arith.addf %188, %189 : vector<1x2xf32>
    %c0_71 = arith.constant 0 : index
    %c0_72 = arith.constant 0 : index
    %c0_73 = arith.constant 0 : index
    %191 = vector.load %arg24[%c0_71, %c0_72, %c0_73] : memref<1x1x2xf32, #tpu.memory_space<vmem>>, vector<1x1x2xf32>
    %192 = vector.shape_cast %191 : vector<1x1x2xf32> to vector<1x2xf32>
    %193 = vector.shape_cast %190 : vector<1x2xf32> to vector<1x1x2xf32>
    tpu.vector_store %arg24[%c0_71, %c0_72, %c0_73], %193 {strides = array<i32>} : memref<1x1x2xf32, #tpu.memory_space<vmem>>, vector<1x1x2xf32>,
    return
  }
  func.func @transform_0(%arg0: i32) -> (i32, i32, i32) {
    %c0_i32 = arith.constant 0 : i32
    %c0_i32_0 = arith.constant 0 : i32
    %c0_i32_1 = arith.constant 0 : i32
    return %arg0, %c0_i32, %c0_i32_0 : i32, i32, i32
  }
  func.func @transform_1(%arg0: i32) -> (i32, i32) {
    %c0_i32 = arith.constant 0 : i32
    %c0_i32_0 = arith.constant 0 : i32
    %c0_i32_1 = arith.constant 0 : i32
    return %c0_i32, %c0_i32_0 : i32, i32
  }
  func.func @transform_2(%arg0: i32) -> (i32, i32) {
    %c0_i32 = arith.constant 0 : i32
    %c0_i32_0 = arith.constant 0 : i32
    %c0_i32_1 = arith.constant 0 : i32
    return %c0_i32, %c0_i32_0 : i32, i32
  }
  func.func @transform_3(%arg0: i32) -> (i32, i32) {
    %c0_i32 = arith.constant 0 : i32
    %c0_i32_0 = arith.constant 0 : i32
    %c0_i32_1 = arith.constant 0 : i32
    return %c0_i32, %c0_i32_0 : i32, i32
  }
  func.func @transform_4(%arg0: i32) -> (i32, i32) {
    %c0_i32 = arith.constant 0 : i32
    %c0_i32_0 = arith.constant 0 : i32
    %c0_i32_1 = arith.constant 0 : i32
    return %c0_i32, %c0_i32_0 : i32, i32
  }
  func.func @transform_5(%arg0: i32) -> (i32, i32) {
    %c0_i32 = arith.constant 0 : i32
    %c0_i32_0 = arith.constant 0 : i32
    %c0_i32_1 = arith.constant 0 : i32
    return %c0_i32, %c0_i32_0 : i32, i32
  }
  func.func @transform_6(%arg0: i32) -> (i32, i32) {
    %c0_i32 = arith.constant 0 : i32
    %c0_i32_0 = arith.constant 0 : i32
    %c0_i32_1 = arith.constant 0 : i32
    return %c0_i32, %c0_i32_0 : i32, i32
  }
  func.func @transform_7(%arg0: i32) -> (i32, i32) {
    %c0_i32 = arith.constant 0 : i32
    %c0_i32_0 = arith.constant 0 : i32
    %c0_i32_1 = arith.constant 0 : i32
    return %c0_i32, %c0_i32_0 : i32, i32
  }
  func.func @transform_8(%arg0: i32) -> (i32, i32) {
    %c0_i32 = arith.constant 0 : i32
    %c0_i32_0 = arith.constant 0 : i32
    %c0_i32_1 = arith.constant 0 : i32
    return %c0_i32, %c0_i32_0 : i32, i32
  }
  func.func @transform_9(%arg0: i32) -> (i32, i32) {
    %c0_i32 = arith.constant 0 : i32
    %c0_i32_0 = arith.constant 0 : i32
    %c0_i32_1 = arith.constant 0 : i32
    return %c0_i32, %c0_i32_0 : i32, i32
  }
  func.func @transform_10(%arg0: i32) -> (i32, i32) {
    %c0_i32 = arith.constant 0 : i32
    %c0_i32_0 = arith.constant 0 : i32
    %c0_i32_1 = arith.constant 0 : i32
    return %c0_i32, %c0_i32_0 : i32, i32
  }
  func.func @transform_11(%arg0: i32) -> (i32, i32) {
    %c0_i32 = arith.constant 0 : i32
    %c0_i32_0 = arith.constant 0 : i32
    %c0_i32_1 = arith.constant 0 : i32
    return %c0_i32, %c0_i32_0 : i32, i32
  }
  func.func @transform_12(%arg0: i32) -> (i32, i32) {
    %c0_i32 = arith.constant 0 : i32
    %c0_i32_0 = arith.constant 0 : i32
    %c0_i32_1 = arith.constant 0 : i32
    return %c0_i32, %c0_i32_0 : i32, i32
  }
  func.func @transform_13(%arg0: i32) -> (i32, i32) {
    %c0_i32 = arith.constant 0 : i32
    %c0_i32_0 = arith.constant 0 : i32
    %c0_i32_1 = arith.constant 0 : i32
    return %c0_i32, %c0_i32_0 : i32, i32
  }
  func.func @transform_14(%arg0: i32) -> (i32, i32) {
    %c0_i32 = arith.constant 0 : i32
    %c0_i32_0 = arith.constant 0 : i32
    %c0_i32_1 = arith.constant 0 : i32
    return %c0_i32, %c0_i32_0 : i32, i32
  }
  func.func @transform_15(%arg0: i32) -> (i32, i32) {
    %c0_i32 = arith.constant 0 : i32
    %c0_i32_0 = arith.constant 0 : i32
    %c0_i32_1 = arith.constant 0 : i32
    return %c0_i32, %c0_i32_0 : i32, i32
  }
  func.func @transform_16(%arg0: i32) -> (i32, i32) {
    %c0_i32 = arith.constant 0 : i32
    %c0_i32_0 = arith.constant 0 : i32
    %c0_i32_1 = arith.constant 0 : i32
    return %c0_i32, %c0_i32_0 : i32, i32
  }
  func.func @transform_17(%arg0: i32) -> (i32, i32) {
    %c0_i32 = arith.constant 0 : i32
    %c0_i32_0 = arith.constant 0 : i32
    %c0_i32_1 = arith.constant 0 : i32
    return %c0_i32, %c0_i32_0 : i32, i32
  }
  func.func @transform_18(%arg0: i32) -> (i32, i32) {
    %c0_i32 = arith.constant 0 : i32
    %c0_i32_0 = arith.constant 0 : i32
    %c0_i32_1 = arith.constant 0 : i32
    return %c0_i32, %c0_i32_0 : i32, i32
  }
  func.func @transform_19(%arg0: i32) -> (i32, i32) {
    %c0_i32 = arith.constant 0 : i32
    %c0_i32_0 = arith.constant 0 : i32
    %c0_i32_1 = arith.constant 0 : i32
    return %c0_i32, %c0_i32_0 : i32, i32
  }
  func.func @transform_20(%arg0: i32) -> (i32, i32) {
    %c0_i32 = arith.constant 0 : i32
    %c0_i32_0 = arith.constant 0 : i32
    %c0_i32_1 = arith.constant 0 : i32
    return %c0_i32, %c0_i32_0 : i32, i32
  }
  func.func @transform_21(%arg0: i32) -> (i32, i32, i32) {
    %c0_i32 = arith.constant 0 : i32
    %c0_i32_0 = arith.constant 0 : i32
    %c0_i32_1 = arith.constant 0 : i32
    %c0_i32_2 = arith.constant 0 : i32
    return %c0_i32, %c0_i32_0, %c0_i32_1 : i32, i32, i32
  }
  func.func @transform_22(%arg0: i32) -> (i32, i32) {
    %c0_i32 = arith.constant 0 : i32
    %c0_i32_0 = arith.constant 0 : i32
    %c0_i32_1 = arith.constant 0 : i32
    return %c0_i32, %c0_i32_0 : i32, i32
  }
  func.func @transform_23(%arg0: i32) -> (i32, i32, i32) {
    %c0_i32 = arith.constant 0 : i32
    %c0_i32_0 = arith.constant 0 : i32
    %c0_i32_1 = arith.constant 0 : i32
    return %arg0, %c0_i32, %c0_i32_0 : i32, i32, i32
  }
}

</mosaic_0001>

<llo_original>
// kernel: deepconvnet_forward.1
$region0: #{deepconvnet_forward.1}
  #allocation0 [shape = 'u32[]', space=smem, size = 0x4, offset = 0x4, fixed_abs, tag = 'smem constant byte address 0x4 - core index']
  #allocation1 [shape = 'u32[144,128]{1,0:T(1,128)}', space=vmem, size = 0x12000, scoped, tag = 'internal scratch']
  %s0 = inlined_call_operand.hbm [shape: f32[2,2,750], index: 0, kind: input, shape index: {}]
  %s1 = inlined_call_operand.vmem [shape: f32[25,10], index: 1, kind: input, shape index: {}]
  %s2 = inlined_call_operand.vmem [shape: f32[25,1], index: 2, kind: input, shape index: {}]
  %s3 = inlined_call_operand.vmem [shape: f32[25,1], index: 3, kind: input, shape index: {}]
  %s4 = inlined_call_operand.hbm [shape: f32[745,373], index: 4, kind: input, shape index: {}]
  %s5 = inlined_call_operand.hbm [shape: f32[50,125], index: 5, kind: input, shape index: {}]
  %s6 = inlined_call_operand.vmem [shape: f32[50,1], index: 6, kind: input, shape index: {}]
  %s7 = inlined_call_operand.vmem [shape: f32[50,1], index: 7, kind: input, shape index: {}]
  %s8 = inlined_call_operand.vmem [shape: f32[368,184], index: 8, kind: input, shape index: {}]
  %s9 = inlined_call_operand.vmem [shape: f32[100,250], index: 9, kind: input, shape index: {}]
  %s10 = inlined_call_operand.vmem [shape: f32[100,1], index: 10, kind: input, shape index: {}]
  %s11 = inlined_call_operand.vmem [shape: f32[100,1], index: 11, kind: input, shape index: {}]
  %s12 = inlined_call_operand.vmem [shape: f32[179,90], index: 12, kind: input, shape index: {}]
  %s13 = inlined_call_operand.vmem [shape: f32[200,500], index: 13, kind: input, shape index: {}]
  %s14 = inlined_call_operand.vmem [shape: f32[200,1], index: 14, kind: input, shape index: {}]
  %s15 = inlined_call_operand.vmem [shape: f32[200,1], index: 15, kind: input, shape index: {}]
  %s16 = inlined_call_operand.vmem [shape: f32[85,43], index: 16, kind: input, shape index: {}]
  %s17 = inlined_call_operand.vmem [shape: f32[330,1000], index: 17, kind: input, shape index: {}]
  %s18 = inlined_call_operand.vmem [shape: f32[330,1], index: 18, kind: input, shape index: {}]
  %s19 = inlined_call_operand.vmem [shape: f32[330,1], index: 19, kind: input, shape index: {}]
  %s20 = inlined_call_operand.vmem [shape: f32[38,19], index: 20, kind: input, shape index: {}]
  %s21 = inlined_call_operand.vmem [shape: f32[2,330,19], index: 21, kind: input, shape index: {}]
  %s22 = inlined_call_operand.vmem [shape: f32[1,2], index: 22, kind: input, shape index: {}]
  %s23 = inlined_call_operand.hbm [shape: f32[2,1,2], index: 23, kind: output, shape index: {}]
  %s24 = sld [smem:[#allocation0]]
  $region137: #{deepconvnet_forward.1} parent=0
    _
  %s26 = ssub.s32 1, %s24
  %s27 = scalar_select 0, %s26, %s24
  $region1: #{deepconvnet_forward.1} parent=0
    #allocation2 [shape = 'u8[12288]{0}', space=vmem, size = 0x3000, scoped, tag = 'input window, operand 0']
    #allocation3 [shape = 's32[2]{0}', space=sflag, size = 0x8, scoped, tag = 'scoped memory for deepconvnet_forward.1']
    #allocation4 [shape = 's32[2]{0}', space=sflag, size = 0x8, scoped, tag = 'scoped memory for deepconvnet_forward.1']
    #allocation5 [shape = 'u8[1155072]{0}', space=vmem, size = 0x11a000, scoped, tag = 'input window, operand 4, single buffered']
    #allocation6 [shape = 's32[1]{0}', space=sflag, size = 0x4, scoped, tag = 'scoped memory for deepconvnet_forward.1']
    #allocation7 [shape = 'u8[28672]{0}', space=vmem, size = 0x7000, scoped, tag = 'input window, operand 5, single buffered']
    #allocation8 [shape = 'u8[1024]{0}', space=vmem, size = 0x400, scoped, tag = 'output window, operand 0']
    %28 = vsyncpa [#allocation3], 0
    %s29 = scalar_lea.sflag [#allocation3], 1
    %30 = vsyncpa %s29, 0
    %31 = vsyncpa [#allocation6], 0
    %32 = vsyncpa [#allocation4], 0
    %s33 = scalar_lea.sflag [#allocation4], 1
    %34 = vsyncpa %s33, 0
    loop: start=0, step=1, limit=4
    $region2: #{deepconvnet_forward.1} parent=1 // loop_pre_header
      _
    $region3: #{deepconvnet_forward.1} parent=1 // loop_header
      %s36 = sphi 0, %s40
      %p37 = scmp.ge.s32.totalorder %s36, 4
      %s46 = sphi 0, %s48
      %s49 = sphi 0, %s46
      %s50 = sphi 0, %s49
      %s66 = sphi 0, %s50
      %s70 = sphi 0, %s70
      %s72 = sphi 0, %s70
      %s73 = sphi 0, %s72
      %s87 = sphi 0, %s73
      %s91 = sphi 0, %s91
      %s93 = sphi 0, %s91
      %s94 = sphi 0, %s93
      %s108 = sphi 0, %s94
      %s112 = sphi 0, %s112
      %s114 = sphi 0, %s112
      %s115 = sphi 0, %s114
      %s129 = sphi 0, %s115
      %s133 = sphi 0, %s133
      %s135 = sphi 0, %s133
      %s136 = sphi 0, %s135
      %s150 = sphi 0, %s136
      %s154 = sphi 0, %s154
      %s156 = sphi 0, %s154
      %s157 = sphi 0, %s156
      %s171 = sphi 0, %s157
      %s175 = sphi 0, %s175
      %s177 = sphi 0, %s175
      %s178 = sphi 0, %s177
      %s192 = sphi 0, %s178
      %s196 = sphi 0, %s196
      %s198 = sphi 0, %s196
      %s199 = sphi 0, %s198
      %s213 = sphi 0, %s199
      %s217 = sphi 0, %s217
      %s219 = sphi 0, %s217
      %s220 = sphi 0, %s219
      %s234 = sphi 0, %s220
      %s238 = sphi 0, %s238
      %s240 = sphi 0, %s238
      %s241 = sphi 0, %s240
      %s255 = sphi 0, %s241
      %s259 = sphi 0, %s259
      %s261 = sphi 0, %s259
      %s262 = sphi 0, %s261
      %s276 = sphi 0, %s262
      %s280 = sphi 0, %s280
      %s282 = sphi 0, %s280
      %s283 = sphi 0, %s282
      %s297 = sphi 0, %s283
      %s301 = sphi 0, %s301
      %s303 = sphi 0, %s301
      %s304 = sphi 0, %s303
      %s318 = sphi 0, %s304
      %s322 = sphi 0, %s322
      %s324 = sphi 0, %s322
      %s325 = sphi 0, %s324
      %s339 = sphi 0, %s325
      %s343 = sphi 0, %s343
      %s345 = sphi 0, %s343
      %s346 = sphi 0, %s345
      %s360 = sphi 0, %s346
      %s364 = sphi 0, %s364
      %s366 = sphi 0, %s364
      %s367 = sphi 0, %s366
      %s381 = sphi 0, %s367
      %s385 = sphi 0, %s385
      %s387 = sphi 0, %s385
      %s388 = sphi 0, %s387
      %s402 = sphi 0, %s388
      %s406 = sphi 0, %s406
      %s408 = sphi 0, %s406
      %s409 = sphi 0, %s408
      %s423 = sphi 0, %s409
      %s427 = sphi 0, %s427
      %s429 = sphi 0, %s427
      %s430 = sphi 0, %s429
      %s444 = sphi 0, %s430
      %s448 = sphi 0, %s448
      %s450 = sphi 0, %s448
      %s451 = sphi 0, %s450
      %s465 = sphi 0, %s451
      %s469 = sphi 0, %s469
      %s471 = sphi 0, %s469
      %s472 = sphi 0, %s471
      %s486 = sphi 0, %s472
      %s490 = sphi 0, %s490
      %s492 = sphi 0, %s490
      %s493 = sphi 0, %s492
      %s507 = sphi 0, %s493
      %s511 = sphi 0, %s511
      %s513 = sphi 0, %s511
      %s514 = sphi 0, %s513
      %s528 = sphi 0, %s514
      %s534 = sphi 0, %s536
      %s537 = sphi 0, %s534
      %s538 = sphi 0, %s537
      %s554 = sphi 0, %s538
    $region4: #{deepconvnet_forward.1} parent=1 // loop_header_branch
      %39 = sbr.rel (%p37) target = $region8
    $region5: #{deepconvnet_forward.1} parent=1 // loop_body
      %s41 = ssub.s32 %s36, 1
      %s42 = ssub.s32 %s36, 2
      %s43 = sadd.s32 %s36, 1
      %s44 = ssub.s32 %s36, %s43
      %p45 = scmp.eq.s32.totalorder %s44, 0
      %s47 = sadd.s32 %s46, 1
      %s48 = scalar_select %p45, %s46, %s47
      %p51 = pneg %p45
      %p52 = scmp.eq.s32.totalorder %s36, 1
      %p53 = por %p51, %p52
      %p54 = scmp.ne.s32.totalorder %s46, %s49
      %p55 = scmp.eq.s32.totalorder %s36, 0
      %p56 = por %p54, %p55
      %p57 = scmp.ne.s32.totalorder %s46, %s49
      %p58 = scmp.eq.s32.totalorder %s41, 1
      %p59 = por %p57, %p58
      %p60 = scmp.ne.s32.totalorder %s49, %s50
      %p61 = scmp.eq.s32.totalorder %s41, 0
      %p62 = por %p60, %p61
      %p63 = scmp.ne.s32.totalorder %s49, %s50
      %p64 = scmp.eq.s32.totalorder %s42, 1
      %p65 = por %p63, %p64
      %p67 = scmp.ne.s32.totalorder %s50, %s66
      %p68 = scmp.eq.s32.totalorder %s42, 0
      %p69 = por %p67, %p68
      %s71 = sadd.s32 %s70, 1
      %p74 = scmp.eq.s32.totalorder %s36, 1
      %p75 = scmp.ne.s32.totalorder %s70, %s72
      %p76 = scmp.eq.s32.totalorder %s36, 0
      %p77 = por %p75, %p76
      %p78 = scmp.ne.s32.totalorder %s70, %s72
      %p79 = scmp.eq.s32.totalorder %s41, 1
      %p80 = por %p78, %p79
      %p81 = scmp.ne.s32.totalorder %s72, %s73
      %p82 = scmp.eq.s32.totalorder %s41, 0
      %p83 = por %p81, %p82
      %p84 = scmp.ne.s32.totalorder %s72, %s73
      %p85 = scmp.eq.s32.totalorder %s42, 1
      %p86 = por %p84, %p85
      %p88 = scmp.ne.s32.totalorder %s73, %s87
      %p89 = scmp.eq.s32.totalorder %s42, 0
      %p90 = por %p88, %p89
      %s92 = sadd.s32 %s91, 1
      %p95 = scmp.eq.s32.totalorder %s36, 1
      %p96 = scmp.ne.s32.totalorder %s91, %s93
      %p97 = scmp.eq.s32.totalorder %s36, 0
      %p98 = por %p96, %p97
      %p99 = scmp.ne.s32.totalorder %s91, %s93
      %p100 = scmp.eq.s32.totalorder %s41, 1
      %p101 = por %p99, %p100
      %p102 = scmp.ne.s32.totalorder %s93, %s94
      %p103 = scmp.eq.s32.totalorder %s41, 0
      %p104 = por %p102, %p103
      %p105 = scmp.ne.s32.totalorder %s93, %s94
      %p106 = scmp.eq.s32.totalorder %s42, 1
      %p107 = por %p105, %p106
      %p109 = scmp.ne.s32.totalorder %s94, %s108
      %p110 = scmp.eq.s32.totalorder %s42, 0
      %p111 = por %p109, %p110
      %s113 = sadd.s32 %s112, 1
      %p116 = scmp.eq.s32.totalorder %s36, 1
      %p117 = scmp.ne.s32.totalorder %s112, %s114
      %p118 = scmp.eq.s32.totalorder %s36, 0
      %p119 = por %p117, %p118
      %p120 = scmp.ne.s32.totalorder %s112, %s114
      %p121 = scmp.eq.s32.totalorder %s41, 1
      %p122 = por %p120, %p121
      %p123 = scmp.ne.s32.totalorder %s114, %s115
      %p124 = scmp.eq.s32.totalorder %s41, 0
      %p125 = por %p123, %p124
      %p126 = scmp.ne.s32.totalorder %s114, %s115
      %p127 = scmp.eq.s32.totalorder %s42, 1
      %p128 = por %p126, %p127
      %p130 = scmp.ne.s32.totalorder %s115, %s129
      %p131 = scmp.eq.s32.totalorder %s42, 0
      %p132 = por %p130, %p131
      %s134 = sadd.s32 %s133, 1
      %p137 = scmp.eq.s32.totalorder %s36, 1
      %p138 = scmp.ne.s32.totalorder %s133, %s135
      %p139 = scmp.eq.s32.totalorder %s36, 0
      %p140 = por %p138, %p139
      %p141 = scmp.ne.s32.totalorder %s133, %s135
      %p142 = scmp.eq.s32.totalorder %s41, 1
      %p143 = por %p141, %p142
      %p144 = scmp.ne.s32.totalorder %s135, %s136
      %p145 = scmp.eq.s32.totalorder %s41, 0
      %p146 = por %p144, %p145
      %p147 = scmp.ne.s32.totalorder %s135, %s136
      %p148 = scmp.eq.s32.totalorder %s42, 1
      %p149 = por %p147, %p148
      %p151 = scmp.ne.s32.totalorder %s136, %s150
      %p152 = scmp.eq.s32.totalorder %s42, 0
      %p153 = por %p151, %p152
      %s155 = sadd.s32 %s154, 1
      %p158 = scmp.eq.s32.totalorder %s36, 1
      %p159 = scmp.ne.s32.totalorder %s154, %s156
      %p160 = scmp.eq.s32.totalorder %s36, 0
      %p161 = por %p159, %p160
      %p162 = scmp.ne.s32.totalorder %s154, %s156
      %p163 = scmp.eq.s32.totalorder %s41, 1
      %p164 = por %p162, %p163
      %p165 = scmp.ne.s32.totalorder %s156, %s157
      %p166 = scmp.eq.s32.totalorder %s41, 0
      %p167 = por %p165, %p166
      %p168 = scmp.ne.s32.totalorder %s156, %s157
      %p169 = scmp.eq.s32.totalorder %s42, 1
      %p170 = por %p168, %p169
      %p172 = scmp.ne.s32.totalorder %s157, %s171
      %p173 = scmp.eq.s32.totalorder %s42, 0
      %p174 = por %p172, %p173
      %s176 = sadd.s32 %s175, 1
      %p179 = scmp.eq.s32.totalorder %s36, 1
      %p180 = scmp.ne.s32.totalorder %s175, %s177
      %p181 = scmp.eq.s32.totalorder %s36, 0
      %p182 = por %p180, %p181
      %p183 = scmp.ne.s32.totalorder %s175, %s177
      %p184 = scmp.eq.s32.totalorder %s41, 1
      %p185 = por %p183, %p184
      %p186 = scmp.ne.s32.totalorder %s177, %s178
      %p187 = scmp.eq.s32.totalorder %s41, 0
      %p188 = por %p186, %p187
      %p189 = scmp.ne.s32.totalorder %s177, %s178
      %p190 = scmp.eq.s32.totalorder %s42, 1
      %p191 = por %p189, %p190
      %p193 = scmp.ne.s32.totalorder %s178, %s192
      %p194 = scmp.eq.s32.totalorder %s42, 0
      %p195 = por %p193, %p194
      %s197 = sadd.s32 %s196, 1
      %p200 = scmp.eq.s32.totalorder %s36, 1
      %p201 = scmp.ne.s32.totalorder %s196, %s198
      %p202 = scmp.eq.s32.totalorder %s36, 0
      %p203 = por %p201, %p202
      %p204 = scmp.ne.s32.totalorder %s196, %s198
      %p205 = scmp.eq.s32.totalorder %s41, 1
      %p206 = por %p204, %p205
      %p207 = scmp.ne.s32.totalorder %s198, %s199
      %p208 = scmp.eq.s32.totalorder %s41, 0
      %p209 = por %p207, %p208
      %p210 = scmp.ne.s32.totalorder %s198, %s199
      %p211 = scmp.eq.s32.totalorder %s42, 1
      %p212 = por %p210, %p211
      %p214 = scmp.ne.s32.totalorder %s199, %s213
      %p215 = scmp.eq.s32.totalorder %s42, 0
      %p216 = por %p214, %p215
      %s218 = sadd.s32 %s217, 1
      %p221 = scmp.eq.s32.totalorder %s36, 1
      %p222 = scmp.ne.s32.totalorder %s217, %s219
      %p223 = scmp.eq.s32.totalorder %s36, 0
      %p224 = por %p222, %p223
      %p225 = scmp.ne.s32.totalorder %s217, %s219
      %p226 = scmp.eq.s32.totalorder %s41, 1
      %p227 = por %p225, %p226
      %p228 = scmp.ne.s32.totalorder %s219, %s220
      %p229 = scmp.eq.s32.totalorder %s41, 0
      %p230 = por %p228, %p229
      %p231 = scmp.ne.s32.totalorder %s219, %s220
      %p232 = scmp.eq.s32.totalorder %s42, 1
      %p233 = por %p231, %p232
      %p235 = scmp.ne.s32.totalorder %s220, %s234
      %p236 = scmp.eq.s32.totalorder %s42, 0
      %p237 = por %p235, %p236
      %s239 = sadd.s32 %s238, 1
      %p242 = scmp.eq.s32.totalorder %s36, 1
      %p243 = scmp.ne.s32.totalorder %s238, %s240
      %p244 = scmp.eq.s32.totalorder %s36, 0
      %p245 = por %p243, %p244
      %p246 = scmp.ne.s32.totalorder %s238, %s240
      %p247 = scmp.eq.s32.totalorder %s41, 1
      %p248 = por %p246, %p247
      %p249 = scmp.ne.s32.totalorder %s240, %s241
      %p250 = scmp.eq.s32.totalorder %s41, 0
      %p251 = por %p249, %p250
      %p252 = scmp.ne.s32.totalorder %s240, %s241
      %p253 = scmp.eq.s32.totalorder %s42, 1
      %p254 = por %p252, %p253
      %p256 = scmp.ne.s32.totalorder %s241, %s255
      %p257 = scmp.eq.s32.totalorder %s42, 0
      %p258 = por %p256, %p257
      %s260 = sadd.s32 %s259, 1
      %p263 = scmp.eq.s32.totalorder %s36, 1
      %p264 = scmp.ne.s32.totalorder %s259, %s261
      %p265 = scmp.eq.s32.totalorder %s36, 0
      %p266 = por %p264, %p265
      %p267 = scmp.ne.s32.totalorder %s259, %s261
      %p268 = scmp.eq.s32.totalorder %s41, 1
      %p269 = por %p267, %p268
      %p270 = scmp.ne.s32.totalorder %s261, %s262
      %p271 = scmp.eq.s32.totalorder %s41, 0
      %p272 = por %p270, %p271
      %p273 = scmp.ne.s32.totalorder %s261, %s262
      %p274 = scmp.eq.s32.totalorder %s42, 1
      %p275 = por %p273, %p274
      %p277 = scmp.ne.s32.totalorder %s262, %s276
      %p278 = scmp.eq.s32.totalorder %s42, 0
      %p279 = por %p277, %p278
      %s281 = sadd.s32 %s280, 1
      %p284 = scmp.eq.s32.totalorder %s36, 1
      %p285 = scmp.ne.s32.totalorder %s280, %s282
      %p286 = scmp.eq.s32.totalorder %s36, 0
      %p287 = por %p285, %p286
      %p288 = scmp.ne.s32.totalorder %s280, %s282
      %p289 = scmp.eq.s32.totalorder %s41, 1
      %p290 = por %p288, %p289
      %p291 = scmp.ne.s32.totalorder %s282, %s283
      %p292 = scmp.eq.s32.totalorder %s41, 0
      %p293 = por %p291, %p292
      %p294 = scmp.ne.s32.totalorder %s282, %s283
      %p295 = scmp.eq.s32.totalorder %s42, 1
      %p296 = por %p294, %p295
      %p298 = scmp.ne.s32.totalorder %s283, %s297
      %p299 = scmp.eq.s32.totalorder %s42, 0
      %p300 = por %p298, %p299
      %s302 = sadd.s32 %s301, 1
      %p305 = scmp.eq.s32.totalorder %s36, 1
      %p306 = scmp.ne.s32.totalorder %s301, %s303
      %p307 = scmp.eq.s32.totalorder %s36, 0
      %p308 = por %p306, %p307
      %p309 = scmp.ne.s32.totalorder %s301, %s303
      %p310 = scmp.eq.s32.totalorder %s41, 1
      %p311 = por %p309, %p310
      %p312 = scmp.ne.s32.totalorder %s303, %s304
      %p313 = scmp.eq.s32.totalorder %s41, 0
      %p314 = por %p312, %p313
      %p315 = scmp.ne.s32.totalorder %s303, %s304
      %p316 = scmp.eq.s32.totalorder %s42, 1
      %p317 = por %p315, %p316
      %p319 = scmp.ne.s32.totalorder %s304, %s318
      %p320 = scmp.eq.s32.totalorder %s42, 0
      %p321 = por %p319, %p320
      %s323 = sadd.s32 %s322, 1
      %p326 = scmp.eq.s32.totalorder %s36, 1
      %p327 = scmp.ne.s32.totalorder %s322, %s324
      %p328 = scmp.eq.s32.totalorder %s36, 0
      %p329 = por %p327, %p328
      %p330 = scmp.ne.s32.totalorder %s322, %s324
      %p331 = scmp.eq.s32.totalorder %s41, 1
      %p332 = por %p330, %p331
      %p333 = scmp.ne.s32.totalorder %s324, %s325
      %p334 = scmp.eq.s32.totalorder %s41, 0
      %p335 = por %p333, %p334
      %p336 = scmp.ne.s32.totalorder %s324, %s325
      %p337 = scmp.eq.s32.totalorder %s42, 1
      %p338 = por %p336, %p337
      %p340 = scmp.ne.s32.totalorder %s325, %s339
      %p341 = scmp.eq.s32.totalorder %s42, 0
      %p342 = por %p340, %p341
      %s344 = sadd.s32 %s343, 1
      %p347 = scmp.eq.s32.totalorder %s36, 1
      %p348 = scmp.ne.s32.totalorder %s343, %s345
      %p349 = scmp.eq.s32.totalorder %s36, 0
      %p350 = por %p348, %p349
      %p351 = scmp.ne.s32.totalorder %s343, %s345
      %p352 = scmp.eq.s32.totalorder %s41, 1
      %p353 = por %p351, %p352
      %p354 = scmp.ne.s32.totalorder %s345, %s346
      %p355 = scmp.eq.s32.totalorder %s41, 0
      %p356 = por %p354, %p355
      %p357 = scmp.ne.s32.totalorder %s345, %s346
      %p358 = scmp.eq.s32.totalorder %s42, 1
      %p359 = por %p357, %p358
      %p361 = scmp.ne.s32.totalorder %s346, %s360
      %p362 = scmp.eq.s32.totalorder %s42, 0
      %p363 = por %p361, %p362
      %s365 = sadd.s32 %s364, 1
      %p368 = scmp.eq.s32.totalorder %s36, 1
      %p369 = scmp.ne.s32.totalorder %s364, %s366
      %p370 = scmp.eq.s32.totalorder %s36, 0
      %p371 = por %p369, %p370
      %p372 = scmp.ne.s32.totalorder %s364, %s366
      %p373 = scmp.eq.s32.totalorder %s41, 1
      %p374 = por %p372, %p373
      %p375 = scmp.ne.s32.totalorder %s366, %s367
      %p376 = scmp.eq.s32.totalorder %s41, 0
      %p377 = por %p375, %p376
      %p378 = scmp.ne.s32.totalorder %s366, %s367
      %p379 = scmp.eq.s32.totalorder %s42, 1
      %p380 = por %p378, %p379
      %p382 = scmp.ne.s32.totalorder %s367, %s381
      %p383 = scmp.eq.s32.totalorder %s42, 0
      %p384 = por %p382, %p383
      %s386 = sadd.s32 %s385, 1
      %p389 = scmp.eq.s32.totalorder %s36, 1
      %p390 = scmp.ne.s32.totalorder %s385, %s387
      %p391 = scmp.eq.s32.totalorder %s36, 0
      %p392 = por %p390, %p391
      %p393 = scmp.ne.s32.totalorder %s385, %s387
      %p394 = scmp.eq.s32.totalorder %s41, 1
      %p395 = por %p393, %p394
      %p396 = scmp.ne.s32.totalorder %s387, %s388
      %p397 = scmp.eq.s32.totalorder %s41, 0
      %p398 = por %p396, %p397
      %p399 = scmp.ne.s32.totalorder %s387, %s388
      %p400 = scmp.eq.s32.totalorder %s42, 1
      %p401 = por %p399, %p400
      %p403 = scmp.ne.s32.totalorder %s388, %s402
      %p404 = scmp.eq.s32.totalorder %s42, 0
      %p405 = por %p403, %p404
      %s407 = sadd.s32 %s406, 1
      %p410 = scmp.eq.s32.totalorder %s36, 1
      %p411 = scmp.ne.s32.totalorder %s406, %s408
      %p412 = scmp.eq.s32.totalorder %s36, 0
      %p413 = por %p411, %p412
      %p414 = scmp.ne.s32.totalorder %s406, %s408
      %p415 = scmp.eq.s32.totalorder %s41, 1
      %p416 = por %p414, %p415
      %p417 = scmp.ne.s32.totalorder %s408, %s409
      %p418 = scmp.eq.s32.totalorder %s41, 0
      %p419 = por %p417, %p418
      %p420 = scmp.ne.s32.totalorder %s408, %s409
      %p421 = scmp.eq.s32.totalorder %s42, 1
      %p422 = por %p420, %p421
      %p424 = scmp.ne.s32.totalorder %s409, %s423
      %p425 = scmp.eq.s32.totalorder %s42, 0
      %p426 = por %p424, %p425
      %s428 = sadd.s32 %s427, 1
      %p431 = scmp.eq.s32.totalorder %s36, 1
      %p432 = scmp.ne.s32.totalorder %s427, %s429
      %p433 = scmp.eq.s32.totalorder %s36, 0
      %p434 = por %p432, %p433
      %p435 = scmp.ne.s32.totalorder %s427, %s429
      %p436 = scmp.eq.s32.totalorder %s41, 1
      %p437 = por %p435, %p436
      %p438 = scmp.ne.s32.totalorder %s429, %s430
      %p439 = scmp.eq.s32.totalorder %s41, 0
      %p440 = por %p438, %p439
      %p441 = scmp.ne.s32.totalorder %s429, %s430
      %p442 = scmp.eq.s32.totalorder %s42, 1
      %p443 = por %p441, %p442
      %p445 = scmp.ne.s32.totalorder %s430, %s444
      %p446 = scmp.eq.s32.totalorder %s42, 0
      %p447 = por %p445, %p446
      %s449 = sadd.s32 %s448, 1
      %p452 = scmp.eq.s32.totalorder %s36, 1
      %p453 = scmp.ne.s32.totalorder %s448, %s450
      %p454 = scmp.eq.s32.totalorder %s36, 0
      %p455 = por %p453, %p454
      %p456 = scmp.ne.s32.totalorder %s448, %s450
      %p457 = scmp.eq.s32.totalorder %s41, 1
      %p458 = por %p456, %p457
      %p459 = scmp.ne.s32.totalorder %s450, %s451
      %p460 = scmp.eq.s32.totalorder %s41, 0
      %p461 = por %p459, %p460
      %p462 = scmp.ne.s32.totalorder %s450, %s451
      %p463 = scmp.eq.s32.totalorder %s42, 1
      %p464 = por %p462, %p463
      %p466 = scmp.ne.s32.totalorder %s451, %s465
      %p467 = scmp.eq.s32.totalorder %s42, 0
      %p468 = por %p466, %p467
      %s470 = sadd.s32 %s469, 1
      %p473 = scmp.eq.s32.totalorder %s36, 1
      %p474 = scmp.ne.s32.totalorder %s469, %s471
      %p475 = scmp.eq.s32.totalorder %s36, 0
      %p476 = por %p474, %p475
      %p477 = scmp.ne.s32.totalorder %s469, %s471
      %p478 = scmp.eq.s32.totalorder %s41, 1
      %p479 = por %p477, %p478
      %p480 = scmp.ne.s32.totalorder %s471, %s472
      %p481 = scmp.eq.s32.totalorder %s41, 0
      %p482 = por %p480, %p481
      %p483 = scmp.ne.s32.totalorder %s471, %s472
      %p484 = scmp.eq.s32.totalorder %s42, 1
      %p485 = por %p483, %p484
      %p487 = scmp.ne.s32.totalorder %s472, %s486
      %p488 = scmp.eq.s32.totalorder %s42, 0
      %p489 = por %p487, %p488
      %s491 = sadd.s32 %s490, 1
      %p494 = scmp.eq.s32.totalorder %s36, 1
      %p495 = scmp.ne.s32.totalorder %s490, %s492
      %p496 = scmp.eq.s32.totalorder %s36, 0
      %p497 = por %p495, %p496
      %p498 = scmp.ne.s32.totalorder %s490, %s492
      %p499 = scmp.eq.s32.totalorder %s41, 1
      %p500 = por %p498, %p499
      %p501 = scmp.ne.s32.totalorder %s492, %s493
      %p502 = scmp.eq.s32.totalorder %s41, 0
      %p503 = por %p501, %p502
      %p504 = scmp.ne.s32.totalorder %s492, %s493
      %p505 = scmp.eq.s32.totalorder %s42, 1
      %p506 = por %p504, %p505
      %p508 = scmp.ne.s32.totalorder %s493, %s507
      %p509 = scmp.eq.s32.totalorder %s42, 0
      %p510 = por %p508, %p509
      %s512 = sadd.s32 %s511, 1
      %p515 = scmp.eq.s32.totalorder %s36, 1
      %p516 = scmp.ne.s32.totalorder %s511, %s513
      %p517 = scmp.eq.s32.totalorder %s36, 0
      %p518 = por %p516, %p517
      %p519 = scmp.ne.s32.totalorder %s511, %s513
      %p520 = scmp.eq.s32.totalorder %s41, 1
      %p521 = por %p519, %p520
      %p522 = scmp.ne.s32.totalorder %s513, %s514
      %p523 = scmp.eq.s32.totalorder %s41, 0
      %p524 = por %p522, %p523
      %p525 = scmp.ne.s32.totalorder %s513, %s514
      %p526 = scmp.eq.s32.totalorder %s42, 1
      %p527 = por %p525, %p526
      %p529 = scmp.ne.s32.totalorder %s514, %s528
      %p530 = scmp.eq.s32.totalorder %s42, 0
      %p531 = por %p529, %p530
      %s532 = ssub.s32 %s36, %s43
      %p533 = scmp.eq.s32.totalorder %s532, 0
      %s535 = sadd.s32 %s534, 1
      %s536 = scalar_select %p533, %s534, %s535
      %p539 = pneg %p533
      %p540 = scmp.eq.s32.totalorder %s36, 1
      %p541 = por %p539, %p540
      %p542 = scmp.ne.s32.totalorder %s534, %s537
      %p543 = scmp.eq.s32.totalorder %s36, 0
      %p544 = por %p542, %p543
      %p545 = scmp.ne.s32.totalorder %s534, %s537
      %p546 = scmp.eq.s32.totalorder %s41, 1
      %p547 = por %p545, %p546
      %p548 = scmp.ne.s32.totalorder %s537, %s538
      %p549 = scmp.eq.s32.totalorder %s41, 0
      %p550 = por %p548, %p549
      %p551 = scmp.ne.s32.totalorder %s537, %s538
      %p552 = scmp.eq.s32.totalorder %s42, 1
      %p553 = por %p551, %p552
      %p555 = scmp.ne.s32.totalorder %s538, %s554
      %p556 = scmp.eq.s32.totalorder %s42, 0
      %p557 = por %p555, %p556
      %p558 = scmp.le.s32.totalorder 1, %s36
      %p559 = scmp.lt.s32.totalorder %s36, 3
      %p560 = pnand %p558, %p559
      %p561 = pneg %p560
      // Predicated region
      $region9: #{deepconvnet_forward.1} parent=5 // pred_check
        _
      $region10: #{deepconvnet_forward.1} parent=5 // pred_check_branch
        %563 = sbr.rel (%p560) target = $region12
      $region11: #{deepconvnet_forward.1} parent=5 // pred_region
        %s564 = ssub.s32 %s36, 1
        // Predicated region
        $region13: #{deepconvnet_forward.1} parent=11 // pred_check
          %p565 = pneg %p83
        $region14: #{deepconvnet_forward.1} parent=11 // pred_check_branch
          %567 = sbr.rel (%p565) target = $region16
        $region15: #{deepconvnet_forward.1} parent=11 // pred_region
          _
        $region16: #{deepconvnet_forward.1} parent=11 // pred_fallthru
          _
        // Predicated region
        $region17: #{deepconvnet_forward.1} parent=11 // pred_check
          %p568 = pneg %p104
        $region18: #{deepconvnet_forward.1} parent=11 // pred_check_branch
          %570 = sbr.rel (%p568) target = $region20
        $region19: #{deepconvnet_forward.1} parent=11 // pred_region
          _
        $region20: #{deepconvnet_forward.1} parent=11 // pred_fallthru
          _
        // Predicated region
        $region21: #{deepconvnet_forward.1} parent=11 // pred_check
          %p571 = pneg %p125
        $region22: #{deepconvnet_forward.1} parent=11 // pred_check_branch
          %573 = sbr.rel (%p571) target = $region24
        $region23: #{deepconvnet_forward.1} parent=11 // pred_region
          _
        $region24: #{deepconvnet_forward.1} parent=11 // pred_fallthru
          _
        // Predicated region
        $region25: #{deepconvnet_forward.1} parent=11 // pred_check
          %p574 = pneg %p146
        $region26: #{deepconvnet_forward.1} parent=11 // pred_check_branch
          %576 = sbr.rel (%p574) target = $region28
        $region27: #{deepconvnet_forward.1} parent=11 // pred_region
          %s578 = ssub.s32 36096, 36096
          %579 = vsyncadd [#allocation6], %s578
          %s580 = sshll.u32 [#allocation5], 4
          %s581 = int_to_ptr.vmem [resolvable:$true] %s580
          %586 = dma.hbm_to_vmem [thread:$0]  %s4, 36096, %s581, [#allocation6], 384, 384, 24
        $region28: #{deepconvnet_forward.1} parent=11 // pred_fallthru
          _
        // Predicated region
        $region29: #{deepconvnet_forward.1} parent=11 // pred_check
          %p587 = pneg %p167
        $region30: #{deepconvnet_forward.1} parent=11 // pred_check_branch
          %589 = sbr.rel (%p587) target = $region32
        $region31: #{deepconvnet_forward.1} parent=11 // pred_region
          %s591 = ssub.s32 896, 896
          %592 = vsyncadd [#allocation6], %s591
          %s593 = sshll.u32 [#allocation7], 4
          %s594 = int_to_ptr.vmem [resolvable:$true] %s593
          %599 = dma.hbm_to_vmem [thread:$0]  %s5, 896, %s594, [#allocation6], 128, 128, 8
        $region32: #{deepconvnet_forward.1} parent=11 // pred_fallthru
          _
        // Predicated region
        $region33: #{deepconvnet_forward.1} parent=11 // pred_check
          %p600 = pneg %p188
        $region34: #{deepconvnet_forward.1} parent=11 // pred_check_branch
          %602 = sbr.rel (%p600) target = $region36
        $region35: #{deepconvnet_forward.1} parent=11 // pred_region
          _
        $region36: #{deepconvnet_forward.1} parent=11 // pred_fallthru
          _
        // Predicated region
        $region37: #{deepconvnet_forward.1} parent=11 // pred_check
          %p603 = pneg %p209
        $region38: #{deepconvnet_forward.1} parent=11 // pred_check_branch
          %605 = sbr.rel (%p603) target = $region40
        $region39: #{deepconvnet_forward.1} parent=11 // pred_region
          _
        $region40: #{deepconvnet_forward.1} parent=11 // pred_fallthru
          _
        // Predicated region
        $region41: #{deepconvnet_forward.1} parent=11 // pred_check
          %p606 = pneg %p230
        $region42: #{deepconvnet_forward.1} parent=11 // pred_check_branch
          %608 = sbr.rel (%p606) target = $region44
        $region43: #{deepconvnet_forward.1} parent=11 // pred_region
          _
        $region44: #{deepconvnet_forward.1} parent=11 // pred_fallthru
          _
        // Predicated region
        $region45: #{deepconvnet_forward.1} parent=11 // pred_check
          %p609 = pneg %p251
        $region46: #{deepconvnet_forward.1} parent=11 // pred_check_branch
          %611 = sbr.rel (%p609) target = $region48
        $region47: #{deepconvnet_forward.1} parent=11 // pred_region
          _
        $region48: #{deepconvnet_forward.1} parent=11 // pred_fallthru
          _
        // Predicated region
        $region49: #{deepconvnet_forward.1} parent=11 // pred_check
          %p612 = pneg %p272
        $region50: #{deepconvnet_forward.1} parent=11 // pred_check_branch
          %614 = sbr.rel (%p612) target = $region52
        $region51: #{deepconvnet_forward.1} parent=11 // pred_region
          _
        $region52: #{deepconvnet_forward.1} parent=11 // pred_fallthru
          _
        // Predicated region
        $region53: #{deepconvnet_forward.1} parent=11 // pred_check
          %p615 = pneg %p293
        $region54: #{deepconvnet_forward.1} parent=11 // pred_check_branch
          %617 = sbr.rel (%p615) target = $region56
        $region55: #{deepconvnet_forward.1} parent=11 // pred_region
          _
        $region56: #{deepconvnet_forward.1} parent=11 // pred_fallthru
          _
        // Predicated region
        $region57: #{deepconvnet_forward.1} parent=11 // pred_check
          %p618 = pneg %p314
        $region58: #{deepconvnet_forward.1} parent=11 // pred_check_branch
          %620 = sbr.rel (%p618) target = $region60
        $region59: #{deepconvnet_forward.1} parent=11 // pred_region
          _
        $region60: #{deepconvnet_forward.1} parent=11 // pred_fallthru
          _
        // Predicated region
        $region61: #{deepconvnet_forward.1} parent=11 // pred_check
          %p621 = pneg %p335
        $region62: #{deepconvnet_forward.1} parent=11 // pred_check_branch
          %623 = sbr.rel (%p621) target = $region64
        $region63: #{deepconvnet_forward.1} parent=11 // pred_region
          _
        $region64: #{deepconvnet_forward.1} parent=11 // pred_fallthru
          _
        // Predicated region
        $region65: #{deepconvnet_forward.1} parent=11 // pred_check
          %p624 = pneg %p356
        $region66: #{deepconvnet_forward.1} parent=11 // pred_check_branch
          %626 = sbr.rel (%p624) target = $region68
        $region67: #{deepconvnet_forward.1} parent=11 // pred_region
          _
        $region68: #{deepconvnet_forward.1} parent=11 // pred_fallthru
          _
        // Predicated region
        $region69: #{deepconvnet_forward.1} parent=11 // pred_check
          %p627 = pneg %p377
        $region70: #{deepconvnet_forward.1} parent=11 // pred_check_branch
          %629 = sbr.rel (%p627) target = $region72
        $region71: #{deepconvnet_forward.1} parent=11 // pred_region
          _
        $region72: #{deepconvnet_forward.1} parent=11 // pred_fallthru
          _
        // Predicated region
        $region73: #{deepconvnet_forward.1} parent=11 // pred_check
          %p630 = pneg %p398
        $region74: #{deepconvnet_forward.1} parent=11 // pred_check_branch
          %632 = sbr.rel (%p630) target = $region76
        $region75: #{deepconvnet_forward.1} parent=11 // pred_region
          _
        $region76: #{deepconvnet_forward.1} parent=11 // pred_fallthru
          _
        // Predicated region
        $region77: #{deepconvnet_forward.1} parent=11 // pred_check
          %p633 = pneg %p419
        $region78: #{deepconvnet_forward.1} parent=11 // pred_check_branch
          %635 = sbr.rel (%p633) target = $region80
        $region79: #{deepconvnet_forward.1} parent=11 // pred_region
          _
        $region80: #{deepconvnet_forward.1} parent=11 // pred_fallthru
          _
        // Predicated region
        $region81: #{deepconvnet_forward.1} parent=11 // pred_check
          %p636 = pneg %p440
        $region82: #{deepconvnet_forward.1} parent=11 // pred_check_branch
          %638 = sbr.rel (%p636) target = $region84
        $region83: #{deepconvnet_forward.1} parent=11 // pred_region
          _
        $region84: #{deepconvnet_forward.1} parent=11 // pred_fallthru
          _
        // Predicated region
        $region85: #{deepconvnet_forward.1} parent=11 // pred_check
          %p639 = pneg %p461
        $region86: #{deepconvnet_forward.1} parent=11 // pred_check_branch
          %641 = sbr.rel (%p639) target = $region88
        $region87: #{deepconvnet_forward.1} parent=11 // pred_region
          _
        $region88: #{deepconvnet_forward.1} parent=11 // pred_fallthru
          _
        // Predicated region
        $region89: #{deepconvnet_forward.1} parent=11 // pred_check
          %p642 = pneg %p482
        $region90: #{deepconvnet_forward.1} parent=11 // pred_check_branch
          %644 = sbr.rel (%p642) target = $region92
        $region91: #{deepconvnet_forward.1} parent=11 // pred_region
          _
        $region92: #{deepconvnet_forward.1} parent=11 // pred_fallthru
          _
        // Predicated region
        $region93: #{deepconvnet_forward.1} parent=11 // pred_check
          %p645 = pneg %p503
        $region94: #{deepconvnet_forward.1} parent=11 // pred_check_branch
          %647 = sbr.rel (%p645) target = $region96
        $region95: #{deepconvnet_forward.1} parent=11 // pred_region
          _
        $region96: #{deepconvnet_forward.1} parent=11 // pred_fallthru
          _
        // Predicated region
        $region97: #{deepconvnet_forward.1} parent=11 // pred_check
          %p648 = pneg %p524
        $region98: #{deepconvnet_forward.1} parent=11 // pred_check_branch
          %650 = sbr.rel (%p648) target = $region100
        $region99: #{deepconvnet_forward.1} parent=11 // pred_region
          _
        $region100: #{deepconvnet_forward.1} parent=11 // pred_fallthru
          _
      $region12: #{deepconvnet_forward.1} parent=5 // pred_fallthru
        _
      %p651 = scmp.lt.s32.totalorder %s36, 2
      // Predicated region
      $region101: #{deepconvnet_forward.1} parent=5 // pred_check
        %p652 = pneg %p651
      $region102: #{deepconvnet_forward.1} parent=5 // pred_check_branch
        %654 = sbr.rel (%p652) target = $region104
      $region103: #{deepconvnet_forward.1} parent=5 // pred_region
        // Predicated region
        $region105: #{deepconvnet_forward.1} parent=103 // pred_check
          %p655 = pneg %p56
        $region106: #{deepconvnet_forward.1} parent=103 // pred_check_branch
          %657 = sbr.rel (%p655) target = $region108
        $region107: #{deepconvnet_forward.1} parent=103 // pred_region
          %s658 = sand.u32 %s46, 1
          %s659 = scalar_lea.sflag [#allocation3], %s658
          %s660 = sand.u32 %s46, 1
          %s661 = smul.addr %s660, 12
          %s662 = scalar_lea.vmem [#allocation2], %s661
          %s664 = ssub.s32 192, 192
          %665 = vsyncadd %s659, %s664
          %s666 = smul.addr %s36, 6
          %s667 = smul.addr %s666, 32
          %s668 = scalar_lea.hbm %s0, %s667
          %s670 = sshll.u32 %s662, 4
          %s671 = int_to_ptr.vmem [resolvable:$true] %s670
          %673 = dma.hbm_to_vmem [thread:$0]  %s668, 192, %s671, %s659
        $region108: #{deepconvnet_forward.1} parent=103 // pred_fallthru
          _
      $region104: #{deepconvnet_forward.1} parent=5 // pred_fallthru
        _
      %p674 = scmp.le.s32.totalorder 1, %s36
      %p675 = scmp.lt.s32.totalorder %s36, 3
      %p676 = pnand %p674, %p675
      %p677 = pneg %p676
      // Predicated region
      $region109: #{deepconvnet_forward.1} parent=5 // pred_check
        _
      $region110: #{deepconvnet_forward.1} parent=5 // pred_check_branch
        %679 = sbr.rel (%p676) target = $region112
      $region111: #{deepconvnet_forward.1} parent=5 // pred_region
        %s680 = ssub.s32 %s36, 1
        %s681 = sand.u32 %s49, 1
        %s682 = scalar_lea.sflag [#allocation3], %s681
        %s683 = sand.u32 %s49, 1
        %s684 = smul.addr %s683, 12
        %s685 = scalar_lea.vmem [#allocation2], %s684
        // Predicated region
        $region113: #{deepconvnet_forward.1} parent=111 // pred_check
          %p686 = pneg %p62
        $region114: #{deepconvnet_forward.1} parent=111 // pred_check_branch
          %688 = sbr.rel (%p686) target = $region116
        $region115: #{deepconvnet_forward.1} parent=111 // pred_region
          %689 = dma.done %s682, 192
        $region116: #{deepconvnet_forward.1} parent=111 // pred_fallthru
          _
        // Predicated region
        $region117: #{deepconvnet_forward.1} parent=111 // pred_check
          %p690 = pneg %p146
        $region118: #{deepconvnet_forward.1} parent=111 // pred_check_branch
          %692 = sbr.rel (%p690) target = $region120
        $region119: #{deepconvnet_forward.1} parent=111 // pred_region
          %693 = dma.done [#allocation6], 36096
        $region120: #{deepconvnet_forward.1} parent=111 // pred_fallthru
          _
        // Predicated region
        $region121: #{deepconvnet_forward.1} parent=111 // pred_check
          %p694 = pneg %p167
        $region122: #{deepconvnet_forward.1} parent=111 // pred_check_branch
          %696 = sbr.rel (%p694) target = $region124
        $region123: #{deepconvnet_forward.1} parent=111 // pred_region
          %697 = dma.done [#allocation6], 896
        $region124: #{deepconvnet_forward.1} parent=111 // pred_fallthru
          _
        %s698 = sand.u32 %s49, 1
        %s699 = scalar_lea.sflag [#allocation3], %s698
        %s700 = sand.u32 %s49, 1
        %s701 = smul.addr %s700, 12
        %s702 = scalar_lea.vmem [#allocation2], %s701
        %p703 = pneg %p62
        %p704 = pneg %p59
        %p705 = pneg %p83
        %p706 = pneg %p80
        %p707 = pneg %p104
        %p708 = pneg %p101
        %p709 = pneg %p125
        %p710 = pneg %p122
        %p711 = pneg %p146
        %p712 = pneg %p143
        %p713 = pneg %p167
        %p714 = pneg %p164
        %p715 = pneg %p188
        %p716 = pneg %p185
        %p717 = pneg %p209
        %p718 = pneg %p206
        %p719 = pneg %p230
        %p720 = pneg %p227
        %p721 = pneg %p251
        %p722 = pneg %p248
        %p723 = pneg %p272
        %p724 = pneg %p269
        %p725 = pneg %p293
        %p726 = pneg %p290
        %p727 = pneg %p314
        %p728 = pneg %p311
        %p729 = pneg %p335
        %p730 = pneg %p332
        %p731 = pneg %p356
        %p732 = pneg %p353
        %p733 = pneg %p377
        %p734 = pneg %p374
        %p735 = pneg %p398
        %p736 = pneg %p395
        %p737 = pneg %p419
        %p738 = pneg %p416
        %p739 = pneg %p440
        %p740 = pneg %p437
        %p741 = pneg %p461
        %p742 = pneg %p458
        %p743 = pneg %p482
        %p744 = pneg %p479
        %p745 = pneg %p503
        %p746 = pneg %p500
        %p747 = pneg %p524
        %p748 = pneg %p521
        %p749 = pneg %p550
        %p750 = pneg %p547
        %s751 = sand.u32 %s537, 1
        %s752 = scalar_lea.sflag [#allocation4], %s751
        %s753 = sand.u32 %s537, 1
        %s754 = scalar_lea.vmem [#allocation8], %s753
        %v755 = vld [vmem:[%s685] sm:$0xff]
        %v756 = vld [vmem:[%s685 + $0x8] sm:$0xf]
        %v757 = vld [vmem:[%s1] sm:$0xff]
        %v758 = vld [vmem:[%s1 + $0x8] sm:$0xff]
        %v759 = vld [vmem:[%s1 + $0x10] sm:$0xff]
        %v760 = vld [vmem:[%s1 + $0x18] sm:$0x1]
        %762 = vset.pattern.permute.xlu0 0
        %763 = vperm.xlu0 %762, %v757
        %v764 = vpop.permute.xlu0 %763
        %767 = vset.pattern.permute.xlu0 0
        %768 = vperm.xlu0 %767, %v758
        %v769 = vpop.permute.xlu0 %768
        %772 = vset.pattern.permute.xlu0 0
        %773 = vperm.xlu0 %772, %v759
        %v774 = vpop.permute.xlu0 %773
        %777 = vset.pattern.permute.xlu0 0
        %778 = vperm.xlu0 %777, %v760
        %v779 = vpop.permute.xlu0 %778
        %v783 = vlaneseq
        %v784 = vshrl.u32 %v783, 7
        %v785 = vsub.s32 0, %v784
        %v786 = vrot.slane %v755, %v785
        %v787 = vlaneseq
        %v788 = vshrl.u32 %v787, 7
        %v789 = vsub.s32 2, %v788
        %v790 = vrot.slane %v755, %v789
        %v791 = vlaneseq
        %v792 = vshrl.u32 %v791, 7
        %v793 = vsub.s32 4, %v792
        %v794 = vrot.slane %v755, %v793
        %v795 = vlaneseq
        %v796 = vshrl.u32 %v795, 7
        %v797 = vsub.s32 6, %v796
        %v798 = vrot.slane %v755, %v797
        %v799 = vlaneseq
        %v800 = vshrl.u32 %v799, 7
        %v801 = vsub.s32 0, %v800
        %v802 = vrot.slane %v756, %v801
        %v803 = vlaneseq
        %v804 = vshrl.u32 %v803, 7
        %v805 = vsub.s32 2, %v804
        %v806 = vrot.slane %v756, %v805
        %v813 = vlaneseq
        %v814 = vshrl.u32 %v813, 7
        %v815 = vsub.s32 0, %v814
        %v816 = vrot.slane %v786, %v815
        %v817 = vlaneseq
        %v818 = vshrl.u32 %v817, 7
        %v819 = vsub.s32 0, %v818
        %v820 = vrot.slane %v790, %v819
        %v821 = vlaneseq
        %v822 = vshrl.u32 %v821, 7
        %v823 = vsub.s32 0, %v822
        %v824 = vrot.slane %v794, %v823
        %v825 = vlaneseq
        %v826 = vshrl.u32 %v825, 7
        %v827 = vsub.s32 0, %v826
        %v828 = vrot.slane %v798, %v827
        %v829 = vlaneseq
        %v830 = vshrl.u32 %v829, 7
        %v831 = vsub.s32 0, %v830
        %v832 = vrot.slane %v802, %v831
        %v833 = vlaneseq
        %v834 = vshrl.u32 %v833, 7
        %v835 = vsub.s32 0, %v834
        %v836 = vrot.slane %v806, %v835
        %v837 = vmul.f32 %v764, %v816
        %v838 = vmul.f32 %v764, %v820
        %v839 = vmul.f32 %v764, %v824
        %v840 = vmul.f32 %v764, %v828
        %v841 = vmul.f32 %v764, %v832
        %v842 = vmul.f32 %v764, %v836
        %v843 = vmul.f32 %v769, %v816
        %v844 = vmul.f32 %v769, %v820
        %v845 = vmul.f32 %v769, %v824
        %v846 = vmul.f32 %v769, %v828
        %v847 = vmul.f32 %v769, %v832
        %v848 = vmul.f32 %v769, %v836
        %v849 = vmul.f32 %v774, %v816
        %v850 = vmul.f32 %v774, %v820
        %v851 = vmul.f32 %v774, %v824
        %v852 = vmul.f32 %v774, %v828
        %v853 = vmul.f32 %v774, %v832
        %v854 = vmul.f32 %v774, %v836
        %v855 = vmul.f32 %v779, %v816
        %v856 = vmul.f32 %v779, %v820
        %v857 = vmul.f32 %v779, %v824
        %v858 = vmul.f32 %v779, %v828
        %v859 = vmul.f32 %v779, %v832
        %v860 = vmul.f32 %v779, %v836
        %861 = vset.pattern.permute.xlu0 1
        %862 = vperm.xlu0 %861, %v757
        %v863 = vpop.permute.xlu0 %862
        %865 = vset.pattern.permute.xlu0 1
        %866 = vperm.xlu0 %865, %v758
        %v867 = vpop.permute.xlu0 %866
        %869 = vset.pattern.permute.xlu0 1
        %870 = vperm.xlu0 %869, %v759
        %v871 = vpop.permute.xlu0 %870
        %873 = vset.pattern.permute.xlu0 1
        %874 = vperm.xlu0 %873, %v760
        %v875 = vpop.permute.xlu0 %874
        %v877 = vmul.f32 %v863, %v816
        %v878 = vmul.f32 %v863, %v820
        %v879 = vmul.f32 %v863, %v824
        %v880 = vmul.f32 %v863, %v828
        %v881 = vmul.f32 %v863, %v832
        %v882 = vmul.f32 %v863, %v836
        %v883 = vmul.f32 %v867, %v816
        %v884 = vmul.f32 %v867, %v820
        %v885 = vmul.f32 %v867, %v824
        %v886 = vmul.f32 %v867, %v828
        %v887 = vmul.f32 %v867, %v832
        %v888 = vmul.f32 %v867, %v836
        %v889 = vmul.f32 %v871, %v816
        %v890 = vmul.f32 %v871, %v820
        %v891 = vmul.f32 %v871, %v824
        %v892 = vmul.f32 %v871, %v828
        %v893 = vmul.f32 %v871, %v832
        %v894 = vmul.f32 %v871, %v836
        %v895 = vmul.f32 %v875, %v816
        %v896 = vmul.f32 %v875, %v820
        %v897 = vmul.f32 %v875, %v824
        %v898 = vmul.f32 %v875, %v828
        %v899 = vmul.f32 %v875, %v832
        %v900 = vmul.f32 %v875, %v836
        %925 = vrot.lane.b32.xlu0 %v877, 127
        %v926 = vpop.permute.xlu0 %925
        %927 = vrot.lane.b32.xlu0 %v878, 127
        %v928 = vpop.permute.xlu0 %927
        %929 = vrot.lane.b32.xlu0 %v879, 127
        %v930 = vpop.permute.xlu0 %929
        %931 = vrot.lane.b32.xlu0 %v880, 127
        %v932 = vpop.permute.xlu0 %931
        %933 = vrot.lane.b32.xlu0 %v881, 127
        %v934 = vpop.permute.xlu0 %933
        %935 = vrot.lane.b32.xlu0 %v882, 127
        %v936 = vpop.permute.xlu0 %935
        %937 = vrot.lane.b32.xlu0 %v883, 127
        %v938 = vpop.permute.xlu0 %937
        %939 = vrot.lane.b32.xlu0 %v884, 127
        %v940 = vpop.permute.xlu0 %939
        %941 = vrot.lane.b32.xlu0 %v885, 127
        %v942 = vpop.permute.xlu0 %941
        %943 = vrot.lane.b32.xlu0 %v886, 127
        %v944 = vpop.permute.xlu0 %943
        %945 = vrot.lane.b32.xlu0 %v887, 127
        %v946 = vpop.permute.xlu0 %945
        %947 = vrot.lane.b32.xlu0 %v888, 127
        %v948 = vpop.permute.xlu0 %947
        %949 = vrot.lane.b32.xlu0 %v889, 127
        %v950 = vpop.permute.xlu0 %949
        %951 = vrot.lane.b32.xlu0 %v890, 127
        %v952 = vpop.permute.xlu0 %951
        %953 = vrot.lane.b32.xlu0 %v891, 127
        %v954 = vpop.permute.xlu0 %953
        %955 = vrot.lane.b32.xlu0 %v892, 127
        %v956 = vpop.permute.xlu0 %955
        %957 = vrot.lane.b32.xlu0 %v893, 127
        %v958 = vpop.permute.xlu0 %957
        %959 = vrot.lane.b32.xlu0 %v894, 127
        %v960 = vpop.permute.xlu0 %959
        %961 = vrot.lane.b32.xlu0 %v895, 127
        %v962 = vpop.permute.xlu0 %961
        %963 = vrot.lane.b32.xlu0 %v896, 127
        %v964 = vpop.permute.xlu0 %963
        %965 = vrot.lane.b32.xlu0 %v897, 127
        %v966 = vpop.permute.xlu0 %965
        %967 = vrot.lane.b32.xlu0 %v898, 127
        %v968 = vpop.permute.xlu0 %967
        %969 = vrot.lane.b32.xlu0 %v899, 127
        %v970 = vpop.permute.xlu0 %969
        %971 = vrot.lane.b32.xlu0 %v900, 127
        %v972 = vpop.permute.xlu0 %971
        %vm973 = vcmask 1039360
        %v974 = vsel %vm973, %v926, %v928
        %v975 = vsel %vm973, %v928, %v930
        %v976 = vsel %vm973, %v930, %v932
        %v977 = vsel %vm973, %v932, %v934
        %v978 = vsel %vm973, %v934, %v936
        %v979 = vsel %vm973, %v938, %v940
        %v980 = vsel %vm973, %v940, %v942
        %v981 = vsel %vm973, %v942, %v944
        %v982 = vsel %vm973, %v944, %v946
        %v983 = vsel %vm973, %v946, %v948
        %v984 = vsel %vm973, %v950, %v952
        %v985 = vsel %vm973, %v952, %v954
        %v986 = vsel %vm973, %v954, %v956
        %v987 = vsel %vm973, %v956, %v958
        %v988 = vsel %vm973, %v958, %v960
        %v989 = vsel %vm973, %v962, %v964
        %v990 = vsel %vm973, %v964, %v966
        %v991 = vsel %vm973, %v966, %v968
        %v992 = vsel %vm973, %v968, %v970
        %v993 = vsel %vm973, %v970, %v972
        %v1018 = vadd.f32 %v837, %v974
        %v1019 = vadd.f32 %v838, %v975
        %v1020 = vadd.f32 %v839, %v976
        %v1021 = vadd.f32 %v840, %v977
        %v1022 = vadd.f32 %v841, %v978
        %v1023 = vadd.f32 %v842, %v936
        %v1024 = vadd.f32 %v843, %v979
        %v1025 = vadd.f32 %v844, %v980
        %v1026 = vadd.f32 %v845, %v981
        %v1027 = vadd.f32 %v846, %v982
        %v1028 = vadd.f32 %v847, %v983
        %v1029 = vadd.f32 %v848, %v948
        %v1030 = vadd.f32 %v849, %v984
        %v1031 = vadd.f32 %v850, %v985
        %v1032 = vadd.f32 %v851, %v986
        %v1033 = vadd.f32 %v852, %v987
        %v1034 = vadd.f32 %v853, %v988
        %v1035 = vadd.f32 %v854, %v960
        %v1036 = vadd.f32 %v855, %v989
        %v1037 = vadd.f32 %v856, %v990
        %v1038 = vadd.f32 %v857, %v991
        %v1039 = vadd.f32 %v858, %v992
        %v1040 = vadd.f32 %v859, %v993
        %v1041 = vadd.f32 %v860, %v972
        %1042 = vset.pattern.permute.xlu0 2
        %1043 = vperm.xlu0 %1042, %v757
        %v1044 = vpop.permute.xlu0 %1043
        %1046 = vset.pattern.permute.xlu0 2
        %1047 = vperm.xlu0 %1046, %v758
        %v1048 = vpop.permute.xlu0 %1047
        %1050 = vset.pattern.permute.xlu0 2
        %1051 = vperm.xlu0 %1050, %v759
        %v1052 = vpop.permute.xlu0 %1051
        %1054 = vset.pattern.permute.xlu0 2
        %1055 = vperm.xlu0 %1054, %v760
        %v1056 = vpop.permute.xlu0 %1055
        %v1058 = vmul.f32 %v1044, %v816
        %v1059 = vmul.f32 %v1044, %v820
        %v1060 = vmul.f32 %v1044, %v824
        %v1061 = vmul.f32 %v1044, %v828
        %v1062 = vmul.f32 %v1044, %v832
        %v1063 = vmul.f32 %v1044, %v836
        %v1064 = vmul.f32 %v1048, %v816
        %v1065 = vmul.f32 %v1048, %v820
        %v1066 = vmul.f32 %v1048, %v824
        %v1067 = vmul.f32 %v1048, %v828
        %v1068 = vmul.f32 %v1048, %v832
        %v1069 = vmul.f32 %v1048, %v836
        %v1070 = vmul.f32 %v1052, %v816
        %v1071 = vmul.f32 %v1052, %v820
        %v1072 = vmul.f32 %v1052, %v824
        %v1073 = vmul.f32 %v1052, %v828
        %v1074 = vmul.f32 %v1052, %v832
        %v1075 = vmul.f32 %v1052, %v836
        %v1076 = vmul.f32 %v1056, %v816
        %v1077 = vmul.f32 %v1056, %v820
        %v1078 = vmul.f32 %v1056, %v824
        %v1079 = vmul.f32 %v1056, %v828
        %v1080 = vmul.f32 %v1056, %v832
        %v1081 = vmul.f32 %v1056, %v836
        %1106 = vrot.lane.b32.xlu0 %v1058, 126
        %v1107 = vpop.permute.xlu0 %1106
        %1108 = vrot.lane.b32.xlu0 %v1059, 126
        %v1109 = vpop.permute.xlu0 %1108
        %1110 = vrot.lane.b32.xlu0 %v1060, 126
        %v1111 = vpop.permute.xlu0 %1110
        %1112 = vrot.lane.b32.xlu0 %v1061, 126
        %v1113 = vpop.permute.xlu0 %1112
        %1114 = vrot.lane.b32.xlu0 %v1062, 126
        %v1115 = vpop.permute.xlu0 %1114
        %1116 = vrot.lane.b32.xlu0 %v1063, 126
        %v1117 = vpop.permute.xlu0 %1116
        %1118 = vrot.lane.b32.xlu0 %v1064, 126
        %v1119 = vpop.permute.xlu0 %1118
        %1120 = vrot.lane.b32.xlu0 %v1065, 126
        %v1121 = vpop.permute.xlu0 %1120
        %1122 = vrot.lane.b32.xlu0 %v1066, 126
        %v1123 = vpop.permute.xlu0 %1122
        %1124 = vrot.lane.b32.xlu0 %v1067, 126
        %v1125 = vpop.permute.xlu0 %1124
        %1126 = vrot.lane.b32.xlu0 %v1068, 126
        %v1127 = vpop.permute.xlu0 %1126
        %1128 = vrot.lane.b32.xlu0 %v1069, 126
        %v1129 = vpop.permute.xlu0 %1128
        %1130 = vrot.lane.b32.xlu0 %v1070, 126
        %v1131 = vpop.permute.xlu0 %1130
        %1132 = vrot.lane.b32.xlu0 %v1071, 126
        %v1133 = vpop.permute.xlu0 %1132
        %1134 = vrot.lane.b32.xlu0 %v1072, 126
        %v1135 = vpop.permute.xlu0 %1134
        %1136 = vrot.lane.b32.xlu0 %v1073, 126
        %v1137 = vpop.permute.xlu0 %1136
        %1138 = vrot.lane.b32.xlu0 %v1074, 126
        %v1139 = vpop.permute.xlu0 %1138
        %1140 = vrot.lane.b32.xlu0 %v1075, 126
        %v1141 = vpop.permute.xlu0 %1140
        %1142 = vrot.lane.b32.xlu0 %v1076, 126
        %v1143 = vpop.permute.xlu0 %1142
        %1144 = vrot.lane.b32.xlu0 %v1077, 126
        %v1145 = vpop.permute.xlu0 %1144
        %1146 = vrot.lane.b32.xlu0 %v1078, 126
        %v1147 = vpop.permute.xlu0 %1146
        %1148 = vrot.lane.b32.xlu0 %v1079, 126
        %v1149 = vpop.permute.xlu0 %1148
        %1150 = vrot.lane.b32.xlu0 %v1080, 126
        %v1151 = vpop.permute.xlu0 %1150
        %1152 = vrot.lane.b32.xlu0 %v1081, 126
        %v1153 = vpop.permute.xlu0 %1152
        %vm1154 = vcmask 1031168
        %v1155 = vsel %vm1154, %v1107, %v1109
        %v1156 = vsel %vm1154, %v1109, %v1111
        %v1157 = vsel %vm1154, %v1111, %v1113
        %v1158 = vsel %vm1154, %v1113, %v1115
        %v1159 = vsel %vm1154, %v1115, %v1117
        %v1160 = vsel %vm1154, %v1119, %v1121
        %v1161 = vsel %vm1154, %v1121, %v1123
        %v1162 = vsel %vm1154, %v1123, %v1125
        %v1163 = vsel %vm1154, %v1125, %v1127
        %v1164 = vsel %vm1154, %v1127, %v1129
        %v1165 = vsel %vm1154, %v1131, %v1133
        %v1166 = vsel %vm1154, %v1133, %v1135
        %v1167 = vsel %vm1154, %v1135, %v1137
        %v1168 = vsel %vm1154, %v1137, %v1139
        %v1169 = vsel %vm1154, %v1139, %v1141
        %v1170 = vsel %vm1154, %v1143, %v1145
        %v1171 = vsel %vm1154, %v1145, %v1147
        %v1172 = vsel %vm1154, %v1147, %v1149
        %v1173 = vsel %vm1154, %v1149, %v1151
        %v1174 = vsel %vm1154, %v1151, %v1153
        %v1199 = vadd.f32 %v1018, %v1155
        %v1200 = vadd.f32 %v1019, %v1156
        %v1201 = vadd.f32 %v1020, %v1157
        %v1202 = vadd.f32 %v1021, %v1158
        %v1203 = vadd.f32 %v1022, %v1159
        %v1204 = vadd.f32 %v1023, %v1117
        %v1205 = vadd.f32 %v1024, %v1160
        %v1206 = vadd.f32 %v1025, %v1161
        %v1207 = vadd.f32 %v1026, %v1162
        %v1208 = vadd.f32 %v1027, %v1163
        %v1209 = vadd.f32 %v1028, %v1164
        %v1210 = vadd.f32 %v1029, %v1129
        %v1211 = vadd.f32 %v1030, %v1165
        %v1212 = vadd.f32 %v1031, %v1166
        %v1213 = vadd.f32 %v1032, %v1167
        %v1214 = vadd.f32 %v1033, %v1168
        %v1215 = vadd.f32 %v1034, %v1169
        %v1216 = vadd.f32 %v1035, %v1141
        %v1217 = vadd.f32 %v1036, %v1170
        %v1218 = vadd.f32 %v1037, %v1171
        %v1219 = vadd.f32 %v1038, %v1172
        %v1220 = vadd.f32 %v1039, %v1173
        %v1221 = vadd.f32 %v1040, %v1174
        %v1222 = vadd.f32 %v1041, %v1153
        %1223 = vset.pattern.permute.xlu0 3
        %1224 = vperm.xlu0 %1223, %v757
        %v1225 = vpop.permute.xlu0 %1224
        %1227 = vset.pattern.permute.xlu0 3
        %1228 = vperm.xlu0 %1227, %v758
        %v1229 = vpop.permute.xlu0 %1228
        %1231 = vset.pattern.permute.xlu0 3
        %1232 = vperm.xlu0 %1231, %v759
        %v1233 = vpop.permute.xlu0 %1232
        %1235 = vset.pattern.permute.xlu0 3
        %1236 = vperm.xlu0 %1235, %v760
        %v1237 = vpop.permute.xlu0 %1236
        %v1239 = vmul.f32 %v1225, %v816
        %v1240 = vmul.f32 %v1225, %v820
        %v1241 = vmul.f32 %v1225, %v824
        %v1242 = vmul.f32 %v1225, %v828
        %v1243 = vmul.f32 %v1225, %v832
        %v1244 = vmul.f32 %v1225, %v836
        %v1245 = vmul.f32 %v1229, %v816
        %v1246 = vmul.f32 %v1229, %v820
        %v1247 = vmul.f32 %v1229, %v824
        %v1248 = vmul.f32 %v1229, %v828
        %v1249 = vmul.f32 %v1229, %v832
        %v1250 = vmul.f32 %v1229, %v836
        %v1251 = vmul.f32 %v1233, %v816
        %v1252 = vmul.f32 %v1233, %v820
        %v1253 = vmul.f32 %v1233, %v824
        %v1254 = vmul.f32 %v1233, %v828
        %v1255 = vmul.f32 %v1233, %v832
        %v1256 = vmul.f32 %v1233, %v836
        %v1257 = vmul.f32 %v1237, %v816
        %v1258 = vmul.f32 %v1237, %v820
        %v1259 = vmul.f32 %v1237, %v824
        %v1260 = vmul.f32 %v1237, %v828
        %v1261 = vmul.f32 %v1237, %v832
        %v1262 = vmul.f32 %v1237, %v836
        %1287 = vrot.lane.b32.xlu0 %v1239, 125
        %v1288 = vpop.permute.xlu0 %1287
        %1289 = vrot.lane.b32.xlu0 %v1240, 125
        %v1290 = vpop.permute.xlu0 %1289
        %1291 = vrot.lane.b32.xlu0 %v1241, 125
        %v1292 = vpop.permute.xlu0 %1291
        %1293 = vrot.lane.b32.xlu0 %v1242, 125
        %v1294 = vpop.permute.xlu0 %1293
        %1295 = vrot.lane.b32.xlu0 %v1243, 125
        %v1296 = vpop.permute.xlu0 %1295
        %1297 = vrot.lane.b32.xlu0 %v1244, 125
        %v1298 = vpop.permute.xlu0 %1297
        %1299 = vrot.lane.b32.xlu0 %v1245, 125
        %v1300 = vpop.permute.xlu0 %1299
        %1301 = vrot.lane.b32.xlu0 %v1246, 125
        %v1302 = vpop.permute.xlu0 %1301
        %1303 = vrot.lane.b32.xlu0 %v1247, 125
        %v1304 = vpop.permute.xlu0 %1303
        %1305 = vrot.lane.b32.xlu0 %v1248, 125
        %v1306 = vpop.permute.xlu0 %1305
        %1307 = vrot.lane.b32.xlu0 %v1249, 125
        %v1308 = vpop.permute.xlu0 %1307
        %1309 = vrot.lane.b32.xlu0 %v1250, 125
        %v1310 = vpop.permute.xlu0 %1309
        %1311 = vrot.lane.b32.xlu0 %v1251, 125
        %v1312 = vpop.permute.xlu0 %1311
        %1313 = vrot.lane.b32.xlu0 %v1252, 125
        %v1314 = vpop.permute.xlu0 %1313
        %1315 = vrot.lane.b32.xlu0 %v1253, 125
        %v1316 = vpop.permute.xlu0 %1315
        %1317 = vrot.lane.b32.xlu0 %v1254, 125
        %v1318 = vpop.permute.xlu0 %1317
        %1319 = vrot.lane.b32.xlu0 %v1255, 125
        %v1320 = vpop.permute.xlu0 %1319
        %1321 = vrot.lane.b32.xlu0 %v1256, 125
        %v1322 = vpop.permute.xlu0 %1321
        %1323 = vrot.lane.b32.xlu0 %v1257, 125
        %v1324 = vpop.permute.xlu0 %1323
        %1325 = vrot.lane.b32.xlu0 %v1258, 125
        %v1326 = vpop.permute.xlu0 %1325
        %1327 = vrot.lane.b32.xlu0 %v1259, 125
        %v1328 = vpop.permute.xlu0 %1327
        %1329 = vrot.lane.b32.xlu0 %v1260, 125
        %v1330 = vpop.permute.xlu0 %1329
        %1331 = vrot.lane.b32.xlu0 %v1261, 125
        %v1332 = vpop.permute.xlu0 %1331
        %1333 = vrot.lane.b32.xlu0 %v1262, 125
        %v1334 = vpop.permute.xlu0 %1333
        %vm1335 = vcmask 1022976
        %v1336 = vsel %vm1335, %v1288, %v1290
        %v1337 = vsel %vm1335, %v1290, %v1292
        %v1338 = vsel %vm1335, %v1292, %v1294
        %v1339 = vsel %vm1335, %v1294, %v1296
        %v1340 = vsel %vm1335, %v1296, %v1298
        %v1341 = vsel %vm1335, %v1300, %v1302
        %v1342 = vsel %vm1335, %v1302, %v1304
        %v1343 = vsel %vm1335, %v1304, %v1306
        %v1344 = vsel %vm1335, %v1306, %v1308
        %v1345 = vsel %vm1335, %v1308, %v1310
        %v1346 = vsel %vm1335, %v1312, %v1314
        %v1347 = vsel %vm1335, %v1314, %v1316
        %v1348 = vsel %vm1335, %v1316, %v1318
        %v1349 = vsel %vm1335, %v1318, %v1320
        %v1350 = vsel %vm1335, %v1320, %v1322
        %v1351 = vsel %vm1335, %v1324, %v1326
        %v1352 = vsel %vm1335, %v1326, %v1328
        %v1353 = vsel %vm1335, %v1328, %v1330
        %v1354 = vsel %vm1335, %v1330, %v1332
        %v1355 = vsel %vm1335, %v1332, %v1334
        %v1380 = vadd.f32 %v1199, %v1336
        %v1381 = vadd.f32 %v1200, %v1337
        %v1382 = vadd.f32 %v1201, %v1338
        %v1383 = vadd.f32 %v1202, %v1339
        %v1384 = vadd.f32 %v1203, %v1340
        %v1385 = vadd.f32 %v1204, %v1298
        %v1386 = vadd.f32 %v1205, %v1341
        %v1387 = vadd.f32 %v1206, %v1342
        %v1388 = vadd.f32 %v1207, %v1343
        %v1389 = vadd.f32 %v1208, %v1344
        %v1390 = vadd.f32 %v1209, %v1345
        %v1391 = vadd.f32 %v1210, %v1310
        %v1392 = vadd.f32 %v1211, %v1346
        %v1393 = vadd.f32 %v1212, %v1347
        %v1394 = vadd.f32 %v1213, %v1348
        %v1395 = vadd.f32 %v1214, %v1349
        %v1396 = vadd.f32 %v1215, %v1350
        %v1397 = vadd.f32 %v1216, %v1322
        %v1398 = vadd.f32 %v1217, %v1351
        %v1399 = vadd.f32 %v1218, %v1352
        %v1400 = vadd.f32 %v1219, %v1353
        %v1401 = vadd.f32 %v1220, %v1354
        %v1402 = vadd.f32 %v1221, %v1355
        %v1403 = vadd.f32 %v1222, %v1334
        %1404 = vset.pattern.permute.xlu0 4
        %1405 = vperm.xlu0 %1404, %v757
        %v1406 = vpop.permute.xlu0 %1405
        %1408 = vset.pattern.permute.xlu0 4
        %1409 = vperm.xlu0 %1408, %v758
        %v1410 = vpop.permute.xlu0 %1409
        %1412 = vset.pattern.permute.xlu0 4
        %1413 = vperm.xlu0 %1412, %v759
        %v1414 = vpop.permute.xlu0 %1413
        %1416 = vset.pattern.permute.xlu0 4
        %1417 = vperm.xlu0 %1416, %v760
        %v1418 = vpop.permute.xlu0 %1417
        %v1420 = vmul.f32 %v1406, %v816
        %v1421 = vmul.f32 %v1406, %v820
        %v1422 = vmul.f32 %v1406, %v824
        %v1423 = vmul.f32 %v1406, %v828
        %v1424 = vmul.f32 %v1406, %v832
        %v1425 = vmul.f32 %v1406, %v836
        %v1426 = vmul.f32 %v1410, %v816
        %v1427 = vmul.f32 %v1410, %v820
        %v1428 = vmul.f32 %v1410, %v824
        %v1429 = vmul.f32 %v1410, %v828
        %v1430 = vmul.f32 %v1410, %v832
        %v1431 = vmul.f32 %v1410, %v836
        %v1432 = vmul.f32 %v1414, %v816
        %v1433 = vmul.f32 %v1414, %v820
        %v1434 = vmul.f32 %v1414, %v824
        %v1435 = vmul.f32 %v1414, %v828
        %v1436 = vmul.f32 %v1414, %v832
        %v1437 = vmul.f32 %v1414, %v836
        %v1438 = vmul.f32 %v1418, %v816
        %v1439 = vmul.f32 %v1418, %v820
        %v1440 = vmul.f32 %v1418, %v824
        %v1441 = vmul.f32 %v1418, %v828
        %v1442 = vmul.f32 %v1418, %v832
        %v1443 = vmul.f32 %v1418, %v836
        %1468 = vrot.lane.b32.xlu0 %v1420, 124
        %v1469 = vpop.permute.xlu0 %1468
        %1470 = vrot.lane.b32.xlu0 %v1421, 124
        %v1471 = vpop.permute.xlu0 %1470
        %1472 = vrot.lane.b32.xlu0 %v1422, 124
        %v1473 = vpop.permute.xlu0 %1472
        %1474 = vrot.lane.b32.xlu0 %v1423, 124
        %v1475 = vpop.permute.xlu0 %1474
        %1476 = vrot.lane.b32.xlu0 %v1424, 124
        %v1477 = vpop.permute.xlu0 %1476
        %1478 = vrot.lane.b32.xlu0 %v1425, 124
        %v1479 = vpop.permute.xlu0 %1478
        %1480 = vrot.lane.b32.xlu0 %v1426, 124
        %v1481 = vpop.permute.xlu0 %1480
        %1482 = vrot.lane.b32.xlu0 %v1427, 124
        %v1483 = vpop.permute.xlu0 %1482
        %1484 = vrot.lane.b32.xlu0 %v1428, 124
        %v1485 = vpop.permute.xlu0 %1484
        %1486 = vrot.lane.b32.xlu0 %v1429, 124
        %v1487 = vpop.permute.xlu0 %1486
        %1488 = vrot.lane.b32.xlu0 %v1430, 124
        %v1489 = vpop.permute.xlu0 %1488
        %1490 = vrot.lane.b32.xlu0 %v1431, 124
        %v1491 = vpop.permute.xlu0 %1490
        %1492 = vrot.lane.b32.xlu0 %v1432, 124
        %v1493 = vpop.permute.xlu0 %1492
        %1494 = vrot.lane.b32.xlu0 %v1433, 124
        %v1495 = vpop.permute.xlu0 %1494
        %1496 = vrot.lane.b32.xlu0 %v1434, 124
        %v1497 = vpop.permute.xlu0 %1496
        %1498 = vrot.lane.b32.xlu0 %v1435, 124
        %v1499 = vpop.permute.xlu0 %1498
        %1500 = vrot.lane.b32.xlu0 %v1436, 124
        %v1501 = vpop.permute.xlu0 %1500
        %1502 = vrot.lane.b32.xlu0 %v1437, 124
        %v1503 = vpop.permute.xlu0 %1502
        %1504 = vrot.lane.b32.xlu0 %v1438, 124
        %v1505 = vpop.permute.xlu0 %1504
        %1506 = vrot.lane.b32.xlu0 %v1439, 124
        %v1507 = vpop.permute.xlu0 %1506
        %1508 = vrot.lane.b32.xlu0 %v1440, 124
        %v1509 = vpop.permute.xlu0 %1508
        %1510 = vrot.lane.b32.xlu0 %v1441, 124
        %v1511 = vpop.permute.xlu0 %1510
        %1512 = vrot.lane.b32.xlu0 %v1442, 124
        %v1513 = vpop.permute.xlu0 %1512
        %1514 = vrot.lane.b32.xlu0 %v1443, 124
        %v1515 = vpop.permute.xlu0 %1514
        %vm1516 = vcmask 1014784
        %v1517 = vsel %vm1516, %v1469, %v1471
        %v1518 = vsel %vm1516, %v1471, %v1473
        %v1519 = vsel %vm1516, %v1473, %v1475
        %v1520 = vsel %vm1516, %v1475, %v1477
        %v1521 = vsel %vm1516, %v1477, %v1479
        %v1522 = vsel %vm1516, %v1481, %v1483
        %v1523 = vsel %vm1516, %v1483, %v1485
        %v1524 = vsel %vm1516, %v1485, %v1487
        %v1525 = vsel %vm1516, %v1487, %v1489
        %v1526 = vsel %vm1516, %v1489, %v1491
        %v1527 = vsel %vm1516, %v1493, %v1495
        %v1528 = vsel %vm1516, %v1495, %v1497
        %v1529 = vsel %vm1516, %v1497, %v1499
        %v1530 = vsel %vm1516, %v1499, %v1501
        %v1531 = vsel %vm1516, %v1501, %v1503
        %v1532 = vsel %vm1516, %v1505, %v1507
        %v1533 = vsel %vm1516, %v1507, %v1509
        %v1534 = vsel %vm1516, %v1509, %v1511
        %v1535 = vsel %vm1516, %v1511, %v1513
        %v1536 = vsel %vm1516, %v1513, %v1515
        %v1561 = vadd.f32 %v1380, %v1517
        %v1562 = vadd.f32 %v1381, %v1518
        %v1563 = vadd.f32 %v1382, %v1519
        %v1564 = vadd.f32 %v1383, %v1520
        %v1565 = vadd.f32 %v1384, %v1521
        %v1566 = vadd.f32 %v1385, %v1479
        %v1567 = vadd.f32 %v1386, %v1522
        %v1568 = vadd.f32 %v1387, %v1523
        %v1569 = vadd.f32 %v1388, %v1524
        %v1570 = vadd.f32 %v1389, %v1525
        %v1571 = vadd.f32 %v1390, %v1526
        %v1572 = vadd.f32 %v1391, %v1491
        %v1573 = vadd.f32 %v1392, %v1527
        %v1574 = vadd.f32 %v1393, %v1528
        %v1575 = vadd.f32 %v1394, %v1529
        %v1576 = vadd.f32 %v1395, %v1530
        %v1577 = vadd.f32 %v1396, %v1531
        %v1578 = vadd.f32 %v1397, %v1503
        %v1579 = vadd.f32 %v1398, %v1532
        %v1580 = vadd.f32 %v1399, %v1533
        %v1581 = vadd.f32 %v1400, %v1534
        %v1582 = vadd.f32 %v1401, %v1535
        %v1583 = vadd.f32 %v1402, %v1536
        %v1584 = vadd.f32 %v1403, %v1515
        %1585 = vset.pattern.permute.xlu0 5
        %1586 = vperm.xlu0 %1585, %v757
        %v1587 = vpop.permute.xlu0 %1586
        %1589 = vset.pattern.permute.xlu0 5
        %1590 = vperm.xlu0 %1589, %v758
        %v1591 = vpop.permute.xlu0 %1590
        %1593 = vset.pattern.permute.xlu0 5
        %1594 = vperm.xlu0 %1593, %v759
        %v1595 = vpop.permute.xlu0 %1594
        %1597 = vset.pattern.permute.xlu0 5
        %1598 = vperm.xlu0 %1597, %v760
        %v1599 = vpop.permute.xlu0 %1598
        %v1601 = vlaneseq
        %v1602 = vshrl.u32 %v1601, 7
        %v1603 = vsub.s32 1, %v1602
        %v1604 = vrot.slane %v755, %v1603
        %v1605 = vlaneseq
        %v1606 = vshrl.u32 %v1605, 7
        %v1607 = vsub.s32 3, %v1606
        %v1608 = vrot.slane %v755, %v1607
        %v1609 = vlaneseq
        %v1610 = vshrl.u32 %v1609, 7
        %v1611 = vsub.s32 5, %v1610
        %v1612 = vrot.slane %v755, %v1611
        %v1613 = vlaneseq
        %v1614 = vshrl.u32 %v1613, 7
        %v1615 = vsub.s32 7, %v1614
        %v1616 = vrot.slane %v755, %v1615
        %v1617 = vlaneseq
        %v1618 = vshrl.u32 %v1617, 7
        %v1619 = vsub.s32 1, %v1618
        %v1620 = vrot.slane %v756, %v1619
        %v1621 = vlaneseq
        %v1622 = vshrl.u32 %v1621, 7
        %v1623 = vsub.s32 3, %v1622
        %v1624 = vrot.slane %v756, %v1623
        %v1631 = vlaneseq
        %v1632 = vshrl.u32 %v1631, 7
        %v1633 = vsub.s32 1, %v1632
        %v1634 = vrot.slane %v1604, %v1633
        %v1635 = vlaneseq
        %v1636 = vshrl.u32 %v1635, 7
        %v1637 = vsub.s32 1, %v1636
        %v1638 = vrot.slane %v1608, %v1637
        %v1639 = vlaneseq
        %v1640 = vshrl.u32 %v1639, 7
        %v1641 = vsub.s32 1, %v1640
        %v1642 = vrot.slane %v1612, %v1641
        %v1643 = vlaneseq
        %v1644 = vshrl.u32 %v1643, 7
        %v1645 = vsub.s32 1, %v1644
        %v1646 = vrot.slane %v1616, %v1645
        %v1647 = vlaneseq
        %v1648 = vshrl.u32 %v1647, 7
        %v1649 = vsub.s32 1, %v1648
        %v1650 = vrot.slane %v1620, %v1649
        %v1651 = vlaneseq
        %v1652 = vshrl.u32 %v1651, 7
        %v1653 = vsub.s32 1, %v1652
        %v1654 = vrot.slane %v1624, %v1653
        %v1655 = vmul.f32 %v1587, %v1634
        %v1656 = vmul.f32 %v1587, %v1638
        %v1657 = vmul.f32 %v1587, %v1642
        %v1658 = vmul.f32 %v1587, %v1646
        %v1659 = vmul.f32 %v1587, %v1650
        %v1660 = vmul.f32 %v1587, %v1654
        %v1661 = vmul.f32 %v1591, %v1634
        %v1662 = vmul.f32 %v1591, %v1638
        %v1663 = vmul.f32 %v1591, %v1642
        %v1664 = vmul.f32 %v1591, %v1646
        %v1665 = vmul.f32 %v1591, %v1650
        %v1666 = vmul.f32 %v1591, %v1654
        %v1667 = vmul.f32 %v1595, %v1634
        %v1668 = vmul.f32 %v1595, %v1638
        %v1669 = vmul.f32 %v1595, %v1642
        %v1670 = vmul.f32 %v1595, %v1646
        %v1671 = vmul.f32 %v1595, %v1650
        %v1672 = vmul.f32 %v1595, %v1654
        %v1673 = vmul.f32 %v1599, %v1634
        %v1674 = vmul.f32 %v1599, %v1638
        %v1675 = vmul.f32 %v1599, %v1642
        %v1676 = vmul.f32 %v1599, %v1646
        %v1677 = vmul.f32 %v1599, %v1650
        %v1678 = vmul.f32 %v1599, %v1654
        %v1679 = vadd.f32 %v1561, %v1655
        %v1680 = vadd.f32 %v1562, %v1656
        %v1681 = vadd.f32 %v1563, %v1657
        %v1682 = vadd.f32 %v1564, %v1658
        %v1683 = vadd.f32 %v1565, %v1659
        %v1684 = vadd.f32 %v1566, %v1660
        %v1685 = vadd.f32 %v1567, %v1661
        %v1686 = vadd.f32 %v1568, %v1662
        %v1687 = vadd.f32 %v1569, %v1663
        %v1688 = vadd.f32 %v1570, %v1664
        %v1689 = vadd.f32 %v1571, %v1665
        %v1690 = vadd.f32 %v1572, %v1666
        %v1691 = vadd.f32 %v1573, %v1667
        %v1692 = vadd.f32 %v1574, %v1668
        %v1693 = vadd.f32 %v1575, %v1669
        %v1694 = vadd.f32 %v1576, %v1670
        %v1695 = vadd.f32 %v1577, %v1671
        %v1696 = vadd.f32 %v1578, %v1672
        %v1697 = vadd.f32 %v1579, %v1673
        %v1698 = vadd.f32 %v1580, %v1674
        %v1699 = vadd.f32 %v1581, %v1675
        %v1700 = vadd.f32 %v1582, %v1676
        %v1701 = vadd.f32 %v1583, %v1677
        %v1702 = vadd.f32 %v1584, %v1678
        %1703 = vset.pattern.permute.xlu0 6
        %1704 = vperm.xlu0 %1703, %v757
        %v1705 = vpop.permute.xlu0 %1704
        %1707 = vset.pattern.permute.xlu0 6
        %1708 = vperm.xlu0 %1707, %v758
        %v1709 = vpop.permute.xlu0 %1708
        %1711 = vset.pattern.permute.xlu0 6
        %1712 = vperm.xlu0 %1711, %v759
        %v1713 = vpop.permute.xlu0 %1712
        %1715 = vset.pattern.permute.xlu0 6
        %1716 = vperm.xlu0 %1715, %v760
        %v1717 = vpop.permute.xlu0 %1716
        %v1719 = vmul.f32 %v1705, %v1634
        %v1720 = vmul.f32 %v1705, %v1638
        %v1721 = vmul.f32 %v1705, %v1642
        %v1722 = vmul.f32 %v1705, %v1646
        %v1723 = vmul.f32 %v1705, %v1650
        %v1724 = vmul.f32 %v1705, %v1654
        %v1725 = vmul.f32 %v1709, %v1634
        %v1726 = vmul.f32 %v1709, %v1638
        %v1727 = vmul.f32 %v1709, %v1642
        %v1728 = vmul.f32 %v1709, %v1646
        %v1729 = vmul.f32 %v1709, %v1650
        %v1730 = vmul.f32 %v1709, %v1654
        %v1731 = vmul.f32 %v1713, %v1634
        %v1732 = vmul.f32 %v1713, %v1638
        %v1733 = vmul.f32 %v1713, %v1642
        %v1734 = vmul.f32 %v1713, %v1646
        %v1735 = vmul.f32 %v1713, %v1650
        %v1736 = vmul.f32 %v1713, %v1654
        %v1737 = vmul.f32 %v1717, %v1634
        %v1738 = vmul.f32 %v1717, %v1638
        %v1739 = vmul.f32 %v1717, %v1642
        %v1740 = vmul.f32 %v1717, %v1646
        %v1741 = vmul.f32 %v1717, %v1650
        %v1742 = vmul.f32 %v1717, %v1654
        %1767 = vrot.lane.b32.xlu0 %v1719, 127
        %v1768 = vpop.permute.xlu0 %1767
        %1769 = vrot.lane.b32.xlu0 %v1720, 127
        %v1770 = vpop.permute.xlu0 %1769
        %1771 = vrot.lane.b32.xlu0 %v1721, 127
        %v1772 = vpop.permute.xlu0 %1771
        %1773 = vrot.lane.b32.xlu0 %v1722, 127
        %v1774 = vpop.permute.xlu0 %1773
        %1775 = vrot.lane.b32.xlu0 %v1723, 127
        %v1776 = vpop.permute.xlu0 %1775
        %1777 = vrot.lane.b32.xlu0 %v1724, 127
        %v1778 = vpop.permute.xlu0 %1777
        %1779 = vrot.lane.b32.xlu0 %v1725, 127
        %v1780 = vpop.permute.xlu0 %1779
        %1781 = vrot.lane.b32.xlu0 %v1726, 127
        %v1782 = vpop.permute.xlu0 %1781
        %1783 = vrot.lane.b32.xlu0 %v1727, 127
        %v1784 = vpop.permute.xlu0 %1783
        %1785 = vrot.lane.b32.xlu0 %v1728, 127
        %v1786 = vpop.permute.xlu0 %1785
        %1787 = vrot.lane.b32.xlu0 %v1729, 127
        %v1788 = vpop.permute.xlu0 %1787
        %1789 = vrot.lane.b32.xlu0 %v1730, 127
        %v1790 = vpop.permute.xlu0 %1789
        %1791 = vrot.lane.b32.xlu0 %v1731, 127
        %v1792 = vpop.permute.xlu0 %1791
        %1793 = vrot.lane.b32.xlu0 %v1732, 127
        %v1794 = vpop.permute.xlu0 %1793
        %1795 = vrot.lane.b32.xlu0 %v1733, 127
        %v1796 = vpop.permute.xlu0 %1795
        %1797 = vrot.lane.b32.xlu0 %v1734, 127
        %v1798 = vpop.permute.xlu0 %1797
        %1799 = vrot.lane.b32.xlu0 %v1735, 127
        %v1800 = vpop.permute.xlu0 %1799
        %1801 = vrot.lane.b32.xlu0 %v1736, 127
        %v1802 = vpop.permute.xlu0 %1801
        %1803 = vrot.lane.b32.xlu0 %v1737, 127
        %v1804 = vpop.permute.xlu0 %1803
        %1805 = vrot.lane.b32.xlu0 %v1738, 127
        %v1806 = vpop.permute.xlu0 %1805
        %1807 = vrot.lane.b32.xlu0 %v1739, 127
        %v1808 = vpop.permute.xlu0 %1807
        %1809 = vrot.lane.b32.xlu0 %v1740, 127
        %v1810 = vpop.permute.xlu0 %1809
        %1811 = vrot.lane.b32.xlu0 %v1741, 127
        %v1812 = vpop.permute.xlu0 %1811
        %1813 = vrot.lane.b32.xlu0 %v1742, 127
        %v1814 = vpop.permute.xlu0 %1813
        %v1815 = vsel %vm973, %v1768, %v1770
        %v1816 = vsel %vm973, %v1770, %v1772
        %v1817 = vsel %vm973, %v1772, %v1774
        %v1818 = vsel %vm973, %v1774, %v1776
        %v1819 = vsel %vm973, %v1776, %v1778
        %v1820 = vsel %vm973, %v1780, %v1782
        %v1821 = vsel %vm973, %v1782, %v1784
        %v1822 = vsel %vm973, %v1784, %v1786
        %v1823 = vsel %vm973, %v1786, %v1788
        %v1824 = vsel %vm973, %v1788, %v1790
        %v1825 = vsel %vm973, %v1792, %v1794
        %v1826 = vsel %vm973, %v1794, %v1796
        %v1827 = vsel %vm973, %v1796, %v1798
        %v1828 = vsel %vm973, %v1798, %v1800
        %v1829 = vsel %vm973, %v1800, %v1802
        %v1830 = vsel %vm973, %v1804, %v1806
        %v1831 = vsel %vm973, %v1806, %v1808
        %v1832 = vsel %vm973, %v1808, %v1810
        %v1833 = vsel %vm973, %v1810, %v1812
        %v1834 = vsel %vm973, %v1812, %v1814
        %v1859 = vadd.f32 %v1679, %v1815
        %v1860 = vadd.f32 %v1680, %v1816
        %v1861 = vadd.f32 %v1681, %v1817
        %v1862 = vadd.f32 %v1682, %v1818
        %v1863 = vadd.f32 %v1683, %v1819
        %v1864 = vadd.f32 %v1684, %v1778
        %v1865 = vadd.f32 %v1685, %v1820
        %v1866 = vadd.f32 %v1686, %v1821
        %v1867 = vadd.f32 %v1687, %v1822
        %v1868 = vadd.f32 %v1688, %v1823
        %v1869 = vadd.f32 %v1689, %v1824
        %v1870 = vadd.f32 %v1690, %v1790
        %v1871 = vadd.f32 %v1691, %v1825
        %v1872 = vadd.f32 %v1692, %v1826
        %v1873 = vadd.f32 %v1693, %v1827
        %v1874 = vadd.f32 %v1694, %v1828
        %v1875 = vadd.f32 %v1695, %v1829
        %v1876 = vadd.f32 %v1696, %v1802
        %v1877 = vadd.f32 %v1697, %v1830
        %v1878 = vadd.f32 %v1698, %v1831
        %v1879 = vadd.f32 %v1699, %v1832
        %v1880 = vadd.f32 %v1700, %v1833
        %v1881 = vadd.f32 %v1701, %v1834
        %v1882 = vadd.f32 %v1702, %v1814
        %1883 = vset.pattern.permute.xlu0 7
        %1884 = vperm.xlu0 %1883, %v757
        %v1885 = vpop.permute.xlu0 %1884
        %1887 = vset.pattern.permute.xlu0 7
        %1888 = vperm.xlu0 %1887, %v758
        %v1889 = vpop.permute.xlu0 %1888
        %1891 = vset.pattern.permute.xlu0 7
        %1892 = vperm.xlu0 %1891, %v759
        %v1893 = vpop.permute.xlu0 %1892
        %1895 = vset.pattern.permute.xlu0 7
        %1896 = vperm.xlu0 %1895, %v760
        %v1897 = vpop.permute.xlu0 %1896
        %v1899 = vmul.f32 %v1885, %v1634
        %v1900 = vmul.f32 %v1885, %v1638
        %v1901 = vmul.f32 %v1885, %v1642
        %v1902 = vmul.f32 %v1885, %v1646
        %v1903 = vmul.f32 %v1885, %v1650
        %v1904 = vmul.f32 %v1885, %v1654
        %v1905 = vmul.f32 %v1889, %v1634
        %v1906 = vmul.f32 %v1889, %v1638
        %v1907 = vmul.f32 %v1889, %v1642
        %v1908 = vmul.f32 %v1889, %v1646
        %v1909 = vmul.f32 %v1889, %v1650
        %v1910 = vmul.f32 %v1889, %v1654
        %v1911 = vmul.f32 %v1893, %v1634
        %v1912 = vmul.f32 %v1893, %v1638
        %v1913 = vmul.f32 %v1893, %v1642
        %v1914 = vmul.f32 %v1893, %v1646
        %v1915 = vmul.f32 %v1893, %v1650
        %v1916 = vmul.f32 %v1893, %v1654
        %v1917 = vmul.f32 %v1897, %v1634
        %v1918 = vmul.f32 %v1897, %v1638
        %v1919 = vmul.f32 %v1897, %v1642
        %v1920 = vmul.f32 %v1897, %v1646
        %v1921 = vmul.f32 %v1897, %v1650
        %v1922 = vmul.f32 %v1897, %v1654
        %1947 = vrot.lane.b32.xlu0 %v1899, 126
        %v1948 = vpop.permute.xlu0 %1947
        %1949 = vrot.lane.b32.xlu0 %v1900, 126
        %v1950 = vpop.permute.xlu0 %1949
        %1951 = vrot.lane.b32.xlu0 %v1901, 126
        %v1952 = vpop.permute.xlu0 %1951
        %1953 = vrot.lane.b32.xlu0 %v1902, 126
        %v1954 = vpop.permute.xlu0 %1953
        %1955 = vrot.lane.b32.xlu0 %v1903, 126
        %v1956 = vpop.permute.xlu0 %1955
        %1957 = vrot.lane.b32.xlu0 %v1904, 126
        %v1958 = vpop.permute.xlu0 %1957
        %1959 = vrot.lane.b32.xlu0 %v1905, 126
        %v1960 = vpop.permute.xlu0 %1959
        %1961 = vrot.lane.b32.xlu0 %v1906, 126
        %v1962 = vpop.permute.xlu0 %1961
        %1963 = vrot.lane.b32.xlu0 %v1907, 126
        %v1964 = vpop.permute.xlu0 %1963
        %1965 = vrot.lane.b32.xlu0 %v1908, 126
        %v1966 = vpop.permute.xlu0 %1965
        %1967 = vrot.lane.b32.xlu0 %v1909, 126
        %v1968 = vpop.permute.xlu0 %1967
        %1969 = vrot.lane.b32.xlu0 %v1910, 126
        %v1970 = vpop.permute.xlu0 %1969
        %1971 = vrot.lane.b32.xlu0 %v1911, 126
        %v1972 = vpop.permute.xlu0 %1971
        %1973 = vrot.lane.b32.xlu0 %v1912, 126
        %v1974 = vpop.permute.xlu0 %1973
        %1975 = vrot.lane.b32.xlu0 %v1913, 126
        %v1976 = vpop.permute.xlu0 %1975
        %1977 = vrot.lane.b32.xlu0 %v1914, 126
        %v1978 = vpop.permute.xlu0 %1977
        %1979 = vrot.lane.b32.xlu0 %v1915, 126
        %v1980 = vpop.permute.xlu0 %1979
        %1981 = vrot.lane.b32.xlu0 %v1916, 126
        %v1982 = vpop.permute.xlu0 %1981
        %1983 = vrot.lane.b32.xlu0 %v1917, 126
        %v1984 = vpop.permute.xlu0 %1983
        %1985 = vrot.lane.b32.xlu0 %v1918, 126
        %v1986 = vpop.permute.xlu0 %1985
        %1987 = vrot.lane.b32.xlu0 %v1919, 126
        %v1988 = vpop.permute.xlu0 %1987
        %1989 = vrot.lane.b32.xlu0 %v1920, 126
        %v1990 = vpop.permute.xlu0 %1989
        %1991 = vrot.lane.b32.xlu0 %v1921, 126
        %v1992 = vpop.permute.xlu0 %1991
        %1993 = vrot.lane.b32.xlu0 %v1922, 126
        %v1994 = vpop.permute.xlu0 %1993
        %v1995 = vsel %vm1154, %v1948, %v1950
        %v1996 = vsel %vm1154, %v1950, %v1952
        %v1997 = vsel %vm1154, %v1952, %v1954
        %v1998 = vsel %vm1154, %v1954, %v1956
        %v1999 = vsel %vm1154, %v1956, %v1958
        %v2000 = vsel %vm1154, %v1960, %v1962
        %v2001 = vsel %vm1154, %v1962, %v1964
        %v2002 = vsel %vm1154, %v1964, %v1966
        %v2003 = vsel %vm1154, %v1966, %v1968
        %v2004 = vsel %vm1154, %v1968, %v1970
        %v2005 = vsel %vm1154, %v1972, %v1974
        %v2006 = vsel %vm1154, %v1974, %v1976
        %v2007 = vsel %vm1154, %v1976, %v1978
        %v2008 = vsel %vm1154, %v1978, %v1980
        %v2009 = vsel %vm1154, %v1980, %v1982
        %v2010 = vsel %vm1154, %v1984, %v1986
        %v2011 = vsel %vm1154, %v1986, %v1988
        %v2012 = vsel %vm1154, %v1988, %v1990
        %v2013 = vsel %vm1154, %v1990, %v1992
        %v2014 = vsel %vm1154, %v1992, %v1994
        %v2039 = vadd.f32 %v1859, %v1995
        %v2040 = vadd.f32 %v1860, %v1996
        %v2041 = vadd.f32 %v1861, %v1997
        %v2042 = vadd.f32 %v1862, %v1998
        %v2043 = vadd.f32 %v1863, %v1999
        %v2044 = vadd.f32 %v1864, %v1958
        %v2045 = vadd.f32 %v1865, %v2000
        %v2046 = vadd.f32 %v1866, %v2001
        %v2047 = vadd.f32 %v1867, %v2002
        %v2048 = vadd.f32 %v1868, %v2003
        %v2049 = vadd.f32 %v1869, %v2004
        %v2050 = vadd.f32 %v1870, %v1970
        %v2051 = vadd.f32 %v1871, %v2005
        %v2052 = vadd.f32 %v1872, %v2006
        %v2053 = vadd.f32 %v1873, %v2007
        %v2054 = vadd.f32 %v1874, %v2008
        %v2055 = vadd.f32 %v1875, %v2009
        %v2056 = vadd.f32 %v1876, %v1982
        %v2057 = vadd.f32 %v1877, %v2010
        %v2058 = vadd.f32 %v1878, %v2011
        %v2059 = vadd.f32 %v1879, %v2012
        %v2060 = vadd.f32 %v1880, %v2013
        %v2061 = vadd.f32 %v1881, %v2014
        %v2062 = vadd.f32 %v1882, %v1994
        %2063 = vset.pattern.permute.xlu0 8
        %2064 = vperm.xlu0 %2063, %v757
        %v2065 = vpop.permute.xlu0 %2064
        %2067 = vset.pattern.permute.xlu0 8
        %2068 = vperm.xlu0 %2067, %v758
        %v2069 = vpop.permute.xlu0 %2068
        %2071 = vset.pattern.permute.xlu0 8
        %2072 = vperm.xlu0 %2071, %v759
        %v2073 = vpop.permute.xlu0 %2072
        %2075 = vset.pattern.permute.xlu0 8
        %2076 = vperm.xlu0 %2075, %v760
        %v2077 = vpop.permute.xlu0 %2076
        %v2079 = vmul.f32 %v2065, %v1634
        %v2080 = vmul.f32 %v2065, %v1638
        %v2081 = vmul.f32 %v2065, %v1642
        %v2082 = vmul.f32 %v2065, %v1646
        %v2083 = vmul.f32 %v2065, %v1650
        %v2084 = vmul.f32 %v2065, %v1654
        %v2085 = vmul.f32 %v2069, %v1634
        %v2086 = vmul.f32 %v2069, %v1638
        %v2087 = vmul.f32 %v2069, %v1642
        %v2088 = vmul.f32 %v2069, %v1646
        %v2089 = vmul.f32 %v2069, %v1650
        %v2090 = vmul.f32 %v2069, %v1654
        %v2091 = vmul.f32 %v2073, %v1634
        %v2092 = vmul.f32 %v2073, %v1638
        %v2093 = vmul.f32 %v2073, %v1642
        %v2094 = vmul.f32 %v2073, %v1646
        %v2095 = vmul.f32 %v2073, %v1650
        %v2096 = vmul.f32 %v2073, %v1654
        %v2097 = vmul.f32 %v2077, %v1634
        %v2098 = vmul.f32 %v2077, %v1638
        %v2099 = vmul.f32 %v2077, %v1642
        %v2100 = vmul.f32 %v2077, %v1646
        %v2101 = vmul.f32 %v2077, %v1650
        %v2102 = vmul.f32 %v2077, %v1654
        %2127 = vrot.lane.b32.xlu0 %v2079, 125
        %v2128 = vpop.permute.xlu0 %2127
        %2129 = vrot.lane.b32.xlu0 %v2080, 125
        %v2130 = vpop.permute.xlu0 %2129
        %2131 = vrot.lane.b32.xlu0 %v2081, 125
        %v2132 = vpop.permute.xlu0 %2131
        %2133 = vrot.lane.b32.xlu0 %v2082, 125
        %v2134 = vpop.permute.xlu0 %2133
        %2135 = vrot.lane.b32.xlu0 %v2083, 125
        %v2136 = vpop.permute.xlu0 %2135
        %2137 = vrot.lane.b32.xlu0 %v2084, 125
        %v2138 = vpop.permute.xlu0 %2137
        %2139 = vrot.lane.b32.xlu0 %v2085, 125
        %v2140 = vpop.permute.xlu0 %2139
        %2141 = vrot.lane.b32.xlu0 %v2086, 125
        %v2142 = vpop.permute.xlu0 %2141
        %2143 = vrot.lane.b32.xlu0 %v2087, 125
        %v2144 = vpop.permute.xlu0 %2143
        %2145 = vrot.lane.b32.xlu0 %v2088, 125
        %v2146 = vpop.permute.xlu0 %2145
        %2147 = vrot.lane.b32.xlu0 %v2089, 125
        %v2148 = vpop.permute.xlu0 %2147
        %2149 = vrot.lane.b32.xlu0 %v2090, 125
        %v2150 = vpop.permute.xlu0 %2149
        %2151 = vrot.lane.b32.xlu0 %v2091, 125
        %v2152 = vpop.permute.xlu0 %2151
        %2153 = vrot.lane.b32.xlu0 %v2092, 125
        %v2154 = vpop.permute.xlu0 %2153
        %2155 = vrot.lane.b32.xlu0 %v2093, 125
        %v2156 = vpop.permute.xlu0 %2155
        %2157 = vrot.lane.b32.xlu0 %v2094, 125
        %v2158 = vpop.permute.xlu0 %2157
        %2159 = vrot.lane.b32.xlu0 %v2095, 125
        %v2160 = vpop.permute.xlu0 %2159
        %2161 = vrot.lane.b32.xlu0 %v2096, 125
        %v2162 = vpop.permute.xlu0 %2161
        %2163 = vrot.lane.b32.xlu0 %v2097, 125
        %v2164 = vpop.permute.xlu0 %2163
        %2165 = vrot.lane.b32.xlu0 %v2098, 125
        %v2166 = vpop.permute.xlu0 %2165
        %2167 = vrot.lane.b32.xlu0 %v2099, 125
        %v2168 = vpop.permute.xlu0 %2167
        %2169 = vrot.lane.b32.xlu0 %v2100, 125
        %v2170 = vpop.permute.xlu0 %2169
        %2171 = vrot.lane.b32.xlu0 %v2101, 125
        %v2172 = vpop.permute.xlu0 %2171
        %2173 = vrot.lane.b32.xlu0 %v2102, 125
        %v2174 = vpop.permute.xlu0 %2173
        %v2175 = vsel %vm1335, %v2128, %v2130
        %v2176 = vsel %vm1335, %v2130, %v2132
        %v2177 = vsel %vm1335, %v2132, %v2134
        %v2178 = vsel %vm1335, %v2134, %v2136
        %v2179 = vsel %vm1335, %v2136, %v2138
        %v2180 = vsel %vm1335, %v2140, %v2142
        %v2181 = vsel %vm1335, %v2142, %v2144
        %v2182 = vsel %vm1335, %v2144, %v2146
        %v2183 = vsel %vm1335, %v2146, %v2148
        %v2184 = vsel %vm1335, %v2148, %v2150
        %v2185 = vsel %vm1335, %v2152, %v2154
        %v2186 = vsel %vm1335, %v2154, %v2156
        %v2187 = vsel %vm1335, %v2156, %v2158
        %v2188 = vsel %vm1335, %v2158, %v2160
        %v2189 = vsel %vm1335, %v2160, %v2162
        %v2190 = vsel %vm1335, %v2164, %v2166
        %v2191 = vsel %vm1335, %v2166, %v2168
        %v2192 = vsel %vm1335, %v2168, %v2170
        %v2193 = vsel %vm1335, %v2170, %v2172
        %v2194 = vsel %vm1335, %v2172, %v2174
        %v2219 = vadd.f32 %v2039, %v2175
        %v2220 = vadd.f32 %v2040, %v2176
        %v2221 = vadd.f32 %v2041, %v2177
        %v2222 = vadd.f32 %v2042, %v2178
        %v2223 = vadd.f32 %v2043, %v2179
        %v2224 = vadd.f32 %v2044, %v2138
        %v2225 = vadd.f32 %v2045, %v2180
        %v2226 = vadd.f32 %v2046, %v2181
        %v2227 = vadd.f32 %v2047, %v2182
        %v2228 = vadd.f32 %v2048, %v2183
        %v2229 = vadd.f32 %v2049, %v2184
        %v2230 = vadd.f32 %v2050, %v2150
        %v2231 = vadd.f32 %v2051, %v2185
        %v2232 = vadd.f32 %v2052, %v2186
        %v2233 = vadd.f32 %v2053, %v2187
        %v2234 = vadd.f32 %v2054, %v2188
        %v2235 = vadd.f32 %v2055, %v2189
        %v2236 = vadd.f32 %v2056, %v2162
        %v2237 = vadd.f32 %v2057, %v2190
        %v2238 = vadd.f32 %v2058, %v2191
        %v2239 = vadd.f32 %v2059, %v2192
        %v2240 = vadd.f32 %v2060, %v2193
        %v2241 = vadd.f32 %v2061, %v2194
        %v2242 = vadd.f32 %v2062, %v2174
        %2243 = vset.pattern.permute.xlu0 9
        %2244 = vperm.xlu0 %2243, %v757
        %v2245 = vpop.permute.xlu0 %2244
        %2247 = vset.pattern.permute.xlu0 9
        %2248 = vperm.xlu0 %2247, %v758
        %v2249 = vpop.permute.xlu0 %2248
        %2251 = vset.pattern.permute.xlu0 9
        %2252 = vperm.xlu0 %2251, %v759
        %v2253 = vpop.permute.xlu0 %2252
        %2255 = vset.pattern.permute.xlu0 9
        %2256 = vperm.xlu0 %2255, %v760
        %v2257 = vpop.permute.xlu0 %2256
        %v2259 = vmul.f32 %v2245, %v1634
        %v2260 = vmul.f32 %v2245, %v1638
        %v2261 = vmul.f32 %v2245, %v1642
        %v2262 = vmul.f32 %v2245, %v1646
        %v2263 = vmul.f32 %v2245, %v1650
        %v2264 = vmul.f32 %v2245, %v1654
        %v2265 = vmul.f32 %v2249, %v1634
        %v2266 = vmul.f32 %v2249, %v1638
        %v2267 = vmul.f32 %v2249, %v1642
        %v2268 = vmul.f32 %v2249, %v1646
        %v2269 = vmul.f32 %v2249, %v1650
        %v2270 = vmul.f32 %v2249, %v1654
        %v2271 = vmul.f32 %v2253, %v1634
        %v2272 = vmul.f32 %v2253, %v1638
        %v2273 = vmul.f32 %v2253, %v1642
        %v2274 = vmul.f32 %v2253, %v1646
        %v2275 = vmul.f32 %v2253, %v1650
        %v2276 = vmul.f32 %v2253, %v1654
        %v2277 = vmul.f32 %v2257, %v1634
        %v2278 = vmul.f32 %v2257, %v1638
        %v2279 = vmul.f32 %v2257, %v1642
        %v2280 = vmul.f32 %v2257, %v1646
        %v2281 = vmul.f32 %v2257, %v1650
        %v2282 = vmul.f32 %v2257, %v1654
        %2307 = vrot.lane.b32.xlu0 %v2259, 124
        %v2308 = vpop.permute.xlu0 %2307
        %2309 = vrot.lane.b32.xlu0 %v2260, 124
        %v2310 = vpop.permute.xlu0 %2309
        %2311 = vrot.lane.b32.xlu0 %v2261, 124
        %v2312 = vpop.permute.xlu0 %2311
        %2313 = vrot.lane.b32.xlu0 %v2262, 124
        %v2314 = vpop.permute.xlu0 %2313
        %2315 = vrot.lane.b32.xlu0 %v2263, 124
        %v2316 = vpop.permute.xlu0 %2315
        %2317 = vrot.lane.b32.xlu0 %v2264, 124
        %v2318 = vpop.permute.xlu0 %2317
        %2319 = vrot.lane.b32.xlu0 %v2265, 124
        %v2320 = vpop.permute.xlu0 %2319
        %2321 = vrot.lane.b32.xlu0 %v2266, 124
        %v2322 = vpop.permute.xlu0 %2321
        %2323 = vrot.lane.b32.xlu0 %v2267, 124
        %v2324 = vpop.permute.xlu0 %2323
        %2325 = vrot.lane.b32.xlu0 %v2268, 124
        %v2326 = vpop.permute.xlu0 %2325
        %2327 = vrot.lane.b32.xlu0 %v2269, 124
        %v2328 = vpop.permute.xlu0 %2327
        %2329 = vrot.lane.b32.xlu0 %v2270, 124
        %v2330 = vpop.permute.xlu0 %2329
        %2331 = vrot.lane.b32.xlu0 %v2271, 124
        %v2332 = vpop.permute.xlu0 %2331
        %2333 = vrot.lane.b32.xlu0 %v2272, 124
        %v2334 = vpop.permute.xlu0 %2333
        %2335 = vrot.lane.b32.xlu0 %v2273, 124
        %v2336 = vpop.permute.xlu0 %2335
        %2337 = vrot.lane.b32.xlu0 %v2274, 124
        %v2338 = vpop.permute.xlu0 %2337
        %2339 = vrot.lane.b32.xlu0 %v2275, 124
        %v2340 = vpop.permute.xlu0 %2339
        %2341 = vrot.lane.b32.xlu0 %v2276, 124
        %v2342 = vpop.permute.xlu0 %2341
        %2343 = vrot.lane.b32.xlu0 %v2277, 124
        %v2344 = vpop.permute.xlu0 %2343
        %2345 = vrot.lane.b32.xlu0 %v2278, 124
        %v2346 = vpop.permute.xlu0 %2345
        %2347 = vrot.lane.b32.xlu0 %v2279, 124
        %v2348 = vpop.permute.xlu0 %2347
        %2349 = vrot.lane.b32.xlu0 %v2280, 124
        %v2350 = vpop.permute.xlu0 %2349
        %2351 = vrot.lane.b32.xlu0 %v2281, 124
        %v2352 = vpop.permute.xlu0 %2351
        %2353 = vrot.lane.b32.xlu0 %v2282, 124
        %v2354 = vpop.permute.xlu0 %2353
        %v2355 = vsel %vm1516, %v2308, %v2310
        %v2356 = vsel %vm1516, %v2310, %v2312
        %v2357 = vsel %vm1516, %v2312, %v2314
        %v2358 = vsel %vm1516, %v2314, %v2316
        %v2359 = vsel %vm1516, %v2316, %v2318
        %v2360 = vsel %vm1516, %v2320, %v2322
        %v2361 = vsel %vm1516, %v2322, %v2324
        %v2362 = vsel %vm1516, %v2324, %v2326
        %v2363 = vsel %vm1516, %v2326, %v2328
        %v2364 = vsel %vm1516, %v2328, %v2330
        %v2365 = vsel %vm1516, %v2332, %v2334
        %v2366 = vsel %vm1516, %v2334, %v2336
        %v2367 = vsel %vm1516, %v2336, %v2338
        %v2368 = vsel %vm1516, %v2338, %v2340
        %v2369 = vsel %vm1516, %v2340, %v2342
        %v2370 = vsel %vm1516, %v2344, %v2346
        %v2371 = vsel %vm1516, %v2346, %v2348
        %v2372 = vsel %vm1516, %v2348, %v2350
        %v2373 = vsel %vm1516, %v2350, %v2352
        %v2374 = vsel %vm1516, %v2352, %v2354
        %v2399 = vadd.f32 %v2219, %v2355
        %v2400 = vadd.f32 %v2220, %v2356
        %v2401 = vadd.f32 %v2221, %v2357
        %v2402 = vadd.f32 %v2222, %v2358
        %v2403 = vadd.f32 %v2223, %v2359
        %v2404 = vadd.f32 %v2224, %v2318
        %v2405 = vadd.f32 %v2225, %v2360
        %v2406 = vadd.f32 %v2226, %v2361
        %v2407 = vadd.f32 %v2227, %v2362
        %v2408 = vadd.f32 %v2228, %v2363
        %v2409 = vadd.f32 %v2229, %v2364
        %v2410 = vadd.f32 %v2230, %v2330
        %v2411 = vadd.f32 %v2231, %v2365
        %v2412 = vadd.f32 %v2232, %v2366
        %v2413 = vadd.f32 %v2233, %v2367
        %v2414 = vadd.f32 %v2234, %v2368
        %v2415 = vadd.f32 %v2235, %v2369
        %v2416 = vadd.f32 %v2236, %v2342
        %v2417 = vadd.f32 %v2237, %v2370
        %v2418 = vadd.f32 %v2238, %v2371
        %v2419 = vadd.f32 %v2239, %v2372
        %v2420 = vadd.f32 %v2240, %v2373
        %v2421 = vadd.f32 %v2241, %v2374
        %v2422 = vadd.f32 %v2242, %v2354
        %v2423 = vld [vmem:[%s2] sm:$0xff]
        %v2424 = vld [vmem:[%s2 + $0x8] sm:$0xff]
        %v2425 = vld [vmem:[%s2 + $0x10] sm:$0xff]
        %v2426 = vld [vmem:[%s2 + $0x18] sm:$0x1]
        %2428 = vset.pattern.permute.xlu0 0
        %2429 = vperm.xlu0 %2428, %v2423
        %v2430 = vpop.permute.xlu0 %2429
        %2433 = vset.pattern.permute.xlu0 0
        %2434 = vperm.xlu0 %2433, %v2424
        %v2435 = vpop.permute.xlu0 %2434
        %2438 = vset.pattern.permute.xlu0 0
        %2439 = vperm.xlu0 %2438, %v2425
        %v2440 = vpop.permute.xlu0 %2439
        %2443 = vset.pattern.permute.xlu0 0
        %2444 = vperm.xlu0 %2443, %v2426
        %v2445 = vpop.permute.xlu0 %2444
        %v2447 = vmul.f32 %v2399, %v2430
        %v2448 = vmul.f32 %v2400, %v2430
        %v2449 = vmul.f32 %v2401, %v2430
        %v2450 = vmul.f32 %v2402, %v2430
        %v2451 = vmul.f32 %v2403, %v2430
        %v2452 = vmul.f32 %v2404, %v2430
        %v2453 = vmul.f32 %v2405, %v2435
        %v2454 = vmul.f32 %v2406, %v2435
        %v2455 = vmul.f32 %v2407, %v2435
        %v2456 = vmul.f32 %v2408, %v2435
        %v2457 = vmul.f32 %v2409, %v2435
        %v2458 = vmul.f32 %v2410, %v2435
        %v2459 = vmul.f32 %v2411, %v2440
        %v2460 = vmul.f32 %v2412, %v2440
        %v2461 = vmul.f32 %v2413, %v2440
        %v2462 = vmul.f32 %v2414, %v2440
        %v2463 = vmul.f32 %v2415, %v2440
        %v2464 = vmul.f32 %v2416, %v2440
        %v2465 = vmul.f32 %v2417, %v2445
        %v2466 = vmul.f32 %v2418, %v2445
        %v2467 = vmul.f32 %v2419, %v2445
        %v2468 = vmul.f32 %v2420, %v2445
        %v2469 = vmul.f32 %v2421, %v2445
        %v2470 = vmul.f32 %v2422, %v2445
        %v2471 = vld [vmem:[%s3] sm:$0xff]
        %v2472 = vld [vmem:[%s3 + $0x8] sm:$0xff]
        %v2473 = vld [vmem:[%s3 + $0x10] sm:$0xff]
        %v2474 = vld [vmem:[%s3 + $0x18] sm:$0x1]
        %2476 = vset.pattern.permute.xlu0 0
        %2477 = vperm.xlu0 %2476, %v2471
        %v2478 = vpop.permute.xlu0 %2477
        %2481 = vset.pattern.permute.xlu0 0
        %2482 = vperm.xlu0 %2481, %v2472
        %v2483 = vpop.permute.xlu0 %2482
        %2486 = vset.pattern.permute.xlu0 0
        %2487 = vperm.xlu0 %2486, %v2473
        %v2488 = vpop.permute.xlu0 %2487
        %2491 = vset.pattern.permute.xlu0 0
        %2492 = vperm.xlu0 %2491, %v2474
        %v2493 = vpop.permute.xlu0 %2492
        %v2495 = vadd.f32 %v2447, %v2478
        %v2496 = vadd.f32 %v2448, %v2478
        %v2497 = vadd.f32 %v2449, %v2478
        %v2498 = vadd.f32 %v2450, %v2478
        %v2499 = vadd.f32 %v2451, %v2478
        %v2500 = vadd.f32 %v2452, %v2478
        %v2501 = vadd.f32 %v2453, %v2483
        %v2502 = vadd.f32 %v2454, %v2483
        %v2503 = vadd.f32 %v2455, %v2483
        %v2504 = vadd.f32 %v2456, %v2483
        %v2505 = vadd.f32 %v2457, %v2483
        %v2506 = vadd.f32 %v2458, %v2483
        %v2507 = vadd.f32 %v2459, %v2488
        %v2508 = vadd.f32 %v2460, %v2488
        %v2509 = vadd.f32 %v2461, %v2488
        %v2510 = vadd.f32 %v2462, %v2488
        %v2511 = vadd.f32 %v2463, %v2488
        %v2512 = vadd.f32 %v2464, %v2488
        %v2513 = vadd.f32 %v2465, %v2493
        %v2514 = vadd.f32 %v2466, %v2493
        %v2515 = vadd.f32 %v2467, %v2493
        %v2516 = vadd.f32 %v2468, %v2493
        %v2517 = vadd.f32 %v2469, %v2493
        %v2518 = vadd.f32 %v2470, %v2493
        %vm2519 = vcmp.gt.f32.partialorder %v2495, 0.0
        %vm2520 = vcmp.gt.f32.partialorder %v2496, 0.0
        %vm2521 = vcmp.gt.f32.partialorder %v2497, 0.0
        %vm2522 = vcmp.gt.f32.partialorder %v2498, 0.0
        %vm2523 = vcmp.gt.f32.partialorder %v2499, 0.0
        %vm2524 = vcmp.gt.f32.partialorder %v2500, 0.0
        %vm2525 = vcmp.gt.f32.partialorder %v2501, 0.0
        %vm2526 = vcmp.gt.f32.partialorder %v2502, 0.0
        %vm2527 = vcmp.gt.f32.partialorder %v2503, 0.0
        %vm2528 = vcmp.gt.f32.partialorder %v2504, 0.0
        %vm2529 = vcmp.gt.f32.partialorder %v2505, 0.0
        %vm2530 = vcmp.gt.f32.partialorder %v2506, 0.0
        %vm2531 = vcmp.gt.f32.partialorder %v2507, 0.0
        %vm2532 = vcmp.gt.f32.partialorder %v2508, 0.0
        %vm2533 = vcmp.gt.f32.partialorder %v2509, 0.0
        %vm2534 = vcmp.gt.f32.partialorder %v2510, 0.0
        %vm2535 = vcmp.gt.f32.partialorder %v2511, 0.0
        %vm2536 = vcmp.gt.f32.partialorder %v2512, 0.0
        %vm2537 = vcmp.gt.f32.partialorder %v2513, 0.0
        %vm2538 = vcmp.gt.f32.partialorder %v2514, 0.0
        %vm2539 = vcmp.gt.f32.partialorder %v2515, 0.0
        %vm2540 = vcmp.gt.f32.partialorder %v2516, 0.0
        %vm2541 = vcmp.gt.f32.partialorder %v2517, 0.0
        %vm2542 = vcmp.gt.f32.partialorder %v2518, 0.0
        %v2543 = vmul.f32 %v2495, 0.01
        %v2544 = vmul.f32 %v2496, 0.01
        %v2545 = vmul.f32 %v2497, 0.01
        %v2546 = vmul.f32 %v2498, 0.01
        %v2547 = vmul.f32 %v2499, 0.01
        %v2548 = vmul.f32 %v2500, 0.01
        %v2549 = vmul.f32 %v2501, 0.01
        %v2550 = vmul.f32 %v2502, 0.01
        %v2551 = vmul.f32 %v2503, 0.01
        %v2552 = vmul.f32 %v2504, 0.01
        %v2553 = vmul.f32 %v2505, 0.01
        %v2554 = vmul.f32 %v2506, 0.01
        %v2555 = vmul.f32 %v2507, 0.01
        %v2556 = vmul.f32 %v2508, 0.01
        %v2557 = vmul.f32 %v2509, 0.01
        %v2558 = vmul.f32 %v2510, 0.01
        %v2559 = vmul.f32 %v2511, 0.01
        %v2560 = vmul.f32 %v2512, 0.01
        %v2561 = vmul.f32 %v2513, 0.01
        %v2562 = vmul.f32 %v2514, 0.01
        %v2563 = vmul.f32 %v2515, 0.01
        %v2564 = vmul.f32 %v2516, 0.01
        %v2565 = vmul.f32 %v2517, 0.01
        %v2566 = vmul.f32 %v2518, 0.01
        %v2567 = vsel %vm2519, %v2495, %v2543
        %v2568 = vsel %vm2520, %v2496, %v2544
        %v2569 = vsel %vm2521, %v2497, %v2545
        %v2570 = vsel %vm2522, %v2498, %v2546
        %v2571 = vsel %vm2523, %v2499, %v2547
        %v2572 = vsel %vm2524, %v2500, %v2548
        %v2573 = vsel %vm2525, %v2501, %v2549
        %v2574 = vsel %vm2526, %v2502, %v2550
        %v2575 = vsel %vm2527, %v2503, %v2551
        %v2576 = vsel %vm2528, %v2504, %v2552
        %v2577 = vsel %vm2529, %v2505, %v2553
        %v2578 = vsel %vm2530, %v2506, %v2554
        %v2579 = vsel %vm2531, %v2507, %v2555
        %v2580 = vsel %vm2532, %v2508, %v2556
        %v2581 = vsel %vm2533, %v2509, %v2557
        %v2582 = vsel %vm2534, %v2510, %v2558
        %v2583 = vsel %vm2535, %v2511, %v2559
        %v2584 = vsel %vm2536, %v2512, %v2560
        %v2585 = vsel %vm2537, %v2513, %v2561
        %v2586 = vsel %vm2538, %v2514, %v2562
        %v2587 = vsel %vm2539, %v2515, %v2563
        %v2588 = vsel %vm2540, %v2516, %v2564
        %v2589 = vsel %vm2541, %v2517, %v2565
        %v2590 = vsel %vm2542, %v2518, %v2566
        %2615 = vrot.lane.b32.xlu0 %v2567, 127
        %v2616 = vpop.permute.xlu0 %2615
        %2617 = vrot.lane.b32.xlu0 %v2568, 127
        %v2618 = vpop.permute.xlu0 %2617
        %2619 = vrot.lane.b32.xlu0 %v2569, 127
        %v2620 = vpop.permute.xlu0 %2619
        %2621 = vrot.lane.b32.xlu0 %v2570, 127
        %v2622 = vpop.permute.xlu0 %2621
        %2623 = vrot.lane.b32.xlu0 %v2571, 127
        %v2624 = vpop.permute.xlu0 %2623
        %2625 = vrot.lane.b32.xlu0 %v2572, 127
        %v2626 = vpop.permute.xlu0 %2625
        %2627 = vrot.lane.b32.xlu0 %v2573, 127
        %v2628 = vpop.permute.xlu0 %2627
        %2629 = vrot.lane.b32.xlu0 %v2574, 127
        %v2630 = vpop.permute.xlu0 %2629
        %2631 = vrot.lane.b32.xlu0 %v2575, 127
        %v2632 = vpop.permute.xlu0 %2631
        %2633 = vrot.lane.b32.xlu0 %v2576, 127
        %v2634 = vpop.permute.xlu0 %2633
        %2635 = vrot.lane.b32.xlu0 %v2577, 127
        %v2636 = vpop.permute.xlu0 %2635
        %2637 = vrot.lane.b32.xlu0 %v2578, 127
        %v2638 = vpop.permute.xlu0 %2637
        %2639 = vrot.lane.b32.xlu0 %v2579, 127
        %v2640 = vpop.permute.xlu0 %2639
        %2641 = vrot.lane.b32.xlu0 %v2580, 127
        %v2642 = vpop.permute.xlu0 %2641
        %2643 = vrot.lane.b32.xlu0 %v2581, 127
        %v2644 = vpop.permute.xlu0 %2643
        %2645 = vrot.lane.b32.xlu0 %v2582, 127
        %v2646 = vpop.permute.xlu0 %2645
        %2647 = vrot.lane.b32.xlu0 %v2583, 127
        %v2648 = vpop.permute.xlu0 %2647
        %2649 = vrot.lane.b32.xlu0 %v2584, 127
        %v2650 = vpop.permute.xlu0 %2649
        %2651 = vrot.lane.b32.xlu0 %v2585, 127
        %v2652 = vpop.permute.xlu0 %2651
        %2653 = vrot.lane.b32.xlu0 %v2586, 127
        %v2654 = vpop.permute.xlu0 %2653
        %2655 = vrot.lane.b32.xlu0 %v2587, 127
        %v2656 = vpop.permute.xlu0 %2655
        %2657 = vrot.lane.b32.xlu0 %v2588, 127
        %v2658 = vpop.permute.xlu0 %2657
        %2659 = vrot.lane.b32.xlu0 %v2589, 127
        %v2660 = vpop.permute.xlu0 %2659
        %2661 = vrot.lane.b32.xlu0 %v2590, 127
        %v2662 = vpop.permute.xlu0 %2661
        %v2663 = vsel %vm973, %v2616, %v2618
        %v2664 = vsel %vm973, %v2618, %v2620
        %v2665 = vsel %vm973, %v2620, %v2622
        %v2666 = vsel %vm973, %v2622, %v2624
        %v2667 = vsel %vm973, %v2624, %v2626
        %v2668 = vsel %vm973, %v2628, %v2630
        %v2669 = vsel %vm973, %v2630, %v2632
        %v2670 = vsel %vm973, %v2632, %v2634
        %v2671 = vsel %vm973, %v2634, %v2636
        %v2672 = vsel %vm973, %v2636, %v2638
        %v2673 = vsel %vm973, %v2640, %v2642
        %v2674 = vsel %vm973, %v2642, %v2644
        %v2675 = vsel %vm973, %v2644, %v2646
        %v2676 = vsel %vm973, %v2646, %v2648
        %v2677 = vsel %vm973, %v2648, %v2650
        %v2678 = vsel %vm973, %v2652, %v2654
        %v2679 = vsel %vm973, %v2654, %v2656
        %v2680 = vsel %vm973, %v2656, %v2658
        %v2681 = vsel %vm973, %v2658, %v2660
        %v2682 = vsel %vm973, %v2660, %v2662
        %v2707 = vmax.f32 %v2567, %v2663
        %v2708 = vmax.f32 %v2568, %v2664
        %v2709 = vmax.f32 %v2569, %v2665
        %v2710 = vmax.f32 %v2570, %v2666
        %v2711 = vmax.f32 %v2571, %v2667
        %v2712 = vmax.f32 %v2572, %v2626
        %v2713 = vmax.f32 %v2573, %v2668
        %v2714 = vmax.f32 %v2574, %v2669
        %v2715 = vmax.f32 %v2575, %v2670
        %v2716 = vmax.f32 %v2576, %v2671
        %v2717 = vmax.f32 %v2577, %v2672
        %v2718 = vmax.f32 %v2578, %v2638
        %v2719 = vmax.f32 %v2579, %v2673
        %v2720 = vmax.f32 %v2580, %v2674
        %v2721 = vmax.f32 %v2581, %v2675
        %v2722 = vmax.f32 %v2582, %v2676
        %v2723 = vmax.f32 %v2583, %v2677
        %v2724 = vmax.f32 %v2584, %v2650
        %v2725 = vmax.f32 %v2585, %v2678
        %v2726 = vmax.f32 %v2586, %v2679
        %v2727 = vmax.f32 %v2587, %v2680
        %v2728 = vmax.f32 %v2588, %v2681
        %v2729 = vmax.f32 %v2589, %v2682
        %v2730 = vmax.f32 %v2590, %v2662
        %v2731 = vld [vmem:[#allocation5] sm:$0xff]
        %v2732 = vld [vmem:[#allocation5 + $0x8] sm:$0xff]
        %v2733 = vld [vmem:[#allocation5 + $0x10] sm:$0xff]
        %v2734 = vld [vmem:[#allocation5 + $0x18] sm:$0xff]
        %v2735 = vld [vmem:[#allocation5 + $0x20] sm:$0xff]
        %v2736 = vld [vmem:[#allocation5 + $0x28] sm:$0xff]
        %v2737 = vld [vmem:[#allocation5 + $0x30] sm:$0xff]
        %v2738 = vld [vmem:[#allocation5 + $0x38] sm:$0xff]
        %v2739 = vld [vmem:[#allocation5 + $0x40] sm:$0xff]
        %v2740 = vld [vmem:[#allocation5 + $0x48] sm:$0xff]
        %v2741 = vld [vmem:[#allocation5 + $0x50] sm:$0xff]
        %v2742 = vld [vmem:[#allocation5 + $0x58] sm:$0xff]
        %v2743 = vld [vmem:[#allocation5 + $0x60] sm:$0xff]
        %v2744 = vld [vmem:[#allocation5 + $0x68] sm:$0xff]
        %v2745 = vld [vmem:[#allocation5 + $0x70] sm:$0xff]
        %v2746 = vld [vmem:[#allocation5 + $0x78] sm:$0xff]
        %v2747 = vld [vmem:[#allocation5 + $0x80] sm:$0xff]
        %v2748 = vld [vmem:[#allocation5 + $0x88] sm:$0xff]
        %v2749 = vld [vmem:[#allocation5 + $0x90] sm:$0xff]
        %v2750 = vld [vmem:[#allocation5 + $0x98] sm:$0xff]
        %v2751 = vld [vmem:[#allocation5 + $0xa0] sm:$0xff]
        %v2752 = vld [vmem:[#allocation5 + $0xa8] sm:$0xff]
        %v2753 = vld [vmem:[#allocation5 + $0xb0] sm:$0xff]
        %v2754 = vld [vmem:[#allocation5 + $0xb8] sm:$0xff]
        %v2755 = vld [vmem:[#allocation5 + $0xc0] sm:$0xff]
        %v2756 = vld [vmem:[#allocation5 + $0xc8] sm:$0xff]
        %v2757 = vld [vmem:[#allocation5 + $0xd0] sm:$0xff]
        %v2758 = vld [vmem:[#allocation5 + $0xd8] sm:$0xff]
        %v2759 = vld [vmem:[#allocation5 + $0xe0] sm:$0xff]
        %v2760 = vld [vmem:[#allocation5 + $0xe8] sm:$0xff]
        %v2761 = vld [vmem:[#allocation5 + $0xf0] sm:$0xff]
        %v2762 = vld [vmem:[#allocation5 + $0xf8] sm:$0xff]
        %v2763 = vld [vmem:[#allocation5 + $0x100] sm:$0xff]
        %v2764 = vld [vmem:[#allocation5 + $0x108] sm:$0xff]
        %v2765 = vld [vmem:[#allocation5 + $0x110] sm:$0xff]
        %v2766 = vld [vmem:[#allocation5 + $0x118] sm:$0xff]
        %v2767 = vld [vmem:[#allocation5 + $0x120] sm:$0xff]
        %v2768 = vld [vmem:[#allocation5 + $0x128] sm:$0xff]
        %v2769 = vld [vmem:[#allocation5 + $0x130] sm:$0xff]
        %v2770 = vld [vmem:[#allocation5 + $0x138] sm:$0xff]
        %v2771 = vld [vmem:[#allocation5 + $0x140] sm:$0xff]
        %v2772 = vld [vmem:[#allocation5 + $0x148] sm:$0xff]
        %v2773 = vld [vmem:[#allocation5 + $0x150] sm:$0xff]
        %v2774 = vld [vmem:[#allocation5 + $0x158] sm:$0xff]
        %v2775 = vld [vmem:[#allocation5 + $0x160] sm:$0xff]
        %v2776 = vld [vmem:[#allocation5 + $0x168] sm:$0xff]
        %v2777 = vld [vmem:[#allocation5 + $0x170] sm:$0xff]
        %v2778 = vld [vmem:[#allocation5 + $0x178] sm:$0xff]
        %v2779 = vld [vmem:[#allocation5 + $0x180] sm:$0xff]
        %v2780 = vld [vmem:[#allocation5 + $0x188] sm:$0xff]
        %v2781 = vld [vmem:[#allocation5 + $0x190] sm:$0xff]
        %v2782 = vld [vmem:[#allocation5 + $0x198] sm:$0xff]
        %v2783 = vld [vmem:[#allocation5 + $0x1a0] sm:$0xff]
        %v2784 = vld [vmem:[#allocation5 + $0x1a8] sm:$0xff]
        %v2785 = vld [vmem:[#allocation5 + $0x1b0] sm:$0xff]
        %v2786 = vld [vmem:[#allocation5 + $0x1b8] sm:$0xff]
        %v2787 = vld [vmem:[#allocation5 + $0x1c0] sm:$0xff]
        %v2788 = vld [vmem:[#allocation5 + $0x1c8] sm:$0xff]
        %v2789 = vld [vmem:[#allocation5 + $0x1d0] sm:$0xff]
        %v2790 = vld [vmem:[#allocation5 + $0x1d8] sm:$0xff]
        %v2791 = vld [vmem:[#allocation5 + $0x1e0] sm:$0xff]
        %v2792 = vld [vmem:[#allocation5 + $0x1e8] sm:$0xff]
        %v2793 = vld [vmem:[#allocation5 + $0x1f0] sm:$0xff]
        %v2794 = vld [vmem:[#allocation5 + $0x1f8] sm:$0xff]
        %v2795 = vld [vmem:[#allocation5 + $0x200] sm:$0xff]
        %v2796 = vld [vmem:[#allocation5 + $0x208] sm:$0xff]
        %v2797 = vld [vmem:[#allocation5 + $0x210] sm:$0xff]
        %v2798 = vld [vmem:[#allocation5 + $0x218] sm:$0xff]
        %v2799 = vld [vmem:[#allocation5 + $0x220] sm:$0xff]
        %v2800 = vld [vmem:[#allocation5 + $0x228] sm:$0xff]
        %v2801 = vld [vmem:[#allocation5 + $0x230] sm:$0xff]
        %v2802 = vld [vmem:[#allocation5 + $0x238] sm:$0xff]
        %v2803 = vld [vmem:[#allocation5 + $0x240] sm:$0xff]
        %v2804 = vld [vmem:[#allocation5 + $0x248] sm:$0xff]
        %v2805 = vld [vmem:[#allocation5 + $0x250] sm:$0xff]
        %v2806 = vld [vmem:[#allocation5 + $0x258] sm:$0xff]
        %v2807 = vld [vmem:[#allocation5 + $0x260] sm:$0xff]
        %v2808 = vld [vmem:[#allocation5 + $0x268] sm:$0xff]
        %v2809 = vld [vmem:[#allocation5 + $0x270] sm:$0xff]
        %v2810 = vld [vmem:[#allocation5 + $0x278] sm:$0xff]
        %v2811 = vld [vmem:[#allocation5 + $0x280] sm:$0xff]
        %v2812 = vld [vmem:[#allocation5 + $0x288] sm:$0xff]
        %v2813 = vld [vmem:[#allocation5 + $0x290] sm:$0xff]
        %v2814 = vld [vmem:[#allocation5 + $0x298] sm:$0xff]
        %v2815 = vld [vmem:[#allocation5 + $0x2a0] sm:$0xff]
        %v2816 = vld [vmem:[#allocation5 + $0x2a8] sm:$0xff]
        %v2817 = vld [vmem:[#allocation5 + $0x2b0] sm:$0xff]
        %v2818 = vld [vmem:[#allocation5 + $0x2b8] sm:$0xff]
        %v2819 = vld [vmem:[#allocation5 + $0x2c0] sm:$0xff]
        %v2820 = vld [vmem:[#allocation5 + $0x2c8] sm:$0xff]
        %v2821 = vld [vmem:[#allocation5 + $0x2d0] sm:$0xff]
        %v2822 = vld [vmem:[#allocation5 + $0x2d8] sm:$0xff]
        %v2823 = vld [vmem:[#allocation5 + $0x2e0] sm:$0xff]
        %v2824 = vld [vmem:[#allocation5 + $0x2e8] sm:$0xff]
        %v2825 = vld [vmem:[#allocation5 + $0x2f0] sm:$0xff]
        %v2826 = vld [vmem:[#allocation5 + $0x2f8] sm:$0xff]
        %v2827 = vld [vmem:[#allocation5 + $0x300] sm:$0xff]
        %v2828 = vld [vmem:[#allocation5 + $0x308] sm:$0xff]
        %v2829 = vld [vmem:[#allocation5 + $0x310] sm:$0xff]
        %v2830 = vld [vmem:[#allocation5 + $0x318] sm:$0xff]
        %v2831 = vld [vmem:[#allocation5 + $0x320] sm:$0xff]
        %v2832 = vld [vmem:[#allocation5 + $0x328] sm:$0xff]
        %v2833 = vld [vmem:[#allocation5 + $0x330] sm:$0xff]
        %v2834 = vld [vmem:[#allocation5 + $0x338] sm:$0xff]
        %v2835 = vld [vmem:[#allocation5 + $0x340] sm:$0xff]
        %v2836 = vld [vmem:[#allocation5 + $0x348] sm:$0xff]
        %v2837 = vld [vmem:[#allocation5 + $0x350] sm:$0xff]
        %v2838 = vld [vmem:[#allocation5 + $0x358] sm:$0xff]
        %v2839 = vld [vmem:[#allocation5 + $0x360] sm:$0xff]
        %v2840 = vld [vmem:[#allocation5 + $0x368] sm:$0xff]
        %v2841 = vld [vmem:[#allocation5 + $0x370] sm:$0xff]
        %v2842 = vld [vmem:[#allocation5 + $0x378] sm:$0xff]
        %v2843 = vld [vmem:[#allocation5 + $0x380] sm:$0xff]
        %v2844 = vld [vmem:[#allocation5 + $0x388] sm:$0xff]
        %v2845 = vld [vmem:[#allocation5 + $0x390] sm:$0xff]
        %v2846 = vld [vmem:[#allocation5 + $0x398] sm:$0xff]
        %v2847 = vld [vmem:[#allocation5 + $0x3a0] sm:$0xff]
        %v2848 = vld [vmem:[#allocation5 + $0x3a8] sm:$0xff]
        %v2849 = vld [vmem:[#allocation5 + $0x3b0] sm:$0xff]
        %v2850 = vld [vmem:[#allocation5 + $0x3b8] sm:$0xff]
        %v2851 = vld [vmem:[#allocation5 + $0x3c0] sm:$0xff]
        %v2852 = vld [vmem:[#allocation5 + $0x3c8] sm:$0xff]
        %v2853 = vld [vmem:[#allocation5 + $0x3d0] sm:$0xff]
        %v2854 = vld [vmem:[#allocation5 + $0x3d8] sm:$0xff]
        %v2855 = vld [vmem:[#allocation5 + $0x3e0] sm:$0xff]
        %v2856 = vld [vmem:[#allocation5 + $0x3e8] sm:$0xff]
        %v2857 = vld [vmem:[#allocation5 + $0x3f0] sm:$0xff]
        %v2858 = vld [vmem:[#allocation5 + $0x3f8] sm:$0xff]
        %v2859 = vld [vmem:[#allocation5 + $0x400] sm:$0xff]
        %v2860 = vld [vmem:[#allocation5 + $0x408] sm:$0xff]
        %v2861 = vld [vmem:[#allocation5 + $0x410] sm:$0xff]
        %v2862 = vld [vmem:[#allocation5 + $0x418] sm:$0xff]
        %v2863 = vld [vmem:[#allocation5 + $0x420] sm:$0xff]
        %v2864 = vld [vmem:[#allocation5 + $0x428] sm:$0xff]
        %v2865 = vld [vmem:[#allocation5 + $0x430] sm:$0xff]
        %v2866 = vld [vmem:[#allocation5 + $0x438] sm:$0xff]
        %v2867 = vld [vmem:[#allocation5 + $0x440] sm:$0xff]
        %v2868 = vld [vmem:[#allocation5 + $0x448] sm:$0xff]
        %v2869 = vld [vmem:[#allocation5 + $0x450] sm:$0xff]
        %v2870 = vld [vmem:[#allocation5 + $0x458] sm:$0xff]
        %v2871 = vld [vmem:[#allocation5 + $0x460] sm:$0xff]
        %v2872 = vld [vmem:[#allocation5 + $0x468] sm:$0xff]
        %v2873 = vld [vmem:[#allocation5 + $0x470] sm:$0xff]
        %v2874 = vld [vmem:[#allocation5 + $0x478] sm:$0xff]
        %v2875 = vld [vmem:[#allocation5 + $0x480] sm:$0xff]
        %v2876 = vld [vmem:[#allocation5 + $0x488] sm:$0xff]
        %v2877 = vld [vmem:[#allocation5 + $0x490] sm:$0xff]
        %v2878 = vld [vmem:[#allocation5 + $0x498] sm:$0xff]
        %v2879 = vld [vmem:[#allocation5 + $0x4a0] sm:$0xff]
        %v2880 = vld [vmem:[#allocation5 + $0x4a8] sm:$0xff]
        %v2881 = vld [vmem:[#allocation5 + $0x4b0] sm:$0xff]
        %v2882 = vld [vmem:[#allocation5 + $0x4b8] sm:$0xff]
        %v2883 = vld [vmem:[#allocation5 + $0x4c0] sm:$0xff]
        %v2884 = vld [vmem:[#allocation5 + $0x4c8] sm:$0xff]
        %v2885 = vld [vmem:[#allocation5 + $0x4d0] sm:$0xff]
        %v2886 = vld [vmem:[#allocation5 + $0x4d8] sm:$0xff]
        %v2887 = vld [vmem:[#allocation5 + $0x4e0] sm:$0xff]
        %v2888 = vld [vmem:[#allocation5 + $0x4e8] sm:$0xff]
        %v2889 = vld [vmem:[#allocation5 + $0x4f0] sm:$0xff]
        %v2890 = vld [vmem:[#allocation5 + $0x4f8] sm:$0xff]
        %v2891 = vld [vmem:[#allocation5 + $0x500] sm:$0xff]
        %v2892 = vld [vmem:[#allocation5 + $0x508] sm:$0xff]
        %v2893 = vld [vmem:[#allocation5 + $0x510] sm:$0xff]
        %v2894 = vld [vmem:[#allocation5 + $0x518] sm:$0xff]
        %v2895 = vld [vmem:[#allocation5 + $0x520] sm:$0xff]
        %v2896 = vld [vmem:[#allocation5 + $0x528] sm:$0xff]
        %v2897 = vld [vmem:[#allocation5 + $0x530] sm:$0xff]
        %v2898 = vld [vmem:[#allocation5 + $0x538] sm:$0xff]
        %v2899 = vld [vmem:[#allocation5 + $0x540] sm:$0xff]
        %v2900 = vld [vmem:[#allocation5 + $0x548] sm:$0xff]
        %v2901 = vld [vmem:[#allocation5 + $0x550] sm:$0xff]
        %v2902 = vld [vmem:[#allocation5 + $0x558] sm:$0xff]
        %v2903 = vld [vmem:[#allocation5 + $0x560] sm:$0xff]
        %v2904 = vld [vmem:[#allocation5 + $0x568] sm:$0xff]
        %v2905 = vld [vmem:[#allocation5 + $0x570] sm:$0xff]
        %v2906 = vld [vmem:[#allocation5 + $0x578] sm:$0xff]
        %v2907 = vld [vmem:[#allocation5 + $0x580] sm:$0xff]
        %v2908 = vld [vmem:[#allocation5 + $0x588] sm:$0xff]
        %v2909 = vld [vmem:[#allocation5 + $0x590] sm:$0xff]
        %v2910 = vld [vmem:[#allocation5 + $0x598] sm:$0xff]
        %v2911 = vld [vmem:[#allocation5 + $0x5a0] sm:$0xff]
        %v2912 = vld [vmem:[#allocation5 + $0x5a8] sm:$0xff]
        %v2913 = vld [vmem:[#allocation5 + $0x5b0] sm:$0xff]
        %v2914 = vld [vmem:[#allocation5 + $0x5b8] sm:$0xff]
        %v2915 = vld [vmem:[#allocation5 + $0x5c0] sm:$0xff]
        %v2916 = vld [vmem:[#allocation5 + $0x5c8] sm:$0xff]
        %v2917 = vld [vmem:[#allocation5 + $0x5d0] sm:$0xff]
        %v2918 = vld [vmem:[#allocation5 + $0x5d8] sm:$0xff]
        %v2919 = vld [vmem:[#allocation5 + $0x5e0] sm:$0xff]
        %v2920 = vld [vmem:[#allocation5 + $0x5e8] sm:$0xff]
        %v2921 = vld [vmem:[#allocation5 + $0x5f0] sm:$0xff]
        %v2922 = vld [vmem:[#allocation5 + $0x5f8] sm:$0xff]
        %v2923 = vld [vmem:[#allocation5 + $0x600] sm:$0xff]
        %v2924 = vld [vmem:[#allocation5 + $0x608] sm:$0xff]
        %v2925 = vld [vmem:[#allocation5 + $0x610] sm:$0xff]
        %v2926 = vld [vmem:[#allocation5 + $0x618] sm:$0xff]
        %v2927 = vld [vmem:[#allocation5 + $0x620] sm:$0xff]
        %v2928 = vld [vmem:[#allocation5 + $0x628] sm:$0xff]
        %v2929 = vld [vmem:[#allocation5 + $0x630] sm:$0xff]
        %v2930 = vld [vmem:[#allocation5 + $0x638] sm:$0xff]
        %v2931 = vld [vmem:[#allocation5 + $0x640] sm:$0xff]
        %v2932 = vld [vmem:[#allocation5 + $0x648] sm:$0xff]
        %v2933 = vld [vmem:[#allocation5 + $0x650] sm:$0xff]
        %v2934 = vld [vmem:[#allocation5 + $0x658] sm:$0xff]
        %v2935 = vld [vmem:[#allocation5 + $0x660] sm:$0xff]
        %v2936 = vld [vmem:[#allocation5 + $0x668] sm:$0xff]
        %v2937 = vld [vmem:[#allocation5 + $0x670] sm:$0xff]
        %v2938 = vld [vmem:[#allocation5 + $0x678] sm:$0xff]
        %v2939 = vld [vmem:[#allocation5 + $0x680] sm:$0xff]
        %v2940 = vld [vmem:[#allocation5 + $0x688] sm:$0xff]
        %v2941 = vld [vmem:[#allocation5 + $0x690] sm:$0xff]
        %v2942 = vld [vmem:[#allocation5 + $0x698] sm:$0xff]
        %v2943 = vld [vmem:[#allocation5 + $0x6a0] sm:$0xff]
        %v2944 = vld [vmem:[#allocation5 + $0x6a8] sm:$0xff]
        %v2945 = vld [vmem:[#allocation5 + $0x6b0] sm:$0xff]
        %v2946 = vld [vmem:[#allocation5 + $0x6b8] sm:$0xff]
        %v2947 = vld [vmem:[#allocation5 + $0x6c0] sm:$0xff]
        %v2948 = vld [vmem:[#allocation5 + $0x6c8] sm:$0xff]
        %v2949 = vld [vmem:[#allocation5 + $0x6d0] sm:$0xff]
        %v2950 = vld [vmem:[#allocation5 + $0x6d8] sm:$0xff]
        %v2951 = vld [vmem:[#allocation5 + $0x6e0] sm:$0xff]
        %v2952 = vld [vmem:[#allocation5 + $0x6e8] sm:$0xff]
        %v2953 = vld [vmem:[#allocation5 + $0x6f0] sm:$0xff]
        %v2954 = vld [vmem:[#allocation5 + $0x6f8] sm:$0xff]
        %v2955 = vld [vmem:[#allocation5 + $0x700] sm:$0xff]
        %v2956 = vld [vmem:[#allocation5 + $0x708] sm:$0xff]
        %v2957 = vld [vmem:[#allocation5 + $0x710] sm:$0xff]
        %v2958 = vld [vmem:[#allocation5 + $0x718] sm:$0xff]
        %v2959 = vld [vmem:[#allocation5 + $0x720] sm:$0xff]
        %v2960 = vld [vmem:[#allocation5 + $0x728] sm:$0xff]
        %v2961 = vld [vmem:[#allocation5 + $0x730] sm:$0xff]
        %v2962 = vld [vmem:[#allocation5 + $0x738] sm:$0xff]
        %v2963 = vld [vmem:[#allocation5 + $0x740] sm:$0xff]
        %v2964 = vld [vmem:[#allocation5 + $0x748] sm:$0xff]
        %v2965 = vld [vmem:[#allocation5 + $0x750] sm:$0xff]
        %v2966 = vld [vmem:[#allocation5 + $0x758] sm:$0xff]
        %v2967 = vld [vmem:[#allocation5 + $0x760] sm:$0xff]
        %v2968 = vld [vmem:[#allocation5 + $0x768] sm:$0xff]
        %v2969 = vld [vmem:[#allocation5 + $0x770] sm:$0xff]
        %v2970 = vld [vmem:[#allocation5 + $0x778] sm:$0xff]
        %v2971 = vld [vmem:[#allocation5 + $0x780] sm:$0xff]
        %v2972 = vld [vmem:[#allocation5 + $0x788] sm:$0xff]
        %v2973 = vld [vmem:[#allocation5 + $0x790] sm:$0xff]
        %v2974 = vld [vmem:[#allocation5 + $0x798] sm:$0xff]
        %v2975 = vld [vmem:[#allocation5 + $0x7a0] sm:$0xff]
        %v2976 = vld [vmem:[#allocation5 + $0x7a8] sm:$0xff]
        %v2977 = vld [vmem:[#allocation5 + $0x7b0] sm:$0xff]
        %v2978 = vld [vmem:[#allocation5 + $0x7b8] sm:$0xff]
        %v2979 = vld [vmem:[#allocation5 + $0x7c0] sm:$0xff]
        %v2980 = vld [vmem:[#allocation5 + $0x7c8] sm:$0xff]
        %v2981 = vld [vmem:[#allocation5 + $0x7d0] sm:$0xff]
        %v2982 = vld [vmem:[#allocation5 + $0x7d8] sm:$0xff]
        %v2983 = vld [vmem:[#allocation5 + $0x7e0] sm:$0xff]
        %v2984 = vld [vmem:[#allocation5 + $0x7e8] sm:$0xff]
        %v2985 = vld [vmem:[#allocation5 + $0x7f0] sm:$0xff]
        %v2986 = vld [vmem:[#allocation5 + $0x7f8] sm:$0xff]
        %v2987 = vld [vmem:[#allocation5 + $0x800] sm:$0xff]
        %v2988 = vld [vmem:[#allocation5 + $0x808] sm:$0xff]
        %v2989 = vld [vmem:[#allocation5 + $0x810] sm:$0xff]
        %v2990 = vld [vmem:[#allocation5 + $0x818] sm:$0xff]
        %v2991 = vld [vmem:[#allocation5 + $0x820] sm:$0xff]
        %v2992 = vld [vmem:[#allocation5 + $0x828] sm:$0xff]
        %v2993 = vld [vmem:[#allocation5 + $0x830] sm:$0xff]
        %v2994 = vld [vmem:[#allocation5 + $0x838] sm:$0xff]
        %v2995 = vld [vmem:[#allocation5 + $0x840] sm:$0xff]
        %v2996 = vld [vmem:[#allocation5 + $0x848] sm:$0xff]
        %v2997 = vld [vmem:[#allocation5 + $0x850] sm:$0xff]
        %v2998 = vld [vmem:[#allocation5 + $0x858] sm:$0xff]
        %v2999 = vld [vmem:[#allocation5 + $0x860] sm:$0xff]
        %v3000 = vld [vmem:[#allocation5 + $0x868] sm:$0xff]
        %v3001 = vld [vmem:[#allocation5 + $0x870] sm:$0xff]
        %v3002 = vld [vmem:[#allocation5 + $0x878] sm:$0xff]
        %v3003 = vld [vmem:[#allocation5 + $0x880] sm:$0xff]
        %v3004 = vld [vmem:[#allocation5 + $0x888] sm:$0xff]
        %v3005 = vld [vmem:[#allocation5 + $0x890] sm:$0xff]
        %v3006 = vld [vmem:[#allocation5 + $0x898] sm:$0xff]
        %v3007 = vld [vmem:[#allocation5 + $0x8a0] sm:$0xff]
        %v3008 = vld [vmem:[#allocation5 + $0x8a8] sm:$0xff]
        %v3009 = vld [vmem:[#allocation5 + $0x8b0] sm:$0xff]
        %v3010 = vld [vmem:[#allocation5 + $0x8b8] sm:$0x1]
        %v3011 = vld [vmem:[#allocation5 + $0x8c0] sm:$0x1]
        %v3012 = vld [vmem:[#allocation5 + $0x8c8] sm:$0x1]
        %vm3013 = vcmask 859136
        %v3015 = vsel %vm3013, %v2712, 0
        %v3018 = vsel %vm3013, %v2718, 0
        %v3021 = vsel %vm3013, %v2724, 0
        %v3024 = vsel %vm3013, %v2730, 0
        %vm3026 = vcmask 1040384
        %v3028 = vsel %vm3026, %v3010, 0
        %v3031 = vsel %vm3026, %v3011, 0
        %v3034 = vsel %vm3026, %v3012, 0
        %3036 = vmatprep.subr.mxu0 %v2732
        %3037 = vmatpush1.msra.mxu0 %v2731
        %3038 = vmatprep.subr.mxu0 %v2735
        %3039 = vmatpush1.msra.mxu0 %v2734
        %3040 = vmatprep.subr.mxu0 %v2738
        %3041 = vmatpush1.msra.mxu0 %v2737
        %3042 = vmatprep.subr.mxu0 %v2741
        %3043 = vmatpush1.msra.mxu0 %v2740
        %3044 = vmatprep.subr.mxu0 %v2744
        %3045 = vmatpush1.msra.mxu0 %v2743
        %3046 = vmatprep.subr.mxu0 %v2747
        %3047 = vmatpush1.msra.mxu0 %v2746
        %3048 = vmatprep.subr.mxu0 %v2750
        %3049 = vmatpush1.msra.mxu0 %v2749
        %3050 = vmatprep.subr.mxu0 %v2753
        %3051 = vmatpush1.msra.mxu0 %v2752
        %3052 = vmatprep.subr.mxu0 %v2756
        %3053 = vmatpush1.msra.mxu0 %v2755
        %3054 = vmatprep.subr.mxu0 %v2759
        %3055 = vmatpush1.msra.mxu0 %v2758
        %3056 = vmatprep.subr.mxu0 %v2762
        %3057 = vmatpush1.msra.mxu0 %v2761
        %3058 = vmatprep.subr.mxu0 %v2765
        %3059 = vmatpush1.msra.mxu0 %v2764
        %3060 = vmatprep.subr.mxu0 %v2768
        %3061 = vmatpush1.msra.mxu0 %v2767
        %3062 = vmatprep.subr.mxu0 %v2771
        %3063 = vmatpush1.msra.mxu0 %v2770
        %3064 = vmatprep.subr.mxu0 %v2774
        %3065 = vmatpush1.msra.mxu0 %v2773
        %3066 = vmatprep.subr.mxu0 %v2777
        %3067 = vmatpush1.msra.mxu0 %v2776
        %3068 = vmatprep.subr.mxu0 %v2780
        %3069 = vmatpush1.msra.mxu0 %v2779
        %3070 = vmatprep.subr.mxu0 %v2783
        %3071 = vmatpush1.msra.mxu0 %v2782
        %3072 = vmatprep.subr.mxu0 %v2786
        %3073 = vmatpush1.msra.mxu0 %v2785
        %3074 = vmatprep.subr.mxu0 %v2789
        %3075 = vmatpush1.msra.mxu0 %v2788
        %3076 = vmatprep.subr.mxu0 %v2792
        %3077 = vmatpush1.msra.mxu0 %v2791
        %3078 = vmatprep.subr.mxu0 %v2795
        %3079 = vmatpush1.msra.mxu0 %v2794
        %3080 = vmatprep.subr.mxu0 %v2798
        %3081 = vmatpush1.msra.mxu0 %v2797
        %3082 = vmatprep.subr.mxu0 %v2801
        %3083 = vmatpush1.msra.mxu0 %v2800
        %3084 = vmatprep.subr.mxu0 %v2804
        %3085 = vmatpush1.msra.mxu0 %v2803
        %3086 = vmatprep.subr.mxu0 %v2807
        %3087 = vmatpush1.msra.mxu0 %v2806
        %3088 = vmatprep.subr.mxu0 %v2810
        %3089 = vmatpush1.msra.mxu0 %v2809
        %3090 = vmatprep.subr.mxu0 %v2813
        %3091 = vmatpush1.msra.mxu0 %v2812
        %3092 = vmatprep.subr.mxu0 %v2816
        %3093 = vmatpush1.msra.mxu0 %v2815
        %3094 = vmatprep.subr.mxu0 %v2819
        %3095 = vmatpush1.msra.mxu0 %v2818
        %3096 = vmatprep.subr.mxu0 %v2822
        %3097 = vmatpush1.msra.mxu0 %v2821
        %3098 = vmatprep.subr.mxu0 %v2825
        %3099 = vmatpush1.msra.mxu0 %v2824
        %3100 = vmatprep.mubr.f32.mxu0 %v2708
        %3101 = vmatmul.mubr.f32.gmra.mrb[0].mxu0 %v2707
        %v3102 = vpop.f32.mrb[0].mxu0
        %v3103 = vadd.f32 0.0, %v3102
        %v3104 = vpop.f32.mrb[0].mxu0
        %v3105 = vadd.f32 0.0, %v3104
        %3106 = vmatprep.mubr.f32.mxu0 %v2714
        %3107 = vmatmul.mubr.f32.gmra.mrb[0].mxu0 %v2713
        %v3108 = vpop.f32.mrb[0].mxu0
        %v3109 = vadd.f32 0.0, %v3108
        %v3110 = vpop.f32.mrb[0].mxu0
        %v3111 = vadd.f32 0.0, %v3110
        %3112 = vmatprep.mubr.f32.mxu0 %v2720
        %3113 = vmatmul.mubr.f32.gmra.mrb[0].mxu0 %v2719
        %v3114 = vpop.f32.mrb[0].mxu0
        %v3115 = vadd.f32 0.0, %v3114
        %v3116 = vpop.f32.mrb[0].mxu0
        %v3117 = vadd.f32 0.0, %v3116
        %3118 = vmatprep.mubr.f32.mxu0 %v2726
        %3119 = vmatmul.mubr.f32.gmra.mrb[0].mxu0 %v2725
        %v3120 = vpop.f32.mrb[0].mxu0
        %v3121 = vadd.f32 0.0, %v3120
        %v3122 = vpop.f32.mrb[0].mxu0
        %v3123 = vadd.f32 0.0, %v3122
        %3124 = vdwg.mxu0
        %3125 = vmatprep.subr.mxu0 %v2828
        %3126 = vmatpush1.msra.mxu0 %v2827
        %3127 = vmatprep.subr.mxu0 %v2831
        %3128 = vmatpush1.msra.mxu0 %v2830
        %3129 = vmatprep.subr.mxu0 %v2834
        %3130 = vmatpush1.msra.mxu0 %v2833
        %3131 = vmatprep.subr.mxu0 %v2837
        %3132 = vmatpush1.msra.mxu0 %v2836
        %3133 = vmatprep.subr.mxu0 %v2840
        %3134 = vmatpush1.msra.mxu0 %v2839
        %3135 = vmatprep.subr.mxu0 %v2843
        %3136 = vmatpush1.msra.mxu0 %v2842
        %3137 = vmatprep.subr.mxu0 %v2846
        %3138 = vmatpush1.msra.mxu0 %v2845
        %3139 = vmatprep.subr.mxu0 %v2849
        %3140 = vmatpush1.msra.mxu0 %v2848
        %3141 = vmatprep.subr.mxu0 %v2852
        %3142 = vmatpush1.msra.mxu0 %v2851
        %3143 = vmatprep.subr.mxu0 %v2855
        %3144 = vmatpush1.msra.mxu0 %v2854
        %3145 = vmatprep.subr.mxu0 %v2858
        %3146 = vmatpush1.msra.mxu0 %v2857
        %3147 = vmatprep.subr.mxu0 %v2861
        %3148 = vmatpush1.msra.mxu0 %v2860
        %3149 = vmatprep.subr.mxu0 %v2864
        %3150 = vmatpush1.msra.mxu0 %v2863
        %3151 = vmatprep.subr.mxu0 %v2867
        %3152 = vmatpush1.msra.mxu0 %v2866
        %3153 = vmatprep.subr.mxu0 %v2870
        %3154 = vmatpush1.msra.mxu0 %v2869
        %3155 = vmatprep.subr.mxu0 %v2873
        %3156 = vmatpush1.msra.mxu0 %v2872
        %3157 = vmatprep.subr.mxu0 %v2876
        %3158 = vmatpush1.msra.mxu0 %v2875
        %3159 = vmatprep.subr.mxu0 %v2879
        %3160 = vmatpush1.msra.mxu0 %v2878
        %3161 = vmatprep.subr.mxu0 %v2882
        %3162 = vmatpush1.msra.mxu0 %v2881
        %3163 = vmatprep.subr.mxu0 %v2885
        %3164 = vmatpush1.msra.mxu0 %v2884
        %3165 = vmatprep.subr.mxu0 %v2888
        %3166 = vmatpush1.msra.mxu0 %v2887
        %3167 = vmatprep.subr.mxu0 %v2891
        %3168 = vmatpush1.msra.mxu0 %v2890
        %3169 = vmatprep.subr.mxu0 %v2894
        %3170 = vmatpush1.msra.mxu0 %v2893
        %3171 = vmatprep.subr.mxu0 %v2897
        %3172 = vmatpush1.msra.mxu0 %v2896
        %3173 = vmatprep.subr.mxu0 %v2900
        %3174 = vmatpush1.msra.mxu0 %v2899
        %3175 = vmatprep.subr.mxu0 %v2903
        %3176 = vmatpush1.msra.mxu0 %v2902
        %3177 = vmatprep.subr.mxu0 %v2906
        %3178 = vmatpush1.msra.mxu0 %v2905
        %3179 = vmatprep.subr.mxu0 %v2909
        %3180 = vmatpush1.msra.mxu0 %v2908
        %3181 = vmatprep.subr.mxu0 %v2912
        %3182 = vmatpush1.msra.mxu0 %v2911
        %3183 = vmatprep.subr.mxu0 %v2915
        %3184 = vmatpush1.msra.mxu0 %v2914
        %3185 = vmatprep.subr.mxu0 %v2918
        %3186 = vmatpush1.msra.mxu0 %v2917
        %3187 = vmatprep.subr.mxu0 %v2921
        %3188 = vmatpush1.msra.mxu0 %v2920
        %3189 = vmatprep.mubr.f32.mxu0 %v2710
        %3190 = vmatmul.mubr.f32.gmra.mrb[0].mxu0 %v2709
        %v3191 = vpop.f32.mrb[0].mxu0
        %v3192 = vadd.f32 %v3103, %v3191
        %v3193 = vpop.f32.mrb[0].mxu0
        %v3194 = vadd.f32 %v3105, %v3193
        %3195 = vmatprep.mubr.f32.mxu0 %v2716
        %3196 = vmatmul.mubr.f32.gmra.mrb[0].mxu0 %v2715
        %v3197 = vpop.f32.mrb[0].mxu0
        %v3198 = vadd.f32 %v3109, %v3197
        %v3199 = vpop.f32.mrb[0].mxu0
        %v3200 = vadd.f32 %v3111, %v3199
        %3201 = vmatprep.mubr.f32.mxu0 %v2722
        %3202 = vmatmul.mubr.f32.gmra.mrb[0].mxu0 %v2721
        %v3203 = vpop.f32.mrb[0].mxu0
        %v3204 = vadd.f32 %v3115, %v3203
        %v3205 = vpop.f32.mrb[0].mxu0
        %v3206 = vadd.f32 %v3117, %v3205
        %3207 = vmatprep.mubr.f32.mxu0 %v2728
        %3208 = vmatmul.mubr.f32.gmra.mrb[0].mxu0 %v2727
        %v3209 = vpop.f32.mrb[0].mxu0
        %v3210 = vadd.f32 %v3121, %v3209
        %v3211 = vpop.f32.mrb[0].mxu0
        %v3212 = vadd.f32 %v3123, %v3211
        %3213 = vdwg.mxu0
        %3214 = vmatprep.subr.mxu0 %v2924
        %3215 = vmatpush1.msra.mxu0 %v2923
        %3216 = vmatprep.subr.mxu0 %v2927
        %3217 = vmatpush1.msra.mxu0 %v2926
        %3218 = vmatprep.subr.mxu0 %v2930
        %3219 = vmatpush1.msra.mxu0 %v2929
        %3220 = vmatprep.subr.mxu0 %v2933
        %3221 = vmatpush1.msra.mxu0 %v2932
        %3222 = vmatprep.subr.mxu0 %v2936
        %3223 = vmatpush1.msra.mxu0 %v2935
        %3224 = vmatprep.subr.mxu0 %v2939
        %3225 = vmatpush1.msra.mxu0 %v2938
        %3226 = vmatprep.subr.mxu0 %v2942
        %3227 = vmatpush1.msra.mxu0 %v2941
        %3228 = vmatprep.subr.mxu0 %v2945
        %3229 = vmatpush1.msra.mxu0 %v2944
        %3230 = vmatprep.subr.mxu0 %v2948
        %3231 = vmatpush1.msra.mxu0 %v2947
        %3232 = vmatprep.subr.mxu0 %v2951
        %3233 = vmatpush1.msra.mxu0 %v2950
        %3234 = vmatprep.subr.mxu0 %v2954
        %3235 = vmatpush1.msra.mxu0 %v2953
        %3236 = vmatprep.subr.mxu0 %v2957
        %3237 = vmatpush1.msra.mxu0 %v2956
        %3238 = vmatprep.subr.mxu0 %v2960
        %3239 = vmatpush1.msra.mxu0 %v2959
        %3240 = vmatprep.subr.mxu0 %v2963
        %3241 = vmatpush1.msra.mxu0 %v2962
        %3242 = vmatprep.subr.mxu0 %v2966
        %3243 = vmatpush1.msra.mxu0 %v2965
        %3244 = vmatprep.subr.mxu0 %v2969
        %3245 = vmatpush1.msra.mxu0 %v2968
        %3246 = vmatprep.subr.mxu0 %v2972
        %3247 = vmatpush1.msra.mxu0 %v2971
        %3248 = vmatprep.subr.mxu0 %v2975
        %3249 = vmatpush1.msra.mxu0 %v2974
        %3250 = vmatprep.subr.mxu0 %v2978
        %3251 = vmatpush1.msra.mxu0 %v2977
        %3252 = vmatprep.subr.mxu0 %v2981
        %3253 = vmatpush1.msra.mxu0 %v2980
        %3254 = vmatprep.subr.mxu0 %v2984
        %3255 = vmatpush1.msra.mxu0 %v2983
        %3256 = vmatprep.subr.mxu0 %v2987
        %3257 = vmatpush1.msra.mxu0 %v2986
        %3258 = vmatprep.subr.mxu0 %v2990
        %3259 = vmatpush1.msra.mxu0 %v2989
        %3260 = vmatprep.subr.mxu0 %v2993
        %3261 = vmatpush1.msra.mxu0 %v2992
        %3262 = vmatprep.subr.mxu0 %v2996
        %3263 = vmatpush1.msra.mxu0 %v2995
        %3264 = vmatprep.subr.mxu0 %v2999
        %3265 = vmatpush1.msra.mxu0 %v2998
        %3266 = vmatprep.subr.mxu0 %v3002
        %3267 = vmatpush1.msra.mxu0 %v3001
        %3268 = vmatprep.subr.mxu0 %v3005
        %3269 = vmatpush1.msra.mxu0 %v3004
        %3270 = vmatprep.subr.mxu0 %v3008
        %3271 = vmatpush1.msra.mxu0 %v3007
        %3272 = vmatprep.subr.mxu0 %v3031
        %3273 = vmatpush1.msra.mxu0 %v3028
        %3274 = vmatprep.subr.mxu0 0.0
        %3275 = vmatpush1.msra.mxu0 0.0
        %3276 = vmatprep.subr.mxu0 0.0
        %3277 = vmatpush1.msra.mxu0 0.0
        %3278 = vmatprep.mubr.f32.mxu0 %v3015
        %3279 = vmatmul.mubr.f32.gmra.mrb[0].mxu0 %v2711
        %v3280 = vpop.f32.mrb[0].mxu0
        %v3281 = vadd.f32 %v3192, %v3280
        %v3282 = vpop.f32.mrb[0].mxu0
        %v3283 = vadd.f32 %v3194, %v3282
        %3284 = vmatprep.mubr.f32.mxu0 %v3018
        %3285 = vmatmul.mubr.f32.gmra.mrb[0].mxu0 %v2717
        %v3286 = vpop.f32.mrb[0].mxu0
        %v3287 = vadd.f32 %v3198, %v3286
        %v3288 = vpop.f32.mrb[0].mxu0
        %v3289 = vadd.f32 %v3200, %v3288
        %3290 = vmatprep.mubr.f32.mxu0 %v3021
        %3291 = vmatmul.mubr.f32.gmra.mrb[0].mxu0 %v2723
        %v3292 = vpop.f32.mrb[0].mxu0
        %v3293 = vadd.f32 %v3204, %v3292
        %v3294 = vpop.f32.mrb[0].mxu0
        %v3295 = vadd.f32 %v3206, %v3294
        %3296 = vmatprep.mubr.f32.mxu0 %v3024
        %3297 = vmatmul.mubr.f32.gmra.mrb[0].mxu0 %v2729
        %v3298 = vpop.f32.mrb[0].mxu0
        %v3299 = vadd.f32 %v3210, %v3298
        %v3300 = vpop.f32.mrb[0].mxu0
        %v3301 = vadd.f32 %v3212, %v3300
        %3302 = vdwg.mxu0
        %3303 = vmatprep.subr.mxu0 0.0
        %3304 = vmatpush1.msra.mxu0 %v2733
        %3305 = vmatprep.subr.mxu0 0.0
        %3306 = vmatpush1.msra.mxu0 %v2736
        %3307 = vmatprep.subr.mxu0 0.0
        %3308 = vmatpush1.msra.mxu0 %v2739
        %3309 = vmatprep.subr.mxu0 0.0
        %3310 = vmatpush1.msra.mxu0 %v2742
        %3311 = vmatprep.subr.mxu0 0.0
        %3312 = vmatpush1.msra.mxu0 %v2745
        %3313 = vmatprep.subr.mxu0 0.0
        %3314 = vmatpush1.msra.mxu0 %v2748
        %3315 = vmatprep.subr.mxu0 0.0
        %3316 = vmatpush1.msra.mxu0 %v2751
        %3317 = vmatprep.subr.mxu0 0.0
        %3318 = vmatpush1.msra.mxu0 %v2754
        %3319 = vmatprep.subr.mxu0 0.0
        %3320 = vmatpush1.msra.mxu0 %v2757
        %3321 = vmatprep.subr.mxu0 0.0
        %3322 = vmatpush1.msra.mxu0 %v2760
        %3323 = vmatprep.subr.mxu0 0.0
        %3324 = vmatpush1.msra.mxu0 %v2763
        %3325 = vmatprep.subr.mxu0 0.0
        %3326 = vmatpush1.msra.mxu0 %v2766
        %3327 = vmatprep.subr.mxu0 0.0
        %3328 = vmatpush1.msra.mxu0 %v2769
        %3329 = vmatprep.subr.mxu0 0.0
        %3330 = vmatpush1.msra.mxu0 %v2772
        %3331 = vmatprep.subr.mxu0 0.0
        %3332 = vmatpush1.msra.mxu0 %v2775
        %3333 = vmatprep.subr.mxu0 0.0
        %3334 = vmatpush1.msra.mxu0 %v2778
        %3335 = vmatprep.subr.mxu0 0.0
        %3336 = vmatpush1.msra.mxu0 %v2781
        %3337 = vmatprep.subr.mxu0 0.0
        %3338 = vmatpush1.msra.mxu0 %v2784
        %3339 = vmatprep.subr.mxu0 0.0
        %3340 = vmatpush1.msra.mxu0 %v2787
        %3341 = vmatprep.subr.mxu0 0.0
        %3342 = vmatpush1.msra.mxu0 %v2790
        %3343 = vmatprep.subr.mxu0 0.0
        %3344 = vmatpush1.msra.mxu0 %v2793
        %3345 = vmatprep.subr.mxu0 0.0
        %3346 = vmatpush1.msra.mxu0 %v2796
        %3347 = vmatprep.subr.mxu0 0.0
        %3348 = vmatpush1.msra.mxu0 %v2799
        %3349 = vmatprep.subr.mxu0 0.0
        %3350 = vmatpush1.msra.mxu0 %v2802
        %3351 = vmatprep.subr.mxu0 0.0
        %3352 = vmatpush1.msra.mxu0 %v2805
        %3353 = vmatprep.subr.mxu0 0.0
        %3354 = vmatpush1.msra.mxu0 %v2808
        %3355 = vmatprep.subr.mxu0 0.0
        %3356 = vmatpush1.msra.mxu0 %v2811
        %3357 = vmatprep.subr.mxu0 0.0
        %3358 = vmatpush1.msra.mxu0 %v2814
        %3359 = vmatprep.subr.mxu0 0.0
        %3360 = vmatpush1.msra.mxu0 %v2817
        %3361 = vmatprep.subr.mxu0 0.0
        %3362 = vmatpush1.msra.mxu0 %v2820
        %3363 = vmatprep.subr.mxu0 0.0
        %3364 = vmatpush1.msra.mxu0 %v2823
        %3365 = vmatprep.subr.mxu0 0.0
        %3366 = vmatpush1.msra.mxu0 %v2826
        %3367 = vmatprep.mubr.f32.mxu0 %v2708
        %3368 = vmatmul.mubr.f32.gmra.mrb[0].mxu0 %v2707
        %v3369 = vpop.f32.mrb[0].mxu0
        %v3370 = vadd.f32 0.0, %v3369
        %v3371 = vpop.f32.mrb[0].mxu0
        %3372 = vmatprep.mubr.f32.mxu0 %v2714
        %3373 = vmatmul.mubr.f32.gmra.mrb[0].mxu0 %v2713
        %v3374 = vpop.f32.mrb[0].mxu0
        %v3375 = vadd.f32 0.0, %v3374
        %v3376 = vpop.f32.mrb[0].mxu0
        %3377 = vmatprep.mubr.f32.mxu0 %v2720
        %3378 = vmatmul.mubr.f32.gmra.mrb[0].mxu0 %v2719
        %v3379 = vpop.f32.mrb[0].mxu0
        %v3380 = vadd.f32 0.0, %v3379
        %v3381 = vpop.f32.mrb[0].mxu0
        %3382 = vmatprep.mubr.f32.mxu0 %v2726
        %3383 = vmatmul.mubr.f32.gmra.mrb[0].mxu0 %v2725
        %v3384 = vpop.f32.mrb[0].mxu0
        %v3385 = vadd.f32 0.0, %v3384
        %v3386 = vpop.f32.mrb[0].mxu0
        %3387 = vdwg.mxu0
        %3388 = vmatprep.subr.mxu0 0.0
        %3389 = vmatpush1.msra.mxu0 %v2829
        %3390 = vmatprep.subr.mxu0 0.0
        %3391 = vmatpush1.msra.mxu0 %v2832
        %3392 = vmatprep.subr.mxu0 0.0
        %3393 = vmatpush1.msra.mxu0 %v2835
        %3394 = vmatprep.subr.mxu0 0.0
        %3395 = vmatpush1.msra.mxu0 %v2838
        %3396 = vmatprep.subr.mxu0 0.0
        %3397 = vmatpush1.msra.mxu0 %v2841
        %3398 = vmatprep.subr.mxu0 0.0
        %3399 = vmatpush1.msra.mxu0 %v2844
        %3400 = vmatprep.subr.mxu0 0.0
        %3401 = vmatpush1.msra.mxu0 %v2847
        %3402 = vmatprep.subr.mxu0 0.0
        %3403 = vmatpush1.msra.mxu0 %v2850
        %3404 = vmatprep.subr.mxu0 0.0
        %3405 = vmatpush1.msra.mxu0 %v2853
        %3406 = vmatprep.subr.mxu0 0.0
        %3407 = vmatpush1.msra.mxu0 %v2856
        %3408 = vmatprep.subr.mxu0 0.0
        %3409 = vmatpush1.msra.mxu0 %v2859
        %3410 = vmatprep.subr.mxu0 0.0
        %3411 = vmatpush1.msra.mxu0 %v2862
        %3412 = vmatprep.subr.mxu0 0.0
        %3413 = vmatpush1.msra.mxu0 %v2865
        %3414 = vmatprep.subr.mxu0 0.0
        %3415 = vmatpush1.msra.mxu0 %v2868
        %3416 = vmatprep.subr.mxu0 0.0
        %3417 = vmatpush1.msra.mxu0 %v2871
        %3418 = vmatprep.subr.mxu0 0.0
        %3419 = vmatpush1.msra.mxu0 %v2874
        %3420 = vmatprep.subr.mxu0 0.0
        %3421 = vmatpush1.msra.mxu0 %v2877
        %3422 = vmatprep.subr.mxu0 0.0
        %3423 = vmatpush1.msra.mxu0 %v2880
        %3424 = vmatprep.subr.mxu0 0.0
        %3425 = vmatpush1.msra.mxu0 %v2883
        %3426 = vmatprep.subr.mxu0 0.0
        %3427 = vmatpush1.msra.mxu0 %v2886
        %3428 = vmatprep.subr.mxu0 0.0
        %3429 = vmatpush1.msra.mxu0 %v2889
        %3430 = vmatprep.subr.mxu0 0.0
        %3431 = vmatpush1.msra.mxu0 %v2892
        %3432 = vmatprep.subr.mxu0 0.0
        %3433 = vmatpush1.msra.mxu0 %v2895
        %3434 = vmatprep.subr.mxu0 0.0
        %3435 = vmatpush1.msra.mxu0 %v2898
        %3436 = vmatprep.subr.mxu0 0.0
        %3437 = vmatpush1.msra.mxu0 %v2901
        %3438 = vmatprep.subr.mxu0 0.0
        %3439 = vmatpush1.msra.mxu0 %v2904
        %3440 = vmatprep.subr.mxu0 0.0
        %3441 = vmatpush1.msra.mxu0 %v2907
        %3442 = vmatprep.subr.mxu0 0.0
        %3443 = vmatpush1.msra.mxu0 %v2910
        %3444 = vmatprep.subr.mxu0 0.0
        %3445 = vmatpush1.msra.mxu0 %v2913
        %3446 = vmatprep.subr.mxu0 0.0
        %3447 = vmatpush1.msra.mxu0 %v2916
        %3448 = vmatprep.subr.mxu0 0.0
        %3449 = vmatpush1.msra.mxu0 %v2919
        %3450 = vmatprep.subr.mxu0 0.0
        %3451 = vmatpush1.msra.mxu0 %v2922
        %3452 = vmatprep.mubr.f32.mxu0 %v2710
        %3453 = vmatmul.mubr.f32.gmra.mrb[0].mxu0 %v2709
        %v3454 = vpop.f32.mrb[0].mxu0
        %v3455 = vadd.f32 %v3370, %v3454
        %v3456 = vpop.f32.mrb[0].mxu0
        %3457 = vmatprep.mubr.f32.mxu0 %v2716
        %3458 = vmatmul.mubr.f32.gmra.mrb[0].mxu0 %v2715
        %v3459 = vpop.f32.mrb[0].mxu0
        %v3460 = vadd.f32 %v3375, %v3459
        %v3461 = vpop.f32.mrb[0].mxu0
        %3462 = vmatprep.mubr.f32.mxu0 %v2722
        %3463 = vmatmul.mubr.f32.gmra.mrb[0].mxu0 %v2721
        %v3464 = vpop.f32.mrb[0].mxu0
        %v3465 = vadd.f32 %v3380, %v3464
        %v3466 = vpop.f32.mrb[0].mxu0
        %3467 = vmatprep.mubr.f32.mxu0 %v2728
        %3468 = vmatmul.mubr.f32.gmra.mrb[0].mxu0 %v2727
        %v3469 = vpop.f32.mrb[0].mxu0
        %v3470 = vadd.f32 %v3385, %v3469
        %v3471 = vpop.f32.mrb[0].mxu0
        %3472 = vdwg.mxu0
        %3473 = vmatprep.subr.mxu0 0.0
        %3474 = vmatpush1.msra.mxu0 %v2925
        %3475 = vmatprep.subr.mxu0 0.0
        %3476 = vmatpush1.msra.mxu0 %v2928
        %3477 = vmatprep.subr.mxu0 0.0
        %3478 = vmatpush1.msra.mxu0 %v2931
        %3479 = vmatprep.subr.mxu0 0.0
        %3480 = vmatpush1.msra.mxu0 %v2934
        %3481 = vmatprep.subr.mxu0 0.0
        %3482 = vmatpush1.msra.mxu0 %v2937
        %3483 = vmatprep.subr.mxu0 0.0
        %3484 = vmatpush1.msra.mxu0 %v2940
        %3485 = vmatprep.subr.mxu0 0.0
        %3486 = vmatpush1.msra.mxu0 %v2943
        %3487 = vmatprep.subr.mxu0 0.0
        %3488 = vmatpush1.msra.mxu0 %v2946
        %3489 = vmatprep.subr.mxu0 0.0
        %3490 = vmatpush1.msra.mxu0 %v2949
        %3491 = vmatprep.subr.mxu0 0.0
        %3492 = vmatpush1.msra.mxu0 %v2952
        %3493 = vmatprep.subr.mxu0 0.0
        %3494 = vmatpush1.msra.mxu0 %v2955
        %3495 = vmatprep.subr.mxu0 0.0
        %3496 = vmatpush1.msra.mxu0 %v2958
        %3497 = vmatprep.subr.mxu0 0.0
        %3498 = vmatpush1.msra.mxu0 %v2961
        %3499 = vmatprep.subr.mxu0 0.0
        %3500 = vmatpush1.msra.mxu0 %v2964
        %3501 = vmatprep.subr.mxu0 0.0
        %3502 = vmatpush1.msra.mxu0 %v2967
        %3503 = vmatprep.subr.mxu0 0.0
        %3504 = vmatpush1.msra.mxu0 %v2970
        %3505 = vmatprep.subr.mxu0 0.0
        %3506 = vmatpush1.msra.mxu0 %v2973
        %3507 = vmatprep.subr.mxu0 0.0
        %3508 = vmatpush1.msra.mxu0 %v2976
        %3509 = vmatprep.subr.mxu0 0.0
        %3510 = vmatpush1.msra.mxu0 %v2979
        %3511 = vmatprep.subr.mxu0 0.0
        %3512 = vmatpush1.msra.mxu0 %v2982
        %3513 = vmatprep.subr.mxu0 0.0
        %3514 = vmatpush1.msra.mxu0 %v2985
        %3515 = vmatprep.subr.mxu0 0.0
        %3516 = vmatpush1.msra.mxu0 %v2988
        %3517 = vmatprep.subr.mxu0 0.0
        %3518 = vmatpush1.msra.mxu0 %v2991
        %3519 = vmatprep.subr.mxu0 0.0
        %3520 = vmatpush1.msra.mxu0 %v2994
        %3521 = vmatprep.subr.mxu0 0.0
        %3522 = vmatpush1.msra.mxu0 %v2997
        %3523 = vmatprep.subr.mxu0 0.0
        %3524 = vmatpush1.msra.mxu0 %v3000
        %3525 = vmatprep.subr.mxu0 0.0
        %3526 = vmatpush1.msra.mxu0 %v3003
        %3527 = vmatprep.subr.mxu0 0.0
        %3528 = vmatpush1.msra.mxu0 %v3006
        %3529 = vmatprep.subr.mxu0 0.0
        %3530 = vmatpush1.msra.mxu0 %v3009
        %3531 = vmatprep.subr.mxu0 0.0
        %3532 = vmatpush1.msra.mxu0 %v3034
        %3533 = vmatprep.subr.mxu0 0.0
        %3534 = vmatpush1.msra.mxu0 0.0
        %3535 = vmatprep.subr.mxu0 0.0
        %3536 = vmatpush1.msra.mxu0 0.0
        %3537 = vmatprep.mubr.f32.mxu0 %v3015
        %3538 = vmatmul.mubr.f32.gmra.mrb[0].mxu0 %v2711
        %v3539 = vpop.f32.mrb[0].mxu0
        %v3540 = vadd.f32 %v3455, %v3539
        %v3541 = vpop.f32.mrb[0].mxu0
        %3542 = vmatprep.mubr.f32.mxu0 %v3018
        %3543 = vmatmul.mubr.f32.gmra.mrb[0].mxu0 %v2717
        %v3544 = vpop.f32.mrb[0].mxu0
        %v3545 = vadd.f32 %v3460, %v3544
        %v3546 = vpop.f32.mrb[0].mxu0
        %3547 = vmatprep.mubr.f32.mxu0 %v3021
        %3548 = vmatmul.mubr.f32.gmra.mrb[0].mxu0 %v2723
        %v3549 = vpop.f32.mrb[0].mxu0
        %v3550 = vadd.f32 %v3465, %v3549
        %v3551 = vpop.f32.mrb[0].mxu0
        %3552 = vmatprep.mubr.f32.mxu0 %v3024
        %3553 = vmatmul.mubr.f32.gmra.mrb[0].mxu0 %v2729
        %v3554 = vpop.f32.mrb[0].mxu0
        %v3555 = vadd.f32 %v3470, %v3554
        %v3556 = vpop.f32.mrb[0].mxu0
        %3557 = vdwg.mxu0
        %v3570 = vrot.slane %v3281, 7
        %v3571 = vrot.slane %v3283, 7
        %v3572 = vrot.slane %v3540, 7
        %v3573 = vrot.slane %v3287, 7
        %v3574 = vsel %vm3026, %v3570, %v3573
        %v3575 = vrot.slane %v3289, 7
        %v3576 = vsel %vm3026, %v3571, %v3575
        %v3577 = vrot.slane %v3545, 7
        %v3578 = vsel %vm3026, %v3572, %v3577
        %v3579 = vrot.slane %v3293, 7
        %v3580 = vsel %vm3026, %v3573, %v3579
        %v3581 = vrot.slane %v3295, 7
        %v3582 = vsel %vm3026, %v3575, %v3581
        %v3583 = vrot.slane %v3550, 7
        %v3584 = vsel %vm3026, %v3577, %v3583
        %v3585 = vrot.slane %v3299, 7
        %v3586 = vsel %vm3026, %v3579, %v3585
        %v3587 = vrot.slane %v3301, 7
        %v3588 = vsel %vm3026, %v3581, %v3587
        %v3589 = vrot.slane %v3555, 7
        %v3590 = vsel %vm3026, %v3583, %v3589
        %3591 = vrot.lane.b32.xlu0 %v3570, 127
        %v3592 = vpop.permute.xlu0 %3591
        %3593 = vrot.lane.b32.xlu0 %v3571, 127
        %v3594 = vpop.permute.xlu0 %3593
        %3595 = vrot.lane.b32.xlu0 %v3572, 127
        %v3596 = vpop.permute.xlu0 %3595
        %3597 = vrot.lane.b32.xlu0 %v3574, 127
        %v3598 = vpop.permute.xlu0 %3597
        %3599 = vrot.lane.b32.xlu0 %v3576, 127
        %v3600 = vpop.permute.xlu0 %3599
        %3601 = vrot.lane.b32.xlu0 %v3578, 127
        %v3602 = vpop.permute.xlu0 %3601
        %3603 = vrot.lane.b32.xlu0 %v3580, 127
        %v3604 = vpop.permute.xlu0 %3603
        %3605 = vrot.lane.b32.xlu0 %v3582, 127
        %v3606 = vpop.permute.xlu0 %3605
        %3607 = vrot.lane.b32.xlu0 %v3584, 127
        %v3608 = vpop.permute.xlu0 %3607
        %3609 = vrot.lane.b32.xlu0 %v3586, 127
        %v3610 = vpop.permute.xlu0 %3609
        %3611 = vrot.lane.b32.xlu0 %v3588, 127
        %v3612 = vpop.permute.xlu0 %3611
        %3613 = vrot.lane.b32.xlu0 %v3590, 127
        %v3614 = vpop.permute.xlu0 %3613
        %v3615 = vsel %vm973, %v3592, %v3594
        %v3616 = vsel %vm973, %v3594, %v3596
        %v3617 = vsel %vm973, %v3598, %v3600
        %v3618 = vsel %vm973, %v3600, %v3602
        %v3619 = vsel %vm973, %v3604, %v3606
        %v3620 = vsel %vm973, %v3606, %v3608
        %v3621 = vsel %vm973, %v3610, %v3612
        %v3622 = vsel %vm973, %v3612, %v3614
        %vm3635 = vcmask 1041408
        %v3636 = vrot.slane %v3281, 6
        %v3637 = vrot.slane %v3283, 6
        %v3638 = vrot.slane %v3540, 6
        %v3639 = vrot.slane %v3287, 6
        %v3640 = vsel %vm3635, %v3636, %v3639
        %v3641 = vrot.slane %v3289, 6
        %v3642 = vsel %vm3635, %v3637, %v3641
        %v3643 = vrot.slane %v3545, 6
        %v3644 = vsel %vm3635, %v3638, %v3643
        %v3645 = vrot.slane %v3293, 6
        %v3646 = vsel %vm3635, %v3639, %v3645
        %v3647 = vrot.slane %v3295, 6
        %v3648 = vsel %vm3635, %v3641, %v3647
        %v3649 = vrot.slane %v3550, 6
        %v3650 = vsel %vm3635, %v3643, %v3649
        %v3651 = vrot.slane %v3299, 6
        %v3652 = vsel %vm3635, %v3645, %v3651
        %v3653 = vrot.slane %v3301, 6
        %v3654 = vsel %vm3635, %v3647, %v3653
        %v3655 = vrot.slane %v3555, 6
        %v3656 = vsel %vm3635, %v3649, %v3655
        %3657 = vrot.lane.b32.xlu0 %v3636, 126
        %v3658 = vpop.permute.xlu0 %3657
        %3659 = vrot.lane.b32.xlu0 %v3637, 126
        %v3660 = vpop.permute.xlu0 %3659
        %3661 = vrot.lane.b32.xlu0 %v3638, 126
        %v3662 = vpop.permute.xlu0 %3661
        %3663 = vrot.lane.b32.xlu0 %v3640, 126
        %v3664 = vpop.permute.xlu0 %3663
        %3665 = vrot.lane.b32.xlu0 %v3642, 126
        %v3666 = vpop.permute.xlu0 %3665
        %3667 = vrot.lane.b32.xlu0 %v3644, 126
        %v3668 = vpop.permute.xlu0 %3667
        %3669 = vrot.lane.b32.xlu0 %v3646, 126
        %v3670 = vpop.permute.xlu0 %3669
        %3671 = vrot.lane.b32.xlu0 %v3648, 126
        %v3672 = vpop.permute.xlu0 %3671
        %3673 = vrot.lane.b32.xlu0 %v3650, 126
        %v3674 = vpop.permute.xlu0 %3673
        %3675 = vrot.lane.b32.xlu0 %v3652, 126
        %v3676 = vpop.permute.xlu0 %3675
        %3677 = vrot.lane.b32.xlu0 %v3654, 126
        %v3678 = vpop.permute.xlu0 %3677
        %3679 = vrot.lane.b32.xlu0 %v3656, 126
        %v3680 = vpop.permute.xlu0 %3679
        %v3681 = vsel %vm1154, %v3658, %v3660
        %v3682 = vsel %vm1154, %v3660, %v3662
        %v3683 = vsel %vm1154, %v3664, %v3666
        %v3684 = vsel %vm1154, %v3666, %v3668
        %v3685 = vsel %vm1154, %v3670, %v3672
        %v3686 = vsel %vm1154, %v3672, %v3674
        %v3687 = vsel %vm1154, %v3676, %v3678
        %v3688 = vsel %vm1154, %v3678, %v3680
        %vm3701 = vcmask 1042432
        %v3702 = vrot.slane %v3281, 5
        %v3703 = vrot.slane %v3283, 5
        %v3704 = vrot.slane %v3540, 5
        %v3705 = vrot.slane %v3287, 5
        %v3706 = vsel %vm3701, %v3702, %v3705
        %v3707 = vrot.slane %v3289, 5
        %v3708 = vsel %vm3701, %v3703, %v3707
        %v3709 = vrot.slane %v3545, 5
        %v3710 = vsel %vm3701, %v3704, %v3709
        %v3711 = vrot.slane %v3293, 5
        %v3712 = vsel %vm3701, %v3705, %v3711
        %v3713 = vrot.slane %v3295, 5
        %v3714 = vsel %vm3701, %v3707, %v3713
        %v3715 = vrot.slane %v3550, 5
        %v3716 = vsel %vm3701, %v3709, %v3715
        %v3717 = vrot.slane %v3299, 5
        %v3718 = vsel %vm3701, %v3711, %v3717
        %v3719 = vrot.slane %v3301, 5
        %v3720 = vsel %vm3701, %v3713, %v3719
        %v3721 = vrot.slane %v3555, 5
        %v3722 = vsel %vm3701, %v3715, %v3721
        %3723 = vrot.lane.b32.xlu0 %v3702, 125
        %v3724 = vpop.permute.xlu0 %3723
        %3725 = vrot.lane.b32.xlu0 %v3703, 125
        %v3726 = vpop.permute.xlu0 %3725
        %3727 = vrot.lane.b32.xlu0 %v3704, 125
        %v3728 = vpop.permute.xlu0 %3727
        %3729 = vrot.lane.b32.xlu0 %v3706, 125
        %v3730 = vpop.permute.xlu0 %3729
        %3731 = vrot.lane.b32.xlu0 %v3708, 125
        %v3732 = vpop.permute.xlu0 %3731
        %3733 = vrot.lane.b32.xlu0 %v3710, 125
        %v3734 = vpop.permute.xlu0 %3733
        %3735 = vrot.lane.b32.xlu0 %v3712, 125
        %v3736 = vpop.permute.xlu0 %3735
        %3737 = vrot.lane.b32.xlu0 %v3714, 125
        %v3738 = vpop.permute.xlu0 %3737
        %3739 = vrot.lane.b32.xlu0 %v3716, 125
        %v3740 = vpop.permute.xlu0 %3739
        %3741 = vrot.lane.b32.xlu0 %v3718, 125
        %v3742 = vpop.permute.xlu0 %3741
        %3743 = vrot.lane.b32.xlu0 %v3720, 125
        %v3744 = vpop.permute.xlu0 %3743
        %3745 = vrot.lane.b32.xlu0 %v3722, 125
        %v3746 = vpop.permute.xlu0 %3745
        %v3747 = vsel %vm1335, %v3724, %v3726
        %v3748 = vsel %vm1335, %v3726, %v3728
        %v3749 = vsel %vm1335, %v3730, %v3732
        %v3750 = vsel %vm1335, %v3732, %v3734
        %v3751 = vsel %vm1335, %v3736, %v3738
        %v3752 = vsel %vm1335, %v3738, %v3740
        %v3753 = vsel %vm1335, %v3742, %v3744
        %v3754 = vsel %vm1335, %v3744, %v3746
        %vm3767 = vcmask 1043456
        %v3768 = vrot.slane %v3281, 4
        %v3769 = vrot.slane %v3283, 4
        %v3770 = vrot.slane %v3540, 4
        %v3771 = vrot.slane %v3287, 4
        %v3772 = vsel %vm3767, %v3768, %v3771
        %v3773 = vrot.slane %v3289, 4
        %v3774 = vsel %vm3767, %v3769, %v3773
        %v3775 = vrot.slane %v3545, 4
        %v3776 = vsel %vm3767, %v3770, %v3775
        %v3777 = vrot.slane %v3293, 4
        %v3778 = vsel %vm3767, %v3771, %v3777
        %v3779 = vrot.slane %v3295, 4
        %v3780 = vsel %vm3767, %v3773, %v3779
        %v3781 = vrot.slane %v3550, 4
        %v3782 = vsel %vm3767, %v3775, %v3781
        %v3783 = vrot.slane %v3299, 4
        %v3784 = vsel %vm3767, %v3777, %v3783
        %v3785 = vrot.slane %v3301, 4
        %v3786 = vsel %vm3767, %v3779, %v3785
        %v3787 = vrot.slane %v3555, 4
        %v3788 = vsel %vm3767, %v3781, %v3787
        %3789 = vrot.lane.b32.xlu0 %v3768, 124
        %v3790 = vpop.permute.xlu0 %3789
        %3791 = vrot.lane.b32.xlu0 %v3769, 124
        %v3792 = vpop.permute.xlu0 %3791
        %3793 = vrot.lane.b32.xlu0 %v3770, 124
        %v3794 = vpop.permute.xlu0 %3793
        %3795 = vrot.lane.b32.xlu0 %v3772, 124
        %v3796 = vpop.permute.xlu0 %3795
        %3797 = vrot.lane.b32.xlu0 %v3774, 124
        %v3798 = vpop.permute.xlu0 %3797
        %3799 = vrot.lane.b32.xlu0 %v3776, 124
        %v3800 = vpop.permute.xlu0 %3799
        %3801 = vrot.lane.b32.xlu0 %v3778, 124
        %v3802 = vpop.permute.xlu0 %3801
        %3803 = vrot.lane.b32.xlu0 %v3780, 124
        %v3804 = vpop.permute.xlu0 %3803
        %3805 = vrot.lane.b32.xlu0 %v3782, 124
        %v3806 = vpop.permute.xlu0 %3805
        %3807 = vrot.lane.b32.xlu0 %v3784, 124
        %v3808 = vpop.permute.xlu0 %3807
        %3809 = vrot.lane.b32.xlu0 %v3786, 124
        %v3810 = vpop.permute.xlu0 %3809
        %3811 = vrot.lane.b32.xlu0 %v3788, 124
        %v3812 = vpop.permute.xlu0 %3811
        %v3813 = vsel %vm1516, %v3790, %v3792
        %v3814 = vsel %vm1516, %v3792, %v3794
        %v3815 = vsel %vm1516, %v3796, %v3798
        %v3816 = vsel %vm1516, %v3798, %v3800
        %v3817 = vsel %vm1516, %v3802, %v3804
        %v3818 = vsel %vm1516, %v3804, %v3806
        %v3819 = vsel %vm1516, %v3808, %v3810
        %v3820 = vsel %vm1516, %v3810, %v3812
        %v3830 = vsel %vm3026, %v3299, %v3615
        %v3831 = vsel %vm3026, %v3301, %v3616
        %v3832 = vsel %vm3026, %v3555, %v3596
        %v3833 = vsel %vm3635, %v3621, %v3681
        %v3834 = vsel %vm3635, %v3622, %v3682
        %v3835 = vsel %vm3635, %v3614, %v3662
        %v3836 = vsel %vm3701, %v3687, %v3747
        %v3837 = vsel %vm3701, %v3688, %v3748
        %v3838 = vsel %vm3701, %v3680, %v3728
        %v3839 = vsel %vm3767, %v3753, %v3813
        %v3840 = vsel %vm3767, %v3754, %v3814
        %v3841 = vsel %vm3767, %v3746, %v3794
        %v3842 = vld [vmem:[#allocation7] sm:$0xff]
        %v3843 = vld [vmem:[#allocation7 + $0x8] sm:$0xff]
        %v3844 = vld [vmem:[#allocation7 + $0x10] sm:$0xff]
        %v3845 = vld [vmem:[#allocation7 + $0x18] sm:$0xff]
        %v3846 = vld [vmem:[#allocation7 + $0x20] sm:$0xff]
        %v3847 = vld [vmem:[#allocation7 + $0x28] sm:$0xff]
        %v3848 = vld [vmem:[#allocation7 + $0x30] sm:$0x3]
        %v3850 = vsel %vm1335, %v3842, 0
        %v3853 = vsel %vm1335, %v3843, 0
        %v3856 = vsel %vm1335, %v3844, 0
        %v3859 = vsel %vm1335, %v3845, 0
        %v3862 = vsel %vm1335, %v3846, 0
        %v3865 = vsel %vm1335, %v3847, 0
        %v3868 = vsel %vm1335, %v3848, 0
        %vm3870 = vcmask 1044480
        %v3871 = vsel %vm3870, %v3819, 0
        %v3873 = vsel %vm3870, %v3820, 0
        %v3875 = vsel %vm3870, %v3812, 0
        %3877 = vmatprep.subr.mxu0 %v3283
        %3878 = vmatpush1.msra.mxu0 %v3281
        %3879 = vmatprep.subr.mxu0 %v3289
        %3880 = vmatpush1.msra.mxu0 %v3287
        %3881 = vmatprep.subr.mxu0 %v3295
        %3882 = vmatpush1.msra.mxu0 %v3293
        %3883 = vmatprep.subr.mxu0 %v3831
        %3884 = vmatpush1.msra.mxu0 %v3830
        %3885 = vmatprep.subr.mxu0 %v3618
        %3886 = vmatpush1.msra.mxu0 %v3617
        %3887 = vmatprep.subr.mxu0 %v3620
        %3888 = vmatpush1.msra.mxu0 %v3619
        %3889 = vmatprep.subr.mxu0 %v3834
        %3890 = vmatpush1.msra.mxu0 %v3833
        %3891 = vmatprep.subr.mxu0 %v3684
        %3892 = vmatpush1.msra.mxu0 %v3683
        %3893 = vmatprep.subr.mxu0 %v3686
        %3894 = vmatpush1.msra.mxu0 %v3685
        %3895 = vmatprep.subr.mxu0 %v3837
        %3896 = vmatpush1.msra.mxu0 %v3836
        %3897 = vmatprep.subr.mxu0 %v3750
        %3898 = vmatpush1.msra.mxu0 %v3749
        %3899 = vmatprep.subr.mxu0 %v3752
        %3900 = vmatpush1.msra.mxu0 %v3751
        %3901 = vmatprep.subr.mxu0 %v3840
        %3902 = vmatpush1.msra.mxu0 %v3839
        %3903 = vmatprep.subr.mxu0 %v3816
        %3904 = vmatpush1.msra.mxu0 %v3815
        %3905 = vmatprep.subr.mxu0 %v3818
        %3906 = vmatpush1.msra.mxu0 %v3817
        %3907 = vmatprep.subr.mxu0 %v3873
        %3908 = vmatpush1.msra.mxu0 %v3871
        %3909 = vmatprep.subr.mxu0 0.0
        %3910 = vmatpush1.msra.mxu0 0.0
        %3911 = vmatprep.subr.mxu0 0.0
        %3912 = vmatpush1.msra.mxu0 0.0
        %3913 = vmatprep.subr.mxu0 0.0
        %3914 = vmatpush1.msra.mxu0 0.0
        %3915 = vmatprep.subr.mxu0 0.0
        %3916 = vmatpush1.msra.mxu0 0.0
        %3917 = vmatprep.subr.mxu0 0.0
        %3918 = vmatpush1.msra.mxu0 0.0
        %3919 = vmatprep.subr.mxu0 0.0
        %3920 = vmatpush1.msra.mxu0 0.0
        %3921 = vmatprep.subr.mxu0 0.0
        %3922 = vmatpush1.msra.mxu0 0.0
        %3923 = vmatprep.subr.mxu0 0.0
        %3924 = vmatpush1.msra.mxu0 0.0
        %3925 = vmatprep.subr.mxu0 0.0
        %3926 = vmatpush1.msra.mxu0 0.0
        %3927 = vmatprep.subr.mxu0 0.0
        %3928 = vmatpush1.msra.mxu0 0.0
        %3929 = vmatprep.subr.mxu0 0.0
        %3930 = vmatpush1.msra.mxu0 0.0
        %3931 = vmatprep.subr.mxu0 0.0
        %3932 = vmatpush1.msra.mxu0 0.0
        %3933 = vmatprep.subr.mxu0 0.0
        %3934 = vmatpush1.msra.mxu0 0.0
        %3935 = vmatprep.subr.mxu0 0.0
        %3936 = vmatpush1.msra.mxu0 0.0
        %3937 = vmatprep.subr.mxu0 0.0
        %3938 = vmatpush1.msra.mxu0 0.0
        %3939 = vmatprep.subr.mxu0 0.0
        %3940 = vmatpush1.msra.mxu0 0.0
        %3941 = vmatprep.mubr.f32.mxu0 0.0
        %3942 = vmatmul.mubr.f32.gmra.mrb[0].mxu0 %v3850
        %v3943 = vpop.f32.mrb[0].mxu0
        %v3944 = vadd.f32 0.0, %v3943
        %v3945 = vpop.f32.mrb[0].mxu0
        %v3946 = vadd.f32 0.0, %v3945
        %3947 = vmatprep.mubr.f32.mxu0 0.0
        %3948 = vmatmul.mubr.f32.gmra.mrb[0].mxu0 %v3853
        %v3949 = vpop.f32.mrb[0].mxu0
        %v3950 = vadd.f32 0.0, %v3949
        %v3951 = vpop.f32.mrb[0].mxu0
        %v3952 = vadd.f32 0.0, %v3951
        %3953 = vmatprep.mubr.f32.mxu0 0.0
        %3954 = vmatmul.mubr.f32.gmra.mrb[0].mxu0 %v3856
        %v3955 = vpop.f32.mrb[0].mxu0
        %v3956 = vadd.f32 0.0, %v3955
        %v3957 = vpop.f32.mrb[0].mxu0
        %v3958 = vadd.f32 0.0, %v3957
        %3959 = vmatprep.mubr.f32.mxu0 0.0
        %3960 = vmatmul.mubr.f32.gmra.mrb[0].mxu0 %v3859
        %v3961 = vpop.f32.mrb[0].mxu0
        %v3962 = vadd.f32 0.0, %v3961
        %v3963 = vpop.f32.mrb[0].mxu0
        %v3964 = vadd.f32 0.0, %v3963
        %3965 = vmatprep.mubr.f32.mxu0 0.0
        %3966 = vmatmul.mubr.f32.gmra.mrb[0].mxu0 %v3862
        %v3967 = vpop.f32.mrb[0].mxu0
        %v3968 = vadd.f32 0.0, %v3967
        %v3969 = vpop.f32.mrb[0].mxu0
        %v3970 = vadd.f32 0.0, %v3969
        %3971 = vmatprep.mubr.f32.mxu0 0.0
        %3972 = vmatmul.mubr.f32.gmra.mrb[0].mxu0 %v3865
        %v3973 = vpop.f32.mrb[0].mxu0
        %v3974 = vadd.f32 0.0, %v3973
        %v3975 = vpop.f32.mrb[0].mxu0
        %v3976 = vadd.f32 0.0, %v3975
        %3977 = vmatprep.mubr.f32.mxu0 0.0
        %3978 = vmatmul.mubr.f32.gmra.mrb[0].mxu0 %v3868
        %v3979 = vpop.f32.mrb[0].mxu0
        %v3980 = vadd.f32 0.0, %v3979
        %v3981 = vpop.f32.mrb[0].mxu0
        %v3982 = vadd.f32 0.0, %v3981
        %3983 = vdwg.mxu0
        %3984 = vmatprep.subr.mxu0 0.0
        %3985 = vmatpush1.msra.mxu0 %v3540
        %3986 = vmatprep.subr.mxu0 0.0
        %3987 = vmatpush1.msra.mxu0 %v3545
        %3988 = vmatprep.subr.mxu0 0.0
        %3989 = vmatpush1.msra.mxu0 %v3550
        %3990 = vmatprep.subr.mxu0 0.0
        %3991 = vmatpush1.msra.mxu0 %v3832
        %3992 = vmatprep.subr.mxu0 0.0
        %3993 = vmatpush1.msra.mxu0 %v3602
        %3994 = vmatprep.subr.mxu0 0.0
        %3995 = vmatpush1.msra.mxu0 %v3608
        %3996 = vmatprep.subr.mxu0 0.0
        %3997 = vmatpush1.msra.mxu0 %v3835
        %3998 = vmatprep.subr.mxu0 0.0
        %3999 = vmatpush1.msra.mxu0 %v3668
        %4000 = vmatprep.subr.mxu0 0.0
        %4001 = vmatpush1.msra.mxu0 %v3674
        %4002 = vmatprep.subr.mxu0 0.0
        %4003 = vmatpush1.msra.mxu0 %v3838
        %4004 = vmatprep.subr.mxu0 0.0
        %4005 = vmatpush1.msra.mxu0 %v3734
        %4006 = vmatprep.subr.mxu0 0.0
        %4007 = vmatpush1.msra.mxu0 %v3740
        %4008 = vmatprep.subr.mxu0 0.0
        %4009 = vmatpush1.msra.mxu0 %v3841
        %4010 = vmatprep.subr.mxu0 0.0
        %4011 = vmatpush1.msra.mxu0 %v3800
        %4012 = vmatprep.subr.mxu0 0.0
        %4013 = vmatpush1.msra.mxu0 %v3806
        %4014 = vmatprep.subr.mxu0 0.0
        %4015 = vmatpush1.msra.mxu0 %v3875
        %4016 = vmatprep.subr.mxu0 0.0
        %4017 = vmatpush1.msra.mxu0 0.0
        %4018 = vmatprep.subr.mxu0 0.0
        %4019 = vmatpush1.msra.mxu0 0.0
        %4020 = vmatprep.subr.mxu0 0.0
        %4021 = vmatpush1.msra.mxu0 0.0
        %4022 = vmatprep.subr.mxu0 0.0
        %4023 = vmatpush1.msra.mxu0 0.0
        %4024 = vmatprep.subr.mxu0 0.0
        %4025 = vmatpush1.msra.mxu0 0.0
        %4026 = vmatprep.subr.mxu0 0.0
        %4027 = vmatpush1.msra.mxu0 0.0
        %4028 = vmatprep.subr.mxu0 0.0
        %4029 = vmatpush1.msra.mxu0 0.0
        %4030 = vmatprep.subr.mxu0 0.0
        %4031 = vmatpush1.msra.mxu0 0.0
        %4032 = vmatprep.subr.mxu0 0.0
        %4033 = vmatpush1.msra.mxu0 0.0
        %4034 = vmatprep.subr.mxu0 0.0
        %4035 = vmatpush1.msra.mxu0 0.0
        %4036 = vmatprep.subr.mxu0 0.0
        %4037 = vmatpush1.msra.mxu0 0.0
        %4038 = vmatprep.subr.mxu0 0.0
        %4039 = vmatpush1.msra.mxu0 0.0
        %4040 = vmatprep.subr.mxu0 0.0
        %4041 = vmatpush1.msra.mxu0 0.0
        %4042 = vmatprep.subr.mxu0 0.0
        %4043 = vmatpush1.msra.mxu0 0.0
        %4044 = vmatprep.subr.mxu0 0.0
        %4045 = vmatpush1.msra.mxu0 0.0
        %4046 = vmatprep.subr.mxu0 0.0
        %4047 = vmatpush1.msra.mxu0 0.0
        %4048 = vmatprep.mubr.f32.mxu0 0.0
        %4049 = vmatmul.mubr.f32.gmra.mrb[0].mxu0 %v3850
        %v4050 = vpop.f32.mrb[0].mxu0
        %v4051 = vadd.f32 0.0, %v4050
        %v4052 = vpop.f32.mrb[0].mxu0
        %4053 = vmatprep.mubr.f32.mxu0 0.0
        %4054 = vmatmul.mubr.f32.gmra.mrb[0].mxu0 %v3853
        %v4055 = vpop.f32.mrb[0].mxu0
        %v4056 = vadd.f32 0.0, %v4055
        %v4057 = vpop.f32.mrb[0].mxu0
        %4058 = vmatprep.mubr.f32.mxu0 0.0
        %4059 = vmatmul.mubr.f32.gmra.mrb[0].mxu0 %v3856
        %v4060 = vpop.f32.mrb[0].mxu0
        %v4061 = vadd.f32 0.0, %v4060
        %v4062 = vpop.f32.mrb[0].mxu0
        %4063 = vmatprep.mubr.f32.mxu0 0.0
        %4064 = vmatmul.mubr.f32.gmra.mrb[0].mxu0 %v3859
        %v4065 = vpop.f32.mrb[0].mxu0
        %v4066 = vadd.f32 0.0, %v4065
        %v4067 = vpop.f32.mrb[0].mxu0
        %4068 = vmatprep.mubr.f32.mxu0 0.0
        %4069 = vmatmul.mubr.f32.gmra.mrb[0].mxu0 %v3862
        %v4070 = vpop.f32.mrb[0].mxu0
        %v4071 = vadd.f32 0.0, %v4070
        %v4072 = vpop.f32.mrb[0].mxu0
        %4073 = vmatprep.mubr.f32.mxu0 0.0
        %4074 = vmatmul.mubr.f32.gmra.mrb[0].mxu0 %v3865
        %v4075 = vpop.f32.mrb[0].mxu0
        %v4076 = vadd.f32 0.0, %v4075
        %v4077 = vpop.f32.mrb[0].mxu0
        %4078 = vmatprep.mubr.f32.mxu0 0.0
        %4079 = vmatmul.mubr.f32.gmra.mrb[0].mxu0 %v3868
        %v4080 = vpop.f32.mrb[0].mxu0
        %v4081 = vadd.f32 0.0, %v4080
        %v4082 = vpop.f32.mrb[0].mxu0
        %4083 = vdwg.mxu0
        %v4084 = vld [vmem:[%s6] sm:$0xff]
        %v4085 = vld [vmem:[%s6 + $0x8] sm:$0xff]
        %v4086 = vld [vmem:[%s6 + $0x10] sm:$0xff]
        %v4087 = vld [vmem:[%s6 + $0x18] sm:$0xff]
        %v4088 = vld [vmem:[%s6 + $0x20] sm:$0xff]
        %v4089 = vld [vmem:[%s6 + $0x28] sm:$0xff]
        %v4090 = vld [vmem:[%s6 + $0x30] sm:$0x3]
        %4092 = vset.pattern.permute.xlu0 0
        %4093 = vperm.xlu0 %4092, %v4084
        %v4094 = vpop.permute.xlu0 %4093
        %4097 = vset.pattern.permute.xlu0 0
        %4098 = vperm.xlu0 %4097, %v4085
        %v4099 = vpop.permute.xlu0 %4098
        %4102 = vset.pattern.permute.xlu0 0
        %4103 = vperm.xlu0 %4102, %v4086
        %v4104 = vpop.permute.xlu0 %4103
        %4107 = vset.pattern.permute.xlu0 0
        %4108 = vperm.xlu0 %4107, %v4087
        %v4109 = vpop.permute.xlu0 %4108
        %4112 = vset.pattern.permute.xlu0 0
        %4113 = vperm.xlu0 %4112, %v4088
        %v4114 = vpop.permute.xlu0 %4113
        %4117 = vset.pattern.permute.xlu0 0
        %4118 = vperm.xlu0 %4117, %v4089
        %v4119 = vpop.permute.xlu0 %4118
        %4122 = vset.pattern.permute.xlu0 0
        %4123 = vperm.xlu0 %4122, %v4090
        %v4124 = vpop.permute.xlu0 %4123
        %v4126 = vmul.f32 %v3944, %v4094
        %v4127 = vmul.f32 %v3946, %v4094
        %v4128 = vmul.f32 %v4051, %v4094
        %v4129 = vmul.f32 %v3950, %v4099
        %v4130 = vmul.f32 %v3952, %v4099
        %v4131 = vmul.f32 %v4056, %v4099
        %v4132 = vmul.f32 %v3956, %v4104
        %v4133 = vmul.f32 %v3958, %v4104
        %v4134 = vmul.f32 %v4061, %v4104
        %v4135 = vmul.f32 %v3962, %v4109
        %v4136 = vmul.f32 %v3964, %v4109
        %v4137 = vmul.f32 %v4066, %v4109
        %v4138 = vmul.f32 %v3968, %v4114
        %v4139 = vmul.f32 %v3970, %v4114
        %v4140 = vmul.f32 %v4071, %v4114
        %v4141 = vmul.f32 %v3974, %v4119
        %v4142 = vmul.f32 %v3976, %v4119
        %v4143 = vmul.f32 %v4076, %v4119
        %v4144 = vmul.f32 %v3980, %v4124
        %v4145 = vmul.f32 %v3982, %v4124
        %v4146 = vmul.f32 %v4081, %v4124
        %v4147 = vld [vmem:[%s7] sm:$0xff]
        %v4148 = vld [vmem:[%s7 + $0x8] sm:$0xff]
        %v4149 = vld [vmem:[%s7 + $0x10] sm:$0xff]
        %v4150 = vld [vmem:[%s7 + $0x18] sm:$0xff]
        %v4151 = vld [vmem:[%s7 + $0x20] sm:$0xff]
        %v4152 = vld [vmem:[%s7 + $0x28] sm:$0xff]
        %v4153 = vld [vmem:[%s7 + $0x30] sm:$0x3]
        %4155 = vset.pattern.permute.xlu0 0
        %4156 = vperm.xlu0 %4155, %v4147
        %v4157 = vpop.permute.xlu0 %4156
        %4160 = vset.pattern.permute.xlu0 0
        %4161 = vperm.xlu0 %4160, %v4148
        %v4162 = vpop.permute.xlu0 %4161
        %4165 = vset.pattern.permute.xlu0 0
        %4166 = vperm.xlu0 %4165, %v4149
        %v4167 = vpop.permute.xlu0 %4166
        %4170 = vset.pattern.permute.xlu0 0
        %4171 = vperm.xlu0 %4170, %v4150
        %v4172 = vpop.permute.xlu0 %4171
        %4175 = vset.pattern.permute.xlu0 0
        %4176 = vperm.xlu0 %4175, %v4151
        %v4177 = vpop.permute.xlu0 %4176
        %4180 = vset.pattern.permute.xlu0 0
        %4181 = vperm.xlu0 %4180, %v4152
        %v4182 = vpop.permute.xlu0 %4181
        %4185 = vset.pattern.permute.xlu0 0
        %4186 = vperm.xlu0 %4185, %v4153
        %v4187 = vpop.permute.xlu0 %4186
        %v4189 = vadd.f32 %v4126, %v4157
        %v4190 = vadd.f32 %v4127, %v4157
        %v4191 = vadd.f32 %v4128, %v4157
        %v4192 = vadd.f32 %v4129, %v4162
        %v4193 = vadd.f32 %v4130, %v4162
        %v4194 = vadd.f32 %v4131, %v4162
        %v4195 = vadd.f32 %v4132, %v4167
        %v4196 = vadd.f32 %v4133, %v4167
        %v4197 = vadd.f32 %v4134, %v4167
        %v4198 = vadd.f32 %v4135, %v4172
        %v4199 = vadd.f32 %v4136, %v4172
        %v4200 = vadd.f32 %v4137, %v4172
        %v4201 = vadd.f32 %v4138, %v4177
        %v4202 = vadd.f32 %v4139, %v4177
        %v4203 = vadd.f32 %v4140, %v4177
        %v4204 = vadd.f32 %v4141, %v4182
        %v4205 = vadd.f32 %v4142, %v4182
        %v4206 = vadd.f32 %v4143, %v4182
        %v4207 = vadd.f32 %v4144, %v4187
        %v4208 = vadd.f32 %v4145, %v4187
        %v4209 = vadd.f32 %v4146, %v4187
        %vm4210 = vcmp.gt.f32.partialorder %v4189, 0.0
        %vm4211 = vcmp.gt.f32.partialorder %v4190, 0.0
        %vm4212 = vcmp.gt.f32.partialorder %v4191, 0.0
        %vm4213 = vcmp.gt.f32.partialorder %v4192, 0.0
        %vm4214 = vcmp.gt.f32.partialorder %v4193, 0.0
        %vm4215 = vcmp.gt.f32.partialorder %v4194, 0.0
        %vm4216 = vcmp.gt.f32.partialorder %v4195, 0.0
        %vm4217 = vcmp.gt.f32.partialorder %v4196, 0.0
        %vm4218 = vcmp.gt.f32.partialorder %v4197, 0.0
        %vm4219 = vcmp.gt.f32.partialorder %v4198, 0.0
        %vm4220 = vcmp.gt.f32.partialorder %v4199, 0.0
        %vm4221 = vcmp.gt.f32.partialorder %v4200, 0.0
        %vm4222 = vcmp.gt.f32.partialorder %v4201, 0.0
        %vm4223 = vcmp.gt.f32.partialorder %v4202, 0.0
        %vm4224 = vcmp.gt.f32.partialorder %v4203, 0.0
        %vm4225 = vcmp.gt.f32.partialorder %v4204, 0.0
        %vm4226 = vcmp.gt.f32.partialorder %v4205, 0.0
        %vm4227 = vcmp.gt.f32.partialorder %v4206, 0.0
        %vm4228 = vcmp.gt.f32.partialorder %v4207, 0.0
        %vm4229 = vcmp.gt.f32.partialorder %v4208, 0.0
        %vm4230 = vcmp.gt.f32.partialorder %v4209, 0.0
        %v4231 = vmul.f32 %v4189, 0.01
        %v4232 = vmul.f32 %v4190, 0.01
        %v4233 = vmul.f32 %v4191, 0.01
        %v4234 = vmul.f32 %v4192, 0.01
        %v4235 = vmul.f32 %v4193, 0.01
        %v4236 = vmul.f32 %v4194, 0.01
        %v4237 = vmul.f32 %v4195, 0.01
        %v4238 = vmul.f32 %v4196, 0.01
        %v4239 = vmul.f32 %v4197, 0.01
        %v4240 = vmul.f32 %v4198, 0.01
        %v4241 = vmul.f32 %v4199, 0.01
        %v4242 = vmul.f32 %v4200, 0.01
        %v4243 = vmul.f32 %v4201, 0.01
        %v4244 = vmul.f32 %v4202, 0.01
        %v4245 = vmul.f32 %v4203, 0.01
        %v4246 = vmul.f32 %v4204, 0.01
        %v4247 = vmul.f32 %v4205, 0.01
        %v4248 = vmul.f32 %v4206, 0.01
        %v4249 = vmul.f32 %v4207, 0.01
        %v4250 = vmul.f32 %v4208, 0.01
        %v4251 = vmul.f32 %v4209, 0.01
        %v4252 = vsel %vm4210, %v4189, %v4231
        %v4253 = vsel %vm4211, %v4190, %v4232
        %v4254 = vsel %vm4212, %v4191, %v4233
        %v4255 = vsel %vm4213, %v4192, %v4234
        %v4256 = vsel %vm4214, %v4193, %v4235
        %v4257 = vsel %vm4215, %v4194, %v4236
        %v4258 = vsel %vm4216, %v4195, %v4237
        %v4259 = vsel %vm4217, %v4196, %v4238
        %v4260 = vsel %vm4218, %v4197, %v4239
        %v4261 = vsel %vm4219, %v4198, %v4240
        %v4262 = vsel %vm4220, %v4199, %v4241
        %v4263 = vsel %vm4221, %v4200, %v4242
        %v4264 = vsel %vm4222, %v4201, %v4243
        %v4265 = vsel %vm4223, %v4202, %v4244
        %v4266 = vsel %vm4224, %v4203, %v4245
        %v4267 = vsel %vm4225, %v4204, %v4246
        %v4268 = vsel %vm4226, %v4205, %v4247
        %v4269 = vsel %vm4227, %v4206, %v4248
        %v4270 = vsel %vm4228, %v4207, %v4249
        %v4271 = vsel %vm4229, %v4208, %v4250
        %v4272 = vsel %vm4230, %v4209, %v4251
        %4294 = vrot.lane.b32.xlu0 %v4252, 127
        %v4295 = vpop.permute.xlu0 %4294
        %4296 = vrot.lane.b32.xlu0 %v4253, 127
        %v4297 = vpop.permute.xlu0 %4296
        %4298 = vrot.lane.b32.xlu0 %v4254, 127
        %v4299 = vpop.permute.xlu0 %4298
        %4300 = vrot.lane.b32.xlu0 %v4255, 127
        %v4301 = vpop.permute.xlu0 %4300
        %4302 = vrot.lane.b32.xlu0 %v4256, 127
        %v4303 = vpop.permute.xlu0 %4302
        %4304 = vrot.lane.b32.xlu0 %v4257, 127
        %v4305 = vpop.permute.xlu0 %4304
        %4306 = vrot.lane.b32.xlu0 %v4258, 127
        %v4307 = vpop.permute.xlu0 %4306
        %4308 = vrot.lane.b32.xlu0 %v4259, 127
        %v4309 = vpop.permute.xlu0 %4308
        %4310 = vrot.lane.b32.xlu0 %v4260, 127
        %v4311 = vpop.permute.xlu0 %4310
        %4312 = vrot.lane.b32.xlu0 %v4261, 127
        %v4313 = vpop.permute.xlu0 %4312
        %4314 = vrot.lane.b32.xlu0 %v4262, 127
        %v4315 = vpop.permute.xlu0 %4314
        %4316 = vrot.lane.b32.xlu0 %v4263, 127
        %v4317 = vpop.permute.xlu0 %4316
        %4318 = vrot.lane.b32.xlu0 %v4264, 127
        %v4319 = vpop.permute.xlu0 %4318
        %4320 = vrot.lane.b32.xlu0 %v4265, 127
        %v4321 = vpop.permute.xlu0 %4320
        %4322 = vrot.lane.b32.xlu0 %v4266, 127
        %v4323 = vpop.permute.xlu0 %4322
        %4324 = vrot.lane.b32.xlu0 %v4267, 127
        %v4325 = vpop.permute.xlu0 %4324
        %4326 = vrot.lane.b32.xlu0 %v4268, 127
        %v4327 = vpop.permute.xlu0 %4326
        %4328 = vrot.lane.b32.xlu0 %v4269, 127
        %v4329 = vpop.permute.xlu0 %4328
        %4330 = vrot.lane.b32.xlu0 %v4270, 127
        %v4331 = vpop.permute.xlu0 %4330
        %4332 = vrot.lane.b32.xlu0 %v4271, 127
        %v4333 = vpop.permute.xlu0 %4332
        %4334 = vrot.lane.b32.xlu0 %v4272, 127
        %v4335 = vpop.permute.xlu0 %4334
        %v4336 = vsel %vm973, %v4295, %v4297
        %v4337 = vsel %vm973, %v4297, %v4299
        %v4338 = vsel %vm973, %v4301, %v4303
        %v4339 = vsel %vm973, %v4303, %v4305
        %v4340 = vsel %vm973, %v4307, %v4309
        %v4341 = vsel %vm973, %v4309, %v4311
        %v4342 = vsel %vm973, %v4313, %v4315
        %v4343 = vsel %vm973, %v4315, %v4317
        %v4344 = vsel %vm973, %v4319, %v4321
        %v4345 = vsel %vm973, %v4321, %v4323
        %v4346 = vsel %vm973, %v4325, %v4327
        %v4347 = vsel %vm973, %v4327, %v4329
        %v4348 = vsel %vm973, %v4331, %v4333
        %v4349 = vsel %vm973, %v4333, %v4335
        %v4371 = vmax.f32 %v4252, %v4336
        %v4372 = vmax.f32 %v4253, %v4337
        %v4373 = vmax.f32 %v4254, %v4299
        %v4374 = vmax.f32 %v4255, %v4338
        %v4375 = vmax.f32 %v4256, %v4339
        %v4376 = vmax.f32 %v4257, %v4305
        %v4377 = vmax.f32 %v4258, %v4340
        %v4378 = vmax.f32 %v4259, %v4341
        %v4379 = vmax.f32 %v4260, %v4311
        %v4380 = vmax.f32 %v4261, %v4342
        %v4381 = vmax.f32 %v4262, %v4343
        %v4382 = vmax.f32 %v4263, %v4317
        %v4383 = vmax.f32 %v4264, %v4344
        %v4384 = vmax.f32 %v4265, %v4345
        %v4385 = vmax.f32 %v4266, %v4323
        %v4386 = vmax.f32 %v4267, %v4346
        %v4387 = vmax.f32 %v4268, %v4347
        %v4388 = vmax.f32 %v4269, %v4329
        %v4389 = vmax.f32 %v4270, %v4348
        %v4390 = vmax.f32 %v4271, %v4349
        %v4391 = vmax.f32 %v4272, %v4335
        %v4392 = vld [vmem:[%s8] sm:$0xff]
        %v4393 = vld [vmem:[%s8 + $0x8] sm:$0xff]
        %v4394 = vld [vmem:[%s8 + $0x10] sm:$0xff]
        %v4395 = vld [vmem:[%s8 + $0x18] sm:$0xff]
        %v4396 = vld [vmem:[%s8 + $0x20] sm:$0xff]
        %v4397 = vld [vmem:[%s8 + $0x28] sm:$0xff]
        %v4398 = vld [vmem:[%s8 + $0x30] sm:$0xff]
        %v4399 = vld [vmem:[%s8 + $0x38] sm:$0xff]
        %v4400 = vld [vmem:[%s8 + $0x40] sm:$0xff]
        %v4401 = vld [vmem:[%s8 + $0x48] sm:$0xff]
        %v4402 = vld [vmem:[%s8 + $0x50] sm:$0xff]
        %v4403 = vld [vmem:[%s8 + $0x58] sm:$0xff]
        %v4404 = vld [vmem:[%s8 + $0x60] sm:$0xff]
        %v4405 = vld [vmem:[%s8 + $0x68] sm:$0xff]
        %v4406 = vld [vmem:[%s8 + $0x70] sm:$0xff]
        %v4407 = vld [vmem:[%s8 + $0x78] sm:$0xff]
        %v4408 = vld [vmem:[%s8 + $0x80] sm:$0xff]
        %v4409 = vld [vmem:[%s8 + $0x88] sm:$0xff]
        %v4410 = vld [vmem:[%s8 + $0x90] sm:$0xff]
        %v4411 = vld [vmem:[%s8 + $0x98] sm:$0xff]
        %v4412 = vld [vmem:[%s8 + $0xa0] sm:$0xff]
        %v4413 = vld [vmem:[%s8 + $0xa8] sm:$0xff]
        %v4414 = vld [vmem:[%s8 + $0xb0] sm:$0xff]
        %v4415 = vld [vmem:[%s8 + $0xb8] sm:$0xff]
        %v4416 = vld [vmem:[%s8 + $0xc0] sm:$0xff]
        %v4417 = vld [vmem:[%s8 + $0xc8] sm:$0xff]
        %v4418 = vld [vmem:[%s8 + $0xd0] sm:$0xff]
        %v4419 = vld [vmem:[%s8 + $0xd8] sm:$0xff]
        %v4420 = vld [vmem:[%s8 + $0xe0] sm:$0xff]
        %v4421 = vld [vmem:[%s8 + $0xe8] sm:$0xff]
        %v4422 = vld [vmem:[%s8 + $0xf0] sm:$0xff]
        %v4423 = vld [vmem:[%s8 + $0xf8] sm:$0xff]
        %v4424 = vld [vmem:[%s8 + $0x100] sm:$0xff]
        %v4425 = vld [vmem:[%s8 + $0x108] sm:$0xff]
        %v4426 = vld [vmem:[%s8 + $0x110] sm:$0xff]
        %v4427 = vld [vmem:[%s8 + $0x118] sm:$0xff]
        %v4428 = vld [vmem:[%s8 + $0x120] sm:$0xff]
        %v4429 = vld [vmem:[%s8 + $0x128] sm:$0xff]
        %v4430 = vld [vmem:[%s8 + $0x130] sm:$0xff]
        %v4431 = vld [vmem:[%s8 + $0x138] sm:$0xff]
        %v4432 = vld [vmem:[%s8 + $0x140] sm:$0xff]
        %v4433 = vld [vmem:[%s8 + $0x148] sm:$0xff]
        %v4434 = vld [vmem:[%s8 + $0x150] sm:$0xff]
        %v4435 = vld [vmem:[%s8 + $0x158] sm:$0xff]
        %v4436 = vld [vmem:[%s8 + $0x160] sm:$0xff]
        %v4437 = vld [vmem:[%s8 + $0x168] sm:$0xff]
        %v4438 = vld [vmem:[%s8 + $0x170] sm:$0xff]
        %v4439 = vld [vmem:[%s8 + $0x178] sm:$0xff]
        %v4440 = vld [vmem:[%s8 + $0x180] sm:$0xff]
        %v4441 = vld [vmem:[%s8 + $0x188] sm:$0xff]
        %v4442 = vld [vmem:[%s8 + $0x190] sm:$0xff]
        %v4443 = vld [vmem:[%s8 + $0x198] sm:$0xff]
        %v4444 = vld [vmem:[%s8 + $0x1a0] sm:$0xff]
        %v4445 = vld [vmem:[%s8 + $0x1a8] sm:$0xff]
        %v4446 = vld [vmem:[%s8 + $0x1b0] sm:$0xff]
        %v4447 = vld [vmem:[%s8 + $0x1b8] sm:$0xff]
        %v4448 = vld [vmem:[%s8 + $0x1c0] sm:$0xff]
        %v4449 = vld [vmem:[%s8 + $0x1c8] sm:$0xff]
        %v4450 = vld [vmem:[%s8 + $0x1d0] sm:$0xff]
        %v4451 = vld [vmem:[%s8 + $0x1d8] sm:$0xff]
        %v4452 = vld [vmem:[%s8 + $0x1e0] sm:$0xff]
        %v4453 = vld [vmem:[%s8 + $0x1e8] sm:$0xff]
        %v4454 = vld [vmem:[%s8 + $0x1f0] sm:$0xff]
        %v4455 = vld [vmem:[%s8 + $0x1f8] sm:$0xff]
        %v4456 = vld [vmem:[%s8 + $0x200] sm:$0xff]
        %v4457 = vld [vmem:[%s8 + $0x208] sm:$0xff]
        %v4458 = vld [vmem:[%s8 + $0x210] sm:$0xff]
        %v4459 = vld [vmem:[%s8 + $0x218] sm:$0xff]
        %v4460 = vld [vmem:[%s8 + $0x220] sm:$0xff]
        %v4461 = vld [vmem:[%s8 + $0x228] sm:$0xff]
        %v4462 = vld [vmem:[%s8 + $0x230] sm:$0xff]
        %v4463 = vld [vmem:[%s8 + $0x238] sm:$0xff]
        %v4464 = vld [vmem:[%s8 + $0x240] sm:$0xff]
        %v4465 = vld [vmem:[%s8 + $0x248] sm:$0xff]
        %v4466 = vld [vmem:[%s8 + $0x250] sm:$0xff]
        %v4467 = vld [vmem:[%s8 + $0x258] sm:$0xff]
        %v4468 = vld [vmem:[%s8 + $0x260] sm:$0xff]
        %v4469 = vld [vmem:[%s8 + $0x268] sm:$0xff]
        %v4470 = vld [vmem:[%s8 + $0x270] sm:$0xff]
        %v4471 = vld [vmem:[%s8 + $0x278] sm:$0xff]
        %v4472 = vld [vmem:[%s8 + $0x280] sm:$0xff]
        %v4473 = vld [vmem:[%s8 + $0x288] sm:$0xff]
        %v4474 = vld [vmem:[%s8 + $0x290] sm:$0xff]
        %v4475 = vld [vmem:[%s8 + $0x298] sm:$0xff]
        %v4476 = vld [vmem:[%s8 + $0x2a0] sm:$0xff]
        %v4477 = vld [vmem:[%s8 + $0x2a8] sm:$0xff]
        %v4478 = vld [vmem:[%s8 + $0x2b0] sm:$0xff]
        %v4479 = vld [vmem:[%s8 + $0x2b8] sm:$0xff]
        %v4480 = vld [vmem:[%s8 + $0x2c0] sm:$0xff]
        %v4481 = vld [vmem:[%s8 + $0x2c8] sm:$0xff]
        %v4482 = vld [vmem:[%s8 + $0x2d0] sm:$0xff]
        %v4483 = vld [vmem:[%s8 + $0x2d8] sm:$0xff]
        %vm4484 = vcmask 916480
        %v4486 = vsel %vm4484, %v4373, 0
        %v4489 = vsel %vm4484, %v4376, 0
        %v4492 = vsel %vm4484, %v4379, 0
        %v4495 = vsel %vm4484, %v4382, 0
        %v4498 = vsel %vm4484, %v4385, 0
        %v4501 = vsel %vm4484, %v4388, 0
        %v4504 = vsel %vm4484, %v4391, 0
        %4506 = vmatprep.subr.mxu0 %v4393
        %4507 = vmatpush1.msra.mxu0 %v4392
        %4508 = vmatprep.subr.mxu0 %v4395
        %4509 = vmatpush1.msra.mxu0 %v4394
        %4510 = vmatprep.subr.mxu0 %v4397
        %4511 = vmatpush1.msra.mxu0 %v4396
        %4512 = vmatprep.subr.mxu0 %v4399
        %4513 = vmatpush1.msra.mxu0 %v4398
        %4514 = vmatprep.subr.mxu0 %v4401
        %4515 = vmatpush1.msra.mxu0 %v4400
        %4516 = vmatprep.subr.mxu0 %v4403
        %4517 = vmatpush1.msra.mxu0 %v4402
        %4518 = vmatprep.subr.mxu0 %v4405
        %4519 = vmatpush1.msra.mxu0 %v4404
        %4520 = vmatprep.subr.mxu0 %v4407
        %4521 = vmatpush1.msra.mxu0 %v4406
        %4522 = vmatprep.subr.mxu0 %v4409
        %4523 = vmatpush1.msra.mxu0 %v4408
        %4524 = vmatprep.subr.mxu0 %v4411
        %4525 = vmatpush1.msra.mxu0 %v4410
        %4526 = vmatprep.subr.mxu0 %v4413
        %4527 = vmatpush1.msra.mxu0 %v4412
        %4528 = vmatprep.subr.mxu0 %v4415
        %4529 = vmatpush1.msra.mxu0 %v4414
        %4530 = vmatprep.subr.mxu0 %v4417
        %4531 = vmatpush1.msra.mxu0 %v4416
        %4532 = vmatprep.subr.mxu0 %v4419
        %4533 = vmatpush1.msra.mxu0 %v4418
        %4534 = vmatprep.subr.mxu0 %v4421
        %4535 = vmatpush1.msra.mxu0 %v4420
        %4536 = vmatprep.subr.mxu0 %v4423
        %4537 = vmatpush1.msra.mxu0 %v4422
        %4538 = vmatprep.subr.mxu0 %v4425
        %4539 = vmatpush1.msra.mxu0 %v4424
        %4540 = vmatprep.subr.mxu0 %v4427
        %4541 = vmatpush1.msra.mxu0 %v4426
        %4542 = vmatprep.subr.mxu0 %v4429
        %4543 = vmatpush1.msra.mxu0 %v4428
        %4544 = vmatprep.subr.mxu0 %v4431
        %4545 = vmatpush1.msra.mxu0 %v4430
        %4546 = vmatprep.subr.mxu0 %v4433
        %4547 = vmatpush1.msra.mxu0 %v4432
        %4548 = vmatprep.subr.mxu0 %v4435
        %4549 = vmatpush1.msra.mxu0 %v4434
        %4550 = vmatprep.subr.mxu0 %v4437
        %4551 = vmatpush1.msra.mxu0 %v4436
        %4552 = vmatprep.subr.mxu0 %v4439
        %4553 = vmatpush1.msra.mxu0 %v4438
        %4554 = vmatprep.subr.mxu0 %v4441
        %4555 = vmatpush1.msra.mxu0 %v4440
        %4556 = vmatprep.subr.mxu0 %v4443
        %4557 = vmatpush1.msra.mxu0 %v4442
        %4558 = vmatprep.subr.mxu0 %v4445
        %4559 = vmatpush1.msra.mxu0 %v4444
        %4560 = vmatprep.subr.mxu0 %v4447
        %4561 = vmatpush1.msra.mxu0 %v4446
        %4562 = vmatprep.subr.mxu0 %v4449
        %4563 = vmatpush1.msra.mxu0 %v4448
        %4564 = vmatprep.subr.mxu0 %v4451
        %4565 = vmatpush1.msra.mxu0 %v4450
        %4566 = vmatprep.subr.mxu0 %v4453
        %4567 = vmatpush1.msra.mxu0 %v4452
        %4568 = vmatprep.subr.mxu0 %v4455
        %4569 = vmatpush1.msra.mxu0 %v4454
        %4570 = vmatprep.mubr.f32.mxu0 %v4372
        %4571 = vmatmul.mubr.f32.gmra.mrb[0].mxu0 %v4371
        %v4572 = vpop.f32.mrb[0].mxu0
        %v4573 = vadd.f32 0.0, %v4572
        %v4574 = vpop.f32.mrb[0].mxu0
        %v4575 = vadd.f32 0.0, %v4574
        %4576 = vmatprep.mubr.f32.mxu0 %v4375
        %4577 = vmatmul.mubr.f32.gmra.mrb[0].mxu0 %v4374
        %v4578 = vpop.f32.mrb[0].mxu0
        %v4579 = vadd.f32 0.0, %v4578
        %v4580 = vpop.f32.mrb[0].mxu0
        %v4581 = vadd.f32 0.0, %v4580
        %4582 = vmatprep.mubr.f32.mxu0 %v4378
        %4583 = vmatmul.mubr.f32.gmra.mrb[0].mxu0 %v4377
        %v4584 = vpop.f32.mrb[0].mxu0
        %v4585 = vadd.f32 0.0, %v4584
        %v4586 = vpop.f32.mrb[0].mxu0
        %v4587 = vadd.f32 0.0, %v4586
        %4588 = vmatprep.mubr.f32.mxu0 %v4381
        %4589 = vmatmul.mubr.f32.gmra.mrb[0].mxu0 %v4380
        %v4590 = vpop.f32.mrb[0].mxu0
        %v4591 = vadd.f32 0.0, %v4590
        %v4592 = vpop.f32.mrb[0].mxu0
        %v4593 = vadd.f32 0.0, %v4592
        %4594 = vmatprep.mubr.f32.mxu0 %v4384
        %4595 = vmatmul.mubr.f32.gmra.mrb[0].mxu0 %v4383
        %v4596 = vpop.f32.mrb[0].mxu0
        %v4597 = vadd.f32 0.0, %v4596
        %v4598 = vpop.f32.mrb[0].mxu0
        %v4599 = vadd.f32 0.0, %v4598
        %4600 = vmatprep.mubr.f32.mxu0 %v4387
        %4601 = vmatmul.mubr.f32.gmra.mrb[0].mxu0 %v4386
        %v4602 = vpop.f32.mrb[0].mxu0
        %v4603 = vadd.f32 0.0, %v4602
        %v4604 = vpop.f32.mrb[0].mxu0
        %v4605 = vadd.f32 0.0, %v4604
        %4606 = vmatprep.mubr.f32.mxu0 %v4390
        %4607 = vmatmul.mubr.f32.gmra.mrb[0].mxu0 %v4389
        %v4608 = vpop.f32.mrb[0].mxu0
        %v4609 = vadd.f32 0.0, %v4608
        %v4610 = vpop.f32.mrb[0].mxu0
        %v4611 = vadd.f32 0.0, %v4610
        %4612 = vdwg.mxu0
        %4613 = vmatprep.subr.mxu0 %v4457
        %4614 = vmatpush1.msra.mxu0 %v4456
        %4615 = vmatprep.subr.mxu0 %v4459
        %4616 = vmatpush1.msra.mxu0 %v4458
        %4617 = vmatprep.subr.mxu0 %v4461
        %4618 = vmatpush1.msra.mxu0 %v4460
        %4619 = vmatprep.subr.mxu0 %v4463
        %4620 = vmatpush1.msra.mxu0 %v4462
        %4621 = vmatprep.subr.mxu0 %v4465
        %4622 = vmatpush1.msra.mxu0 %v4464
        %4623 = vmatprep.subr.mxu0 %v4467
        %4624 = vmatpush1.msra.mxu0 %v4466
        %4625 = vmatprep.subr.mxu0 %v4469
        %4626 = vmatpush1.msra.mxu0 %v4468
        %4627 = vmatprep.subr.mxu0 %v4471
        %4628 = vmatpush1.msra.mxu0 %v4470
        %4629 = vmatprep.subr.mxu0 %v4473
        %4630 = vmatpush1.msra.mxu0 %v4472
        %4631 = vmatprep.subr.mxu0 %v4475
        %4632 = vmatpush1.msra.mxu0 %v4474
        %4633 = vmatprep.subr.mxu0 %v4477
        %4634 = vmatpush1.msra.mxu0 %v4476
        %4635 = vmatprep.subr.mxu0 %v4479
        %4636 = vmatpush1.msra.mxu0 %v4478
        %4637 = vmatprep.subr.mxu0 %v4481
        %4638 = vmatpush1.msra.mxu0 %v4480
        %4639 = vmatprep.subr.mxu0 %v4483
        %4640 = vmatpush1.msra.mxu0 %v4482
        %4641 = vmatprep.subr.mxu0 0.0
        %4642 = vmatpush1.msra.mxu0 0.0
        %4643 = vmatprep.subr.mxu0 0.0
        %4644 = vmatpush1.msra.mxu0 0.0
        %4645 = vmatprep.subr.mxu0 0.0
        %4646 = vmatpush1.msra.mxu0 0.0
        %4647 = vmatprep.subr.mxu0 0.0
        %4648 = vmatpush1.msra.mxu0 0.0
        %4649 = vmatprep.subr.mxu0 0.0
        %4650 = vmatpush1.msra.mxu0 0.0
        %4651 = vmatprep.subr.mxu0 0.0
        %4652 = vmatpush1.msra.mxu0 0.0
        %4653 = vmatprep.subr.mxu0 0.0
        %4654 = vmatpush1.msra.mxu0 0.0
        %4655 = vmatprep.subr.mxu0 0.0
        %4656 = vmatpush1.msra.mxu0 0.0
        %4657 = vmatprep.subr.mxu0 0.0
        %4658 = vmatpush1.msra.mxu0 0.0
        %4659 = vmatprep.subr.mxu0 0.0
        %4660 = vmatpush1.msra.mxu0 0.0
        %4661 = vmatprep.subr.mxu0 0.0
        %4662 = vmatpush1.msra.mxu0 0.0
        %4663 = vmatprep.subr.mxu0 0.0
        %4664 = vmatpush1.msra.mxu0 0.0
        %4665 = vmatprep.subr.mxu0 0.0
        %4666 = vmatpush1.msra.mxu0 0.0
        %4667 = vmatprep.subr.mxu0 0.0
        %4668 = vmatpush1.msra.mxu0 0.0
        %4669 = vmatprep.subr.mxu0 0.0
        %4670 = vmatpush1.msra.mxu0 0.0
        %4671 = vmatprep.subr.mxu0 0.0
        %4672 = vmatpush1.msra.mxu0 0.0
        %4673 = vmatprep.subr.mxu0 0.0
        %4674 = vmatpush1.msra.mxu0 0.0
        %4675 = vmatprep.subr.mxu0 0.0
        %4676 = vmatpush1.msra.mxu0 0.0
        %4677 = vmatprep.mubr.f32.mxu0 0.0
        %4678 = vmatmul.mubr.f32.gmra.mrb[0].mxu0 %v4486
        %v4679 = vpop.f32.mrb[0].mxu0
        %v4680 = vadd.f32 %v4573, %v4679
        %v4681 = vpop.f32.mrb[0].mxu0
        %v4682 = vadd.f32 %v4575, %v4681
        %4683 = vmatprep.mubr.f32.mxu0 0.0
        %4684 = vmatmul.mubr.f32.gmra.mrb[0].mxu0 %v4489
        %v4685 = vpop.f32.mrb[0].mxu0
        %v4686 = vadd.f32 %v4579, %v4685
        %v4687 = vpop.f32.mrb[0].mxu0
        %v4688 = vadd.f32 %v4581, %v4687
        %4689 = vmatprep.mubr.f32.mxu0 0.0
        %4690 = vmatmul.mubr.f32.gmra.mrb[0].mxu0 %v4492
        %v4691 = vpop.f32.mrb[0].mxu0
        %v4692 = vadd.f32 %v4585, %v4691
        %v4693 = vpop.f32.mrb[0].mxu0
        %v4694 = vadd.f32 %v4587, %v4693
        %4695 = vmatprep.mubr.f32.mxu0 0.0
        %4696 = vmatmul.mubr.f32.gmra.mrb[0].mxu0 %v4495
        %v4697 = vpop.f32.mrb[0].mxu0
        %v4698 = vadd.f32 %v4591, %v4697
        %v4699 = vpop.f32.mrb[0].mxu0
        %v4700 = vadd.f32 %v4593, %v4699
        %4701 = vmatprep.mubr.f32.mxu0 0.0
        %4702 = vmatmul.mubr.f32.gmra.mrb[0].mxu0 %v4498
        %v4703 = vpop.f32.mrb[0].mxu0
        %v4704 = vadd.f32 %v4597, %v4703
        %v4705 = vpop.f32.mrb[0].mxu0
        %v4706 = vadd.f32 %v4599, %v4705
        %4707 = vmatprep.mubr.f32.mxu0 0.0
        %4708 = vmatmul.mubr.f32.gmra.mrb[0].mxu0 %v4501
        %v4709 = vpop.f32.mrb[0].mxu0
        %v4710 = vadd.f32 %v4603, %v4709
        %v4711 = vpop.f32.mrb[0].mxu0
        %v4712 = vadd.f32 %v4605, %v4711
        %4713 = vmatprep.mubr.f32.mxu0 0.0
        %4714 = vmatmul.mubr.f32.gmra.mrb[0].mxu0 %v4504
        %v4715 = vpop.f32.mrb[0].mxu0
        %v4716 = vadd.f32 %v4609, %v4715
        %v4717 = vpop.f32.mrb[0].mxu0
        %v4718 = vadd.f32 %v4611, %v4717
        %4719 = vdwg.mxu0
        %v4734 = vrot.slane %v4680, 6
        %v4735 = vrot.slane %v4682, 6
        %v4736 = vrot.slane %v4686, 6
        %v4737 = vsel %vm3635, %v4734, %v4736
        %v4738 = vrot.slane %v4688, 6
        %v4739 = vsel %vm3635, %v4735, %v4738
        %v4740 = vrot.slane %v4692, 6
        %v4741 = vsel %vm3635, %v4736, %v4740
        %v4742 = vrot.slane %v4694, 6
        %v4743 = vsel %vm3635, %v4738, %v4742
        %v4744 = vrot.slane %v4698, 6
        %v4745 = vsel %vm3635, %v4740, %v4744
        %v4746 = vrot.slane %v4700, 6
        %v4747 = vsel %vm3635, %v4742, %v4746
        %v4748 = vrot.slane %v4704, 6
        %v4749 = vsel %vm3635, %v4744, %v4748
        %v4750 = vrot.slane %v4706, 6
        %v4751 = vsel %vm3635, %v4746, %v4750
        %v4752 = vrot.slane %v4710, 6
        %v4753 = vsel %vm3635, %v4748, %v4752
        %v4754 = vrot.slane %v4712, 6
        %v4755 = vsel %vm3635, %v4750, %v4754
        %v4756 = vrot.slane %v4716, 6
        %v4757 = vsel %vm3635, %v4752, %v4756
        %v4758 = vrot.slane %v4718, 6
        %v4759 = vsel %vm3635, %v4754, %v4758
        %4760 = vrot.lane.b32.xlu0 %v4734, 127
        %v4761 = vpop.permute.xlu0 %4760
        %4762 = vrot.lane.b32.xlu0 %v4735, 127
        %v4763 = vpop.permute.xlu0 %4762
        %4764 = vrot.lane.b32.xlu0 %v4737, 127
        %v4765 = vpop.permute.xlu0 %4764
        %4766 = vrot.lane.b32.xlu0 %v4739, 127
        %v4767 = vpop.permute.xlu0 %4766
        %4768 = vrot.lane.b32.xlu0 %v4741, 127
        %v4769 = vpop.permute.xlu0 %4768
        %4770 = vrot.lane.b32.xlu0 %v4743, 127
        %v4771 = vpop.permute.xlu0 %4770
        %4772 = vrot.lane.b32.xlu0 %v4745, 127
        %v4773 = vpop.permute.xlu0 %4772
        %4774 = vrot.lane.b32.xlu0 %v4747, 127
        %v4775 = vpop.permute.xlu0 %4774
        %4776 = vrot.lane.b32.xlu0 %v4749, 127
        %v4777 = vpop.permute.xlu0 %4776
        %4778 = vrot.lane.b32.xlu0 %v4751, 127
        %v4779 = vpop.permute.xlu0 %4778
        %4780 = vrot.lane.b32.xlu0 %v4753, 127
        %v4781 = vpop.permute.xlu0 %4780
        %4782 = vrot.lane.b32.xlu0 %v4755, 127
        %v4783 = vpop.permute.xlu0 %4782
        %4784 = vrot.lane.b32.xlu0 %v4757, 127
        %v4785 = vpop.permute.xlu0 %4784
        %4786 = vrot.lane.b32.xlu0 %v4759, 127
        %v4787 = vpop.permute.xlu0 %4786
        %v4788 = vsel %vm973, %v4761, %v4763
        %v4789 = vsel %vm973, %v4765, %v4767
        %v4790 = vsel %vm973, %v4769, %v4771
        %v4791 = vsel %vm973, %v4773, %v4775
        %v4792 = vsel %vm973, %v4777, %v4779
        %v4793 = vsel %vm973, %v4781, %v4783
        %v4794 = vsel %vm973, %v4785, %v4787
        %v4809 = vrot.slane %v4680, 4
        %v4810 = vrot.slane %v4682, 4
        %v4811 = vrot.slane %v4686, 4
        %v4812 = vsel %vm3767, %v4809, %v4811
        %v4813 = vrot.slane %v4688, 4
        %v4814 = vsel %vm3767, %v4810, %v4813
        %v4815 = vrot.slane %v4692, 4
        %v4816 = vsel %vm3767, %v4811, %v4815
        %v4817 = vrot.slane %v4694, 4
        %v4818 = vsel %vm3767, %v4813, %v4817
        %v4819 = vrot.slane %v4698, 4
        %v4820 = vsel %vm3767, %v4815, %v4819
        %v4821 = vrot.slane %v4700, 4
        %v4822 = vsel %vm3767, %v4817, %v4821
        %v4823 = vrot.slane %v4704, 4
        %v4824 = vsel %vm3767, %v4819, %v4823
        %v4825 = vrot.slane %v4706, 4
        %v4826 = vsel %vm3767, %v4821, %v4825
        %v4827 = vrot.slane %v4710, 4
        %v4828 = vsel %vm3767, %v4823, %v4827
        %v4829 = vrot.slane %v4712, 4
        %v4830 = vsel %vm3767, %v4825, %v4829
        %v4831 = vrot.slane %v4716, 4
        %v4832 = vsel %vm3767, %v4827, %v4831
        %v4833 = vrot.slane %v4718, 4
        %v4834 = vsel %vm3767, %v4829, %v4833
        %4835 = vrot.lane.b32.xlu0 %v4809, 126
        %v4836 = vpop.permute.xlu0 %4835
        %4837 = vrot.lane.b32.xlu0 %v4810, 126
        %v4838 = vpop.permute.xlu0 %4837
        %4839 = vrot.lane.b32.xlu0 %v4812, 126
        %v4840 = vpop.permute.xlu0 %4839
        %4841 = vrot.lane.b32.xlu0 %v4814, 126
        %v4842 = vpop.permute.xlu0 %4841
        %4843 = vrot.lane.b32.xlu0 %v4816, 126
        %v4844 = vpop.permute.xlu0 %4843
        %4845 = vrot.lane.b32.xlu0 %v4818, 126
        %v4846 = vpop.permute.xlu0 %4845
        %4847 = vrot.lane.b32.xlu0 %v4820, 126
        %v4848 = vpop.permute.xlu0 %4847
        %4849 = vrot.lane.b32.xlu0 %v4822, 126
        %v4850 = vpop.permute.xlu0 %4849
        %4851 = vrot.lane.b32.xlu0 %v4824, 126
        %v4852 = vpop.permute.xlu0 %4851
        %4853 = vrot.lane.b32.xlu0 %v4826, 126
        %v4854 = vpop.permute.xlu0 %4853
        %4855 = vrot.lane.b32.xlu0 %v4828, 126
        %v4856 = vpop.permute.xlu0 %4855
        %4857 = vrot.lane.b32.xlu0 %v4830, 126
        %v4858 = vpop.permute.xlu0 %4857
        %4859 = vrot.lane.b32.xlu0 %v4832, 126
        %v4860 = vpop.permute.xlu0 %4859
        %4861 = vrot.lane.b32.xlu0 %v4834, 126
        %v4862 = vpop.permute.xlu0 %4861
        %v4863 = vsel %vm1154, %v4836, %v4838
        %v4864 = vsel %vm1154, %v4840, %v4842
        %v4865 = vsel %vm1154, %v4844, %v4846
        %v4866 = vsel %vm1154, %v4848, %v4850
        %v4867 = vsel %vm1154, %v4852, %v4854
        %v4868 = vsel %vm1154, %v4856, %v4858
        %v4869 = vsel %vm1154, %v4860, %v4862
        %vm4884 = vcmask 1045504
        %v4885 = vrot.slane %v4680, 2
        %v4886 = vrot.slane %v4682, 2
        %v4887 = vrot.slane %v4686, 2
        %v4888 = vsel %vm4884, %v4885, %v4887
        %v4889 = vrot.slane %v4688, 2
        %v4890 = vsel %vm4884, %v4886, %v4889
        %v4891 = vrot.slane %v4692, 2
        %v4892 = vsel %vm4884, %v4887, %v4891
        %v4893 = vrot.slane %v4694, 2
        %v4894 = vsel %vm4884, %v4889, %v4893
        %v4895 = vrot.slane %v4698, 2
        %v4896 = vsel %vm4884, %v4891, %v4895
        %v4897 = vrot.slane %v4700, 2
        %v4898 = vsel %vm4884, %v4893, %v4897
        %v4899 = vrot.slane %v4704, 2
        %v4900 = vsel %vm4884, %v4895, %v4899
        %v4901 = vrot.slane %v4706, 2
        %v4902 = vsel %vm4884, %v4897, %v4901
        %v4903 = vrot.slane %v4710, 2
        %v4904 = vsel %vm4884, %v4899, %v4903
        %v4905 = vrot.slane %v4712, 2
        %v4906 = vsel %vm4884, %v4901, %v4905
        %v4907 = vrot.slane %v4716, 2
        %v4908 = vsel %vm4884, %v4903, %v4907
        %v4909 = vrot.slane %v4718, 2
        %v4910 = vsel %vm4884, %v4905, %v4909
        %4911 = vrot.lane.b32.xlu0 %v4885, 125
        %v4912 = vpop.permute.xlu0 %4911
        %4913 = vrot.lane.b32.xlu0 %v4886, 125
        %v4914 = vpop.permute.xlu0 %4913
        %4915 = vrot.lane.b32.xlu0 %v4888, 125
        %v4916 = vpop.permute.xlu0 %4915
        %4917 = vrot.lane.b32.xlu0 %v4890, 125
        %v4918 = vpop.permute.xlu0 %4917
        %4919 = vrot.lane.b32.xlu0 %v4892, 125
        %v4920 = vpop.permute.xlu0 %4919
        %4921 = vrot.lane.b32.xlu0 %v4894, 125
        %v4922 = vpop.permute.xlu0 %4921
        %4923 = vrot.lane.b32.xlu0 %v4896, 125
        %v4924 = vpop.permute.xlu0 %4923
        %4925 = vrot.lane.b32.xlu0 %v4898, 125
        %v4926 = vpop.permute.xlu0 %4925
        %4927 = vrot.lane.b32.xlu0 %v4900, 125
        %v4928 = vpop.permute.xlu0 %4927
        %4929 = vrot.lane.b32.xlu0 %v4902, 125
        %v4930 = vpop.permute.xlu0 %4929
        %4931 = vrot.lane.b32.xlu0 %v4904, 125
        %v4932 = vpop.permute.xlu0 %4931
        %4933 = vrot.lane.b32.xlu0 %v4906, 125
        %v4934 = vpop.permute.xlu0 %4933
        %4935 = vrot.lane.b32.xlu0 %v4908, 125
        %v4936 = vpop.permute.xlu0 %4935
        %4937 = vrot.lane.b32.xlu0 %v4910, 125
        %v4938 = vpop.permute.xlu0 %4937
        %v4939 = vsel %vm1335, %v4912, %v4914
        %v4940 = vsel %vm1335, %v4916, %v4918
        %v4941 = vsel %vm1335, %v4920, %v4922
        %v4942 = vsel %vm1335, %v4924, %v4926
        %v4943 = vsel %vm1335, %v4928, %v4930
        %v4944 = vsel %vm1335, %v4932, %v4934
        %v4945 = vsel %vm1335, %v4936, %v4938
        %4960 = vrot.lane.b32.xlu0 %v4680, 124
        %v4961 = vpop.permute.xlu0 %4960
        %4962 = vrot.lane.b32.xlu0 %v4682, 124
        %v4963 = vpop.permute.xlu0 %4962
        %4964 = vrot.lane.b32.xlu0 %v4686, 124
        %v4965 = vpop.permute.xlu0 %4964
        %4966 = vrot.lane.b32.xlu0 %v4688, 124
        %v4967 = vpop.permute.xlu0 %4966
        %4968 = vrot.lane.b32.xlu0 %v4692, 124
        %v4969 = vpop.permute.xlu0 %4968
        %4970 = vrot.lane.b32.xlu0 %v4694, 124
        %v4971 = vpop.permute.xlu0 %4970
        %4972 = vrot.lane.b32.xlu0 %v4698, 124
        %v4973 = vpop.permute.xlu0 %4972
        %4974 = vrot.lane.b32.xlu0 %v4700, 124
        %v4975 = vpop.permute.xlu0 %4974
        %4976 = vrot.lane.b32.xlu0 %v4704, 124
        %v4977 = vpop.permute.xlu0 %4976
        %4978 = vrot.lane.b32.xlu0 %v4706, 124
        %v4979 = vpop.permute.xlu0 %4978
        %4980 = vrot.lane.b32.xlu0 %v4710, 124
        %v4981 = vpop.permute.xlu0 %4980
        %4982 = vrot.lane.b32.xlu0 %v4712, 124
        %v4983 = vpop.permute.xlu0 %4982
        %4984 = vrot.lane.b32.xlu0 %v4716, 124
        %v4985 = vpop.permute.xlu0 %4984
        %4986 = vrot.lane.b32.xlu0 %v4718, 124
        %v4987 = vpop.permute.xlu0 %4986
        %v4988 = vsel %vm1516, %v4961, %v4963
        %v4989 = vsel %vm1516, %v4965, %v4967
        %v4990 = vsel %vm1516, %v4969, %v4971
        %v4991 = vsel %vm1516, %v4973, %v4975
        %v4992 = vsel %vm1516, %v4977, %v4979
        %v4993 = vsel %vm1516, %v4981, %v4983
        %v4994 = vsel %vm1516, %v4985, %v4987
        %v5007 = vsel %vm3635, %v4716, %v4788
        %v5008 = vsel %vm3635, %v4718, %v4763
        %v5009 = vsel %vm3767, %v4794, %v4863
        %v5010 = vsel %vm3767, %v4787, %v4838
        %v5011 = vsel %vm4884, %v4869, %v4939
        %v5012 = vsel %vm4884, %v4862, %v4914
        %v5013 = vld [vmem:[%s9] sm:$0xff]
        %v5014 = vld [vmem:[%s9 + $0x8] sm:$0xff]
        %v5015 = vld [vmem:[%s9 + $0x10] sm:$0xff]
        %v5016 = vld [vmem:[%s9 + $0x18] sm:$0xff]
        %v5017 = vld [vmem:[%s9 + $0x20] sm:$0xff]
        %v5018 = vld [vmem:[%s9 + $0x28] sm:$0xff]
        %v5019 = vld [vmem:[%s9 + $0x30] sm:$0xff]
        %v5020 = vld [vmem:[%s9 + $0x38] sm:$0xff]
        %v5021 = vld [vmem:[%s9 + $0x40] sm:$0xff]
        %v5022 = vld [vmem:[%s9 + $0x48] sm:$0xff]
        %v5023 = vld [vmem:[%s9 + $0x50] sm:$0xff]
        %v5024 = vld [vmem:[%s9 + $0x58] sm:$0xff]
        %v5025 = vld [vmem:[%s9 + $0x60] sm:$0xff]
        %v5026 = vld [vmem:[%s9 + $0x68] sm:$0xff]
        %v5027 = vld [vmem:[%s9 + $0x70] sm:$0xff]
        %v5028 = vld [vmem:[%s9 + $0x78] sm:$0xff]
        %v5029 = vld [vmem:[%s9 + $0x80] sm:$0xff]
        %v5030 = vld [vmem:[%s9 + $0x88] sm:$0xff]
        %v5031 = vld [vmem:[%s9 + $0x90] sm:$0xff]
        %v5032 = vld [vmem:[%s9 + $0x98] sm:$0xff]
        %v5033 = vld [vmem:[%s9 + $0xa0] sm:$0xff]
        %v5034 = vld [vmem:[%s9 + $0xa8] sm:$0xff]
        %v5035 = vld [vmem:[%s9 + $0xb0] sm:$0xff]
        %v5036 = vld [vmem:[%s9 + $0xb8] sm:$0xff]
        %v5037 = vld [vmem:[%s9 + $0xc0] sm:$0xf]
        %v5038 = vld [vmem:[%s9 + $0xc8] sm:$0xf]
        %vm5039 = vcmask 998400
        %v5041 = vsel %vm5039, %v5014, 0
        %v5044 = vsel %vm5039, %v5016, 0
        %v5047 = vsel %vm5039, %v5018, 0
        %v5050 = vsel %vm5039, %v5020, 0
        %v5053 = vsel %vm5039, %v5022, 0
        %v5056 = vsel %vm5039, %v5024, 0
        %v5059 = vsel %vm5039, %v5026, 0
        %v5062 = vsel %vm5039, %v5028, 0
        %v5065 = vsel %vm5039, %v5030, 0
        %v5068 = vsel %vm5039, %v5032, 0
        %v5071 = vsel %vm5039, %v5034, 0
        %v5074 = vsel %vm5039, %v5036, 0
        %v5077 = vsel %vm5039, %v5038, 0
        %v5079 = vsel %vm3635, %v4994, 0
        %v5081 = vsel %vm3635, %v4987, 0
        %5083 = vmatprep.subr.mxu0 %v4682
        %5084 = vmatpush1.msra.mxu0 %v4680
        %5085 = vmatprep.subr.mxu0 %v4688
        %5086 = vmatpush1.msra.mxu0 %v4686
        %5087 = vmatprep.subr.mxu0 %v4694
        %5088 = vmatpush1.msra.mxu0 %v4692
        %5089 = vmatprep.subr.mxu0 %v4700
        %5090 = vmatpush1.msra.mxu0 %v4698
        %5091 = vmatprep.subr.mxu0 %v4706
        %5092 = vmatpush1.msra.mxu0 %v4704
        %5093 = vmatprep.subr.mxu0 %v4712
        %5094 = vmatpush1.msra.mxu0 %v4710
        %5095 = vmatprep.subr.mxu0 %v5008
        %5096 = vmatpush1.msra.mxu0 %v5007
        %5097 = vmatprep.subr.mxu0 %v4767
        %5098 = vmatpush1.msra.mxu0 %v4789
        %5099 = vmatprep.subr.mxu0 %v4771
        %5100 = vmatpush1.msra.mxu0 %v4790
        %5101 = vmatprep.subr.mxu0 %v4775
        %5102 = vmatpush1.msra.mxu0 %v4791
        %5103 = vmatprep.subr.mxu0 %v4779
        %5104 = vmatpush1.msra.mxu0 %v4792
        %5105 = vmatprep.subr.mxu0 %v4783
        %5106 = vmatpush1.msra.mxu0 %v4793
        %5107 = vmatprep.subr.mxu0 %v5010
        %5108 = vmatpush1.msra.mxu0 %v5009
        %5109 = vmatprep.subr.mxu0 %v4842
        %5110 = vmatpush1.msra.mxu0 %v4864
        %5111 = vmatprep.subr.mxu0 %v4846
        %5112 = vmatpush1.msra.mxu0 %v4865
        %5113 = vmatprep.subr.mxu0 %v4850
        %5114 = vmatpush1.msra.mxu0 %v4866
        %5115 = vmatprep.subr.mxu0 %v4854
        %5116 = vmatpush1.msra.mxu0 %v4867
        %5117 = vmatprep.subr.mxu0 %v4858
        %5118 = vmatpush1.msra.mxu0 %v4868
        %5119 = vmatprep.subr.mxu0 %v5012
        %5120 = vmatpush1.msra.mxu0 %v5011
        %5121 = vmatprep.subr.mxu0 %v4918
        %5122 = vmatpush1.msra.mxu0 %v4940
        %5123 = vmatprep.subr.mxu0 %v4922
        %5124 = vmatpush1.msra.mxu0 %v4941
        %5125 = vmatprep.subr.mxu0 %v4926
        %5126 = vmatpush1.msra.mxu0 %v4942
        %5127 = vmatprep.subr.mxu0 %v4930
        %5128 = vmatpush1.msra.mxu0 %v4943
        %5129 = vmatprep.subr.mxu0 %v4934
        %5130 = vmatpush1.msra.mxu0 %v4944
        %5131 = vmatprep.subr.mxu0 %v4938
        %5132 = vmatpush1.msra.mxu0 %v4945
        %5133 = vmatprep.subr.mxu0 %v4963
        %5134 = vmatpush1.msra.mxu0 %v4988
        %5135 = vmatprep.subr.mxu0 %v4967
        %5136 = vmatpush1.msra.mxu0 %v4989
        %5137 = vmatprep.subr.mxu0 %v4971
        %5138 = vmatpush1.msra.mxu0 %v4990
        %5139 = vmatprep.subr.mxu0 %v4975
        %5140 = vmatpush1.msra.mxu0 %v4991
        %5141 = vmatprep.subr.mxu0 %v4979
        %5142 = vmatpush1.msra.mxu0 %v4992
        %5143 = vmatprep.subr.mxu0 %v4983
        %5144 = vmatpush1.msra.mxu0 %v4993
        %5145 = vmatprep.subr.mxu0 %v5081
        %5146 = vmatpush1.msra.mxu0 %v5079
        %5147 = vmatprep.mubr.f32.mxu0 %v5041
        %5148 = vmatmul.mubr.f32.gmra.mrb[0].mxu0 %v5013
        %v5149 = vpop.f32.mrb[0].mxu0
        %v5150 = vadd.f32 0.0, %v5149
        %v5151 = vpop.f32.mrb[0].mxu0
        %v5152 = vadd.f32 0.0, %v5151
        %5153 = vmatprep.mubr.f32.mxu0 %v5044
        %5154 = vmatmul.mubr.f32.gmra.mrb[0].mxu0 %v5015
        %v5155 = vpop.f32.mrb[0].mxu0
        %v5156 = vadd.f32 0.0, %v5155
        %v5157 = vpop.f32.mrb[0].mxu0
        %v5158 = vadd.f32 0.0, %v5157
        %5159 = vmatprep.mubr.f32.mxu0 %v5047
        %5160 = vmatmul.mubr.f32.gmra.mrb[0].mxu0 %v5017
        %v5161 = vpop.f32.mrb[0].mxu0
        %v5162 = vadd.f32 0.0, %v5161
        %v5163 = vpop.f32.mrb[0].mxu0
        %v5164 = vadd.f32 0.0, %v5163
        %5165 = vmatprep.mubr.f32.mxu0 %v5050
        %5166 = vmatmul.mubr.f32.gmra.mrb[0].mxu0 %v5019
        %v5167 = vpop.f32.mrb[0].mxu0
        %v5168 = vadd.f32 0.0, %v5167
        %v5169 = vpop.f32.mrb[0].mxu0
        %v5170 = vadd.f32 0.0, %v5169
        %5171 = vmatprep.mubr.f32.mxu0 %v5053
        %5172 = vmatmul.mubr.f32.gmra.mrb[0].mxu0 %v5021
        %v5173 = vpop.f32.mrb[0].mxu0
        %v5174 = vadd.f32 0.0, %v5173
        %v5175 = vpop.f32.mrb[0].mxu0
        %v5176 = vadd.f32 0.0, %v5175
        %5177 = vmatprep.mubr.f32.mxu0 %v5056
        %5178 = vmatmul.mubr.f32.gmra.mrb[0].mxu0 %v5023
        %v5179 = vpop.f32.mrb[0].mxu0
        %v5180 = vadd.f32 0.0, %v5179
        %v5181 = vpop.f32.mrb[0].mxu0
        %v5182 = vadd.f32 0.0, %v5181
        %5183 = vmatprep.mubr.f32.mxu0 %v5059
        %5184 = vmatmul.mubr.f32.gmra.mrb[0].mxu0 %v5025
        %v5185 = vpop.f32.mrb[0].mxu0
        %v5186 = vadd.f32 0.0, %v5185
        %v5187 = vpop.f32.mrb[0].mxu0
        %v5188 = vadd.f32 0.0, %v5187
        %5189 = vmatprep.mubr.f32.mxu0 %v5062
        %5190 = vmatmul.mubr.f32.gmra.mrb[0].mxu0 %v5027
        %v5191 = vpop.f32.mrb[0].mxu0
        %v5192 = vadd.f32 0.0, %v5191
        %v5193 = vpop.f32.mrb[0].mxu0
        %v5194 = vadd.f32 0.0, %v5193
        %5195 = vmatprep.mubr.f32.mxu0 %v5065
        %5196 = vmatmul.mubr.f32.gmra.mrb[0].mxu0 %v5029
        %v5197 = vpop.f32.mrb[0].mxu0
        %v5198 = vadd.f32 0.0, %v5197
        %v5199 = vpop.f32.mrb[0].mxu0
        %v5200 = vadd.f32 0.0, %v5199
        %5201 = vmatprep.mubr.f32.mxu0 %v5068
        %5202 = vmatmul.mubr.f32.gmra.mrb[0].mxu0 %v5031
        %v5203 = vpop.f32.mrb[0].mxu0
        %v5204 = vadd.f32 0.0, %v5203
        %v5205 = vpop.f32.mrb[0].mxu0
        %v5206 = vadd.f32 0.0, %v5205
        %5207 = vmatprep.mubr.f32.mxu0 %v5071
        %5208 = vmatmul.mubr.f32.gmra.mrb[0].mxu0 %v5033
        %v5209 = vpop.f32.mrb[0].mxu0
        %v5210 = vadd.f32 0.0, %v5209
        %v5211 = vpop.f32.mrb[0].mxu0
        %v5212 = vadd.f32 0.0, %v5211
        %5213 = vmatprep.mubr.f32.mxu0 %v5074
        %5214 = vmatmul.mubr.f32.gmra.mrb[0].mxu0 %v5035
        %v5215 = vpop.f32.mrb[0].mxu0
        %v5216 = vadd.f32 0.0, %v5215
        %v5217 = vpop.f32.mrb[0].mxu0
        %v5218 = vadd.f32 0.0, %v5217
        %5219 = vmatprep.mubr.f32.mxu0 %v5077
        %5220 = vmatmul.mubr.f32.gmra.mrb[0].mxu0 %v5037
        %v5221 = vpop.f32.mrb[0].mxu0
        %v5222 = vadd.f32 0.0, %v5221
        %v5223 = vpop.f32.mrb[0].mxu0
        %v5224 = vadd.f32 0.0, %v5223
        %5225 = vdwg.mxu0
        %v5226 = vld [vmem:[%s10] sm:$0xff]
        %v5227 = vld [vmem:[%s10 + $0x8] sm:$0xff]
        %v5228 = vld [vmem:[%s10 + $0x10] sm:$0xff]
        %v5229 = vld [vmem:[%s10 + $0x18] sm:$0xff]
        %v5230 = vld [vmem:[%s10 + $0x20] sm:$0xff]
        %v5231 = vld [vmem:[%s10 + $0x28] sm:$0xff]
        %v5232 = vld [vmem:[%s10 + $0x30] sm:$0xff]
        %v5233 = vld [vmem:[%s10 + $0x38] sm:$0xff]
        %v5234 = vld [vmem:[%s10 + $0x40] sm:$0xff]
        %v5235 = vld [vmem:[%s10 + $0x48] sm:$0xff]
        %v5236 = vld [vmem:[%s10 + $0x50] sm:$0xff]
        %v5237 = vld [vmem:[%s10 + $0x58] sm:$0xff]
        %v5238 = vld [vmem:[%s10 + $0x60] sm:$0xf]
        %5240 = vset.pattern.permute.xlu0 0
        %5241 = vperm.xlu0 %5240, %v5226
        %v5242 = vpop.permute.xlu0 %5241
        %5245 = vset.pattern.permute.xlu0 0
        %5246 = vperm.xlu0 %5245, %v5227
        %v5247 = vpop.permute.xlu0 %5246
        %5250 = vset.pattern.permute.xlu0 0
        %5251 = vperm.xlu0 %5250, %v5228
        %v5252 = vpop.permute.xlu0 %5251
        %5255 = vset.pattern.permute.xlu0 0
        %5256 = vperm.xlu0 %5255, %v5229
        %v5257 = vpop.permute.xlu0 %5256
        %5260 = vset.pattern.permute.xlu0 0
        %5261 = vperm.xlu0 %5260, %v5230
        %v5262 = vpop.permute.xlu0 %5261
        %5265 = vset.pattern.permute.xlu0 0
        %5266 = vperm.xlu0 %5265, %v5231
        %v5267 = vpop.permute.xlu0 %5266
        %5270 = vset.pattern.permute.xlu0 0
        %5271 = vperm.xlu0 %5270, %v5232
        %v5272 = vpop.permute.xlu0 %5271
        %5275 = vset.pattern.permute.xlu0 0
        %5276 = vperm.xlu0 %5275, %v5233
        %v5277 = vpop.permute.xlu0 %5276
        %5280 = vset.pattern.permute.xlu0 0
        %5281 = vperm.xlu0 %5280, %v5234
        %v5282 = vpop.permute.xlu0 %5281
        %5285 = vset.pattern.permute.xlu0 0
        %5286 = vperm.xlu0 %5285, %v5235
        %v5287 = vpop.permute.xlu0 %5286
        %5290 = vset.pattern.permute.xlu0 0
        %5291 = vperm.xlu0 %5290, %v5236
        %v5292 = vpop.permute.xlu0 %5291
        %5295 = vset.pattern.permute.xlu0 0
        %5296 = vperm.xlu0 %5295, %v5237
        %v5297 = vpop.permute.xlu0 %5296
        %5300 = vset.pattern.permute.xlu0 0
        %5301 = vperm.xlu0 %5300, %v5238
        %v5302 = vpop.permute.xlu0 %5301
        %v5304 = vmul.f32 %v5150, %v5242
        %v5305 = vmul.f32 %v5152, %v5242
        %v5306 = vmul.f32 %v5156, %v5247
        %v5307 = vmul.f32 %v5158, %v5247
        %v5308 = vmul.f32 %v5162, %v5252
        %v5309 = vmul.f32 %v5164, %v5252
        %v5310 = vmul.f32 %v5168, %v5257
        %v5311 = vmul.f32 %v5170, %v5257
        %v5312 = vmul.f32 %v5174, %v5262
        %v5313 = vmul.f32 %v5176, %v5262
        %v5314 = vmul.f32 %v5180, %v5267
        %v5315 = vmul.f32 %v5182, %v5267
        %v5316 = vmul.f32 %v5186, %v5272
        %v5317 = vmul.f32 %v5188, %v5272
        %v5318 = vmul.f32 %v5192, %v5277
        %v5319 = vmul.f32 %v5194, %v5277
        %v5320 = vmul.f32 %v5198, %v5282
        %v5321 = vmul.f32 %v5200, %v5282
        %v5322 = vmul.f32 %v5204, %v5287
        %v5323 = vmul.f32 %v5206, %v5287
        %v5324 = vmul.f32 %v5210, %v5292
        %v5325 = vmul.f32 %v5212, %v5292
        %v5326 = vmul.f32 %v5216, %v5297
        %v5327 = vmul.f32 %v5218, %v5297
        %v5328 = vmul.f32 %v5222, %v5302
        %v5329 = vmul.f32 %v5224, %v5302
        %v5330 = vld [vmem:[%s11] sm:$0xff]
        %v5331 = vld [vmem:[%s11 + $0x8] sm:$0xff]
        %v5332 = vld [vmem:[%s11 + $0x10] sm:$0xff]
        %v5333 = vld [vmem:[%s11 + $0x18] sm:$0xff]
        %v5334 = vld [vmem:[%s11 + $0x20] sm:$0xff]
        %v5335 = vld [vmem:[%s11 + $0x28] sm:$0xff]
        %v5336 = vld [vmem:[%s11 + $0x30] sm:$0xff]
        %v5337 = vld [vmem:[%s11 + $0x38] sm:$0xff]
        %v5338 = vld [vmem:[%s11 + $0x40] sm:$0xff]
        %v5339 = vld [vmem:[%s11 + $0x48] sm:$0xff]
        %v5340 = vld [vmem:[%s11 + $0x50] sm:$0xff]
        %v5341 = vld [vmem:[%s11 + $0x58] sm:$0xff]
        %v5342 = vld [vmem:[%s11 + $0x60] sm:$0xf]
        %5344 = vset.pattern.permute.xlu0 0
        %5345 = vperm.xlu0 %5344, %v5330
        %v5346 = vpop.permute.xlu0 %5345
        %5349 = vset.pattern.permute.xlu0 0
        %5350 = vperm.xlu0 %5349, %v5331
        %v5351 = vpop.permute.xlu0 %5350
        %5354 = vset.pattern.permute.xlu0 0
        %5355 = vperm.xlu0 %5354, %v5332
        %v5356 = vpop.permute.xlu0 %5355
        %5359 = vset.pattern.permute.xlu0 0
        %5360 = vperm.xlu0 %5359, %v5333
        %v5361 = vpop.permute.xlu0 %5360
        %5364 = vset.pattern.permute.xlu0 0
        %5365 = vperm.xlu0 %5364, %v5334
        %v5366 = vpop.permute.xlu0 %5365
        %5369 = vset.pattern.permute.xlu0 0
        %5370 = vperm.xlu0 %5369, %v5335
        %v5371 = vpop.permute.xlu0 %5370
        %5374 = vset.pattern.permute.xlu0 0
        %5375 = vperm.xlu0 %5374, %v5336
        %v5376 = vpop.permute.xlu0 %5375
        %5379 = vset.pattern.permute.xlu0 0
        %5380 = vperm.xlu0 %5379, %v5337
        %v5381 = vpop.permute.xlu0 %5380
        %5384 = vset.pattern.permute.xlu0 0
        %5385 = vperm.xlu0 %5384, %v5338
        %v5386 = vpop.permute.xlu0 %5385
        %5389 = vset.pattern.permute.xlu0 0
        %5390 = vperm.xlu0 %5389, %v5339
        %v5391 = vpop.permute.xlu0 %5390
        %5394 = vset.pattern.permute.xlu0 0
        %5395 = vperm.xlu0 %5394, %v5340
        %v5396 = vpop.permute.xlu0 %5395
        %5399 = vset.pattern.permute.xlu0 0
        %5400 = vperm.xlu0 %5399, %v5341
        %v5401 = vpop.permute.xlu0 %5400
        %5404 = vset.pattern.permute.xlu0 0
        %5405 = vperm.xlu0 %5404, %v5342
        %v5406 = vpop.permute.xlu0 %5405
        %v5408 = vadd.f32 %v5304, %v5346
        %v5409 = vadd.f32 %v5305, %v5346
        %v5410 = vadd.f32 %v5306, %v5351
        %v5411 = vadd.f32 %v5307, %v5351
        %v5412 = vadd.f32 %v5308, %v5356
        %v5413 = vadd.f32 %v5309, %v5356
        %v5414 = vadd.f32 %v5310, %v5361
        %v5415 = vadd.f32 %v5311, %v5361
        %v5416 = vadd.f32 %v5312, %v5366
        %v5417 = vadd.f32 %v5313, %v5366
        %v5418 = vadd.f32 %v5314, %v5371
        %v5419 = vadd.f32 %v5315, %v5371
        %v5420 = vadd.f32 %v5316, %v5376
        %v5421 = vadd.f32 %v5317, %v5376
        %v5422 = vadd.f32 %v5318, %v5381
        %v5423 = vadd.f32 %v5319, %v5381
        %v5424 = vadd.f32 %v5320, %v5386
        %v5425 = vadd.f32 %v5321, %v5386
        %v5426 = vadd.f32 %v5322, %v5391
        %v5427 = vadd.f32 %v5323, %v5391
        %v5428 = vadd.f32 %v5324, %v5396
        %v5429 = vadd.f32 %v5325, %v5396
        %v5430 = vadd.f32 %v5326, %v5401
        %v5431 = vadd.f32 %v5327, %v5401
        %v5432 = vadd.f32 %v5328, %v5406
        %v5433 = vadd.f32 %v5329, %v5406
        %vm5434 = vcmp.gt.f32.partialorder %v5408, 0.0
        %vm5435 = vcmp.gt.f32.partialorder %v5409, 0.0
        %vm5436 = vcmp.gt.f32.partialorder %v5410, 0.0
        %vm5437 = vcmp.gt.f32.partialorder %v5411, 0.0
        %vm5438 = vcmp.gt.f32.partialorder %v5412, 0.0
        %vm5439 = vcmp.gt.f32.partialorder %v5413, 0.0
        %vm5440 = vcmp.gt.f32.partialorder %v5414, 0.0
        %vm5441 = vcmp.gt.f32.partialorder %v5415, 0.0
        %vm5442 = vcmp.gt.f32.partialorder %v5416, 0.0
        %vm5443 = vcmp.gt.f32.partialorder %v5417, 0.0
        %vm5444 = vcmp.gt.f32.partialorder %v5418, 0.0
        %vm5445 = vcmp.gt.f32.partialorder %v5419, 0.0
        %vm5446 = vcmp.gt.f32.partialorder %v5420, 0.0
        %vm5447 = vcmp.gt.f32.partialorder %v5421, 0.0
        %vm5448 = vcmp.gt.f32.partialorder %v5422, 0.0
        %vm5449 = vcmp.gt.f32.partialorder %v5423, 0.0
        %vm5450 = vcmp.gt.f32.partialorder %v5424, 0.0
        %vm5451 = vcmp.gt.f32.partialorder %v5425, 0.0
        %vm5452 = vcmp.gt.f32.partialorder %v5426, 0.0
        %vm5453 = vcmp.gt.f32.partialorder %v5427, 0.0
        %vm5454 = vcmp.gt.f32.partialorder %v5428, 0.0
        %vm5455 = vcmp.gt.f32.partialorder %v5429, 0.0
        %vm5456 = vcmp.gt.f32.partialorder %v5430, 0.0
        %vm5457 = vcmp.gt.f32.partialorder %v5431, 0.0
        %vm5458 = vcmp.gt.f32.partialorder %v5432, 0.0
        %vm5459 = vcmp.gt.f32.partialorder %v5433, 0.0
        %v5460 = vmul.f32 %v5408, 0.01
        %v5461 = vmul.f32 %v5409, 0.01
        %v5462 = vmul.f32 %v5410, 0.01
        %v5463 = vmul.f32 %v5411, 0.01
        %v5464 = vmul.f32 %v5412, 0.01
        %v5465 = vmul.f32 %v5413, 0.01
        %v5466 = vmul.f32 %v5414, 0.01
        %v5467 = vmul.f32 %v5415, 0.01
        %v5468 = vmul.f32 %v5416, 0.01
        %v5469 = vmul.f32 %v5417, 0.01
        %v5470 = vmul.f32 %v5418, 0.01
        %v5471 = vmul.f32 %v5419, 0.01
        %v5472 = vmul.f32 %v5420, 0.01
        %v5473 = vmul.f32 %v5421, 0.01
        %v5474 = vmul.f32 %v5422, 0.01
        %v5475 = vmul.f32 %v5423, 0.01
        %v5476 = vmul.f32 %v5424, 0.01
        %v5477 = vmul.f32 %v5425, 0.01
        %v5478 = vmul.f32 %v5426, 0.01
        %v5479 = vmul.f32 %v5427, 0.01
        %v5480 = vmul.f32 %v5428, 0.01
        %v5481 = vmul.f32 %v5429, 0.01
        %v5482 = vmul.f32 %v5430, 0.01
        %v5483 = vmul.f32 %v5431, 0.01
        %v5484 = vmul.f32 %v5432, 0.01
        %v5485 = vmul.f32 %v5433, 0.01
        %v5486 = vsel %vm5434, %v5408, %v5460
        %v5487 = vsel %vm5435, %v5409, %v5461
        %v5488 = vsel %vm5436, %v5410, %v5462
        %v5489 = vsel %vm5437, %v5411, %v5463
        %v5490 = vsel %vm5438, %v5412, %v5464
        %v5491 = vsel %vm5439, %v5413, %v5465
        %v5492 = vsel %vm5440, %v5414, %v5466
        %v5493 = vsel %vm5441, %v5415, %v5467
        %v5494 = vsel %vm5442, %v5416, %v5468
        %v5495 = vsel %vm5443, %v5417, %v5469
        %v5496 = vsel %vm5444, %v5418, %v5470
        %v5497 = vsel %vm5445, %v5419, %v5471
        %v5498 = vsel %vm5446, %v5420, %v5472
        %v5499 = vsel %vm5447, %v5421, %v5473
        %v5500 = vsel %vm5448, %v5422, %v5474
        %v5501 = vsel %vm5449, %v5423, %v5475
        %v5502 = vsel %vm5450, %v5424, %v5476
        %v5503 = vsel %vm5451, %v5425, %v5477
        %v5504 = vsel %vm5452, %v5426, %v5478
        %v5505 = vsel %vm5453, %v5427, %v5479
        %v5506 = vsel %vm5454, %v5428, %v5480
        %v5507 = vsel %vm5455, %v5429, %v5481
        %v5508 = vsel %vm5456, %v5430, %v5482
        %v5509 = vsel %vm5457, %v5431, %v5483
        %v5510 = vsel %vm5458, %v5432, %v5484
        %v5511 = vsel %vm5459, %v5433, %v5485
        %5538 = vrot.lane.b32.xlu0 %v5486, 127
        %v5539 = vpop.permute.xlu0 %5538
        %5540 = vrot.lane.b32.xlu0 %v5487, 127
        %v5541 = vpop.permute.xlu0 %5540
        %5542 = vrot.lane.b32.xlu0 %v5488, 127
        %v5543 = vpop.permute.xlu0 %5542
        %5544 = vrot.lane.b32.xlu0 %v5489, 127
        %v5545 = vpop.permute.xlu0 %5544
        %5546 = vrot.lane.b32.xlu0 %v5490, 127
        %v5547 = vpop.permute.xlu0 %5546
        %5548 = vrot.lane.b32.xlu0 %v5491, 127
        %v5549 = vpop.permute.xlu0 %5548
        %5550 = vrot.lane.b32.xlu0 %v5492, 127
        %v5551 = vpop.permute.xlu0 %5550
        %5552 = vrot.lane.b32.xlu0 %v5493, 127
        %v5553 = vpop.permute.xlu0 %5552
        %5554 = vrot.lane.b32.xlu0 %v5494, 127
        %v5555 = vpop.permute.xlu0 %5554
        %5556 = vrot.lane.b32.xlu0 %v5495, 127
        %v5557 = vpop.permute.xlu0 %5556
        %5558 = vrot.lane.b32.xlu0 %v5496, 127
        %v5559 = vpop.permute.xlu0 %5558
        %5560 = vrot.lane.b32.xlu0 %v5497, 127
        %v5561 = vpop.permute.xlu0 %5560
        %5562 = vrot.lane.b32.xlu0 %v5498, 127
        %v5563 = vpop.permute.xlu0 %5562
        %5564 = vrot.lane.b32.xlu0 %v5499, 127
        %v5565 = vpop.permute.xlu0 %5564
        %5566 = vrot.lane.b32.xlu0 %v5500, 127
        %v5567 = vpop.permute.xlu0 %5566
        %5568 = vrot.lane.b32.xlu0 %v5501, 127
        %v5569 = vpop.permute.xlu0 %5568
        %5570 = vrot.lane.b32.xlu0 %v5502, 127
        %v5571 = vpop.permute.xlu0 %5570
        %5572 = vrot.lane.b32.xlu0 %v5503, 127
        %v5573 = vpop.permute.xlu0 %5572
        %5574 = vrot.lane.b32.xlu0 %v5504, 127
        %v5575 = vpop.permute.xlu0 %5574
        %5576 = vrot.lane.b32.xlu0 %v5505, 127
        %v5577 = vpop.permute.xlu0 %5576
        %5578 = vrot.lane.b32.xlu0 %v5506, 127
        %v5579 = vpop.permute.xlu0 %5578
        %5580 = vrot.lane.b32.xlu0 %v5507, 127
        %v5581 = vpop.permute.xlu0 %5580
        %5582 = vrot.lane.b32.xlu0 %v5508, 127
        %v5583 = vpop.permute.xlu0 %5582
        %5584 = vrot.lane.b32.xlu0 %v5509, 127
        %v5585 = vpop.permute.xlu0 %5584
        %5586 = vrot.lane.b32.xlu0 %v5510, 127
        %v5587 = vpop.permute.xlu0 %5586
        %5588 = vrot.lane.b32.xlu0 %v5511, 127
        %v5589 = vpop.permute.xlu0 %5588
        %v5590 = vsel %vm973, %v5539, %v5541
        %v5591 = vsel %vm973, %v5543, %v5545
        %v5592 = vsel %vm973, %v5547, %v5549
        %v5593 = vsel %vm973, %v5551, %v5553
        %v5594 = vsel %vm973, %v5555, %v5557
        %v5595 = vsel %vm973, %v5559, %v5561
        %v5596 = vsel %vm973, %v5563, %v5565
        %v5597 = vsel %vm973, %v5567, %v5569
        %v5598 = vsel %vm973, %v5571, %v5573
        %v5599 = vsel %vm973, %v5575, %v5577
        %v5600 = vsel %vm973, %v5579, %v5581
        %v5601 = vsel %vm973, %v5583, %v5585
        %v5602 = vsel %vm973, %v5587, %v5589
        %v5629 = vmax.f32 %v5486, %v5590
        %v5630 = vmax.f32 %v5487, %v5541
        %v5631 = vmax.f32 %v5488, %v5591
        %v5632 = vmax.f32 %v5489, %v5545
        %v5633 = vmax.f32 %v5490, %v5592
        %v5634 = vmax.f32 %v5491, %v5549
        %v5635 = vmax.f32 %v5492, %v5593
        %v5636 = vmax.f32 %v5493, %v5553
        %v5637 = vmax.f32 %v5494, %v5594
        %v5638 = vmax.f32 %v5495, %v5557
        %v5639 = vmax.f32 %v5496, %v5595
        %v5640 = vmax.f32 %v5497, %v5561
        %v5641 = vmax.f32 %v5498, %v5596
        %v5642 = vmax.f32 %v5499, %v5565
        %v5643 = vmax.f32 %v5500, %v5597
        %v5644 = vmax.f32 %v5501, %v5569
        %v5645 = vmax.f32 %v5502, %v5598
        %v5646 = vmax.f32 %v5503, %v5573
        %v5647 = vmax.f32 %v5504, %v5599
        %v5648 = vmax.f32 %v5505, %v5577
        %v5649 = vmax.f32 %v5506, %v5600
        %v5650 = vmax.f32 %v5507, %v5581
        %v5651 = vmax.f32 %v5508, %v5601
        %v5652 = vmax.f32 %v5509, %v5585
        %v5653 = vmax.f32 %v5510, %v5602
        %v5654 = vmax.f32 %v5511, %v5589
        %v5655 = vld [vmem:[%s12] sm:$0xff]
        %v5656 = vld [vmem:[%s12 + $0x8] sm:$0xff]
        %v5657 = vld [vmem:[%s12 + $0x10] sm:$0xff]
        %v5658 = vld [vmem:[%s12 + $0x18] sm:$0xff]
        %v5659 = vld [vmem:[%s12 + $0x20] sm:$0xff]
        %v5660 = vld [vmem:[%s12 + $0x28] sm:$0xff]
        %v5661 = vld [vmem:[%s12 + $0x30] sm:$0xff]
        %v5662 = vld [vmem:[%s12 + $0x38] sm:$0xff]
        %v5663 = vld [vmem:[%s12 + $0x40] sm:$0xff]
        %v5664 = vld [vmem:[%s12 + $0x48] sm:$0xff]
        %v5665 = vld [vmem:[%s12 + $0x50] sm:$0xff]
        %v5666 = vld [vmem:[%s12 + $0x58] sm:$0xff]
        %v5667 = vld [vmem:[%s12 + $0x60] sm:$0xff]
        %v5668 = vld [vmem:[%s12 + $0x68] sm:$0xff]
        %v5669 = vld [vmem:[%s12 + $0x70] sm:$0xff]
        %v5670 = vld [vmem:[%s12 + $0x78] sm:$0xff]
        %v5671 = vld [vmem:[%s12 + $0x80] sm:$0xff]
        %v5672 = vld [vmem:[%s12 + $0x88] sm:$0xff]
        %v5673 = vld [vmem:[%s12 + $0x90] sm:$0xff]
        %v5674 = vld [vmem:[%s12 + $0x98] sm:$0xff]
        %v5675 = vld [vmem:[%s12 + $0xa0] sm:$0xff]
        %v5676 = vld [vmem:[%s12 + $0xa8] sm:$0xff]
        %v5677 = vld [vmem:[%s12 + $0xb0] sm:$0x7]
        %vm5678 = vcmask 416768
        %v5680 = vsel %vm5678, %v5630, 0
        %v5683 = vsel %vm5678, %v5632, 0
        %v5686 = vsel %vm5678, %v5634, 0
        %v5689 = vsel %vm5678, %v5636, 0
        %v5692 = vsel %vm5678, %v5638, 0
        %v5695 = vsel %vm5678, %v5640, 0
        %v5698 = vsel %vm5678, %v5642, 0
        %v5701 = vsel %vm5678, %v5644, 0
        %v5704 = vsel %vm5678, %v5646, 0
        %v5707 = vsel %vm5678, %v5648, 0
        %v5710 = vsel %vm5678, %v5650, 0
        %v5713 = vsel %vm5678, %v5652, 0
        %v5716 = vsel %vm5678, %v5654, 0
        %v5719 = vsel %vm3701, %v5677, 0
        %5721 = vmatprep.subr.mxu0 0.0
        %5722 = vmatpush1.msra.mxu0 %v5655
        %5723 = vmatprep.subr.mxu0 0.0
        %5724 = vmatpush1.msra.mxu0 %v5656
        %5725 = vmatprep.subr.mxu0 0.0
        %5726 = vmatpush1.msra.mxu0 %v5657
        %5727 = vmatprep.subr.mxu0 0.0
        %5728 = vmatpush1.msra.mxu0 %v5658
        %5729 = vmatprep.subr.mxu0 0.0
        %5730 = vmatpush1.msra.mxu0 %v5659
        %5731 = vmatprep.subr.mxu0 0.0
        %5732 = vmatpush1.msra.mxu0 %v5660
        %5733 = vmatprep.subr.mxu0 0.0
        %5734 = vmatpush1.msra.mxu0 %v5661
        %5735 = vmatprep.subr.mxu0 0.0
        %5736 = vmatpush1.msra.mxu0 %v5662
        %5737 = vmatprep.subr.mxu0 0.0
        %5738 = vmatpush1.msra.mxu0 %v5663
        %5739 = vmatprep.subr.mxu0 0.0
        %5740 = vmatpush1.msra.mxu0 %v5664
        %5741 = vmatprep.subr.mxu0 0.0
        %5742 = vmatpush1.msra.mxu0 %v5665
        %5743 = vmatprep.subr.mxu0 0.0
        %5744 = vmatpush1.msra.mxu0 %v5666
        %5745 = vmatprep.subr.mxu0 0.0
        %5746 = vmatpush1.msra.mxu0 %v5667
        %5747 = vmatprep.subr.mxu0 0.0
        %5748 = vmatpush1.msra.mxu0 %v5668
        %5749 = vmatprep.subr.mxu0 0.0
        %5750 = vmatpush1.msra.mxu0 %v5669
        %5751 = vmatprep.subr.mxu0 0.0
        %5752 = vmatpush1.msra.mxu0 %v5670
        %5753 = vmatprep.subr.mxu0 0.0
        %5754 = vmatpush1.msra.mxu0 %v5671
        %5755 = vmatprep.subr.mxu0 0.0
        %5756 = vmatpush1.msra.mxu0 %v5672
        %5757 = vmatprep.subr.mxu0 0.0
        %5758 = vmatpush1.msra.mxu0 %v5673
        %5759 = vmatprep.subr.mxu0 0.0
        %5760 = vmatpush1.msra.mxu0 %v5674
        %5761 = vmatprep.subr.mxu0 0.0
        %5762 = vmatpush1.msra.mxu0 %v5675
        %5763 = vmatprep.subr.mxu0 0.0
        %5764 = vmatpush1.msra.mxu0 %v5676
        %5765 = vmatprep.subr.mxu0 0.0
        %5766 = vmatpush1.msra.mxu0 %v5719
        %5767 = vmatprep.subr.mxu0 0.0
        %5768 = vmatpush1.msra.mxu0 0.0
        %5769 = vmatprep.subr.mxu0 0.0
        %5770 = vmatpush1.msra.mxu0 0.0
        %5771 = vmatprep.subr.mxu0 0.0
        %5772 = vmatpush1.msra.mxu0 0.0
        %5773 = vmatprep.subr.mxu0 0.0
        %5774 = vmatpush1.msra.mxu0 0.0
        %5775 = vmatprep.subr.mxu0 0.0
        %5776 = vmatpush1.msra.mxu0 0.0
        %5777 = vmatprep.subr.mxu0 0.0
        %5778 = vmatpush1.msra.mxu0 0.0
        %5779 = vmatprep.subr.mxu0 0.0
        %5780 = vmatpush1.msra.mxu0 0.0
        %5781 = vmatprep.subr.mxu0 0.0
        %5782 = vmatpush1.msra.mxu0 0.0
        %5783 = vmatprep.subr.mxu0 0.0
        %5784 = vmatpush1.msra.mxu0 0.0
        %5785 = vmatprep.mubr.f32.mxu0 %v5680
        %5786 = vmatmul.mubr.f32.gmra.mrb[0].mxu0 %v5629
        %v5787 = vpop.f32.mrb[0].mxu0
        %v5788 = vadd.f32 0.0, %v5787
        %v5789 = vpop.f32.mrb[0].mxu0
        %5790 = vmatprep.mubr.f32.mxu0 %v5683
        %5791 = vmatmul.mubr.f32.gmra.mrb[0].mxu0 %v5631
        %v5792 = vpop.f32.mrb[0].mxu0
        %v5793 = vadd.f32 0.0, %v5792
        %v5794 = vpop.f32.mrb[0].mxu0
        %5795 = vmatprep.mubr.f32.mxu0 %v5686
        %5796 = vmatmul.mubr.f32.gmra.mrb[0].mxu0 %v5633
        %v5797 = vpop.f32.mrb[0].mxu0
        %v5798 = vadd.f32 0.0, %v5797
        %v5799 = vpop.f32.mrb[0].mxu0
        %5800 = vmatprep.mubr.f32.mxu0 %v5689
        %5801 = vmatmul.mubr.f32.gmra.mrb[0].mxu0 %v5635
        %v5802 = vpop.f32.mrb[0].mxu0
        %v5803 = vadd.f32 0.0, %v5802
        %v5804 = vpop.f32.mrb[0].mxu0
        %5805 = vmatprep.mubr.f32.mxu0 %v5692
        %5806 = vmatmul.mubr.f32.gmra.mrb[0].mxu0 %v5637
        %v5807 = vpop.f32.mrb[0].mxu0
        %v5808 = vadd.f32 0.0, %v5807
        %v5809 = vpop.f32.mrb[0].mxu0
        %5810 = vmatprep.mubr.f32.mxu0 %v5695
        %5811 = vmatmul.mubr.f32.gmra.mrb[0].mxu0 %v5639
        %v5812 = vpop.f32.mrb[0].mxu0
        %v5813 = vadd.f32 0.0, %v5812
        %v5814 = vpop.f32.mrb[0].mxu0
        %5815 = vmatprep.mubr.f32.mxu0 %v5698
        %5816 = vmatmul.mubr.f32.gmra.mrb[0].mxu0 %v5641
        %v5817 = vpop.f32.mrb[0].mxu0
        %v5818 = vadd.f32 0.0, %v5817
        %v5819 = vpop.f32.mrb[0].mxu0
        %5820 = vmatprep.mubr.f32.mxu0 %v5701
        %5821 = vmatmul.mubr.f32.gmra.mrb[0].mxu0 %v5643
        %v5822 = vpop.f32.mrb[0].mxu0
        %v5823 = vadd.f32 0.0, %v5822
        %v5824 = vpop.f32.mrb[0].mxu0
        %5825 = vmatprep.mubr.f32.mxu0 %v5704
        %5826 = vmatmul.mubr.f32.gmra.mrb[0].mxu0 %v5645
        %v5827 = vpop.f32.mrb[0].mxu0
        %v5828 = vadd.f32 0.0, %v5827
        %v5829 = vpop.f32.mrb[0].mxu0
        %5830 = vmatprep.mubr.f32.mxu0 %v5707
        %5831 = vmatmul.mubr.f32.gmra.mrb[0].mxu0 %v5647
        %v5832 = vpop.f32.mrb[0].mxu0
        %v5833 = vadd.f32 0.0, %v5832
        %v5834 = vpop.f32.mrb[0].mxu0
        %5835 = vmatprep.mubr.f32.mxu0 %v5710
        %5836 = vmatmul.mubr.f32.gmra.mrb[0].mxu0 %v5649
        %v5837 = vpop.f32.mrb[0].mxu0
        %v5838 = vadd.f32 0.0, %v5837
        %v5839 = vpop.f32.mrb[0].mxu0
        %5840 = vmatprep.mubr.f32.mxu0 %v5713
        %5841 = vmatmul.mubr.f32.gmra.mrb[0].mxu0 %v5651
        %v5842 = vpop.f32.mrb[0].mxu0
        %v5843 = vadd.f32 0.0, %v5842
        %v5844 = vpop.f32.mrb[0].mxu0
        %5845 = vmatprep.mubr.f32.mxu0 %v5716
        %5846 = vmatmul.mubr.f32.gmra.mrb[0].mxu0 %v5653
        %v5847 = vpop.f32.mrb[0].mxu0
        %v5848 = vadd.f32 0.0, %v5847
        %v5849 = vpop.f32.mrb[0].mxu0
        %5850 = vdwg.mxu0
        %v5864 = vrot.slane %v5788, 4
        %v5865 = vrot.slane %v5793, 4
        %v5866 = vsel %vm3767, %v5864, %v5865
        %v5867 = vrot.slane %v5798, 4
        %v5868 = vsel %vm3767, %v5865, %v5867
        %v5869 = vrot.slane %v5803, 4
        %v5870 = vsel %vm3767, %v5867, %v5869
        %v5871 = vrot.slane %v5808, 4
        %v5872 = vsel %vm3767, %v5869, %v5871
        %v5873 = vrot.slane %v5813, 4
        %v5874 = vsel %vm3767, %v5871, %v5873
        %v5875 = vrot.slane %v5818, 4
        %v5876 = vsel %vm3767, %v5873, %v5875
        %v5877 = vrot.slane %v5823, 4
        %v5878 = vsel %vm3767, %v5875, %v5877
        %v5879 = vrot.slane %v5828, 4
        %v5880 = vsel %vm3767, %v5877, %v5879
        %v5881 = vrot.slane %v5833, 4
        %v5882 = vsel %vm3767, %v5879, %v5881
        %v5883 = vrot.slane %v5838, 4
        %v5884 = vsel %vm3767, %v5881, %v5883
        %v5885 = vrot.slane %v5843, 4
        %v5886 = vsel %vm3767, %v5883, %v5885
        %v5887 = vrot.slane %v5848, 4
        %v5888 = vsel %vm3767, %v5885, %v5887
        %5889 = vrot.lane.b32.xlu0 %v5864, 127
        %v5890 = vpop.permute.xlu0 %5889
        %5891 = vrot.lane.b32.xlu0 %v5866, 127
        %v5892 = vpop.permute.xlu0 %5891
        %5893 = vrot.lane.b32.xlu0 %v5868, 127
        %v5894 = vpop.permute.xlu0 %5893
        %5895 = vrot.lane.b32.xlu0 %v5870, 127
        %v5896 = vpop.permute.xlu0 %5895
        %5897 = vrot.lane.b32.xlu0 %v5872, 127
        %v5898 = vpop.permute.xlu0 %5897
        %5899 = vrot.lane.b32.xlu0 %v5874, 127
        %v5900 = vpop.permute.xlu0 %5899
        %5901 = vrot.lane.b32.xlu0 %v5876, 127
        %v5902 = vpop.permute.xlu0 %5901
        %5903 = vrot.lane.b32.xlu0 %v5878, 127
        %v5904 = vpop.permute.xlu0 %5903
        %5905 = vrot.lane.b32.xlu0 %v5880, 127
        %v5906 = vpop.permute.xlu0 %5905
        %5907 = vrot.lane.b32.xlu0 %v5882, 127
        %v5908 = vpop.permute.xlu0 %5907
        %5909 = vrot.lane.b32.xlu0 %v5884, 127
        %v5910 = vpop.permute.xlu0 %5909
        %5911 = vrot.lane.b32.xlu0 %v5886, 127
        %v5912 = vpop.permute.xlu0 %5911
        %5913 = vrot.lane.b32.xlu0 %v5888, 127
        %v5914 = vpop.permute.xlu0 %5913
        %5928 = vrot.lane.b32.xlu0 %v5788, 126
        %v5929 = vpop.permute.xlu0 %5928
        %5930 = vrot.lane.b32.xlu0 %v5793, 126
        %v5931 = vpop.permute.xlu0 %5930
        %5932 = vrot.lane.b32.xlu0 %v5798, 126
        %v5933 = vpop.permute.xlu0 %5932
        %5934 = vrot.lane.b32.xlu0 %v5803, 126
        %v5935 = vpop.permute.xlu0 %5934
        %5936 = vrot.lane.b32.xlu0 %v5808, 126
        %v5937 = vpop.permute.xlu0 %5936
        %5938 = vrot.lane.b32.xlu0 %v5813, 126
        %v5939 = vpop.permute.xlu0 %5938
        %5940 = vrot.lane.b32.xlu0 %v5818, 126
        %v5941 = vpop.permute.xlu0 %5940
        %5942 = vrot.lane.b32.xlu0 %v5823, 126
        %v5943 = vpop.permute.xlu0 %5942
        %5944 = vrot.lane.b32.xlu0 %v5828, 126
        %v5945 = vpop.permute.xlu0 %5944
        %5946 = vrot.lane.b32.xlu0 %v5833, 126
        %v5947 = vpop.permute.xlu0 %5946
        %5948 = vrot.lane.b32.xlu0 %v5838, 126
        %v5949 = vpop.permute.xlu0 %5948
        %5950 = vrot.lane.b32.xlu0 %v5843, 126
        %v5951 = vpop.permute.xlu0 %5950
        %5952 = vrot.lane.b32.xlu0 %v5848, 126
        %v5953 = vpop.permute.xlu0 %5952
        %5967 = vrot.lane.b32.xlu0 %v5864, 125
        %v5968 = vpop.permute.xlu0 %5967
        %5969 = vrot.lane.b32.xlu0 %v5866, 125
        %v5970 = vpop.permute.xlu0 %5969
        %5971 = vrot.lane.b32.xlu0 %v5868, 125
        %v5972 = vpop.permute.xlu0 %5971
        %5973 = vrot.lane.b32.xlu0 %v5870, 125
        %v5974 = vpop.permute.xlu0 %5973
        %5975 = vrot.lane.b32.xlu0 %v5872, 125
        %v5976 = vpop.permute.xlu0 %5975
        %5977 = vrot.lane.b32.xlu0 %v5874, 125
        %v5978 = vpop.permute.xlu0 %5977
        %5979 = vrot.lane.b32.xlu0 %v5876, 125
        %v5980 = vpop.permute.xlu0 %5979
        %5981 = vrot.lane.b32.xlu0 %v5878, 125
        %v5982 = vpop.permute.xlu0 %5981
        %5983 = vrot.lane.b32.xlu0 %v5880, 125
        %v5984 = vpop.permute.xlu0 %5983
        %5985 = vrot.lane.b32.xlu0 %v5882, 125
        %v5986 = vpop.permute.xlu0 %5985
        %5987 = vrot.lane.b32.xlu0 %v5884, 125
        %v5988 = vpop.permute.xlu0 %5987
        %5989 = vrot.lane.b32.xlu0 %v5886, 125
        %v5990 = vpop.permute.xlu0 %5989
        %5991 = vrot.lane.b32.xlu0 %v5888, 125
        %v5992 = vpop.permute.xlu0 %5991
        %6006 = vrot.lane.b32.xlu0 %v5788, 124
        %v6007 = vpop.permute.xlu0 %6006
        %6008 = vrot.lane.b32.xlu0 %v5793, 124
        %v6009 = vpop.permute.xlu0 %6008
        %6010 = vrot.lane.b32.xlu0 %v5798, 124
        %v6011 = vpop.permute.xlu0 %6010
        %6012 = vrot.lane.b32.xlu0 %v5803, 124
        %v6013 = vpop.permute.xlu0 %6012
        %6014 = vrot.lane.b32.xlu0 %v5808, 124
        %v6015 = vpop.permute.xlu0 %6014
        %6016 = vrot.lane.b32.xlu0 %v5813, 124
        %v6017 = vpop.permute.xlu0 %6016
        %6018 = vrot.lane.b32.xlu0 %v5818, 124
        %v6019 = vpop.permute.xlu0 %6018
        %6020 = vrot.lane.b32.xlu0 %v5823, 124
        %v6021 = vpop.permute.xlu0 %6020
        %6022 = vrot.lane.b32.xlu0 %v5828, 124
        %v6023 = vpop.permute.xlu0 %6022
        %6024 = vrot.lane.b32.xlu0 %v5833, 124
        %v6025 = vpop.permute.xlu0 %6024
        %6026 = vrot.lane.b32.xlu0 %v5838, 124
        %v6027 = vpop.permute.xlu0 %6026
        %6028 = vrot.lane.b32.xlu0 %v5843, 124
        %v6029 = vpop.permute.xlu0 %6028
        %6030 = vrot.lane.b32.xlu0 %v5848, 124
        %v6031 = vpop.permute.xlu0 %6030
        %v6044 = vsel %vm3767, %v5848, %v5890
        %v6045 = vsel %vm3767, %v5953, %v5968
        %v6046 = vld [vmem:[%s13] sm:$0xff]
        %v6047 = vld [vmem:[%s13 + $0x8] sm:$0xff]
        %v6048 = vld [vmem:[%s13 + $0x10] sm:$0xff]
        %v6049 = vld [vmem:[%s13 + $0x18] sm:$0xff]
        %v6050 = vld [vmem:[%s13 + $0x20] sm:$0xff]
        %v6051 = vld [vmem:[%s13 + $0x28] sm:$0xff]
        %v6052 = vld [vmem:[%s13 + $0x30] sm:$0xff]
        %v6053 = vld [vmem:[%s13 + $0x38] sm:$0xff]
        %v6054 = vld [vmem:[%s13 + $0x40] sm:$0xff]
        %v6055 = vld [vmem:[%s13 + $0x48] sm:$0xff]
        %v6056 = vld [vmem:[%s13 + $0x50] sm:$0xff]
        %v6057 = vld [vmem:[%s13 + $0x58] sm:$0xff]
        %v6058 = vld [vmem:[%s13 + $0x60] sm:$0xff]
        %v6059 = vld [vmem:[%s13 + $0x68] sm:$0xff]
        %v6060 = vld [vmem:[%s13 + $0x70] sm:$0xff]
        %v6061 = vld [vmem:[%s13 + $0x78] sm:$0xff]
        %v6062 = vld [vmem:[%s13 + $0x80] sm:$0xff]
        %v6063 = vld [vmem:[%s13 + $0x88] sm:$0xff]
        %v6064 = vld [vmem:[%s13 + $0x90] sm:$0xff]
        %v6065 = vld [vmem:[%s13 + $0x98] sm:$0xff]
        %v6066 = vld [vmem:[%s13 + $0xa0] sm:$0xff]
        %v6067 = vld [vmem:[%s13 + $0xa8] sm:$0xff]
        %v6068 = vld [vmem:[%s13 + $0xb0] sm:$0xff]
        %v6069 = vld [vmem:[%s13 + $0xb8] sm:$0xff]
        %v6070 = vld [vmem:[%s13 + $0xc0] sm:$0xff]
        %v6071 = vld [vmem:[%s13 + $0xc8] sm:$0xff]
        %v6072 = vld [vmem:[%s13 + $0xd0] sm:$0xff]
        %v6073 = vld [vmem:[%s13 + $0xd8] sm:$0xff]
        %v6074 = vld [vmem:[%s13 + $0xe0] sm:$0xff]
        %v6075 = vld [vmem:[%s13 + $0xe8] sm:$0xff]
        %v6076 = vld [vmem:[%s13 + $0xf0] sm:$0xff]
        %v6077 = vld [vmem:[%s13 + $0xf8] sm:$0xff]
        %v6078 = vld [vmem:[%s13 + $0x100] sm:$0xff]
        %v6079 = vld [vmem:[%s13 + $0x108] sm:$0xff]
        %v6080 = vld [vmem:[%s13 + $0x110] sm:$0xff]
        %v6081 = vld [vmem:[%s13 + $0x118] sm:$0xff]
        %v6082 = vld [vmem:[%s13 + $0x120] sm:$0xff]
        %v6083 = vld [vmem:[%s13 + $0x128] sm:$0xff]
        %v6084 = vld [vmem:[%s13 + $0x130] sm:$0xff]
        %v6085 = vld [vmem:[%s13 + $0x138] sm:$0xff]
        %v6086 = vld [vmem:[%s13 + $0x140] sm:$0xff]
        %v6087 = vld [vmem:[%s13 + $0x148] sm:$0xff]
        %v6088 = vld [vmem:[%s13 + $0x150] sm:$0xff]
        %v6089 = vld [vmem:[%s13 + $0x158] sm:$0xff]
        %v6090 = vld [vmem:[%s13 + $0x160] sm:$0xff]
        %v6091 = vld [vmem:[%s13 + $0x168] sm:$0xff]
        %v6092 = vld [vmem:[%s13 + $0x170] sm:$0xff]
        %v6093 = vld [vmem:[%s13 + $0x178] sm:$0xff]
        %v6094 = vld [vmem:[%s13 + $0x180] sm:$0xff]
        %v6095 = vld [vmem:[%s13 + $0x188] sm:$0xff]
        %v6096 = vld [vmem:[%s13 + $0x190] sm:$0xff]
        %v6097 = vld [vmem:[%s13 + $0x198] sm:$0xff]
        %v6098 = vld [vmem:[%s13 + $0x1a0] sm:$0xff]
        %v6099 = vld [vmem:[%s13 + $0x1a8] sm:$0xff]
        %v6100 = vld [vmem:[%s13 + $0x1b0] sm:$0xff]
        %v6101 = vld [vmem:[%s13 + $0x1b8] sm:$0xff]
        %v6102 = vld [vmem:[%s13 + $0x1c0] sm:$0xff]
        %v6103 = vld [vmem:[%s13 + $0x1c8] sm:$0xff]
        %v6104 = vld [vmem:[%s13 + $0x1d0] sm:$0xff]
        %v6105 = vld [vmem:[%s13 + $0x1d8] sm:$0xff]
        %v6106 = vld [vmem:[%s13 + $0x1e0] sm:$0xff]
        %v6107 = vld [vmem:[%s13 + $0x1e8] sm:$0xff]
        %v6108 = vld [vmem:[%s13 + $0x1f0] sm:$0xff]
        %v6109 = vld [vmem:[%s13 + $0x1f8] sm:$0xff]
        %v6110 = vld [vmem:[%s13 + $0x200] sm:$0xff]
        %v6111 = vld [vmem:[%s13 + $0x208] sm:$0xff]
        %v6112 = vld [vmem:[%s13 + $0x210] sm:$0xff]
        %v6113 = vld [vmem:[%s13 + $0x218] sm:$0xff]
        %v6114 = vld [vmem:[%s13 + $0x220] sm:$0xff]
        %v6115 = vld [vmem:[%s13 + $0x228] sm:$0xff]
        %v6116 = vld [vmem:[%s13 + $0x230] sm:$0xff]
        %v6117 = vld [vmem:[%s13 + $0x238] sm:$0xff]
        %v6118 = vld [vmem:[%s13 + $0x240] sm:$0xff]
        %v6119 = vld [vmem:[%s13 + $0x248] sm:$0xff]
        %v6120 = vld [vmem:[%s13 + $0x250] sm:$0xff]
        %v6121 = vld [vmem:[%s13 + $0x258] sm:$0xff]
        %v6122 = vld [vmem:[%s13 + $0x260] sm:$0xff]
        %v6123 = vld [vmem:[%s13 + $0x268] sm:$0xff]
        %v6124 = vld [vmem:[%s13 + $0x270] sm:$0xff]
        %v6125 = vld [vmem:[%s13 + $0x278] sm:$0xff]
        %v6126 = vld [vmem:[%s13 + $0x280] sm:$0xff]
        %v6127 = vld [vmem:[%s13 + $0x288] sm:$0xff]
        %v6128 = vld [vmem:[%s13 + $0x290] sm:$0xff]
        %v6129 = vld [vmem:[%s13 + $0x298] sm:$0xff]
        %v6130 = vld [vmem:[%s13 + $0x2a0] sm:$0xff]
        %v6131 = vld [vmem:[%s13 + $0x2a8] sm:$0xff]
        %v6132 = vld [vmem:[%s13 + $0x2b0] sm:$0xff]
        %v6133 = vld [vmem:[%s13 + $0x2b8] sm:$0xff]
        %v6134 = vld [vmem:[%s13 + $0x2c0] sm:$0xff]
        %v6135 = vld [vmem:[%s13 + $0x2c8] sm:$0xff]
        %v6136 = vld [vmem:[%s13 + $0x2d0] sm:$0xff]
        %v6137 = vld [vmem:[%s13 + $0x2d8] sm:$0xff]
        %v6138 = vld [vmem:[%s13 + $0x2e0] sm:$0xff]
        %v6139 = vld [vmem:[%s13 + $0x2e8] sm:$0xff]
        %v6140 = vld [vmem:[%s13 + $0x2f0] sm:$0xff]
        %v6141 = vld [vmem:[%s13 + $0x2f8] sm:$0xff]
        %v6142 = vld [vmem:[%s13 + $0x300] sm:$0xff]
        %v6143 = vld [vmem:[%s13 + $0x308] sm:$0xff]
        %v6144 = vld [vmem:[%s13 + $0x310] sm:$0xff]
        %v6145 = vld [vmem:[%s13 + $0x318] sm:$0xff]
        %vm6146 = vcmask 949248
        %v6148 = vsel %vm6146, %v6049, 0
        %v6151 = vsel %vm6146, %v6053, 0
        %v6154 = vsel %vm6146, %v6057, 0
        %v6157 = vsel %vm6146, %v6061, 0
        %v6160 = vsel %vm6146, %v6065, 0
        %v6163 = vsel %vm6146, %v6069, 0
        %v6166 = vsel %vm6146, %v6073, 0
        %v6169 = vsel %vm6146, %v6077, 0
        %v6172 = vsel %vm6146, %v6081, 0
        %v6175 = vsel %vm6146, %v6085, 0
        %v6178 = vsel %vm6146, %v6089, 0
        %v6181 = vsel %vm6146, %v6093, 0
        %v6184 = vsel %vm6146, %v6097, 0
        %v6187 = vsel %vm6146, %v6101, 0
        %v6190 = vsel %vm6146, %v6105, 0
        %v6193 = vsel %vm6146, %v6109, 0
        %v6196 = vsel %vm6146, %v6113, 0
        %v6199 = vsel %vm6146, %v6117, 0
        %v6202 = vsel %vm6146, %v6121, 0
        %v6205 = vsel %vm6146, %v6125, 0
        %v6208 = vsel %vm6146, %v6129, 0
        %v6211 = vsel %vm6146, %v6133, 0
        %v6214 = vsel %vm6146, %v6137, 0
        %v6217 = vsel %vm6146, %v6141, 0
        %v6220 = vsel %vm6146, %v6145, 0
        %v6222 = vsel %vm3767, %v6031, 0
        %6224 = vmatprep.subr.mxu0 0.0
        %6225 = vmatpush1.msra.mxu0 %v5788
        %6226 = vmatprep.subr.mxu0 0.0
        %6227 = vmatpush1.msra.mxu0 %v5793
        %6228 = vmatprep.subr.mxu0 0.0
        %6229 = vmatpush1.msra.mxu0 %v5798
        %6230 = vmatprep.subr.mxu0 0.0
        %6231 = vmatpush1.msra.mxu0 %v5803
        %6232 = vmatprep.subr.mxu0 0.0
        %6233 = vmatpush1.msra.mxu0 %v5808
        %6234 = vmatprep.subr.mxu0 0.0
        %6235 = vmatpush1.msra.mxu0 %v5813
        %6236 = vmatprep.subr.mxu0 0.0
        %6237 = vmatpush1.msra.mxu0 %v5818
        %6238 = vmatprep.subr.mxu0 0.0
        %6239 = vmatpush1.msra.mxu0 %v5823
        %6240 = vmatprep.subr.mxu0 0.0
        %6241 = vmatpush1.msra.mxu0 %v5828
        %6242 = vmatprep.subr.mxu0 0.0
        %6243 = vmatpush1.msra.mxu0 %v5833
        %6244 = vmatprep.subr.mxu0 0.0
        %6245 = vmatpush1.msra.mxu0 %v5838
        %6246 = vmatprep.subr.mxu0 0.0
        %6247 = vmatpush1.msra.mxu0 %v5843
        %6248 = vmatprep.subr.mxu0 0.0
        %6249 = vmatpush1.msra.mxu0 %v6044
        %6250 = vmatprep.subr.mxu0 0.0
        %6251 = vmatpush1.msra.mxu0 %v5892
        %6252 = vmatprep.subr.mxu0 0.0
        %6253 = vmatpush1.msra.mxu0 %v5894
        %6254 = vmatprep.subr.mxu0 0.0
        %6255 = vmatpush1.msra.mxu0 %v5896
        %6256 = vmatprep.subr.mxu0 0.0
        %6257 = vmatpush1.msra.mxu0 %v5898
        %6258 = vmatprep.subr.mxu0 0.0
        %6259 = vmatpush1.msra.mxu0 %v5900
        %6260 = vmatprep.subr.mxu0 0.0
        %6261 = vmatpush1.msra.mxu0 %v5902
        %6262 = vmatprep.subr.mxu0 0.0
        %6263 = vmatpush1.msra.mxu0 %v5904
        %6264 = vmatprep.subr.mxu0 0.0
        %6265 = vmatpush1.msra.mxu0 %v5906
        %6266 = vmatprep.subr.mxu0 0.0
        %6267 = vmatpush1.msra.mxu0 %v5908
        %6268 = vmatprep.subr.mxu0 0.0
        %6269 = vmatpush1.msra.mxu0 %v5910
        %6270 = vmatprep.subr.mxu0 0.0
        %6271 = vmatpush1.msra.mxu0 %v5912
        %6272 = vmatprep.subr.mxu0 0.0
        %6273 = vmatpush1.msra.mxu0 %v5914
        %6274 = vmatprep.subr.mxu0 0.0
        %6275 = vmatpush1.msra.mxu0 %v5929
        %6276 = vmatprep.subr.mxu0 0.0
        %6277 = vmatpush1.msra.mxu0 %v5931
        %6278 = vmatprep.subr.mxu0 0.0
        %6279 = vmatpush1.msra.mxu0 %v5933
        %6280 = vmatprep.subr.mxu0 0.0
        %6281 = vmatpush1.msra.mxu0 %v5935
        %6282 = vmatprep.subr.mxu0 0.0
        %6283 = vmatpush1.msra.mxu0 %v5937
        %6284 = vmatprep.subr.mxu0 0.0
        %6285 = vmatpush1.msra.mxu0 %v5939
        %6286 = vmatprep.subr.mxu0 0.0
        %6287 = vmatpush1.msra.mxu0 %v5941
        %6288 = vmatprep.mubr.f32.mxu0 %v6047
        %6289 = vmatmul.mubr.f32.gmra.mrb[0].mxu0 %v6046
        %v6290 = vpop.f32.mrb[0].mxu0
        %v6291 = vadd.f32 0.0, %v6290
        %v6292 = vpop.f32.mrb[0].mxu0
        %6293 = vmatprep.mubr.f32.mxu0 %v6051
        %6294 = vmatmul.mubr.f32.gmra.mrb[0].mxu0 %v6050
        %v6295 = vpop.f32.mrb[0].mxu0
        %v6296 = vadd.f32 0.0, %v6295
        %v6297 = vpop.f32.mrb[0].mxu0
        %6298 = vmatprep.mubr.f32.mxu0 %v6055
        %6299 = vmatmul.mubr.f32.gmra.mrb[0].mxu0 %v6054
        %v6300 = vpop.f32.mrb[0].mxu0
        %v6301 = vadd.f32 0.0, %v6300
        %v6302 = vpop.f32.mrb[0].mxu0
        %6303 = vmatprep.mubr.f32.mxu0 %v6059
        %6304 = vmatmul.mubr.f32.gmra.mrb[0].mxu0 %v6058
        %v6305 = vpop.f32.mrb[0].mxu0
        %v6306 = vadd.f32 0.0, %v6305
        %v6307 = vpop.f32.mrb[0].mxu0
        %6308 = vmatprep.mubr.f32.mxu0 %v6063
        %6309 = vmatmul.mubr.f32.gmra.mrb[0].mxu0 %v6062
        %v6310 = vpop.f32.mrb[0].mxu0
        %v6311 = vadd.f32 0.0, %v6310
        %v6312 = vpop.f32.mrb[0].mxu0
        %6313 = vmatprep.mubr.f32.mxu0 %v6067
        %6314 = vmatmul.mubr.f32.gmra.mrb[0].mxu0 %v6066
        %v6315 = vpop.f32.mrb[0].mxu0
        %v6316 = vadd.f32 0.0, %v6315
        %v6317 = vpop.f32.mrb[0].mxu0
        %6318 = vmatprep.mubr.f32.mxu0 %v6071
        %6319 = vmatmul.mubr.f32.gmra.mrb[0].mxu0 %v6070
        %v6320 = vpop.f32.mrb[0].mxu0
        %v6321 = vadd.f32 0.0, %v6320
        %v6322 = vpop.f32.mrb[0].mxu0
        %6323 = vmatprep.mubr.f32.mxu0 %v6075
        %6324 = vmatmul.mubr.f32.gmra.mrb[0].mxu0 %v6074
        %v6325 = vpop.f32.mrb[0].mxu0
        %v6326 = vadd.f32 0.0, %v6325
        %v6327 = vpop.f32.mrb[0].mxu0
        %6328 = vmatprep.mubr.f32.mxu0 %v6079
        %6329 = vmatmul.mubr.f32.gmra.mrb[0].mxu0 %v6078
        %v6330 = vpop.f32.mrb[0].mxu0
        %v6331 = vadd.f32 0.0, %v6330
        %v6332 = vpop.f32.mrb[0].mxu0
        %6333 = vmatprep.mubr.f32.mxu0 %v6083
        %6334 = vmatmul.mubr.f32.gmra.mrb[0].mxu0 %v6082
        %v6335 = vpop.f32.mrb[0].mxu0
        %v6336 = vadd.f32 0.0, %v6335
        %v6337 = vpop.f32.mrb[0].mxu0
        %6338 = vmatprep.mubr.f32.mxu0 %v6087
        %6339 = vmatmul.mubr.f32.gmra.mrb[0].mxu0 %v6086
        %v6340 = vpop.f32.mrb[0].mxu0
        %v6341 = vadd.f32 0.0, %v6340
        %v6342 = vpop.f32.mrb[0].mxu0
        %6343 = vmatprep.mubr.f32.mxu0 %v6091
        %6344 = vmatmul.mubr.f32.gmra.mrb[0].mxu0 %v6090
        %v6345 = vpop.f32.mrb[0].mxu0
        %v6346 = vadd.f32 0.0, %v6345
        %v6347 = vpop.f32.mrb[0].mxu0
        %6348 = vmatprep.mubr.f32.mxu0 %v6095
        %6349 = vmatmul.mubr.f32.gmra.mrb[0].mxu0 %v6094
        %v6350 = vpop.f32.mrb[0].mxu0
        %v6351 = vadd.f32 0.0, %v6350
        %v6352 = vpop.f32.mrb[0].mxu0
        %6353 = vmatprep.mubr.f32.mxu0 %v6099
        %6354 = vmatmul.mubr.f32.gmra.mrb[0].mxu0 %v6098
        %v6355 = vpop.f32.mrb[0].mxu0
        %v6356 = vadd.f32 0.0, %v6355
        %v6357 = vpop.f32.mrb[0].mxu0
        %6358 = vmatprep.mubr.f32.mxu0 %v6103
        %6359 = vmatmul.mubr.f32.gmra.mrb[0].mxu0 %v6102
        %v6360 = vpop.f32.mrb[0].mxu0
        %v6361 = vadd.f32 0.0, %v6360
        %v6362 = vpop.f32.mrb[0].mxu0
        %6363 = vmatprep.mubr.f32.mxu0 %v6107
        %6364 = vmatmul.mubr.f32.gmra.mrb[0].mxu0 %v6106
        %v6365 = vpop.f32.mrb[0].mxu0
        %v6366 = vadd.f32 0.0, %v6365
        %v6367 = vpop.f32.mrb[0].mxu0
        %6368 = vmatprep.mubr.f32.mxu0 %v6111
        %6369 = vmatmul.mubr.f32.gmra.mrb[0].mxu0 %v6110
        %v6370 = vpop.f32.mrb[0].mxu0
        %v6371 = vadd.f32 0.0, %v6370
        %v6372 = vpop.f32.mrb[0].mxu0
        %6373 = vmatprep.mubr.f32.mxu0 %v6115
        %6374 = vmatmul.mubr.f32.gmra.mrb[0].mxu0 %v6114
        %v6375 = vpop.f32.mrb[0].mxu0
        %v6376 = vadd.f32 0.0, %v6375
        %v6377 = vpop.f32.mrb[0].mxu0
        %6378 = vmatprep.mubr.f32.mxu0 %v6119
        %6379 = vmatmul.mubr.f32.gmra.mrb[0].mxu0 %v6118
        %v6380 = vpop.f32.mrb[0].mxu0
        %v6381 = vadd.f32 0.0, %v6380
        %v6382 = vpop.f32.mrb[0].mxu0
        %6383 = vmatprep.mubr.f32.mxu0 %v6123
        %6384 = vmatmul.mubr.f32.gmra.mrb[0].mxu0 %v6122
        %v6385 = vpop.f32.mrb[0].mxu0
        %v6386 = vadd.f32 0.0, %v6385
        %v6387 = vpop.f32.mrb[0].mxu0
        %6388 = vmatprep.mubr.f32.mxu0 %v6127
        %6389 = vmatmul.mubr.f32.gmra.mrb[0].mxu0 %v6126
        %v6390 = vpop.f32.mrb[0].mxu0
        %v6391 = vadd.f32 0.0, %v6390
        %v6392 = vpop.f32.mrb[0].mxu0
        %6393 = vmatprep.mubr.f32.mxu0 %v6131
        %6394 = vmatmul.mubr.f32.gmra.mrb[0].mxu0 %v6130
        %v6395 = vpop.f32.mrb[0].mxu0
        %v6396 = vadd.f32 0.0, %v6395
        %v6397 = vpop.f32.mrb[0].mxu0
        %6398 = vmatprep.mubr.f32.mxu0 %v6135
        %6399 = vmatmul.mubr.f32.gmra.mrb[0].mxu0 %v6134
        %v6400 = vpop.f32.mrb[0].mxu0
        %v6401 = vadd.f32 0.0, %v6400
        %v6402 = vpop.f32.mrb[0].mxu0
        %6403 = vmatprep.mubr.f32.mxu0 %v6139
        %6404 = vmatmul.mubr.f32.gmra.mrb[0].mxu0 %v6138
        %v6405 = vpop.f32.mrb[0].mxu0
        %v6406 = vadd.f32 0.0, %v6405
        %v6407 = vpop.f32.mrb[0].mxu0
        %6408 = vmatprep.mubr.f32.mxu0 %v6143
        %6409 = vmatmul.mubr.f32.gmra.mrb[0].mxu0 %v6142
        %v6410 = vpop.f32.mrb[0].mxu0
        %v6411 = vadd.f32 0.0, %v6410
        %v6412 = vpop.f32.mrb[0].mxu0
        %6413 = vdwg.mxu0
        %6414 = vmatprep.subr.mxu0 0.0
        %6415 = vmatpush1.msra.mxu0 %v5943
        %6416 = vmatprep.subr.mxu0 0.0
        %6417 = vmatpush1.msra.mxu0 %v5945
        %6418 = vmatprep.subr.mxu0 0.0
        %6419 = vmatpush1.msra.mxu0 %v5947
        %6420 = vmatprep.subr.mxu0 0.0
        %6421 = vmatpush1.msra.mxu0 %v5949
        %6422 = vmatprep.subr.mxu0 0.0
        %6423 = vmatpush1.msra.mxu0 %v5951
        %6424 = vmatprep.subr.mxu0 0.0
        %6425 = vmatpush1.msra.mxu0 %v6045
        %6426 = vmatprep.subr.mxu0 0.0
        %6427 = vmatpush1.msra.mxu0 %v5970
        %6428 = vmatprep.subr.mxu0 0.0
        %6429 = vmatpush1.msra.mxu0 %v5972
        %6430 = vmatprep.subr.mxu0 0.0
        %6431 = vmatpush1.msra.mxu0 %v5974
        %6432 = vmatprep.subr.mxu0 0.0
        %6433 = vmatpush1.msra.mxu0 %v5976
        %6434 = vmatprep.subr.mxu0 0.0
        %6435 = vmatpush1.msra.mxu0 %v5978
        %6436 = vmatprep.subr.mxu0 0.0
        %6437 = vmatpush1.msra.mxu0 %v5980
        %6438 = vmatprep.subr.mxu0 0.0
        %6439 = vmatpush1.msra.mxu0 %v5982
        %6440 = vmatprep.subr.mxu0 0.0
        %6441 = vmatpush1.msra.mxu0 %v5984
        %6442 = vmatprep.subr.mxu0 0.0
        %6443 = vmatpush1.msra.mxu0 %v5986
        %6444 = vmatprep.subr.mxu0 0.0
        %6445 = vmatpush1.msra.mxu0 %v5988
        %6446 = vmatprep.subr.mxu0 0.0
        %6447 = vmatpush1.msra.mxu0 %v5990
        %6448 = vmatprep.subr.mxu0 0.0
        %6449 = vmatpush1.msra.mxu0 %v5992
        %6450 = vmatprep.subr.mxu0 0.0
        %6451 = vmatpush1.msra.mxu0 %v6007
        %6452 = vmatprep.subr.mxu0 0.0
        %6453 = vmatpush1.msra.mxu0 %v6009
        %6454 = vmatprep.subr.mxu0 0.0
        %6455 = vmatpush1.msra.mxu0 %v6011
        %6456 = vmatprep.subr.mxu0 0.0
        %6457 = vmatpush1.msra.mxu0 %v6013
        %6458 = vmatprep.subr.mxu0 0.0
        %6459 = vmatpush1.msra.mxu0 %v6015
        %6460 = vmatprep.subr.mxu0 0.0
        %6461 = vmatpush1.msra.mxu0 %v6017
        %6462 = vmatprep.subr.mxu0 0.0
        %6463 = vmatpush1.msra.mxu0 %v6019
        %6464 = vmatprep.subr.mxu0 0.0
        %6465 = vmatpush1.msra.mxu0 %v6021
        %6466 = vmatprep.subr.mxu0 0.0
        %6467 = vmatpush1.msra.mxu0 %v6023
        %6468 = vmatprep.subr.mxu0 0.0
        %6469 = vmatpush1.msra.mxu0 %v6025
        %6470 = vmatprep.subr.mxu0 0.0
        %6471 = vmatpush1.msra.mxu0 %v6027
        %6472 = vmatprep.subr.mxu0 0.0
        %6473 = vmatpush1.msra.mxu0 %v6029
        %6474 = vmatprep.subr.mxu0 0.0
        %6475 = vmatpush1.msra.mxu0 %v6222
        %6476 = vmatprep.subr.mxu0 0.0
        %6477 = vmatpush1.msra.mxu0 0.0
        %6478 = vmatprep.mubr.f32.mxu0 %v6148
        %6479 = vmatmul.mubr.f32.gmra.mrb[0].mxu0 %v6048
        %v6480 = vpop.f32.mrb[0].mxu0
        %v6481 = vadd.f32 %v6291, %v6480
        %v6482 = vpop.f32.mrb[0].mxu0
        %6483 = vmatprep.mubr.f32.mxu0 %v6151
        %6484 = vmatmul.mubr.f32.gmra.mrb[0].mxu0 %v6052
        %v6485 = vpop.f32.mrb[0].mxu0
        %v6486 = vadd.f32 %v6296, %v6485
        %v6487 = vpop.f32.mrb[0].mxu0
        %6488 = vmatprep.mubr.f32.mxu0 %v6154
        %6489 = vmatmul.mubr.f32.gmra.mrb[0].mxu0 %v6056
        %v6490 = vpop.f32.mrb[0].mxu0
        %v6491 = vadd.f32 %v6301, %v6490
        %v6492 = vpop.f32.mrb[0].mxu0
        %6493 = vmatprep.mubr.f32.mxu0 %v6157
        %6494 = vmatmul.mubr.f32.gmra.mrb[0].mxu0 %v6060
        %v6495 = vpop.f32.mrb[0].mxu0
        %v6496 = vadd.f32 %v6306, %v6495
        %v6497 = vpop.f32.mrb[0].mxu0
        %6498 = vmatprep.mubr.f32.mxu0 %v6160
        %6499 = vmatmul.mubr.f32.gmra.mrb[0].mxu0 %v6064
        %v6500 = vpop.f32.mrb[0].mxu0
        %v6501 = vadd.f32 %v6311, %v6500
        %v6502 = vpop.f32.mrb[0].mxu0
        %6503 = vmatprep.mubr.f32.mxu0 %v6163
        %6504 = vmatmul.mubr.f32.gmra.mrb[0].mxu0 %v6068
        %v6505 = vpop.f32.mrb[0].mxu0
        %v6506 = vadd.f32 %v6316, %v6505
        %v6507 = vpop.f32.mrb[0].mxu0
        %6508 = vmatprep.mubr.f32.mxu0 %v6166
        %6509 = vmatmul.mubr.f32.gmra.mrb[0].mxu0 %v6072
        %v6510 = vpop.f32.mrb[0].mxu0
        %v6511 = vadd.f32 %v6321, %v6510
        %v6512 = vpop.f32.mrb[0].mxu0
        %6513 = vmatprep.mubr.f32.mxu0 %v6169
        %6514 = vmatmul.mubr.f32.gmra.mrb[0].mxu0 %v6076
        %v6515 = vpop.f32.mrb[0].mxu0
        %v6516 = vadd.f32 %v6326, %v6515
        %v6517 = vpop.f32.mrb[0].mxu0
        %6518 = vmatprep.mubr.f32.mxu0 %v6172
        %6519 = vmatmul.mubr.f32.gmra.mrb[0].mxu0 %v6080
        %v6520 = vpop.f32.mrb[0].mxu0
        %v6521 = vadd.f32 %v6331, %v6520
        %v6522 = vpop.f32.mrb[0].mxu0
        %6523 = vmatprep.mubr.f32.mxu0 %v6175
        %6524 = vmatmul.mubr.f32.gmra.mrb[0].mxu0 %v6084
        %v6525 = vpop.f32.mrb[0].mxu0
        %v6526 = vadd.f32 %v6336, %v6525
        %v6527 = vpop.f32.mrb[0].mxu0
        %6528 = vmatprep.mubr.f32.mxu0 %v6178
        %6529 = vmatmul.mubr.f32.gmra.mrb[0].mxu0 %v6088
        %v6530 = vpop.f32.mrb[0].mxu0
        %v6531 = vadd.f32 %v6341, %v6530
        %v6532 = vpop.f32.mrb[0].mxu0
        %6533 = vmatprep.mubr.f32.mxu0 %v6181
        %6534 = vmatmul.mubr.f32.gmra.mrb[0].mxu0 %v6092
        %v6535 = vpop.f32.mrb[0].mxu0
        %v6536 = vadd.f32 %v6346, %v6535
        %v6537 = vpop.f32.mrb[0].mxu0
        %6538 = vmatprep.mubr.f32.mxu0 %v6184
        %6539 = vmatmul.mubr.f32.gmra.mrb[0].mxu0 %v6096
        %v6540 = vpop.f32.mrb[0].mxu0
        %v6541 = vadd.f32 %v6351, %v6540
        %v6542 = vpop.f32.mrb[0].mxu0
        %6543 = vmatprep.mubr.f32.mxu0 %v6187
        %6544 = vmatmul.mubr.f32.gmra.mrb[0].mxu0 %v6100
        %v6545 = vpop.f32.mrb[0].mxu0
        %v6546 = vadd.f32 %v6356, %v6545
        %v6547 = vpop.f32.mrb[0].mxu0
        %6548 = vmatprep.mubr.f32.mxu0 %v6190
        %6549 = vmatmul.mubr.f32.gmra.mrb[0].mxu0 %v6104
        %v6550 = vpop.f32.mrb[0].mxu0
        %v6551 = vadd.f32 %v6361, %v6550
        %v6552 = vpop.f32.mrb[0].mxu0
        %6553 = vmatprep.mubr.f32.mxu0 %v6193
        %6554 = vmatmul.mubr.f32.gmra.mrb[0].mxu0 %v6108
        %v6555 = vpop.f32.mrb[0].mxu0
        %v6556 = vadd.f32 %v6366, %v6555
        %v6557 = vpop.f32.mrb[0].mxu0
        %6558 = vmatprep.mubr.f32.mxu0 %v6196
        %6559 = vmatmul.mubr.f32.gmra.mrb[0].mxu0 %v6112
        %v6560 = vpop.f32.mrb[0].mxu0
        %v6561 = vadd.f32 %v6371, %v6560
        %v6562 = vpop.f32.mrb[0].mxu0
        %6563 = vmatprep.mubr.f32.mxu0 %v6199
        %6564 = vmatmul.mubr.f32.gmra.mrb[0].mxu0 %v6116
        %v6565 = vpop.f32.mrb[0].mxu0
        %v6566 = vadd.f32 %v6376, %v6565
        %v6567 = vpop.f32.mrb[0].mxu0
        %6568 = vmatprep.mubr.f32.mxu0 %v6202
        %6569 = vmatmul.mubr.f32.gmra.mrb[0].mxu0 %v6120
        %v6570 = vpop.f32.mrb[0].mxu0
        %v6571 = vadd.f32 %v6381, %v6570
        %v6572 = vpop.f32.mrb[0].mxu0
        %6573 = vmatprep.mubr.f32.mxu0 %v6205
        %6574 = vmatmul.mubr.f32.gmra.mrb[0].mxu0 %v6124
        %v6575 = vpop.f32.mrb[0].mxu0
        %v6576 = vadd.f32 %v6386, %v6575
        %v6577 = vpop.f32.mrb[0].mxu0
        %6578 = vmatprep.mubr.f32.mxu0 %v6208
        %6579 = vmatmul.mubr.f32.gmra.mrb[0].mxu0 %v6128
        %v6580 = vpop.f32.mrb[0].mxu0
        %v6581 = vadd.f32 %v6391, %v6580
        %v6582 = vpop.f32.mrb[0].mxu0
        %6583 = vmatprep.mubr.f32.mxu0 %v6211
        %6584 = vmatmul.mubr.f32.gmra.mrb[0].mxu0 %v6132
        %v6585 = vpop.f32.mrb[0].mxu0
        %v6586 = vadd.f32 %v6396, %v6585
        %v6587 = vpop.f32.mrb[0].mxu0
        %6588 = vmatprep.mubr.f32.mxu0 %v6214
        %6589 = vmatmul.mubr.f32.gmra.mrb[0].mxu0 %v6136
        %v6590 = vpop.f32.mrb[0].mxu0
        %v6591 = vadd.f32 %v6401, %v6590
        %v6592 = vpop.f32.mrb[0].mxu0
        %6593 = vmatprep.mubr.f32.mxu0 %v6217
        %6594 = vmatmul.mubr.f32.gmra.mrb[0].mxu0 %v6140
        %v6595 = vpop.f32.mrb[0].mxu0
        %v6596 = vadd.f32 %v6406, %v6595
        %v6597 = vpop.f32.mrb[0].mxu0
        %6598 = vmatprep.mubr.f32.mxu0 %v6220
        %6599 = vmatmul.mubr.f32.gmra.mrb[0].mxu0 %v6144
        %v6600 = vpop.f32.mrb[0].mxu0
        %v6601 = vadd.f32 %v6411, %v6600
        %v6602 = vpop.f32.mrb[0].mxu0
        %6603 = vdwg.mxu0
        %v6604 = vld [vmem:[%s14] sm:$0xff]
        %v6605 = vld [vmem:[%s14 + $0x8] sm:$0xff]
        %v6606 = vld [vmem:[%s14 + $0x10] sm:$0xff]
        %v6607 = vld [vmem:[%s14 + $0x18] sm:$0xff]
        %v6608 = vld [vmem:[%s14 + $0x20] sm:$0xff]
        %v6609 = vld [vmem:[%s14 + $0x28] sm:$0xff]
        %v6610 = vld [vmem:[%s14 + $0x30] sm:$0xff]
        %v6611 = vld [vmem:[%s14 + $0x38] sm:$0xff]
        %v6612 = vld [vmem:[%s14 + $0x40] sm:$0xff]
        %v6613 = vld [vmem:[%s14 + $0x48] sm:$0xff]
        %v6614 = vld [vmem:[%s14 + $0x50] sm:$0xff]
        %v6615 = vld [vmem:[%s14 + $0x58] sm:$0xff]
        %v6616 = vld [vmem:[%s14 + $0x60] sm:$0xff]
        %v6617 = vld [vmem:[%s14 + $0x68] sm:$0xff]
        %v6618 = vld [vmem:[%s14 + $0x70] sm:$0xff]
        %v6619 = vld [vmem:[%s14 + $0x78] sm:$0xff]
        %v6620 = vld [vmem:[%s14 + $0x80] sm:$0xff]
        %v6621 = vld [vmem:[%s14 + $0x88] sm:$0xff]
        %v6622 = vld [vmem:[%s14 + $0x90] sm:$0xff]
        %v6623 = vld [vmem:[%s14 + $0x98] sm:$0xff]
        %v6624 = vld [vmem:[%s14 + $0xa0] sm:$0xff]
        %v6625 = vld [vmem:[%s14 + $0xa8] sm:$0xff]
        %v6626 = vld [vmem:[%s14 + $0xb0] sm:$0xff]
        %v6627 = vld [vmem:[%s14 + $0xb8] sm:$0xff]
        %v6628 = vld [vmem:[%s14 + $0xc0] sm:$0xff]
        %6630 = vset.pattern.permute.xlu0 0
        %6631 = vperm.xlu0 %6630, %v6604
        %v6632 = vpop.permute.xlu0 %6631
        %6635 = vset.pattern.permute.xlu0 0
        %6636 = vperm.xlu0 %6635, %v6605
        %v6637 = vpop.permute.xlu0 %6636
        %6640 = vset.pattern.permute.xlu0 0
        %6641 = vperm.xlu0 %6640, %v6606
        %v6642 = vpop.permute.xlu0 %6641
        %6645 = vset.pattern.permute.xlu0 0
        %6646 = vperm.xlu0 %6645, %v6607
        %v6647 = vpop.permute.xlu0 %6646
        %6650 = vset.pattern.permute.xlu0 0
        %6651 = vperm.xlu0 %6650, %v6608
        %v6652 = vpop.permute.xlu0 %6651
        %6655 = vset.pattern.permute.xlu0 0
        %6656 = vperm.xlu0 %6655, %v6609
        %v6657 = vpop.permute.xlu0 %6656
        %6660 = vset.pattern.permute.xlu0 0
        %6661 = vperm.xlu0 %6660, %v6610
        %v6662 = vpop.permute.xlu0 %6661
        %6665 = vset.pattern.permute.xlu0 0
        %6666 = vperm.xlu0 %6665, %v6611
        %v6667 = vpop.permute.xlu0 %6666
        %6670 = vset.pattern.permute.xlu0 0
        %6671 = vperm.xlu0 %6670, %v6612
        %v6672 = vpop.permute.xlu0 %6671
        %6675 = vset.pattern.permute.xlu0 0
        %6676 = vperm.xlu0 %6675, %v6613
        %v6677 = vpop.permute.xlu0 %6676
        %6680 = vset.pattern.permute.xlu0 0
        %6681 = vperm.xlu0 %6680, %v6614
        %v6682 = vpop.permute.xlu0 %6681
        %6685 = vset.pattern.permute.xlu0 0
        %6686 = vperm.xlu0 %6685, %v6615
        %v6687 = vpop.permute.xlu0 %6686
        %6690 = vset.pattern.permute.xlu0 0
        %6691 = vperm.xlu0 %6690, %v6616
        %v6692 = vpop.permute.xlu0 %6691
        %6695 = vset.pattern.permute.xlu0 0
        %6696 = vperm.xlu0 %6695, %v6617
        %v6697 = vpop.permute.xlu0 %6696
        %6700 = vset.pattern.permute.xlu0 0
        %6701 = vperm.xlu0 %6700, %v6618
        %v6702 = vpop.permute.xlu0 %6701
        %6705 = vset.pattern.permute.xlu0 0
        %6706 = vperm.xlu0 %6705, %v6619
        %v6707 = vpop.permute.xlu0 %6706
        %6710 = vset.pattern.permute.xlu0 0
        %6711 = vperm.xlu0 %6710, %v6620
        %v6712 = vpop.permute.xlu0 %6711
        %6715 = vset.pattern.permute.xlu0 0
        %6716 = vperm.xlu0 %6715, %v6621
        %v6717 = vpop.permute.xlu0 %6716
        %6720 = vset.pattern.permute.xlu0 0
        %6721 = vperm.xlu0 %6720, %v6622
        %v6722 = vpop.permute.xlu0 %6721
        %6725 = vset.pattern.permute.xlu0 0
        %6726 = vperm.xlu0 %6725, %v6623
        %v6727 = vpop.permute.xlu0 %6726
        %6730 = vset.pattern.permute.xlu0 0
        %6731 = vperm.xlu0 %6730, %v6624
        %v6732 = vpop.permute.xlu0 %6731
        %6735 = vset.pattern.permute.xlu0 0
        %6736 = vperm.xlu0 %6735, %v6625
        %v6737 = vpop.permute.xlu0 %6736
        %6740 = vset.pattern.permute.xlu0 0
        %6741 = vperm.xlu0 %6740, %v6626
        %v6742 = vpop.permute.xlu0 %6741
        %6745 = vset.pattern.permute.xlu0 0
        %6746 = vperm.xlu0 %6745, %v6627
        %v6747 = vpop.permute.xlu0 %6746
        %6750 = vset.pattern.permute.xlu0 0
        %6751 = vperm.xlu0 %6750, %v6628
        %v6752 = vpop.permute.xlu0 %6751
        %v6754 = vmul.f32 %v6481, %v6632
        %v6755 = vmul.f32 %v6486, %v6637
        %v6756 = vmul.f32 %v6491, %v6642
        %v6757 = vmul.f32 %v6496, %v6647
        %v6758 = vmul.f32 %v6501, %v6652
        %v6759 = vmul.f32 %v6506, %v6657
        %v6760 = vmul.f32 %v6511, %v6662
        %v6761 = vmul.f32 %v6516, %v6667
        %v6762 = vmul.f32 %v6521, %v6672
        %v6763 = vmul.f32 %v6526, %v6677
        %v6764 = vmul.f32 %v6531, %v6682
        %v6765 = vmul.f32 %v6536, %v6687
        %v6766 = vmul.f32 %v6541, %v6692
        %v6767 = vmul.f32 %v6546, %v6697
        %v6768 = vmul.f32 %v6551, %v6702
        %v6769 = vmul.f32 %v6556, %v6707
        %v6770 = vmul.f32 %v6561, %v6712
        %v6771 = vmul.f32 %v6566, %v6717
        %v6772 = vmul.f32 %v6571, %v6722
        %v6773 = vmul.f32 %v6576, %v6727
        %v6774 = vmul.f32 %v6581, %v6732
        %v6775 = vmul.f32 %v6586, %v6737
        %v6776 = vmul.f32 %v6591, %v6742
        %v6777 = vmul.f32 %v6596, %v6747
        %v6778 = vmul.f32 %v6601, %v6752
        %v6779 = vld [vmem:[%s15] sm:$0xff]
        %v6780 = vld [vmem:[%s15 + $0x8] sm:$0xff]
        %v6781 = vld [vmem:[%s15 + $0x10] sm:$0xff]
        %v6782 = vld [vmem:[%s15 + $0x18] sm:$0xff]
        %v6783 = vld [vmem:[%s15 + $0x20] sm:$0xff]
        %v6784 = vld [vmem:[%s15 + $0x28] sm:$0xff]
        %v6785 = vld [vmem:[%s15 + $0x30] sm:$0xff]
        %v6786 = vld [vmem:[%s15 + $0x38] sm:$0xff]
        %v6787 = vld [vmem:[%s15 + $0x40] sm:$0xff]
        %v6788 = vld [vmem:[%s15 + $0x48] sm:$0xff]
        %v6789 = vld [vmem:[%s15 + $0x50] sm:$0xff]
        %v6790 = vld [vmem:[%s15 + $0x58] sm:$0xff]
        %v6791 = vld [vmem:[%s15 + $0x60] sm:$0xff]
        %v6792 = vld [vmem:[%s15 + $0x68] sm:$0xff]
        %v6793 = vld [vmem:[%s15 + $0x70] sm:$0xff]
        %v6794 = vld [vmem:[%s15 + $0x78] sm:$0xff]
        %v6795 = vld [vmem:[%s15 + $0x80] sm:$0xff]
        %v6796 = vld [vmem:[%s15 + $0x88] sm:$0xff]
        %v6797 = vld [vmem:[%s15 + $0x90] sm:$0xff]
        %v6798 = vld [vmem:[%s15 + $0x98] sm:$0xff]
        %v6799 = vld [vmem:[%s15 + $0xa0] sm:$0xff]
        %v6800 = vld [vmem:[%s15 + $0xa8] sm:$0xff]
        %v6801 = vld [vmem:[%s15 + $0xb0] sm:$0xff]
        %v6802 = vld [vmem:[%s15 + $0xb8] sm:$0xff]
        %v6803 = vld [vmem:[%s15 + $0xc0] sm:$0xff]
        %6805 = vset.pattern.permute.xlu0 0
        %6806 = vperm.xlu0 %6805, %v6779
        %v6807 = vpop.permute.xlu0 %6806
        %6810 = vset.pattern.permute.xlu0 0
        %6811 = vperm.xlu0 %6810, %v6780
        %v6812 = vpop.permute.xlu0 %6811
        %6815 = vset.pattern.permute.xlu0 0
        %6816 = vperm.xlu0 %6815, %v6781
        %v6817 = vpop.permute.xlu0 %6816
        %6820 = vset.pattern.permute.xlu0 0
        %6821 = vperm.xlu0 %6820, %v6782
        %v6822 = vpop.permute.xlu0 %6821
        %6825 = vset.pattern.permute.xlu0 0
        %6826 = vperm.xlu0 %6825, %v6783
        %v6827 = vpop.permute.xlu0 %6826
        %6830 = vset.pattern.permute.xlu0 0
        %6831 = vperm.xlu0 %6830, %v6784
        %v6832 = vpop.permute.xlu0 %6831
        %6835 = vset.pattern.permute.xlu0 0
        %6836 = vperm.xlu0 %6835, %v6785
        %v6837 = vpop.permute.xlu0 %6836
        %6840 = vset.pattern.permute.xlu0 0
        %6841 = vperm.xlu0 %6840, %v6786
        %v6842 = vpop.permute.xlu0 %6841
        %6845 = vset.pattern.permute.xlu0 0
        %6846 = vperm.xlu0 %6845, %v6787
        %v6847 = vpop.permute.xlu0 %6846
        %6850 = vset.pattern.permute.xlu0 0
        %6851 = vperm.xlu0 %6850, %v6788
        %v6852 = vpop.permute.xlu0 %6851
        %6855 = vset.pattern.permute.xlu0 0
        %6856 = vperm.xlu0 %6855, %v6789
        %v6857 = vpop.permute.xlu0 %6856
        %6860 = vset.pattern.permute.xlu0 0
        %6861 = vperm.xlu0 %6860, %v6790
        %v6862 = vpop.permute.xlu0 %6861
        %6865 = vset.pattern.permute.xlu0 0
        %6866 = vperm.xlu0 %6865, %v6791
        %v6867 = vpop.permute.xlu0 %6866
        %6870 = vset.pattern.permute.xlu0 0
        %6871 = vperm.xlu0 %6870, %v6792
        %v6872 = vpop.permute.xlu0 %6871
        %6875 = vset.pattern.permute.xlu0 0
        %6876 = vperm.xlu0 %6875, %v6793
        %v6877 = vpop.permute.xlu0 %6876
        %6880 = vset.pattern.permute.xlu0 0
        %6881 = vperm.xlu0 %6880, %v6794
        %v6882 = vpop.permute.xlu0 %6881
        %6885 = vset.pattern.permute.xlu0 0
        %6886 = vperm.xlu0 %6885, %v6795
        %v6887 = vpop.permute.xlu0 %6886
        %6890 = vset.pattern.permute.xlu0 0
        %6891 = vperm.xlu0 %6890, %v6796
        %v6892 = vpop.permute.xlu0 %6891
        %6895 = vset.pattern.permute.xlu0 0
        %6896 = vperm.xlu0 %6895, %v6797
        %v6897 = vpop.permute.xlu0 %6896
        %6900 = vset.pattern.permute.xlu0 0
        %6901 = vperm.xlu0 %6900, %v6798
        %v6902 = vpop.permute.xlu0 %6901
        %6905 = vset.pattern.permute.xlu0 0
        %6906 = vperm.xlu0 %6905, %v6799
        %v6907 = vpop.permute.xlu0 %6906
        %6910 = vset.pattern.permute.xlu0 0
        %6911 = vperm.xlu0 %6910, %v6800
        %v6912 = vpop.permute.xlu0 %6911
        %6915 = vset.pattern.permute.xlu0 0
        %6916 = vperm.xlu0 %6915, %v6801
        %v6917 = vpop.permute.xlu0 %6916
        %6920 = vset.pattern.permute.xlu0 0
        %6921 = vperm.xlu0 %6920, %v6802
        %v6922 = vpop.permute.xlu0 %6921
        %6925 = vset.pattern.permute.xlu0 0
        %6926 = vperm.xlu0 %6925, %v6803
        %v6927 = vpop.permute.xlu0 %6926
        %v6929 = vadd.f32 %v6754, %v6807
        %v6930 = vadd.f32 %v6755, %v6812
        %v6931 = vadd.f32 %v6756, %v6817
        %v6932 = vadd.f32 %v6757, %v6822
        %v6933 = vadd.f32 %v6758, %v6827
        %v6934 = vadd.f32 %v6759, %v6832
        %v6935 = vadd.f32 %v6760, %v6837
        %v6936 = vadd.f32 %v6761, %v6842
        %v6937 = vadd.f32 %v6762, %v6847
        %v6938 = vadd.f32 %v6763, %v6852
        %v6939 = vadd.f32 %v6764, %v6857
        %v6940 = vadd.f32 %v6765, %v6862
        %v6941 = vadd.f32 %v6766, %v6867
        %v6942 = vadd.f32 %v6767, %v6872
        %v6943 = vadd.f32 %v6768, %v6877
        %v6944 = vadd.f32 %v6769, %v6882
        %v6945 = vadd.f32 %v6770, %v6887
        %v6946 = vadd.f32 %v6771, %v6892
        %v6947 = vadd.f32 %v6772, %v6897
        %v6948 = vadd.f32 %v6773, %v6902
        %v6949 = vadd.f32 %v6774, %v6907
        %v6950 = vadd.f32 %v6775, %v6912
        %v6951 = vadd.f32 %v6776, %v6917
        %v6952 = vadd.f32 %v6777, %v6922
        %v6953 = vadd.f32 %v6778, %v6927
        %vm6954 = vcmp.gt.f32.partialorder %v6929, 0.0
        %vm6955 = vcmp.gt.f32.partialorder %v6930, 0.0
        %vm6956 = vcmp.gt.f32.partialorder %v6931, 0.0
        %vm6957 = vcmp.gt.f32.partialorder %v6932, 0.0
        %vm6958 = vcmp.gt.f32.partialorder %v6933, 0.0
        %vm6959 = vcmp.gt.f32.partialorder %v6934, 0.0
        %vm6960 = vcmp.gt.f32.partialorder %v6935, 0.0
        %vm6961 = vcmp.gt.f32.partialorder %v6936, 0.0
        %vm6962 = vcmp.gt.f32.partialorder %v6937, 0.0
        %vm6963 = vcmp.gt.f32.partialorder %v6938, 0.0
        %vm6964 = vcmp.gt.f32.partialorder %v6939, 0.0
        %vm6965 = vcmp.gt.f32.partialorder %v6940, 0.0
        %vm6966 = vcmp.gt.f32.partialorder %v6941, 0.0
        %vm6967 = vcmp.gt.f32.partialorder %v6942, 0.0
        %vm6968 = vcmp.gt.f32.partialorder %v6943, 0.0
        %vm6969 = vcmp.gt.f32.partialorder %v6944, 0.0
        %vm6970 = vcmp.gt.f32.partialorder %v6945, 0.0
        %vm6971 = vcmp.gt.f32.partialorder %v6946, 0.0
        %vm6972 = vcmp.gt.f32.partialorder %v6947, 0.0
        %vm6973 = vcmp.gt.f32.partialorder %v6948, 0.0
        %vm6974 = vcmp.gt.f32.partialorder %v6949, 0.0
        %vm6975 = vcmp.gt.f32.partialorder %v6950, 0.0
        %vm6976 = vcmp.gt.f32.partialorder %v6951, 0.0
        %vm6977 = vcmp.gt.f32.partialorder %v6952, 0.0
        %vm6978 = vcmp.gt.f32.partialorder %v6953, 0.0
        %v6979 = vmul.f32 %v6929, 0.01
        %v6980 = vmul.f32 %v6930, 0.01
        %v6981 = vmul.f32 %v6931, 0.01
        %v6982 = vmul.f32 %v6932, 0.01
        %v6983 = vmul.f32 %v6933, 0.01
        %v6984 = vmul.f32 %v6934, 0.01
        %v6985 = vmul.f32 %v6935, 0.01
        %v6986 = vmul.f32 %v6936, 0.01
        %v6987 = vmul.f32 %v6937, 0.01
        %v6988 = vmul.f32 %v6938, 0.01
        %v6989 = vmul.f32 %v6939, 0.01
        %v6990 = vmul.f32 %v6940, 0.01
        %v6991 = vmul.f32 %v6941, 0.01
        %v6992 = vmul.f32 %v6942, 0.01
        %v6993 = vmul.f32 %v6943, 0.01
        %v6994 = vmul.f32 %v6944, 0.01
        %v6995 = vmul.f32 %v6945, 0.01
        %v6996 = vmul.f32 %v6946, 0.01
        %v6997 = vmul.f32 %v6947, 0.01
        %v6998 = vmul.f32 %v6948, 0.01
        %v6999 = vmul.f32 %v6949, 0.01
        %v7000 = vmul.f32 %v6950, 0.01
        %v7001 = vmul.f32 %v6951, 0.01
        %v7002 = vmul.f32 %v6952, 0.01
        %v7003 = vmul.f32 %v6953, 0.01
        %v7004 = vsel %vm6954, %v6929, %v6979
        %v7005 = vsel %vm6955, %v6930, %v6980
        %v7006 = vsel %vm6956, %v6931, %v6981
        %v7007 = vsel %vm6957, %v6932, %v6982
        %v7008 = vsel %vm6958, %v6933, %v6983
        %v7009 = vsel %vm6959, %v6934, %v6984
        %v7010 = vsel %vm6960, %v6935, %v6985
        %v7011 = vsel %vm6961, %v6936, %v6986
        %v7012 = vsel %vm6962, %v6937, %v6987
        %v7013 = vsel %vm6963, %v6938, %v6988
        %v7014 = vsel %vm6964, %v6939, %v6989
        %v7015 = vsel %vm6965, %v6940, %v6990
        %v7016 = vsel %vm6966, %v6941, %v6991
        %v7017 = vsel %vm6967, %v6942, %v6992
        %v7018 = vsel %vm6968, %v6943, %v6993
        %v7019 = vsel %vm6969, %v6944, %v6994
        %v7020 = vsel %vm6970, %v6945, %v6995
        %v7021 = vsel %vm6971, %v6946, %v6996
        %v7022 = vsel %vm6972, %v6947, %v6997
        %v7023 = vsel %vm6973, %v6948, %v6998
        %v7024 = vsel %vm6974, %v6949, %v6999
        %v7025 = vsel %vm6975, %v6950, %v7000
        %v7026 = vsel %vm6976, %v6951, %v7001
        %v7027 = vsel %vm6977, %v6952, %v7002
        %v7028 = vsel %vm6978, %v6953, %v7003
        %7054 = vrot.lane.b32.xlu0 %v7004, 127
        %v7055 = vpop.permute.xlu0 %7054
        %7056 = vrot.lane.b32.xlu0 %v7005, 127
        %v7057 = vpop.permute.xlu0 %7056
        %7058 = vrot.lane.b32.xlu0 %v7006, 127
        %v7059 = vpop.permute.xlu0 %7058
        %7060 = vrot.lane.b32.xlu0 %v7007, 127
        %v7061 = vpop.permute.xlu0 %7060
        %7062 = vrot.lane.b32.xlu0 %v7008, 127
        %v7063 = vpop.permute.xlu0 %7062
        %7064 = vrot.lane.b32.xlu0 %v7009, 127
        %v7065 = vpop.permute.xlu0 %7064
        %7066 = vrot.lane.b32.xlu0 %v7010, 127
        %v7067 = vpop.permute.xlu0 %7066
        %7068 = vrot.lane.b32.xlu0 %v7011, 127
        %v7069 = vpop.permute.xlu0 %7068
        %7070 = vrot.lane.b32.xlu0 %v7012, 127
        %v7071 = vpop.permute.xlu0 %7070
        %7072 = vrot.lane.b32.xlu0 %v7013, 127
        %v7073 = vpop.permute.xlu0 %7072
        %7074 = vrot.lane.b32.xlu0 %v7014, 127
        %v7075 = vpop.permute.xlu0 %7074
        %7076 = vrot.lane.b32.xlu0 %v7015, 127
        %v7077 = vpop.permute.xlu0 %7076
        %7078 = vrot.lane.b32.xlu0 %v7016, 127
        %v7079 = vpop.permute.xlu0 %7078
        %7080 = vrot.lane.b32.xlu0 %v7017, 127
        %v7081 = vpop.permute.xlu0 %7080
        %7082 = vrot.lane.b32.xlu0 %v7018, 127
        %v7083 = vpop.permute.xlu0 %7082
        %7084 = vrot.lane.b32.xlu0 %v7019, 127
        %v7085 = vpop.permute.xlu0 %7084
        %7086 = vrot.lane.b32.xlu0 %v7020, 127
        %v7087 = vpop.permute.xlu0 %7086
        %7088 = vrot.lane.b32.xlu0 %v7021, 127
        %v7089 = vpop.permute.xlu0 %7088
        %7090 = vrot.lane.b32.xlu0 %v7022, 127
        %v7091 = vpop.permute.xlu0 %7090
        %7092 = vrot.lane.b32.xlu0 %v7023, 127
        %v7093 = vpop.permute.xlu0 %7092
        %7094 = vrot.lane.b32.xlu0 %v7024, 127
        %v7095 = vpop.permute.xlu0 %7094
        %7096 = vrot.lane.b32.xlu0 %v7025, 127
        %v7097 = vpop.permute.xlu0 %7096
        %7098 = vrot.lane.b32.xlu0 %v7026, 127
        %v7099 = vpop.permute.xlu0 %7098
        %7100 = vrot.lane.b32.xlu0 %v7027, 127
        %v7101 = vpop.permute.xlu0 %7100
        %7102 = vrot.lane.b32.xlu0 %v7028, 127
        %v7103 = vpop.permute.xlu0 %7102
        %v7129 = vmax.f32 %v7004, %v7055
        %v7130 = vmax.f32 %v7005, %v7057
        %v7131 = vmax.f32 %v7006, %v7059
        %v7132 = vmax.f32 %v7007, %v7061
        %v7133 = vmax.f32 %v7008, %v7063
        %v7134 = vmax.f32 %v7009, %v7065
        %v7135 = vmax.f32 %v7010, %v7067
        %v7136 = vmax.f32 %v7011, %v7069
        %v7137 = vmax.f32 %v7012, %v7071
        %v7138 = vmax.f32 %v7013, %v7073
        %v7139 = vmax.f32 %v7014, %v7075
        %v7140 = vmax.f32 %v7015, %v7077
        %v7141 = vmax.f32 %v7016, %v7079
        %v7142 = vmax.f32 %v7017, %v7081
        %v7143 = vmax.f32 %v7018, %v7083
        %v7144 = vmax.f32 %v7019, %v7085
        %v7145 = vmax.f32 %v7020, %v7087
        %v7146 = vmax.f32 %v7021, %v7089
        %v7147 = vmax.f32 %v7022, %v7091
        %v7148 = vmax.f32 %v7023, %v7093
        %v7149 = vmax.f32 %v7024, %v7095
        %v7150 = vmax.f32 %v7025, %v7097
        %v7151 = vmax.f32 %v7026, %v7099
        %v7152 = vmax.f32 %v7027, %v7101
        %v7153 = vmax.f32 %v7028, %v7103
        %v7154 = vld [vmem:[%s16] sm:$0xff]
        %v7155 = vld [vmem:[%s16 + $0x8] sm:$0xff]
        %v7156 = vld [vmem:[%s16 + $0x10] sm:$0xff]
        %v7157 = vld [vmem:[%s16 + $0x18] sm:$0xff]
        %v7158 = vld [vmem:[%s16 + $0x20] sm:$0xff]
        %v7159 = vld [vmem:[%s16 + $0x28] sm:$0xff]
        %v7160 = vld [vmem:[%s16 + $0x30] sm:$0xff]
        %v7161 = vld [vmem:[%s16 + $0x38] sm:$0xff]
        %v7162 = vld [vmem:[%s16 + $0x40] sm:$0xff]
        %v7163 = vld [vmem:[%s16 + $0x48] sm:$0xff]
        %v7164 = vld [vmem:[%s16 + $0x50] sm:$0x1f]
        %vm7165 = vcmask 695296
        %v7167 = vsel %vm7165, %v7129, 0
        %v7170 = vsel %vm7165, %v7130, 0
        %v7173 = vsel %vm7165, %v7131, 0
        %v7176 = vsel %vm7165, %v7132, 0
        %v7179 = vsel %vm7165, %v7133, 0
        %v7182 = vsel %vm7165, %v7134, 0
        %v7185 = vsel %vm7165, %v7135, 0
        %v7188 = vsel %vm7165, %v7136, 0
        %v7191 = vsel %vm7165, %v7137, 0
        %v7194 = vsel %vm7165, %v7138, 0
        %v7197 = vsel %vm7165, %v7139, 0
        %v7200 = vsel %vm7165, %v7140, 0
        %v7203 = vsel %vm7165, %v7141, 0
        %v7206 = vsel %vm7165, %v7142, 0
        %v7209 = vsel %vm7165, %v7143, 0
        %v7212 = vsel %vm7165, %v7144, 0
        %v7215 = vsel %vm7165, %v7145, 0
        %v7218 = vsel %vm7165, %v7146, 0
        %v7221 = vsel %vm7165, %v7147, 0
        %v7224 = vsel %vm7165, %v7148, 0
        %v7227 = vsel %vm7165, %v7149, 0
        %v7230 = vsel %vm7165, %v7150, 0
        %v7233 = vsel %vm7165, %v7151, 0
        %v7236 = vsel %vm7165, %v7152, 0
        %v7239 = vsel %vm7165, %v7153, 0
        %v7242 = vsel %vm3870, %v7164, 0
        %7244 = vmatprep.subr.mxu0 0.0
        %7245 = vmatpush1.msra.mxu0 %v7154
        %7246 = vmatprep.subr.mxu0 0.0
        %7247 = vmatpush1.msra.mxu0 %v7155
        %7248 = vmatprep.subr.mxu0 0.0
        %7249 = vmatpush1.msra.mxu0 %v7156
        %7250 = vmatprep.subr.mxu0 0.0
        %7251 = vmatpush1.msra.mxu0 %v7157
        %7252 = vmatprep.subr.mxu0 0.0
        %7253 = vmatpush1.msra.mxu0 %v7158
        %7254 = vmatprep.subr.mxu0 0.0
        %7255 = vmatpush1.msra.mxu0 %v7159
        %7256 = vmatprep.subr.mxu0 0.0
        %7257 = vmatpush1.msra.mxu0 %v7160
        %7258 = vmatprep.subr.mxu0 0.0
        %7259 = vmatpush1.msra.mxu0 %v7161
        %7260 = vmatprep.subr.mxu0 0.0
        %7261 = vmatpush1.msra.mxu0 %v7162
        %7262 = vmatprep.subr.mxu0 0.0
        %7263 = vmatpush1.msra.mxu0 %v7163
        %7264 = vmatprep.subr.mxu0 0.0
        %7265 = vmatpush1.msra.mxu0 %v7242
        %7266 = vmatprep.subr.mxu0 0.0
        %7267 = vmatpush1.msra.mxu0 0.0
        %7268 = vmatprep.subr.mxu0 0.0
        %7269 = vmatpush1.msra.mxu0 0.0
        %7270 = vmatprep.subr.mxu0 0.0
        %7271 = vmatpush1.msra.mxu0 0.0
        %7272 = vmatprep.subr.mxu0 0.0
        %7273 = vmatpush1.msra.mxu0 0.0
        %7274 = vmatprep.subr.mxu0 0.0
        %7275 = vmatpush1.msra.mxu0 0.0
        %7276 = vmatprep.subr.mxu0 0.0
        %7277 = vmatpush1.msra.mxu0 0.0
        %7278 = vmatprep.subr.mxu0 0.0
        %7279 = vmatpush1.msra.mxu0 0.0
        %7280 = vmatprep.subr.mxu0 0.0
        %7281 = vmatpush1.msra.mxu0 0.0
        %7282 = vmatprep.subr.mxu0 0.0
        %7283 = vmatpush1.msra.mxu0 0.0
        %7284 = vmatprep.subr.mxu0 0.0
        %7285 = vmatpush1.msra.mxu0 0.0
        %7286 = vmatprep.subr.mxu0 0.0
        %7287 = vmatpush1.msra.mxu0 0.0
        %7288 = vmatprep.subr.mxu0 0.0
        %7289 = vmatpush1.msra.mxu0 0.0
        %7290 = vmatprep.subr.mxu0 0.0
        %7291 = vmatpush1.msra.mxu0 0.0
        %7292 = vmatprep.subr.mxu0 0.0
        %7293 = vmatpush1.msra.mxu0 0.0
        %7294 = vmatprep.subr.mxu0 0.0
        %7295 = vmatpush1.msra.mxu0 0.0
        %7296 = vmatprep.subr.mxu0 0.0
        %7297 = vmatpush1.msra.mxu0 0.0
        %7298 = vmatprep.subr.mxu0 0.0
        %7299 = vmatpush1.msra.mxu0 0.0
        %7300 = vmatprep.subr.mxu0 0.0
        %7301 = vmatpush1.msra.mxu0 0.0
        %7302 = vmatprep.subr.mxu0 0.0
        %7303 = vmatpush1.msra.mxu0 0.0
        %7304 = vmatprep.subr.mxu0 0.0
        %7305 = vmatpush1.msra.mxu0 0.0
        %7306 = vmatprep.subr.mxu0 0.0
        %7307 = vmatpush1.msra.mxu0 0.0
        %7308 = vmatprep.mubr.f32.mxu0 0.0
        %7309 = vmatmul.mubr.f32.gmra.mrb[0].mxu0 %v7167
        %v7310 = vpop.f32.mrb[0].mxu0
        %v7311 = vadd.f32 0.0, %v7310
        %v7312 = vpop.f32.mrb[0].mxu0
        %7313 = vmatprep.mubr.f32.mxu0 0.0
        %7314 = vmatmul.mubr.f32.gmra.mrb[0].mxu0 %v7170
        %v7315 = vpop.f32.mrb[0].mxu0
        %v7316 = vadd.f32 0.0, %v7315
        %v7317 = vpop.f32.mrb[0].mxu0
        %7318 = vmatprep.mubr.f32.mxu0 0.0
        %7319 = vmatmul.mubr.f32.gmra.mrb[0].mxu0 %v7173
        %v7320 = vpop.f32.mrb[0].mxu0
        %v7321 = vadd.f32 0.0, %v7320
        %v7322 = vpop.f32.mrb[0].mxu0
        %7323 = vmatprep.mubr.f32.mxu0 0.0
        %7324 = vmatmul.mubr.f32.gmra.mrb[0].mxu0 %v7176
        %v7325 = vpop.f32.mrb[0].mxu0
        %v7326 = vadd.f32 0.0, %v7325
        %v7327 = vpop.f32.mrb[0].mxu0
        %7328 = vmatprep.mubr.f32.mxu0 0.0
        %7329 = vmatmul.mubr.f32.gmra.mrb[0].mxu0 %v7179
        %v7330 = vpop.f32.mrb[0].mxu0
        %v7331 = vadd.f32 0.0, %v7330
        %v7332 = vpop.f32.mrb[0].mxu0
        %7333 = vmatprep.mubr.f32.mxu0 0.0
        %7334 = vmatmul.mubr.f32.gmra.mrb[0].mxu0 %v7182
        %v7335 = vpop.f32.mrb[0].mxu0
        %v7336 = vadd.f32 0.0, %v7335
        %v7337 = vpop.f32.mrb[0].mxu0
        %7338 = vmatprep.mubr.f32.mxu0 0.0
        %7339 = vmatmul.mubr.f32.gmra.mrb[0].mxu0 %v7185
        %v7340 = vpop.f32.mrb[0].mxu0
        %v7341 = vadd.f32 0.0, %v7340
        %v7342 = vpop.f32.mrb[0].mxu0
        %7343 = vmatprep.mubr.f32.mxu0 0.0
        %7344 = vmatmul.mubr.f32.gmra.mrb[0].mxu0 %v7188
        %v7345 = vpop.f32.mrb[0].mxu0
        %v7346 = vadd.f32 0.0, %v7345
        %v7347 = vpop.f32.mrb[0].mxu0
        %7348 = vmatprep.mubr.f32.mxu0 0.0
        %7349 = vmatmul.mubr.f32.gmra.mrb[0].mxu0 %v7191
        %v7350 = vpop.f32.mrb[0].mxu0
        %v7351 = vadd.f32 0.0, %v7350
        %v7352 = vpop.f32.mrb[0].mxu0
        %7353 = vmatprep.mubr.f32.mxu0 0.0
        %7354 = vmatmul.mubr.f32.gmra.mrb[0].mxu0 %v7194
        %v7355 = vpop.f32.mrb[0].mxu0
        %v7356 = vadd.f32 0.0, %v7355
        %v7357 = vpop.f32.mrb[0].mxu0
        %7358 = vmatprep.mubr.f32.mxu0 0.0
        %7359 = vmatmul.mubr.f32.gmra.mrb[0].mxu0 %v7197
        %v7360 = vpop.f32.mrb[0].mxu0
        %v7361 = vadd.f32 0.0, %v7360
        %v7362 = vpop.f32.mrb[0].mxu0
        %7363 = vmatprep.mubr.f32.mxu0 0.0
        %7364 = vmatmul.mubr.f32.gmra.mrb[0].mxu0 %v7200
        %v7365 = vpop.f32.mrb[0].mxu0
        %v7366 = vadd.f32 0.0, %v7365
        %v7367 = vpop.f32.mrb[0].mxu0
        %7368 = vmatprep.mubr.f32.mxu0 0.0
        %7369 = vmatmul.mubr.f32.gmra.mrb[0].mxu0 %v7203
        %v7370 = vpop.f32.mrb[0].mxu0
        %v7371 = vadd.f32 0.0, %v7370
        %v7372 = vpop.f32.mrb[0].mxu0
        %7373 = vmatprep.mubr.f32.mxu0 0.0
        %7374 = vmatmul.mubr.f32.gmra.mrb[0].mxu0 %v7206
        %v7375 = vpop.f32.mrb[0].mxu0
        %v7376 = vadd.f32 0.0, %v7375
        %v7377 = vpop.f32.mrb[0].mxu0
        %7378 = vmatprep.mubr.f32.mxu0 0.0
        %7379 = vmatmul.mubr.f32.gmra.mrb[0].mxu0 %v7209
        %v7380 = vpop.f32.mrb[0].mxu0
        %v7381 = vadd.f32 0.0, %v7380
        %v7382 = vpop.f32.mrb[0].mxu0
        %7383 = vmatprep.mubr.f32.mxu0 0.0
        %7384 = vmatmul.mubr.f32.gmra.mrb[0].mxu0 %v7212
        %v7385 = vpop.f32.mrb[0].mxu0
        %v7386 = vadd.f32 0.0, %v7385
        %v7387 = vpop.f32.mrb[0].mxu0
        %7388 = vmatprep.mubr.f32.mxu0 0.0
        %7389 = vmatmul.mubr.f32.gmra.mrb[0].mxu0 %v7215
        %v7390 = vpop.f32.mrb[0].mxu0
        %v7391 = vadd.f32 0.0, %v7390
        %v7392 = vpop.f32.mrb[0].mxu0
        %7393 = vmatprep.mubr.f32.mxu0 0.0
        %7394 = vmatmul.mubr.f32.gmra.mrb[0].mxu0 %v7218
        %v7395 = vpop.f32.mrb[0].mxu0
        %v7396 = vadd.f32 0.0, %v7395
        %v7397 = vpop.f32.mrb[0].mxu0
        %7398 = vmatprep.mubr.f32.mxu0 0.0
        %7399 = vmatmul.mubr.f32.gmra.mrb[0].mxu0 %v7221
        %v7400 = vpop.f32.mrb[0].mxu0
        %v7401 = vadd.f32 0.0, %v7400
        %v7402 = vpop.f32.mrb[0].mxu0
        %7403 = vmatprep.mubr.f32.mxu0 0.0
        %7404 = vmatmul.mubr.f32.gmra.mrb[0].mxu0 %v7224
        %v7405 = vpop.f32.mrb[0].mxu0
        %v7406 = vadd.f32 0.0, %v7405
        %v7407 = vpop.f32.mrb[0].mxu0
        %7408 = vmatprep.mubr.f32.mxu0 0.0
        %7409 = vmatmul.mubr.f32.gmra.mrb[0].mxu0 %v7227
        %v7410 = vpop.f32.mrb[0].mxu0
        %v7411 = vadd.f32 0.0, %v7410
        %v7412 = vpop.f32.mrb[0].mxu0
        %7413 = vmatprep.mubr.f32.mxu0 0.0
        %7414 = vmatmul.mubr.f32.gmra.mrb[0].mxu0 %v7230
        %v7415 = vpop.f32.mrb[0].mxu0
        %v7416 = vadd.f32 0.0, %v7415
        %v7417 = vpop.f32.mrb[0].mxu0
        %7418 = vmatprep.mubr.f32.mxu0 0.0
        %7419 = vmatmul.mubr.f32.gmra.mrb[0].mxu0 %v7233
        %v7420 = vpop.f32.mrb[0].mxu0
        %v7421 = vadd.f32 0.0, %v7420
        %v7422 = vpop.f32.mrb[0].mxu0
        %7423 = vmatprep.mubr.f32.mxu0 0.0
        %7424 = vmatmul.mubr.f32.gmra.mrb[0].mxu0 %v7236
        %v7425 = vpop.f32.mrb[0].mxu0
        %v7426 = vadd.f32 0.0, %v7425
        %v7427 = vpop.f32.mrb[0].mxu0
        %7428 = vmatprep.mubr.f32.mxu0 0.0
        %7429 = vmatmul.mubr.f32.gmra.mrb[0].mxu0 %v7239
        %v7430 = vpop.f32.mrb[0].mxu0
        %v7431 = vadd.f32 0.0, %v7430
        %v7432 = vpop.f32.mrb[0].mxu0
        %7433 = vdwg.mxu0
        %7459 = vrot.lane.b32.xlu0 %v7311, 127
        %v7460 = vpop.permute.xlu0 %7459
        %7461 = vrot.lane.b32.xlu0 %v7316, 127
        %v7462 = vpop.permute.xlu0 %7461
        %7463 = vrot.lane.b32.xlu0 %v7321, 127
        %v7464 = vpop.permute.xlu0 %7463
        %7465 = vrot.lane.b32.xlu0 %v7326, 127
        %v7466 = vpop.permute.xlu0 %7465
        %7467 = vrot.lane.b32.xlu0 %v7331, 127
        %v7468 = vpop.permute.xlu0 %7467
        %7469 = vrot.lane.b32.xlu0 %v7336, 127
        %v7470 = vpop.permute.xlu0 %7469
        %7471 = vrot.lane.b32.xlu0 %v7341, 127
        %v7472 = vpop.permute.xlu0 %7471
        %7473 = vrot.lane.b32.xlu0 %v7346, 127
        %v7474 = vpop.permute.xlu0 %7473
        %7475 = vrot.lane.b32.xlu0 %v7351, 127
        %v7476 = vpop.permute.xlu0 %7475
        %7477 = vrot.lane.b32.xlu0 %v7356, 127
        %v7478 = vpop.permute.xlu0 %7477
        %7479 = vrot.lane.b32.xlu0 %v7361, 127
        %v7480 = vpop.permute.xlu0 %7479
        %7481 = vrot.lane.b32.xlu0 %v7366, 127
        %v7482 = vpop.permute.xlu0 %7481
        %7483 = vrot.lane.b32.xlu0 %v7371, 127
        %v7484 = vpop.permute.xlu0 %7483
        %7485 = vrot.lane.b32.xlu0 %v7376, 127
        %v7486 = vpop.permute.xlu0 %7485
        %7487 = vrot.lane.b32.xlu0 %v7381, 127
        %v7488 = vpop.permute.xlu0 %7487
        %7489 = vrot.lane.b32.xlu0 %v7386, 127
        %v7490 = vpop.permute.xlu0 %7489
        %7491 = vrot.lane.b32.xlu0 %v7391, 127
        %v7492 = vpop.permute.xlu0 %7491
        %7493 = vrot.lane.b32.xlu0 %v7396, 127
        %v7494 = vpop.permute.xlu0 %7493
        %7495 = vrot.lane.b32.xlu0 %v7401, 127
        %v7496 = vpop.permute.xlu0 %7495
        %7497 = vrot.lane.b32.xlu0 %v7406, 127
        %v7498 = vpop.permute.xlu0 %7497
        %7499 = vrot.lane.b32.xlu0 %v7411, 127
        %v7500 = vpop.permute.xlu0 %7499
        %7501 = vrot.lane.b32.xlu0 %v7416, 127
        %v7502 = vpop.permute.xlu0 %7501
        %7503 = vrot.lane.b32.xlu0 %v7421, 127
        %v7504 = vpop.permute.xlu0 %7503
        %7505 = vrot.lane.b32.xlu0 %v7426, 127
        %v7506 = vpop.permute.xlu0 %7505
        %7507 = vrot.lane.b32.xlu0 %v7431, 127
        %v7508 = vpop.permute.xlu0 %7507
        %7534 = vrot.lane.b32.xlu0 %v7311, 126
        %v7535 = vpop.permute.xlu0 %7534
        %7536 = vrot.lane.b32.xlu0 %v7316, 126
        %v7537 = vpop.permute.xlu0 %7536
        %7538 = vrot.lane.b32.xlu0 %v7321, 126
        %v7539 = vpop.permute.xlu0 %7538
        %7540 = vrot.lane.b32.xlu0 %v7326, 126
        %v7541 = vpop.permute.xlu0 %7540
        %7542 = vrot.lane.b32.xlu0 %v7331, 126
        %v7543 = vpop.permute.xlu0 %7542
        %7544 = vrot.lane.b32.xlu0 %v7336, 126
        %v7545 = vpop.permute.xlu0 %7544
        %7546 = vrot.lane.b32.xlu0 %v7341, 126
        %v7547 = vpop.permute.xlu0 %7546
        %7548 = vrot.lane.b32.xlu0 %v7346, 126
        %v7549 = vpop.permute.xlu0 %7548
        %7550 = vrot.lane.b32.xlu0 %v7351, 126
        %v7551 = vpop.permute.xlu0 %7550
        %7552 = vrot.lane.b32.xlu0 %v7356, 126
        %v7553 = vpop.permute.xlu0 %7552
        %7554 = vrot.lane.b32.xlu0 %v7361, 126
        %v7555 = vpop.permute.xlu0 %7554
        %7556 = vrot.lane.b32.xlu0 %v7366, 126
        %v7557 = vpop.permute.xlu0 %7556
        %7558 = vrot.lane.b32.xlu0 %v7371, 126
        %v7559 = vpop.permute.xlu0 %7558
        %7560 = vrot.lane.b32.xlu0 %v7376, 126
        %v7561 = vpop.permute.xlu0 %7560
        %7562 = vrot.lane.b32.xlu0 %v7381, 126
        %v7563 = vpop.permute.xlu0 %7562
        %7564 = vrot.lane.b32.xlu0 %v7386, 126
        %v7565 = vpop.permute.xlu0 %7564
        %7566 = vrot.lane.b32.xlu0 %v7391, 126
        %v7567 = vpop.permute.xlu0 %7566
        %7568 = vrot.lane.b32.xlu0 %v7396, 126
        %v7569 = vpop.permute.xlu0 %7568
        %7570 = vrot.lane.b32.xlu0 %v7401, 126
        %v7571 = vpop.permute.xlu0 %7570
        %7572 = vrot.lane.b32.xlu0 %v7406, 126
        %v7573 = vpop.permute.xlu0 %7572
        %7574 = vrot.lane.b32.xlu0 %v7411, 126
        %v7575 = vpop.permute.xlu0 %7574
        %7576 = vrot.lane.b32.xlu0 %v7416, 126
        %v7577 = vpop.permute.xlu0 %7576
        %7578 = vrot.lane.b32.xlu0 %v7421, 126
        %v7579 = vpop.permute.xlu0 %7578
        %7580 = vrot.lane.b32.xlu0 %v7426, 126
        %v7581 = vpop.permute.xlu0 %7580
        %7582 = vrot.lane.b32.xlu0 %v7431, 126
        %v7583 = vpop.permute.xlu0 %7582
        %7609 = vrot.lane.b32.xlu0 %v7311, 125
        %v7610 = vpop.permute.xlu0 %7609
        %7611 = vrot.lane.b32.xlu0 %v7316, 125
        %v7612 = vpop.permute.xlu0 %7611
        %7613 = vrot.lane.b32.xlu0 %v7321, 125
        %v7614 = vpop.permute.xlu0 %7613
        %7615 = vrot.lane.b32.xlu0 %v7326, 125
        %v7616 = vpop.permute.xlu0 %7615
        %7617 = vrot.lane.b32.xlu0 %v7331, 125
        %v7618 = vpop.permute.xlu0 %7617
        %7619 = vrot.lane.b32.xlu0 %v7336, 125
        %v7620 = vpop.permute.xlu0 %7619
        %7621 = vrot.lane.b32.xlu0 %v7341, 125
        %v7622 = vpop.permute.xlu0 %7621
        %7623 = vrot.lane.b32.xlu0 %v7346, 125
        %v7624 = vpop.permute.xlu0 %7623
        %7625 = vrot.lane.b32.xlu0 %v7351, 125
        %v7626 = vpop.permute.xlu0 %7625
        %7627 = vrot.lane.b32.xlu0 %v7356, 125
        %v7628 = vpop.permute.xlu0 %7627
        %7629 = vrot.lane.b32.xlu0 %v7361, 125
        %v7630 = vpop.permute.xlu0 %7629
        %7631 = vrot.lane.b32.xlu0 %v7366, 125
        %v7632 = vpop.permute.xlu0 %7631
        %7633 = vrot.lane.b32.xlu0 %v7371, 125
        %v7634 = vpop.permute.xlu0 %7633
        %7635 = vrot.lane.b32.xlu0 %v7376, 125
        %v7636 = vpop.permute.xlu0 %7635
        %7637 = vrot.lane.b32.xlu0 %v7381, 125
        %v7638 = vpop.permute.xlu0 %7637
        %7639 = vrot.lane.b32.xlu0 %v7386, 125
        %v7640 = vpop.permute.xlu0 %7639
        %7641 = vrot.lane.b32.xlu0 %v7391, 125
        %v7642 = vpop.permute.xlu0 %7641
        %7643 = vrot.lane.b32.xlu0 %v7396, 125
        %v7644 = vpop.permute.xlu0 %7643
        %7645 = vrot.lane.b32.xlu0 %v7401, 125
        %v7646 = vpop.permute.xlu0 %7645
        %7647 = vrot.lane.b32.xlu0 %v7406, 125
        %v7648 = vpop.permute.xlu0 %7647
        %7649 = vrot.lane.b32.xlu0 %v7411, 125
        %v7650 = vpop.permute.xlu0 %7649
        %7651 = vrot.lane.b32.xlu0 %v7416, 125
        %v7652 = vpop.permute.xlu0 %7651
        %7653 = vrot.lane.b32.xlu0 %v7421, 125
        %v7654 = vpop.permute.xlu0 %7653
        %7655 = vrot.lane.b32.xlu0 %v7426, 125
        %v7656 = vpop.permute.xlu0 %7655
        %7657 = vrot.lane.b32.xlu0 %v7431, 125
        %v7658 = vpop.permute.xlu0 %7657
        %7684 = vrot.lane.b32.xlu0 %v7311, 124
        %v7685 = vpop.permute.xlu0 %7684
        %7686 = vrot.lane.b32.xlu0 %v7316, 124
        %v7687 = vpop.permute.xlu0 %7686
        %7688 = vrot.lane.b32.xlu0 %v7321, 124
        %v7689 = vpop.permute.xlu0 %7688
        %7690 = vrot.lane.b32.xlu0 %v7326, 124
        %v7691 = vpop.permute.xlu0 %7690
        %7692 = vrot.lane.b32.xlu0 %v7331, 124
        %v7693 = vpop.permute.xlu0 %7692
        %7694 = vrot.lane.b32.xlu0 %v7336, 124
        %v7695 = vpop.permute.xlu0 %7694
        %7696 = vrot.lane.b32.xlu0 %v7341, 124
        %v7697 = vpop.permute.xlu0 %7696
        %7698 = vrot.lane.b32.xlu0 %v7346, 124
        %v7699 = vpop.permute.xlu0 %7698
        %7700 = vrot.lane.b32.xlu0 %v7351, 124
        %v7701 = vpop.permute.xlu0 %7700
        %7702 = vrot.lane.b32.xlu0 %v7356, 124
        %v7703 = vpop.permute.xlu0 %7702
        %7704 = vrot.lane.b32.xlu0 %v7361, 124
        %v7705 = vpop.permute.xlu0 %7704
        %7706 = vrot.lane.b32.xlu0 %v7366, 124
        %v7707 = vpop.permute.xlu0 %7706
        %7708 = vrot.lane.b32.xlu0 %v7371, 124
        %v7709 = vpop.permute.xlu0 %7708
        %7710 = vrot.lane.b32.xlu0 %v7376, 124
        %v7711 = vpop.permute.xlu0 %7710
        %7712 = vrot.lane.b32.xlu0 %v7381, 124
        %v7713 = vpop.permute.xlu0 %7712
        %7714 = vrot.lane.b32.xlu0 %v7386, 124
        %v7715 = vpop.permute.xlu0 %7714
        %7716 = vrot.lane.b32.xlu0 %v7391, 124
        %v7717 = vpop.permute.xlu0 %7716
        %7718 = vrot.lane.b32.xlu0 %v7396, 124
        %v7719 = vpop.permute.xlu0 %7718
        %7720 = vrot.lane.b32.xlu0 %v7401, 124
        %v7721 = vpop.permute.xlu0 %7720
        %7722 = vrot.lane.b32.xlu0 %v7406, 124
        %v7723 = vpop.permute.xlu0 %7722
        %7724 = vrot.lane.b32.xlu0 %v7411, 124
        %v7725 = vpop.permute.xlu0 %7724
        %7726 = vrot.lane.b32.xlu0 %v7416, 124
        %v7727 = vpop.permute.xlu0 %7726
        %7728 = vrot.lane.b32.xlu0 %v7421, 124
        %v7729 = vpop.permute.xlu0 %7728
        %7730 = vrot.lane.b32.xlu0 %v7426, 124
        %v7731 = vpop.permute.xlu0 %7730
        %7732 = vrot.lane.b32.xlu0 %v7431, 124
        %v7733 = vpop.permute.xlu0 %7732
        %v7759 = vld [vmem:[%s17] sm:$0xff]
        %v7760 = vld [vmem:[%s17 + $0x8] sm:$0xff]
        %v7761 = vld [vmem:[%s17 + $0x10] sm:$0xff]
        %v7762 = vld [vmem:[%s17 + $0x18] sm:$0xff]
        %v7763 = vld [vmem:[%s17 + $0x20] sm:$0xff]
        %v7764 = vld [vmem:[%s17 + $0x28] sm:$0xff]
        %v7765 = vld [vmem:[%s17 + $0x30] sm:$0xff]
        %v7766 = vld [vmem:[%s17 + $0x38] sm:$0xff]
        %v7767 = vld [vmem:[%s17 + $0x40] sm:$0xff]
        %v7768 = vld [vmem:[%s17 + $0x48] sm:$0xff]
        %v7769 = vld [vmem:[%s17 + $0x50] sm:$0xff]
        %v7770 = vld [vmem:[%s17 + $0x58] sm:$0xff]
        %v7771 = vld [vmem:[%s17 + $0x60] sm:$0xff]
        %v7772 = vld [vmem:[%s17 + $0x68] sm:$0xff]
        %v7773 = vld [vmem:[%s17 + $0x70] sm:$0xff]
        %v7774 = vld [vmem:[%s17 + $0x78] sm:$0xff]
        %v7775 = vld [vmem:[%s17 + $0x80] sm:$0xff]
        %v7776 = vld [vmem:[%s17 + $0x88] sm:$0xff]
        %v7777 = vld [vmem:[%s17 + $0x90] sm:$0xff]
        %v7778 = vld [vmem:[%s17 + $0x98] sm:$0xff]
        %v7779 = vld [vmem:[%s17 + $0xa0] sm:$0xff]
        %v7780 = vld [vmem:[%s17 + $0xa8] sm:$0xff]
        %v7781 = vld [vmem:[%s17 + $0xb0] sm:$0xff]
        %v7782 = vld [vmem:[%s17 + $0xb8] sm:$0xff]
        %v7783 = vld [vmem:[%s17 + $0xc0] sm:$0xff]
        %v7784 = vld [vmem:[%s17 + $0xc8] sm:$0xff]
        %v7785 = vld [vmem:[%s17 + $0xd0] sm:$0xff]
        %v7786 = vld [vmem:[%s17 + $0xd8] sm:$0xff]
        %v7787 = vld [vmem:[%s17 + $0xe0] sm:$0xff]
        %v7788 = vld [vmem:[%s17 + $0xe8] sm:$0xff]
        %v7789 = vld [vmem:[%s17 + $0xf0] sm:$0xff]
        %v7790 = vld [vmem:[%s17 + $0xf8] sm:$0xff]
        %v7791 = vld [vmem:[%s17 + $0x100] sm:$0xff]
        %v7792 = vld [vmem:[%s17 + $0x108] sm:$0xff]
        %v7793 = vld [vmem:[%s17 + $0x110] sm:$0xff]
        %v7794 = vld [vmem:[%s17 + $0x118] sm:$0xff]
        %v7795 = vld [vmem:[%s17 + $0x120] sm:$0xff]
        %v7796 = vld [vmem:[%s17 + $0x128] sm:$0xff]
        %v7797 = vld [vmem:[%s17 + $0x130] sm:$0xff]
        %v7798 = vld [vmem:[%s17 + $0x138] sm:$0xff]
        %v7799 = vld [vmem:[%s17 + $0x140] sm:$0xff]
        %v7800 = vld [vmem:[%s17 + $0x148] sm:$0xff]
        %v7801 = vld [vmem:[%s17 + $0x150] sm:$0xff]
        %v7802 = vld [vmem:[%s17 + $0x158] sm:$0xff]
        %v7803 = vld [vmem:[%s17 + $0x160] sm:$0xff]
        %v7804 = vld [vmem:[%s17 + $0x168] sm:$0xff]
        %v7805 = vld [vmem:[%s17 + $0x170] sm:$0xff]
        %v7806 = vld [vmem:[%s17 + $0x178] sm:$0xff]
        %v7807 = vld [vmem:[%s17 + $0x180] sm:$0xff]
        %v7808 = vld [vmem:[%s17 + $0x188] sm:$0xff]
        %v7809 = vld [vmem:[%s17 + $0x190] sm:$0xff]
        %v7810 = vld [vmem:[%s17 + $0x198] sm:$0xff]
        %v7811 = vld [vmem:[%s17 + $0x1a0] sm:$0xff]
        %v7812 = vld [vmem:[%s17 + $0x1a8] sm:$0xff]
        %v7813 = vld [vmem:[%s17 + $0x1b0] sm:$0xff]
        %v7814 = vld [vmem:[%s17 + $0x1b8] sm:$0xff]
        %v7815 = vld [vmem:[%s17 + $0x1c0] sm:$0xff]
        %v7816 = vld [vmem:[%s17 + $0x1c8] sm:$0xff]
        %v7817 = vld [vmem:[%s17 + $0x1d0] sm:$0xff]
        %v7818 = vld [vmem:[%s17 + $0x1d8] sm:$0xff]
        %v7819 = vld [vmem:[%s17 + $0x1e0] sm:$0xff]
        %v7820 = vld [vmem:[%s17 + $0x1e8] sm:$0xff]
        %v7821 = vld [vmem:[%s17 + $0x1f0] sm:$0xff]
        %v7822 = vld [vmem:[%s17 + $0x1f8] sm:$0xff]
        %v7823 = vld [vmem:[%s17 + $0x200] sm:$0xff]
        %v7824 = vld [vmem:[%s17 + $0x208] sm:$0xff]
        %v7825 = vld [vmem:[%s17 + $0x210] sm:$0xff]
        %v7826 = vld [vmem:[%s17 + $0x218] sm:$0xff]
        %v7827 = vld [vmem:[%s17 + $0x220] sm:$0xff]
        %v7828 = vld [vmem:[%s17 + $0x228] sm:$0xff]
        %v7829 = vld [vmem:[%s17 + $0x230] sm:$0xff]
        %v7830 = vld [vmem:[%s17 + $0x238] sm:$0xff]
        %v7831 = vld [vmem:[%s17 + $0x240] sm:$0xff]
        %v7832 = vld [vmem:[%s17 + $0x248] sm:$0xff]
        %v7833 = vld [vmem:[%s17 + $0x250] sm:$0xff]
        %v7834 = vld [vmem:[%s17 + $0x258] sm:$0xff]
        %v7835 = vld [vmem:[%s17 + $0x260] sm:$0xff]
        %v7836 = vld [vmem:[%s17 + $0x268] sm:$0xff]
        %v7837 = vld [vmem:[%s17 + $0x270] sm:$0xff]
        %v7838 = vld [vmem:[%s17 + $0x278] sm:$0xff]
        %v7839 = vld [vmem:[%s17 + $0x280] sm:$0xff]
        %v7840 = vld [vmem:[%s17 + $0x288] sm:$0xff]
        %v7841 = vld [vmem:[%s17 + $0x290] sm:$0xff]
        %v7842 = vld [vmem:[%s17 + $0x298] sm:$0xff]
        %v7843 = vld [vmem:[%s17 + $0x2a0] sm:$0xff]
        %v7844 = vld [vmem:[%s17 + $0x2a8] sm:$0xff]
        %v7845 = vld [vmem:[%s17 + $0x2b0] sm:$0xff]
        %v7846 = vld [vmem:[%s17 + $0x2b8] sm:$0xff]
        %v7847 = vld [vmem:[%s17 + $0x2c0] sm:$0xff]
        %v7848 = vld [vmem:[%s17 + $0x2c8] sm:$0xff]
        %v7849 = vld [vmem:[%s17 + $0x2d0] sm:$0xff]
        %v7850 = vld [vmem:[%s17 + $0x2d8] sm:$0xff]
        %v7851 = vld [vmem:[%s17 + $0x2e0] sm:$0xff]
        %v7852 = vld [vmem:[%s17 + $0x2e8] sm:$0xff]
        %v7853 = vld [vmem:[%s17 + $0x2f0] sm:$0xff]
        %v7854 = vld [vmem:[%s17 + $0x2f8] sm:$0xff]
        %v7855 = vld [vmem:[%s17 + $0x300] sm:$0xff]
        %v7856 = vld [vmem:[%s17 + $0x308] sm:$0xff]
        %v7857 = vld [vmem:[%s17 + $0x310] sm:$0xff]
        %v7858 = vld [vmem:[%s17 + $0x318] sm:$0xff]
        %v7859 = vld [vmem:[%s17 + $0x320] sm:$0xff]
        %v7860 = vld [vmem:[%s17 + $0x328] sm:$0xff]
        %v7861 = vld [vmem:[%s17 + $0x330] sm:$0xff]
        %v7862 = vld [vmem:[%s17 + $0x338] sm:$0xff]
        %v7863 = vld [vmem:[%s17 + $0x340] sm:$0xff]
        %v7864 = vld [vmem:[%s17 + $0x348] sm:$0xff]
        %v7865 = vld [vmem:[%s17 + $0x350] sm:$0xff]
        %v7866 = vld [vmem:[%s17 + $0x358] sm:$0xff]
        %v7867 = vld [vmem:[%s17 + $0x360] sm:$0xff]
        %v7868 = vld [vmem:[%s17 + $0x368] sm:$0xff]
        %v7869 = vld [vmem:[%s17 + $0x370] sm:$0xff]
        %v7870 = vld [vmem:[%s17 + $0x378] sm:$0xff]
        %v7871 = vld [vmem:[%s17 + $0x380] sm:$0xff]
        %v7872 = vld [vmem:[%s17 + $0x388] sm:$0xff]
        %v7873 = vld [vmem:[%s17 + $0x390] sm:$0xff]
        %v7874 = vld [vmem:[%s17 + $0x398] sm:$0xff]
        %v7875 = vld [vmem:[%s17 + $0x3a0] sm:$0xff]
        %v7876 = vld [vmem:[%s17 + $0x3a8] sm:$0xff]
        %v7877 = vld [vmem:[%s17 + $0x3b0] sm:$0xff]
        %v7878 = vld [vmem:[%s17 + $0x3b8] sm:$0xff]
        %v7879 = vld [vmem:[%s17 + $0x3c0] sm:$0xff]
        %v7880 = vld [vmem:[%s17 + $0x3c8] sm:$0xff]
        %v7881 = vld [vmem:[%s17 + $0x3d0] sm:$0xff]
        %v7882 = vld [vmem:[%s17 + $0x3d8] sm:$0xff]
        %v7883 = vld [vmem:[%s17 + $0x3e0] sm:$0xff]
        %v7884 = vld [vmem:[%s17 + $0x3e8] sm:$0xff]
        %v7885 = vld [vmem:[%s17 + $0x3f0] sm:$0xff]
        %v7886 = vld [vmem:[%s17 + $0x3f8] sm:$0xff]
        %v7887 = vld [vmem:[%s17 + $0x400] sm:$0xff]
        %v7888 = vld [vmem:[%s17 + $0x408] sm:$0xff]
        %v7889 = vld [vmem:[%s17 + $0x410] sm:$0xff]
        %v7890 = vld [vmem:[%s17 + $0x418] sm:$0xff]
        %v7891 = vld [vmem:[%s17 + $0x420] sm:$0xff]
        %v7892 = vld [vmem:[%s17 + $0x428] sm:$0xff]
        %v7893 = vld [vmem:[%s17 + $0x430] sm:$0xff]
        %v7894 = vld [vmem:[%s17 + $0x438] sm:$0xff]
        %v7895 = vld [vmem:[%s17 + $0x440] sm:$0xff]
        %v7896 = vld [vmem:[%s17 + $0x448] sm:$0xff]
        %v7897 = vld [vmem:[%s17 + $0x450] sm:$0xff]
        %v7898 = vld [vmem:[%s17 + $0x458] sm:$0xff]
        %v7899 = vld [vmem:[%s17 + $0x460] sm:$0xff]
        %v7900 = vld [vmem:[%s17 + $0x468] sm:$0xff]
        %v7901 = vld [vmem:[%s17 + $0x470] sm:$0xff]
        %v7902 = vld [vmem:[%s17 + $0x478] sm:$0xff]
        %v7903 = vld [vmem:[%s17 + $0x480] sm:$0xff]
        %v7904 = vld [vmem:[%s17 + $0x488] sm:$0xff]
        %v7905 = vld [vmem:[%s17 + $0x490] sm:$0xff]
        %v7906 = vld [vmem:[%s17 + $0x498] sm:$0xff]
        %v7907 = vld [vmem:[%s17 + $0x4a0] sm:$0xff]
        %v7908 = vld [vmem:[%s17 + $0x4a8] sm:$0xff]
        %v7909 = vld [vmem:[%s17 + $0x4b0] sm:$0xff]
        %v7910 = vld [vmem:[%s17 + $0x4b8] sm:$0xff]
        %v7911 = vld [vmem:[%s17 + $0x4c0] sm:$0xff]
        %v7912 = vld [vmem:[%s17 + $0x4c8] sm:$0xff]
        %v7913 = vld [vmem:[%s17 + $0x4d0] sm:$0xff]
        %v7914 = vld [vmem:[%s17 + $0x4d8] sm:$0xff]
        %v7915 = vld [vmem:[%s17 + $0x4e0] sm:$0xff]
        %v7916 = vld [vmem:[%s17 + $0x4e8] sm:$0xff]
        %v7917 = vld [vmem:[%s17 + $0x4f0] sm:$0xff]
        %v7918 = vld [vmem:[%s17 + $0x4f8] sm:$0xff]
        %v7919 = vld [vmem:[%s17 + $0x500] sm:$0xff]
        %v7920 = vld [vmem:[%s17 + $0x508] sm:$0xff]
        %v7921 = vld [vmem:[%s17 + $0x510] sm:$0xff]
        %v7922 = vld [vmem:[%s17 + $0x518] sm:$0xff]
        %v7923 = vld [vmem:[%s17 + $0x520] sm:$0xff]
        %v7924 = vld [vmem:[%s17 + $0x528] sm:$0xff]
        %v7925 = vld [vmem:[%s17 + $0x530] sm:$0xff]
        %v7926 = vld [vmem:[%s17 + $0x538] sm:$0xff]
        %v7927 = vld [vmem:[%s17 + $0x540] sm:$0xff]
        %v7928 = vld [vmem:[%s17 + $0x548] sm:$0xff]
        %v7929 = vld [vmem:[%s17 + $0x550] sm:$0xff]
        %v7930 = vld [vmem:[%s17 + $0x558] sm:$0xff]
        %v7931 = vld [vmem:[%s17 + $0x560] sm:$0xff]
        %v7932 = vld [vmem:[%s17 + $0x568] sm:$0xff]
        %v7933 = vld [vmem:[%s17 + $0x570] sm:$0xff]
        %v7934 = vld [vmem:[%s17 + $0x578] sm:$0xff]
        %v7935 = vld [vmem:[%s17 + $0x580] sm:$0xff]
        %v7936 = vld [vmem:[%s17 + $0x588] sm:$0xff]
        %v7937 = vld [vmem:[%s17 + $0x590] sm:$0xff]
        %v7938 = vld [vmem:[%s17 + $0x598] sm:$0xff]
        %v7939 = vld [vmem:[%s17 + $0x5a0] sm:$0xff]
        %v7940 = vld [vmem:[%s17 + $0x5a8] sm:$0xff]
        %v7941 = vld [vmem:[%s17 + $0x5b0] sm:$0xff]
        %v7942 = vld [vmem:[%s17 + $0x5b8] sm:$0xff]
        %v7943 = vld [vmem:[%s17 + $0x5c0] sm:$0xff]
        %v7944 = vld [vmem:[%s17 + $0x5c8] sm:$0xff]
        %v7945 = vld [vmem:[%s17 + $0x5d0] sm:$0xff]
        %v7946 = vld [vmem:[%s17 + $0x5d8] sm:$0xff]
        %v7947 = vld [vmem:[%s17 + $0x5e0] sm:$0xff]
        %v7948 = vld [vmem:[%s17 + $0x5e8] sm:$0xff]
        %v7949 = vld [vmem:[%s17 + $0x5f0] sm:$0xff]
        %v7950 = vld [vmem:[%s17 + $0x5f8] sm:$0xff]
        %v7951 = vld [vmem:[%s17 + $0x600] sm:$0xff]
        %v7952 = vld [vmem:[%s17 + $0x608] sm:$0xff]
        %v7953 = vld [vmem:[%s17 + $0x610] sm:$0xff]
        %v7954 = vld [vmem:[%s17 + $0x618] sm:$0xff]
        %v7955 = vld [vmem:[%s17 + $0x620] sm:$0xff]
        %v7956 = vld [vmem:[%s17 + $0x628] sm:$0xff]
        %v7957 = vld [vmem:[%s17 + $0x630] sm:$0xff]
        %v7958 = vld [vmem:[%s17 + $0x638] sm:$0xff]
        %v7959 = vld [vmem:[%s17 + $0x640] sm:$0xff]
        %v7960 = vld [vmem:[%s17 + $0x648] sm:$0xff]
        %v7961 = vld [vmem:[%s17 + $0x650] sm:$0xff]
        %v7962 = vld [vmem:[%s17 + $0x658] sm:$0xff]
        %v7963 = vld [vmem:[%s17 + $0x660] sm:$0xff]
        %v7964 = vld [vmem:[%s17 + $0x668] sm:$0xff]
        %v7965 = vld [vmem:[%s17 + $0x670] sm:$0xff]
        %v7966 = vld [vmem:[%s17 + $0x678] sm:$0xff]
        %v7967 = vld [vmem:[%s17 + $0x680] sm:$0xff]
        %v7968 = vld [vmem:[%s17 + $0x688] sm:$0xff]
        %v7969 = vld [vmem:[%s17 + $0x690] sm:$0xff]
        %v7970 = vld [vmem:[%s17 + $0x698] sm:$0xff]
        %v7971 = vld [vmem:[%s17 + $0x6a0] sm:$0xff]
        %v7972 = vld [vmem:[%s17 + $0x6a8] sm:$0xff]
        %v7973 = vld [vmem:[%s17 + $0x6b0] sm:$0xff]
        %v7974 = vld [vmem:[%s17 + $0x6b8] sm:$0xff]
        %v7975 = vld [vmem:[%s17 + $0x6c0] sm:$0xff]
        %v7976 = vld [vmem:[%s17 + $0x6c8] sm:$0xff]
        %v7977 = vld [vmem:[%s17 + $0x6d0] sm:$0xff]
        %v7978 = vld [vmem:[%s17 + $0x6d8] sm:$0xff]
        %v7979 = vld [vmem:[%s17 + $0x6e0] sm:$0xff]
        %v7980 = vld [vmem:[%s17 + $0x6e8] sm:$0xff]
        %v7981 = vld [vmem:[%s17 + $0x6f0] sm:$0xff]
        %v7982 = vld [vmem:[%s17 + $0x6f8] sm:$0xff]
        %v7983 = vld [vmem:[%s17 + $0x700] sm:$0xff]
        %v7984 = vld [vmem:[%s17 + $0x708] sm:$0xff]
        %v7985 = vld [vmem:[%s17 + $0x710] sm:$0xff]
        %v7986 = vld [vmem:[%s17 + $0x718] sm:$0xff]
        %v7987 = vld [vmem:[%s17 + $0x720] sm:$0xff]
        %v7988 = vld [vmem:[%s17 + $0x728] sm:$0xff]
        %v7989 = vld [vmem:[%s17 + $0x730] sm:$0xff]
        %v7990 = vld [vmem:[%s17 + $0x738] sm:$0xff]
        %v7991 = vld [vmem:[%s17 + $0x740] sm:$0xff]
        %v7992 = vld [vmem:[%s17 + $0x748] sm:$0xff]
        %v7993 = vld [vmem:[%s17 + $0x750] sm:$0xff]
        %v7994 = vld [vmem:[%s17 + $0x758] sm:$0xff]
        %v7995 = vld [vmem:[%s17 + $0x760] sm:$0xff]
        %v7996 = vld [vmem:[%s17 + $0x768] sm:$0xff]
        %v7997 = vld [vmem:[%s17 + $0x770] sm:$0xff]
        %v7998 = vld [vmem:[%s17 + $0x778] sm:$0xff]
        %v7999 = vld [vmem:[%s17 + $0x780] sm:$0xff]
        %v8000 = vld [vmem:[%s17 + $0x788] sm:$0xff]
        %v8001 = vld [vmem:[%s17 + $0x790] sm:$0xff]
        %v8002 = vld [vmem:[%s17 + $0x798] sm:$0xff]
        %v8003 = vld [vmem:[%s17 + $0x7a0] sm:$0xff]
        %v8004 = vld [vmem:[%s17 + $0x7a8] sm:$0xff]
        %v8005 = vld [vmem:[%s17 + $0x7b0] sm:$0xff]
        %v8006 = vld [vmem:[%s17 + $0x7b8] sm:$0xff]
        %v8007 = vld [vmem:[%s17 + $0x7c0] sm:$0xff]
        %v8008 = vld [vmem:[%s17 + $0x7c8] sm:$0xff]
        %v8009 = vld [vmem:[%s17 + $0x7d0] sm:$0xff]
        %v8010 = vld [vmem:[%s17 + $0x7d8] sm:$0xff]
        %v8011 = vld [vmem:[%s17 + $0x7e0] sm:$0xff]
        %v8012 = vld [vmem:[%s17 + $0x7e8] sm:$0xff]
        %v8013 = vld [vmem:[%s17 + $0x7f0] sm:$0xff]
        %v8014 = vld [vmem:[%s17 + $0x7f8] sm:$0xff]
        %v8015 = vld [vmem:[%s17 + $0x800] sm:$0xff]
        %v8016 = vld [vmem:[%s17 + $0x808] sm:$0xff]
        %v8017 = vld [vmem:[%s17 + $0x810] sm:$0xff]
        %v8018 = vld [vmem:[%s17 + $0x818] sm:$0xff]
        %v8019 = vld [vmem:[%s17 + $0x820] sm:$0xff]
        %v8020 = vld [vmem:[%s17 + $0x828] sm:$0xff]
        %v8021 = vld [vmem:[%s17 + $0x830] sm:$0xff]
        %v8022 = vld [vmem:[%s17 + $0x838] sm:$0xff]
        %v8023 = vld [vmem:[%s17 + $0x840] sm:$0xff]
        %v8024 = vld [vmem:[%s17 + $0x848] sm:$0xff]
        %v8025 = vld [vmem:[%s17 + $0x850] sm:$0xff]
        %v8026 = vld [vmem:[%s17 + $0x858] sm:$0xff]
        %v8027 = vld [vmem:[%s17 + $0x860] sm:$0xff]
        %v8028 = vld [vmem:[%s17 + $0x868] sm:$0xff]
        %v8029 = vld [vmem:[%s17 + $0x870] sm:$0xff]
        %v8030 = vld [vmem:[%s17 + $0x878] sm:$0xff]
        %v8031 = vld [vmem:[%s17 + $0x880] sm:$0xff]
        %v8032 = vld [vmem:[%s17 + $0x888] sm:$0xff]
        %v8033 = vld [vmem:[%s17 + $0x890] sm:$0xff]
        %v8034 = vld [vmem:[%s17 + $0x898] sm:$0xff]
        %v8035 = vld [vmem:[%s17 + $0x8a0] sm:$0xff]
        %v8036 = vld [vmem:[%s17 + $0x8a8] sm:$0xff]
        %v8037 = vld [vmem:[%s17 + $0x8b0] sm:$0xff]
        %v8038 = vld [vmem:[%s17 + $0x8b8] sm:$0xff]
        %v8039 = vld [vmem:[%s17 + $0x8c0] sm:$0xff]
        %v8040 = vld [vmem:[%s17 + $0x8c8] sm:$0xff]
        %v8041 = vld [vmem:[%s17 + $0x8d0] sm:$0xff]
        %v8042 = vld [vmem:[%s17 + $0x8d8] sm:$0xff]
        %v8043 = vld [vmem:[%s17 + $0x8e0] sm:$0xff]
        %v8044 = vld [vmem:[%s17 + $0x8e8] sm:$0xff]
        %v8045 = vld [vmem:[%s17 + $0x8f0] sm:$0xff]
        %v8046 = vld [vmem:[%s17 + $0x8f8] sm:$0xff]
        %v8047 = vld [vmem:[%s17 + $0x900] sm:$0xff]
        %v8048 = vld [vmem:[%s17 + $0x908] sm:$0xff]
        %v8049 = vld [vmem:[%s17 + $0x910] sm:$0xff]
        %v8050 = vld [vmem:[%s17 + $0x918] sm:$0xff]
        %v8051 = vld [vmem:[%s17 + $0x920] sm:$0xff]
        %v8052 = vld [vmem:[%s17 + $0x928] sm:$0xff]
        %v8053 = vld [vmem:[%s17 + $0x930] sm:$0xff]
        %v8054 = vld [vmem:[%s17 + $0x938] sm:$0xff]
        %v8055 = vld [vmem:[%s17 + $0x940] sm:$0xff]
        %v8056 = vld [vmem:[%s17 + $0x948] sm:$0xff]
        %v8057 = vld [vmem:[%s17 + $0x950] sm:$0xff]
        %v8058 = vld [vmem:[%s17 + $0x958] sm:$0xff]
        %v8059 = vld [vmem:[%s17 + $0x960] sm:$0xff]
        %v8060 = vld [vmem:[%s17 + $0x968] sm:$0xff]
        %v8061 = vld [vmem:[%s17 + $0x970] sm:$0xff]
        %v8062 = vld [vmem:[%s17 + $0x978] sm:$0xff]
        %v8063 = vld [vmem:[%s17 + $0x980] sm:$0xff]
        %v8064 = vld [vmem:[%s17 + $0x988] sm:$0xff]
        %v8065 = vld [vmem:[%s17 + $0x990] sm:$0xff]
        %v8066 = vld [vmem:[%s17 + $0x998] sm:$0xff]
        %v8067 = vld [vmem:[%s17 + $0x9a0] sm:$0xff]
        %v8068 = vld [vmem:[%s17 + $0x9a8] sm:$0xff]
        %v8069 = vld [vmem:[%s17 + $0x9b0] sm:$0xff]
        %v8070 = vld [vmem:[%s17 + $0x9b8] sm:$0xff]
        %v8071 = vld [vmem:[%s17 + $0x9c0] sm:$0xff]
        %v8072 = vld [vmem:[%s17 + $0x9c8] sm:$0xff]
        %v8073 = vld [vmem:[%s17 + $0x9d0] sm:$0xff]
        %v8074 = vld [vmem:[%s17 + $0x9d8] sm:$0xff]
        %v8075 = vld [vmem:[%s17 + $0x9e0] sm:$0xff]
        %v8076 = vld [vmem:[%s17 + $0x9e8] sm:$0xff]
        %v8077 = vld [vmem:[%s17 + $0x9f0] sm:$0xff]
        %v8078 = vld [vmem:[%s17 + $0x9f8] sm:$0xff]
        %v8079 = vld [vmem:[%s17 + $0xa00] sm:$0xff]
        %v8080 = vld [vmem:[%s17 + $0xa08] sm:$0xff]
        %v8081 = vld [vmem:[%s17 + $0xa10] sm:$0xff]
        %v8082 = vld [vmem:[%s17 + $0xa18] sm:$0xff]
        %v8083 = vld [vmem:[%s17 + $0xa20] sm:$0xff]
        %v8084 = vld [vmem:[%s17 + $0xa28] sm:$0xff]
        %v8085 = vld [vmem:[%s17 + $0xa30] sm:$0xff]
        %v8086 = vld [vmem:[%s17 + $0xa38] sm:$0xff]
        %v8087 = vld [vmem:[%s17 + $0xa40] sm:$0x3]
        %v8088 = vld [vmem:[%s17 + $0xa48] sm:$0x3]
        %v8089 = vld [vmem:[%s17 + $0xa50] sm:$0x3]
        %v8090 = vld [vmem:[%s17 + $0xa58] sm:$0x3]
        %v8091 = vld [vmem:[%s17 + $0xa60] sm:$0x3]
        %v8092 = vld [vmem:[%s17 + $0xa68] sm:$0x3]
        %v8093 = vld [vmem:[%s17 + $0xa70] sm:$0x3]
        %v8094 = vld [vmem:[%s17 + $0xa78] sm:$0x3]
        %vm8095 = vcmask 850944
        %v8097 = vsel %vm8095, %v7766, 0
        %v8100 = vsel %vm8095, %v7774, 0
        %v8103 = vsel %vm8095, %v7782, 0
        %v8106 = vsel %vm8095, %v7790, 0
        %v8109 = vsel %vm8095, %v7798, 0
        %v8112 = vsel %vm8095, %v7806, 0
        %v8115 = vsel %vm8095, %v7814, 0
        %v8118 = vsel %vm8095, %v7822, 0
        %v8121 = vsel %vm8095, %v7830, 0
        %v8124 = vsel %vm8095, %v7838, 0
        %v8127 = vsel %vm8095, %v7846, 0
        %v8130 = vsel %vm8095, %v7854, 0
        %v8133 = vsel %vm8095, %v7862, 0
        %v8136 = vsel %vm8095, %v7870, 0
        %v8139 = vsel %vm8095, %v7878, 0
        %v8142 = vsel %vm8095, %v7886, 0
        %v8145 = vsel %vm8095, %v7894, 0
        %v8148 = vsel %vm8095, %v7902, 0
        %v8151 = vsel %vm8095, %v7910, 0
        %v8154 = vsel %vm8095, %v7918, 0
        %v8157 = vsel %vm8095, %v7926, 0
        %v8160 = vsel %vm8095, %v7934, 0
        %v8163 = vsel %vm8095, %v7942, 0
        %v8166 = vsel %vm8095, %v7950, 0
        %v8169 = vsel %vm8095, %v7958, 0
        %v8172 = vsel %vm8095, %v7966, 0
        %v8175 = vsel %vm8095, %v7974, 0
        %v8178 = vsel %vm8095, %v7982, 0
        %v8181 = vsel %vm8095, %v7990, 0
        %v8184 = vsel %vm8095, %v7998, 0
        %v8187 = vsel %vm8095, %v8006, 0
        %v8190 = vsel %vm8095, %v8014, 0
        %v8193 = vsel %vm8095, %v8022, 0
        %v8196 = vsel %vm8095, %v8030, 0
        %v8199 = vsel %vm8095, %v8038, 0
        %v8202 = vsel %vm8095, %v8046, 0
        %v8205 = vsel %vm8095, %v8054, 0
        %v8208 = vsel %vm8095, %v8062, 0
        %v8211 = vsel %vm8095, %v8070, 0
        %v8214 = vsel %vm8095, %v8078, 0
        %v8217 = vsel %vm8095, %v8086, 0
        %v8220 = vsel %vm8095, %v8094, 0
        %8222 = vmatprep.subr.mxu0 0.0
        %8223 = vmatpush1.msra.mxu0 %v7311
        %8224 = vmatprep.subr.mxu0 0.0
        %8225 = vmatpush1.msra.mxu0 %v7316
        %8226 = vmatprep.subr.mxu0 0.0
        %8227 = vmatpush1.msra.mxu0 %v7321
        %8228 = vmatprep.subr.mxu0 0.0
        %8229 = vmatpush1.msra.mxu0 %v7326
        %8230 = vmatprep.subr.mxu0 0.0
        %8231 = vmatpush1.msra.mxu0 %v7331
        %8232 = vmatprep.subr.mxu0 0.0
        %8233 = vmatpush1.msra.mxu0 %v7336
        %8234 = vmatprep.subr.mxu0 0.0
        %8235 = vmatpush1.msra.mxu0 %v7341
        %8236 = vmatprep.subr.mxu0 0.0
        %8237 = vmatpush1.msra.mxu0 %v7346
        %8238 = vmatprep.subr.mxu0 0.0
        %8239 = vmatpush1.msra.mxu0 %v7351
        %8240 = vmatprep.subr.mxu0 0.0
        %8241 = vmatpush1.msra.mxu0 %v7356
        %8242 = vmatprep.subr.mxu0 0.0
        %8243 = vmatpush1.msra.mxu0 %v7361
        %8244 = vmatprep.subr.mxu0 0.0
        %8245 = vmatpush1.msra.mxu0 %v7366
        %8246 = vmatprep.subr.mxu0 0.0
        %8247 = vmatpush1.msra.mxu0 %v7371
        %8248 = vmatprep.subr.mxu0 0.0
        %8249 = vmatpush1.msra.mxu0 %v7376
        %8250 = vmatprep.subr.mxu0 0.0
        %8251 = vmatpush1.msra.mxu0 %v7381
        %8252 = vmatprep.subr.mxu0 0.0
        %8253 = vmatpush1.msra.mxu0 %v7386
        %8254 = vmatprep.subr.mxu0 0.0
        %8255 = vmatpush1.msra.mxu0 %v7391
        %8256 = vmatprep.subr.mxu0 0.0
        %8257 = vmatpush1.msra.mxu0 %v7396
        %8258 = vmatprep.subr.mxu0 0.0
        %8259 = vmatpush1.msra.mxu0 %v7401
        %8260 = vmatprep.subr.mxu0 0.0
        %8261 = vmatpush1.msra.mxu0 %v7406
        %8262 = vmatprep.subr.mxu0 0.0
        %8263 = vmatpush1.msra.mxu0 %v7411
        %8264 = vmatprep.subr.mxu0 0.0
        %8265 = vmatpush1.msra.mxu0 %v7416
        %8266 = vmatprep.subr.mxu0 0.0
        %8267 = vmatpush1.msra.mxu0 %v7421
        %8268 = vmatprep.subr.mxu0 0.0
        %8269 = vmatpush1.msra.mxu0 %v7426
        %8270 = vmatprep.subr.mxu0 0.0
        %8271 = vmatpush1.msra.mxu0 %v7431
        %8272 = vmatprep.subr.mxu0 0.0
        %8273 = vmatpush1.msra.mxu0 %v7460
        %8274 = vmatprep.subr.mxu0 0.0
        %8275 = vmatpush1.msra.mxu0 %v7462
        %8276 = vmatprep.subr.mxu0 0.0
        %8277 = vmatpush1.msra.mxu0 %v7464
        %8278 = vmatprep.subr.mxu0 0.0
        %8279 = vmatpush1.msra.mxu0 %v7466
        %8280 = vmatprep.subr.mxu0 0.0
        %8281 = vmatpush1.msra.mxu0 %v7468
        %8282 = vmatprep.subr.mxu0 0.0
        %8283 = vmatpush1.msra.mxu0 %v7470
        %8284 = vmatprep.subr.mxu0 0.0
        %8285 = vmatpush1.msra.mxu0 %v7472
        %8286 = vmatprep.mubr.f32.mxu0 %v7760
        %8287 = vmatmul.mubr.f32.gmra.mrb[0].mxu0 %v7759
        %v8288 = vpop.f32.mrb[0].mxu0
        %v8289 = vadd.f32 0.0, %v8288
        %v8290 = vpop.f32.mrb[0].mxu0
        %8291 = vmatprep.mubr.f32.mxu0 %v7768
        %8292 = vmatmul.mubr.f32.gmra.mrb[0].mxu0 %v7767
        %v8293 = vpop.f32.mrb[0].mxu0
        %v8294 = vadd.f32 0.0, %v8293
        %v8295 = vpop.f32.mrb[0].mxu0
        %8296 = vmatprep.mubr.f32.mxu0 %v7776
        %8297 = vmatmul.mubr.f32.gmra.mrb[0].mxu0 %v7775
        %v8298 = vpop.f32.mrb[0].mxu0
        %v8299 = vadd.f32 0.0, %v8298
        %v8300 = vpop.f32.mrb[0].mxu0
        %8301 = vmatprep.mubr.f32.mxu0 %v7784
        %8302 = vmatmul.mubr.f32.gmra.mrb[0].mxu0 %v7783
        %v8303 = vpop.f32.mrb[0].mxu0
        %v8304 = vadd.f32 0.0, %v8303
        %v8305 = vpop.f32.mrb[0].mxu0
        %8306 = vmatprep.mubr.f32.mxu0 %v7792
        %8307 = vmatmul.mubr.f32.gmra.mrb[0].mxu0 %v7791
        %v8308 = vpop.f32.mrb[0].mxu0
        %v8309 = vadd.f32 0.0, %v8308
        %v8310 = vpop.f32.mrb[0].mxu0
        %8311 = vmatprep.mubr.f32.mxu0 %v7800
        %8312 = vmatmul.mubr.f32.gmra.mrb[0].mxu0 %v7799
        %v8313 = vpop.f32.mrb[0].mxu0
        %v8314 = vadd.f32 0.0, %v8313
        %v8315 = vpop.f32.mrb[0].mxu0
        %8316 = vmatprep.mubr.f32.mxu0 %v7808
        %8317 = vmatmul.mubr.f32.gmra.mrb[0].mxu0 %v7807
        %v8318 = vpop.f32.mrb[0].mxu0
        %v8319 = vadd.f32 0.0, %v8318
        %v8320 = vpop.f32.mrb[0].mxu0
        %8321 = vmatprep.mubr.f32.mxu0 %v7816
        %8322 = vmatmul.mubr.f32.gmra.mrb[0].mxu0 %v7815
        %v8323 = vpop.f32.mrb[0].mxu0
        %v8324 = vadd.f32 0.0, %v8323
        %v8325 = vpop.f32.mrb[0].mxu0
        %8326 = vmatprep.mubr.f32.mxu0 %v7824
        %8327 = vmatmul.mubr.f32.gmra.mrb[0].mxu0 %v7823
        %v8328 = vpop.f32.mrb[0].mxu0
        %v8329 = vadd.f32 0.0, %v8328
        %v8330 = vpop.f32.mrb[0].mxu0
        %8331 = vmatprep.mubr.f32.mxu0 %v7832
        %8332 = vmatmul.mubr.f32.gmra.mrb[0].mxu0 %v7831
        %v8333 = vpop.f32.mrb[0].mxu0
        %v8334 = vadd.f32 0.0, %v8333
        %v8335 = vpop.f32.mrb[0].mxu0
        %8336 = vmatprep.mubr.f32.mxu0 %v7840
        %8337 = vmatmul.mubr.f32.gmra.mrb[0].mxu0 %v7839
        %v8338 = vpop.f32.mrb[0].mxu0
        %v8339 = vadd.f32 0.0, %v8338
        %v8340 = vpop.f32.mrb[0].mxu0
        %8341 = vmatprep.mubr.f32.mxu0 %v7848
        %8342 = vmatmul.mubr.f32.gmra.mrb[0].mxu0 %v7847
        %v8343 = vpop.f32.mrb[0].mxu0
        %v8344 = vadd.f32 0.0, %v8343
        %v8345 = vpop.f32.mrb[0].mxu0
        %8346 = vmatprep.mubr.f32.mxu0 %v7856
        %8347 = vmatmul.mubr.f32.gmra.mrb[0].mxu0 %v7855
        %v8348 = vpop.f32.mrb[0].mxu0
        %v8349 = vadd.f32 0.0, %v8348
        %v8350 = vpop.f32.mrb[0].mxu0
        %8351 = vmatprep.mubr.f32.mxu0 %v7864
        %8352 = vmatmul.mubr.f32.gmra.mrb[0].mxu0 %v7863
        %v8353 = vpop.f32.mrb[0].mxu0
        %v8354 = vadd.f32 0.0, %v8353
        %v8355 = vpop.f32.mrb[0].mxu0
        %8356 = vmatprep.mubr.f32.mxu0 %v7872
        %8357 = vmatmul.mubr.f32.gmra.mrb[0].mxu0 %v7871
        %v8358 = vpop.f32.mrb[0].mxu0
        %v8359 = vadd.f32 0.0, %v8358
        %v8360 = vpop.f32.mrb[0].mxu0
        %8361 = vmatprep.mubr.f32.mxu0 %v7880
        %8362 = vmatmul.mubr.f32.gmra.mrb[0].mxu0 %v7879
        %v8363 = vpop.f32.mrb[0].mxu0
        %v8364 = vadd.f32 0.0, %v8363
        %v8365 = vpop.f32.mrb[0].mxu0
        %8366 = vmatprep.mubr.f32.mxu0 %v7888
        %8367 = vmatmul.mubr.f32.gmra.mrb[0].mxu0 %v7887
        %v8368 = vpop.f32.mrb[0].mxu0
        %v8369 = vadd.f32 0.0, %v8368
        %v8370 = vpop.f32.mrb[0].mxu0
        %8371 = vmatprep.mubr.f32.mxu0 %v7896
        %8372 = vmatmul.mubr.f32.gmra.mrb[0].mxu0 %v7895
        %v8373 = vpop.f32.mrb[0].mxu0
        %v8374 = vadd.f32 0.0, %v8373
        %v8375 = vpop.f32.mrb[0].mxu0
        %8376 = vmatprep.mubr.f32.mxu0 %v7904
        %8377 = vmatmul.mubr.f32.gmra.mrb[0].mxu0 %v7903
        %v8378 = vpop.f32.mrb[0].mxu0
        %v8379 = vadd.f32 0.0, %v8378
        %v8380 = vpop.f32.mrb[0].mxu0
        %8381 = vmatprep.mubr.f32.mxu0 %v7912
        %8382 = vmatmul.mubr.f32.gmra.mrb[0].mxu0 %v7911
        %v8383 = vpop.f32.mrb[0].mxu0
        %v8384 = vadd.f32 0.0, %v8383
        %v8385 = vpop.f32.mrb[0].mxu0
        %8386 = vmatprep.mubr.f32.mxu0 %v7920
        %8387 = vmatmul.mubr.f32.gmra.mrb[0].mxu0 %v7919
        %v8388 = vpop.f32.mrb[0].mxu0
        %v8389 = vadd.f32 0.0, %v8388
        %v8390 = vpop.f32.mrb[0].mxu0
        %8391 = vmatprep.mubr.f32.mxu0 %v7928
        %8392 = vmatmul.mubr.f32.gmra.mrb[0].mxu0 %v7927
        %v8393 = vpop.f32.mrb[0].mxu0
        %v8394 = vadd.f32 0.0, %v8393
        %v8395 = vpop.f32.mrb[0].mxu0
        %8396 = vmatprep.mubr.f32.mxu0 %v7936
        %8397 = vmatmul.mubr.f32.gmra.mrb[0].mxu0 %v7935
        %v8398 = vpop.f32.mrb[0].mxu0
        %v8399 = vadd.f32 0.0, %v8398
        %v8400 = vpop.f32.mrb[0].mxu0
        %8401 = vmatprep.mubr.f32.mxu0 %v7944
        %8402 = vmatmul.mubr.f32.gmra.mrb[0].mxu0 %v7943
        %v8403 = vpop.f32.mrb[0].mxu0
        %v8404 = vadd.f32 0.0, %v8403
        %v8405 = vpop.f32.mrb[0].mxu0
        %8406 = vmatprep.mubr.f32.mxu0 %v7952
        %8407 = vmatmul.mubr.f32.gmra.mrb[0].mxu0 %v7951
        %v8408 = vpop.f32.mrb[0].mxu0
        %v8409 = vadd.f32 0.0, %v8408
        %v8410 = vpop.f32.mrb[0].mxu0
        %8411 = vmatprep.mubr.f32.mxu0 %v7960
        %8412 = vmatmul.mubr.f32.gmra.mrb[0].mxu0 %v7959
        %v8413 = vpop.f32.mrb[0].mxu0
        %v8414 = vadd.f32 0.0, %v8413
        %v8415 = vpop.f32.mrb[0].mxu0
        %8416 = vmatprep.mubr.f32.mxu0 %v7968
        %8417 = vmatmul.mubr.f32.gmra.mrb[0].mxu0 %v7967
        %v8418 = vpop.f32.mrb[0].mxu0
        %v8419 = vadd.f32 0.0, %v8418
        %v8420 = vpop.f32.mrb[0].mxu0
        %8421 = vmatprep.mubr.f32.mxu0 %v7976
        %8422 = vmatmul.mubr.f32.gmra.mrb[0].mxu0 %v7975
        %v8423 = vpop.f32.mrb[0].mxu0
        %v8424 = vadd.f32 0.0, %v8423
        %v8425 = vpop.f32.mrb[0].mxu0
        %8426 = vmatprep.mubr.f32.mxu0 %v7984
        %8427 = vmatmul.mubr.f32.gmra.mrb[0].mxu0 %v7983
        %v8428 = vpop.f32.mrb[0].mxu0
        %v8429 = vadd.f32 0.0, %v8428
        %v8430 = vpop.f32.mrb[0].mxu0
        %8431 = vmatprep.mubr.f32.mxu0 %v7992
        %8432 = vmatmul.mubr.f32.gmra.mrb[0].mxu0 %v7991
        %v8433 = vpop.f32.mrb[0].mxu0
        %v8434 = vadd.f32 0.0, %v8433
        %v8435 = vpop.f32.mrb[0].mxu0
        %8436 = vmatprep.mubr.f32.mxu0 %v8000
        %8437 = vmatmul.mubr.f32.gmra.mrb[0].mxu0 %v7999
        %v8438 = vpop.f32.mrb[0].mxu0
        %v8439 = vadd.f32 0.0, %v8438
        %v8440 = vpop.f32.mrb[0].mxu0
        %8441 = vmatprep.mubr.f32.mxu0 %v8008
        %8442 = vmatmul.mubr.f32.gmra.mrb[0].mxu0 %v8007
        %v8443 = vpop.f32.mrb[0].mxu0
        %v8444 = vadd.f32 0.0, %v8443
        %v8445 = vpop.f32.mrb[0].mxu0
        %8446 = vmatprep.mubr.f32.mxu0 %v8016
        %8447 = vmatmul.mubr.f32.gmra.mrb[0].mxu0 %v8015
        %v8448 = vpop.f32.mrb[0].mxu0
        %v8449 = vadd.f32 0.0, %v8448
        %v8450 = vpop.f32.mrb[0].mxu0
        %8451 = vmatprep.mubr.f32.mxu0 %v8024
        %8452 = vmatmul.mubr.f32.gmra.mrb[0].mxu0 %v8023
        %v8453 = vpop.f32.mrb[0].mxu0
        %v8454 = vadd.f32 0.0, %v8453
        %v8455 = vpop.f32.mrb[0].mxu0
        %8456 = vmatprep.mubr.f32.mxu0 %v8032
        %8457 = vmatmul.mubr.f32.gmra.mrb[0].mxu0 %v8031
        %v8458 = vpop.f32.mrb[0].mxu0
        %v8459 = vadd.f32 0.0, %v8458
        %v8460 = vpop.f32.mrb[0].mxu0
        %8461 = vmatprep.mubr.f32.mxu0 %v8040
        %8462 = vmatmul.mubr.f32.gmra.mrb[0].mxu0 %v8039
        %v8463 = vpop.f32.mrb[0].mxu0
        %v8464 = vadd.f32 0.0, %v8463
        %v8465 = vpop.f32.mrb[0].mxu0
        %8466 = vmatprep.mubr.f32.mxu0 %v8048
        %8467 = vmatmul.mubr.f32.gmra.mrb[0].mxu0 %v8047
        %v8468 = vpop.f32.mrb[0].mxu0
        %v8469 = vadd.f32 0.0, %v8468
        %v8470 = vpop.f32.mrb[0].mxu0
        %8471 = vmatprep.mubr.f32.mxu0 %v8056
        %8472 = vmatmul.mubr.f32.gmra.mrb[0].mxu0 %v8055
        %v8473 = vpop.f32.mrb[0].mxu0
        %v8474 = vadd.f32 0.0, %v8473
        %v8475 = vpop.f32.mrb[0].mxu0
        %8476 = vmatprep.mubr.f32.mxu0 %v8064
        %8477 = vmatmul.mubr.f32.gmra.mrb[0].mxu0 %v8063
        %v8478 = vpop.f32.mrb[0].mxu0
        %v8479 = vadd.f32 0.0, %v8478
        %v8480 = vpop.f32.mrb[0].mxu0
        %8481 = vmatprep.mubr.f32.mxu0 %v8072
        %8482 = vmatmul.mubr.f32.gmra.mrb[0].mxu0 %v8071
        %v8483 = vpop.f32.mrb[0].mxu0
        %v8484 = vadd.f32 0.0, %v8483
        %v8485 = vpop.f32.mrb[0].mxu0
        %8486 = vmatprep.mubr.f32.mxu0 %v8080
        %8487 = vmatmul.mubr.f32.gmra.mrb[0].mxu0 %v8079
        %v8488 = vpop.f32.mrb[0].mxu0
        %v8489 = vadd.f32 0.0, %v8488
        %v8490 = vpop.f32.mrb[0].mxu0
        %8491 = vmatprep.mubr.f32.mxu0 %v8088
        %8492 = vmatmul.mubr.f32.gmra.mrb[0].mxu0 %v8087
        %v8493 = vpop.f32.mrb[0].mxu0
        %v8494 = vadd.f32 0.0, %v8493
        %v8495 = vpop.f32.mrb[0].mxu0
        %8496 = vdwg.mxu0
        %8497 = vmatprep.subr.mxu0 0.0
        %8498 = vmatpush1.msra.mxu0 %v7474
        %8499 = vmatprep.subr.mxu0 0.0
        %8500 = vmatpush1.msra.mxu0 %v7476
        %8501 = vmatprep.subr.mxu0 0.0
        %8502 = vmatpush1.msra.mxu0 %v7478
        %8503 = vmatprep.subr.mxu0 0.0
        %8504 = vmatpush1.msra.mxu0 %v7480
        %8505 = vmatprep.subr.mxu0 0.0
        %8506 = vmatpush1.msra.mxu0 %v7482
        %8507 = vmatprep.subr.mxu0 0.0
        %8508 = vmatpush1.msra.mxu0 %v7484
        %8509 = vmatprep.subr.mxu0 0.0
        %8510 = vmatpush1.msra.mxu0 %v7486
        %8511 = vmatprep.subr.mxu0 0.0
        %8512 = vmatpush1.msra.mxu0 %v7488
        %8513 = vmatprep.subr.mxu0 0.0
        %8514 = vmatpush1.msra.mxu0 %v7490
        %8515 = vmatprep.subr.mxu0 0.0
        %8516 = vmatpush1.msra.mxu0 %v7492
        %8517 = vmatprep.subr.mxu0 0.0
        %8518 = vmatpush1.msra.mxu0 %v7494
        %8519 = vmatprep.subr.mxu0 0.0
        %8520 = vmatpush1.msra.mxu0 %v7496
        %8521 = vmatprep.subr.mxu0 0.0
        %8522 = vmatpush1.msra.mxu0 %v7498
        %8523 = vmatprep.subr.mxu0 0.0
        %8524 = vmatpush1.msra.mxu0 %v7500
        %8525 = vmatprep.subr.mxu0 0.0
        %8526 = vmatpush1.msra.mxu0 %v7502
        %8527 = vmatprep.subr.mxu0 0.0
        %8528 = vmatpush1.msra.mxu0 %v7504
        %8529 = vmatprep.subr.mxu0 0.0
        %8530 = vmatpush1.msra.mxu0 %v7506
        %8531 = vmatprep.subr.mxu0 0.0
        %8532 = vmatpush1.msra.mxu0 %v7508
        %8533 = vmatprep.subr.mxu0 0.0
        %8534 = vmatpush1.msra.mxu0 %v7535
        %8535 = vmatprep.subr.mxu0 0.0
        %8536 = vmatpush1.msra.mxu0 %v7537
        %8537 = vmatprep.subr.mxu0 0.0
        %8538 = vmatpush1.msra.mxu0 %v7539
        %8539 = vmatprep.subr.mxu0 0.0
        %8540 = vmatpush1.msra.mxu0 %v7541
        %8541 = vmatprep.subr.mxu0 0.0
        %8542 = vmatpush1.msra.mxu0 %v7543
        %8543 = vmatprep.subr.mxu0 0.0
        %8544 = vmatpush1.msra.mxu0 %v7545
        %8545 = vmatprep.subr.mxu0 0.0
        %8546 = vmatpush1.msra.mxu0 %v7547
        %8547 = vmatprep.subr.mxu0 0.0
        %8548 = vmatpush1.msra.mxu0 %v7549
        %8549 = vmatprep.subr.mxu0 0.0
        %8550 = vmatpush1.msra.mxu0 %v7551
        %8551 = vmatprep.subr.mxu0 0.0
        %8552 = vmatpush1.msra.mxu0 %v7553
        %8553 = vmatprep.subr.mxu0 0.0
        %8554 = vmatpush1.msra.mxu0 %v7555
        %8555 = vmatprep.subr.mxu0 0.0
        %8556 = vmatpush1.msra.mxu0 %v7557
        %8557 = vmatprep.subr.mxu0 0.0
        %8558 = vmatpush1.msra.mxu0 %v7559
        %8559 = vmatprep.subr.mxu0 0.0
        %8560 = vmatpush1.msra.mxu0 %v7561
        %8561 = vmatprep.mubr.f32.mxu0 %v7762
        %8562 = vmatmul.mubr.f32.gmra.mrb[0].mxu0 %v7761
        %v8563 = vpop.f32.mrb[0].mxu0
        %v8564 = vadd.f32 %v8289, %v8563
        %v8565 = vpop.f32.mrb[0].mxu0
        %8566 = vmatprep.mubr.f32.mxu0 %v7770
        %8567 = vmatmul.mubr.f32.gmra.mrb[0].mxu0 %v7769
        %v8568 = vpop.f32.mrb[0].mxu0
        %v8569 = vadd.f32 %v8294, %v8568
        %v8570 = vpop.f32.mrb[0].mxu0
        %8571 = vmatprep.mubr.f32.mxu0 %v7778
        %8572 = vmatmul.mubr.f32.gmra.mrb[0].mxu0 %v7777
        %v8573 = vpop.f32.mrb[0].mxu0
        %v8574 = vadd.f32 %v8299, %v8573
        %v8575 = vpop.f32.mrb[0].mxu0
        %8576 = vmatprep.mubr.f32.mxu0 %v7786
        %8577 = vmatmul.mubr.f32.gmra.mrb[0].mxu0 %v7785
        %v8578 = vpop.f32.mrb[0].mxu0
        %v8579 = vadd.f32 %v8304, %v8578
        %v8580 = vpop.f32.mrb[0].mxu0
        %8581 = vmatprep.mubr.f32.mxu0 %v7794
        %8582 = vmatmul.mubr.f32.gmra.mrb[0].mxu0 %v7793
        %v8583 = vpop.f32.mrb[0].mxu0
        %v8584 = vadd.f32 %v8309, %v8583
        %v8585 = vpop.f32.mrb[0].mxu0
        %8586 = vmatprep.mubr.f32.mxu0 %v7802
        %8587 = vmatmul.mubr.f32.gmra.mrb[0].mxu0 %v7801
        %v8588 = vpop.f32.mrb[0].mxu0
        %v8589 = vadd.f32 %v8314, %v8588
        %v8590 = vpop.f32.mrb[0].mxu0
        %8591 = vmatprep.mubr.f32.mxu0 %v7810
        %8592 = vmatmul.mubr.f32.gmra.mrb[0].mxu0 %v7809
        %v8593 = vpop.f32.mrb[0].mxu0
        %v8594 = vadd.f32 %v8319, %v8593
        %v8595 = vpop.f32.mrb[0].mxu0
        %8596 = vmatprep.mubr.f32.mxu0 %v7818
        %8597 = vmatmul.mubr.f32.gmra.mrb[0].mxu0 %v7817
        %v8598 = vpop.f32.mrb[0].mxu0
        %v8599 = vadd.f32 %v8324, %v8598
        %v8600 = vpop.f32.mrb[0].mxu0
        %8601 = vmatprep.mubr.f32.mxu0 %v7826
        %8602 = vmatmul.mubr.f32.gmra.mrb[0].mxu0 %v7825
        %v8603 = vpop.f32.mrb[0].mxu0
        %v8604 = vadd.f32 %v8329, %v8603
        %v8605 = vpop.f32.mrb[0].mxu0
        %8606 = vmatprep.mubr.f32.mxu0 %v7834
        %8607 = vmatmul.mubr.f32.gmra.mrb[0].mxu0 %v7833
        %v8608 = vpop.f32.mrb[0].mxu0
        %v8609 = vadd.f32 %v8334, %v8608
        %v8610 = vpop.f32.mrb[0].mxu0
        %8611 = vmatprep.mubr.f32.mxu0 %v7842
        %8612 = vmatmul.mubr.f32.gmra.mrb[0].mxu0 %v7841
        %v8613 = vpop.f32.mrb[0].mxu0
        %v8614 = vadd.f32 %v8339, %v8613
        %v8615 = vpop.f32.mrb[0].mxu0
        %8616 = vmatprep.mubr.f32.mxu0 %v7850
        %8617 = vmatmul.mubr.f32.gmra.mrb[0].mxu0 %v7849
        %v8618 = vpop.f32.mrb[0].mxu0
        %v8619 = vadd.f32 %v8344, %v8618
        %v8620 = vpop.f32.mrb[0].mxu0
        %8621 = vmatprep.mubr.f32.mxu0 %v7858
        %8622 = vmatmul.mubr.f32.gmra.mrb[0].mxu0 %v7857
        %v8623 = vpop.f32.mrb[0].mxu0
        %v8624 = vadd.f32 %v8349, %v8623
        %v8625 = vpop.f32.mrb[0].mxu0
        %8626 = vmatprep.mubr.f32.mxu0 %v7866
        %8627 = vmatmul.mubr.f32.gmra.mrb[0].mxu0 %v7865
        %v8628 = vpop.f32.mrb[0].mxu0
        %v8629 = vadd.f32 %v8354, %v8628
        %v8630 = vpop.f32.mrb[0].mxu0
        %8631 = vmatprep.mubr.f32.mxu0 %v7874
        %8632 = vmatmul.mubr.f32.gmra.mrb[0].mxu0 %v7873
        %v8633 = vpop.f32.mrb[0].mxu0
        %v8634 = vadd.f32 %v8359, %v8633
        %v8635 = vpop.f32.mrb[0].mxu0
        %8636 = vmatprep.mubr.f32.mxu0 %v7882
        %8637 = vmatmul.mubr.f32.gmra.mrb[0].mxu0 %v7881
        %v8638 = vpop.f32.mrb[0].mxu0
        %v8639 = vadd.f32 %v8364, %v8638
        %v8640 = vpop.f32.mrb[0].mxu0
        %8641 = vmatprep.mubr.f32.mxu0 %v7890
        %8642 = vmatmul.mubr.f32.gmra.mrb[0].mxu0 %v7889
        %v8643 = vpop.f32.mrb[0].mxu0
        %v8644 = vadd.f32 %v8369, %v8643
        %v8645 = vpop.f32.mrb[0].mxu0
        %8646 = vmatprep.mubr.f32.mxu0 %v7898
        %8647 = vmatmul.mubr.f32.gmra.mrb[0].mxu0 %v7897
        %v8648 = vpop.f32.mrb[0].mxu0
        %v8649 = vadd.f32 %v8374, %v8648
        %v8650 = vpop.f32.mrb[0].mxu0
        %8651 = vmatprep.mubr.f32.mxu0 %v7906
        %8652 = vmatmul.mubr.f32.gmra.mrb[0].mxu0 %v7905
        %v8653 = vpop.f32.mrb[0].mxu0
        %v8654 = vadd.f32 %v8379, %v8653
        %v8655 = vpop.f32.mrb[0].mxu0
        %8656 = vmatprep.mubr.f32.mxu0 %v7914
        %8657 = vmatmul.mubr.f32.gmra.mrb[0].mxu0 %v7913
        %v8658 = vpop.f32.mrb[0].mxu0
        %v8659 = vadd.f32 %v8384, %v8658
        %v8660 = vpop.f32.mrb[0].mxu0
        %8661 = vmatprep.mubr.f32.mxu0 %v7922
        %8662 = vmatmul.mubr.f32.gmra.mrb[0].mxu0 %v7921
        %v8663 = vpop.f32.mrb[0].mxu0
        %v8664 = vadd.f32 %v8389, %v8663
        %v8665 = vpop.f32.mrb[0].mxu0
        %8666 = vmatprep.mubr.f32.mxu0 %v7930
        %8667 = vmatmul.mubr.f32.gmra.mrb[0].mxu0 %v7929
        %v8668 = vpop.f32.mrb[0].mxu0
        %v8669 = vadd.f32 %v8394, %v8668
        %v8670 = vpop.f32.mrb[0].mxu0
        %8671 = vmatprep.mubr.f32.mxu0 %v7938
        %8672 = vmatmul.mubr.f32.gmra.mrb[0].mxu0 %v7937
        %v8673 = vpop.f32.mrb[0].mxu0
        %v8674 = vadd.f32 %v8399, %v8673
        %v8675 = vpop.f32.mrb[0].mxu0
        %8676 = vmatprep.mubr.f32.mxu0 %v7946
        %8677 = vmatmul.mubr.f32.gmra.mrb[0].mxu0 %v7945
        %v8678 = vpop.f32.mrb[0].mxu0
        %v8679 = vadd.f32 %v8404, %v8678
        %v8680 = vpop.f32.mrb[0].mxu0
        %8681 = vmatprep.mubr.f32.mxu0 %v7954
        %8682 = vmatmul.mubr.f32.gmra.mrb[0].mxu0 %v7953
        %v8683 = vpop.f32.mrb[0].mxu0
        %v8684 = vadd.f32 %v8409, %v8683
        %v8685 = vpop.f32.mrb[0].mxu0
        %8686 = vmatprep.mubr.f32.mxu0 %v7962
        %8687 = vmatmul.mubr.f32.gmra.mrb[0].mxu0 %v7961
        %v8688 = vpop.f32.mrb[0].mxu0
        %v8689 = vadd.f32 %v8414, %v8688
        %v8690 = vpop.f32.mrb[0].mxu0
        %8691 = vmatprep.mubr.f32.mxu0 %v7970
        %8692 = vmatmul.mubr.f32.gmra.mrb[0].mxu0 %v7969
        %v8693 = vpop.f32.mrb[0].mxu0
        %v8694 = vadd.f32 %v8419, %v8693
        %v8695 = vpop.f32.mrb[0].mxu0
        %8696 = vmatprep.mubr.f32.mxu0 %v7978
        %8697 = vmatmul.mubr.f32.gmra.mrb[0].mxu0 %v7977
        %v8698 = vpop.f32.mrb[0].mxu0
        %v8699 = vadd.f32 %v8424, %v8698
        %v8700 = vpop.f32.mrb[0].mxu0
        %8701 = vmatprep.mubr.f32.mxu0 %v7986
        %8702 = vmatmul.mubr.f32.gmra.mrb[0].mxu0 %v7985
        %v8703 = vpop.f32.mrb[0].mxu0
        %v8704 = vadd.f32 %v8429, %v8703
        %v8705 = vpop.f32.mrb[0].mxu0
        %8706 = vmatprep.mubr.f32.mxu0 %v7994
        %8707 = vmatmul.mubr.f32.gmra.mrb[0].mxu0 %v7993
        %v8708 = vpop.f32.mrb[0].mxu0
        %v8709 = vadd.f32 %v8434, %v8708
        %v8710 = vpop.f32.mrb[0].mxu0
        %8711 = vmatprep.mubr.f32.mxu0 %v8002
        %8712 = vmatmul.mubr.f32.gmra.mrb[0].mxu0 %v8001
        %v8713 = vpop.f32.mrb[0].mxu0
        %v8714 = vadd.f32 %v8439, %v8713
        %v8715 = vpop.f32.mrb[0].mxu0
        %8716 = vmatprep.mubr.f32.mxu0 %v8010
        %8717 = vmatmul.mubr.f32.gmra.mrb[0].mxu0 %v8009
        %v8718 = vpop.f32.mrb[0].mxu0
        %v8719 = vadd.f32 %v8444, %v8718
        %v8720 = vpop.f32.mrb[0].mxu0
        %8721 = vmatprep.mubr.f32.mxu0 %v8018
        %8722 = vmatmul.mubr.f32.gmra.mrb[0].mxu0 %v8017
        %v8723 = vpop.f32.mrb[0].mxu0
        %v8724 = vadd.f32 %v8449, %v8723
        %v8725 = vpop.f32.mrb[0].mxu0
        %8726 = vmatprep.mubr.f32.mxu0 %v8026
        %8727 = vmatmul.mubr.f32.gmra.mrb[0].mxu0 %v8025
        %v8728 = vpop.f32.mrb[0].mxu0
        %v8729 = vadd.f32 %v8454, %v8728
        %v8730 = vpop.f32.mrb[0].mxu0
        %8731 = vmatprep.mubr.f32.mxu0 %v8034
        %8732 = vmatmul.mubr.f32.gmra.mrb[0].mxu0 %v8033
        %v8733 = vpop.f32.mrb[0].mxu0
        %v8734 = vadd.f32 %v8459, %v8733
        %v8735 = vpop.f32.mrb[0].mxu0
        %8736 = vmatprep.mubr.f32.mxu0 %v8042
        %8737 = vmatmul.mubr.f32.gmra.mrb[0].mxu0 %v8041
        %v8738 = vpop.f32.mrb[0].mxu0
        %v8739 = vadd.f32 %v8464, %v8738
        %v8740 = vpop.f32.mrb[0].mxu0
        %8741 = vmatprep.mubr.f32.mxu0 %v8050
        %8742 = vmatmul.mubr.f32.gmra.mrb[0].mxu0 %v8049
        %v8743 = vpop.f32.mrb[0].mxu0
        %v8744 = vadd.f32 %v8469, %v8743
        %v8745 = vpop.f32.mrb[0].mxu0
        %8746 = vmatprep.mubr.f32.mxu0 %v8058
        %8747 = vmatmul.mubr.f32.gmra.mrb[0].mxu0 %v8057
        %v8748 = vpop.f32.mrb[0].mxu0
        %v8749 = vadd.f32 %v8474, %v8748
        %v8750 = vpop.f32.mrb[0].mxu0
        %8751 = vmatprep.mubr.f32.mxu0 %v8066
        %8752 = vmatmul.mubr.f32.gmra.mrb[0].mxu0 %v8065
        %v8753 = vpop.f32.mrb[0].mxu0
        %v8754 = vadd.f32 %v8479, %v8753
        %v8755 = vpop.f32.mrb[0].mxu0
        %8756 = vmatprep.mubr.f32.mxu0 %v8074
        %8757 = vmatmul.mubr.f32.gmra.mrb[0].mxu0 %v8073
        %v8758 = vpop.f32.mrb[0].mxu0
        %v8759 = vadd.f32 %v8484, %v8758
        %v8760 = vpop.f32.mrb[0].mxu0
        %8761 = vmatprep.mubr.f32.mxu0 %v8082
        %8762 = vmatmul.mubr.f32.gmra.mrb[0].mxu0 %v8081
        %v8763 = vpop.f32.mrb[0].mxu0
        %v8764 = vadd.f32 %v8489, %v8763
        %v8765 = vpop.f32.mrb[0].mxu0
        %8766 = vmatprep.mubr.f32.mxu0 %v8090
        %8767 = vmatmul.mubr.f32.gmra.mrb[0].mxu0 %v8089
        %v8768 = vpop.f32.mrb[0].mxu0
        %v8769 = vadd.f32 %v8494, %v8768
        %v8770 = vpop.f32.mrb[0].mxu0
        %8771 = vdwg.mxu0
        %8772 = vmatprep.subr.mxu0 0.0
        %8773 = vmatpush1.msra.mxu0 %v7563
        %8774 = vmatprep.subr.mxu0 0.0
        %8775 = vmatpush1.msra.mxu0 %v7565
        %8776 = vmatprep.subr.mxu0 0.0
        %8777 = vmatpush1.msra.mxu0 %v7567
        %8778 = vmatprep.subr.mxu0 0.0
        %8779 = vmatpush1.msra.mxu0 %v7569
        %8780 = vmatprep.subr.mxu0 0.0
        %8781 = vmatpush1.msra.mxu0 %v7571
        %8782 = vmatprep.subr.mxu0 0.0
        %8783 = vmatpush1.msra.mxu0 %v7573
        %8784 = vmatprep.subr.mxu0 0.0
        %8785 = vmatpush1.msra.mxu0 %v7575
        %8786 = vmatprep.subr.mxu0 0.0
        %8787 = vmatpush1.msra.mxu0 %v7577
        %8788 = vmatprep.subr.mxu0 0.0
        %8789 = vmatpush1.msra.mxu0 %v7579
        %8790 = vmatprep.subr.mxu0 0.0
        %8791 = vmatpush1.msra.mxu0 %v7581
        %8792 = vmatprep.subr.mxu0 0.0
        %8793 = vmatpush1.msra.mxu0 %v7583
        %8794 = vmatprep.subr.mxu0 0.0
        %8795 = vmatpush1.msra.mxu0 %v7610
        %8796 = vmatprep.subr.mxu0 0.0
        %8797 = vmatpush1.msra.mxu0 %v7612
        %8798 = vmatprep.subr.mxu0 0.0
        %8799 = vmatpush1.msra.mxu0 %v7614
        %8800 = vmatprep.subr.mxu0 0.0
        %8801 = vmatpush1.msra.mxu0 %v7616
        %8802 = vmatprep.subr.mxu0 0.0
        %8803 = vmatpush1.msra.mxu0 %v7618
        %8804 = vmatprep.subr.mxu0 0.0
        %8805 = vmatpush1.msra.mxu0 %v7620
        %8806 = vmatprep.subr.mxu0 0.0
        %8807 = vmatpush1.msra.mxu0 %v7622
        %8808 = vmatprep.subr.mxu0 0.0
        %8809 = vmatpush1.msra.mxu0 %v7624
        %8810 = vmatprep.subr.mxu0 0.0
        %8811 = vmatpush1.msra.mxu0 %v7626
        %8812 = vmatprep.subr.mxu0 0.0
        %8813 = vmatpush1.msra.mxu0 %v7628
        %8814 = vmatprep.subr.mxu0 0.0
        %8815 = vmatpush1.msra.mxu0 %v7630
        %8816 = vmatprep.subr.mxu0 0.0
        %8817 = vmatpush1.msra.mxu0 %v7632
        %8818 = vmatprep.subr.mxu0 0.0
        %8819 = vmatpush1.msra.mxu0 %v7634
        %8820 = vmatprep.subr.mxu0 0.0
        %8821 = vmatpush1.msra.mxu0 %v7636
        %8822 = vmatprep.subr.mxu0 0.0
        %8823 = vmatpush1.msra.mxu0 %v7638
        %8824 = vmatprep.subr.mxu0 0.0
        %8825 = vmatpush1.msra.mxu0 %v7640
        %8826 = vmatprep.subr.mxu0 0.0
        %8827 = vmatpush1.msra.mxu0 %v7642
        %8828 = vmatprep.subr.mxu0 0.0
        %8829 = vmatpush1.msra.mxu0 %v7644
        %8830 = vmatprep.subr.mxu0 0.0
        %8831 = vmatpush1.msra.mxu0 %v7646
        %8832 = vmatprep.subr.mxu0 0.0
        %8833 = vmatpush1.msra.mxu0 %v7648
        %8834 = vmatprep.subr.mxu0 0.0
        %8835 = vmatpush1.msra.mxu0 %v7650
        %8836 = vmatprep.mubr.f32.mxu0 %v7764
        %8837 = vmatmul.mubr.f32.gmra.mrb[0].mxu0 %v7763
        %v8838 = vpop.f32.mrb[0].mxu0
        %v8839 = vadd.f32 %v8564, %v8838
        %v8840 = vpop.f32.mrb[0].mxu0
        %8841 = vmatprep.mubr.f32.mxu0 %v7772
        %8842 = vmatmul.mubr.f32.gmra.mrb[0].mxu0 %v7771
        %v8843 = vpop.f32.mrb[0].mxu0
        %v8844 = vadd.f32 %v8569, %v8843
        %v8845 = vpop.f32.mrb[0].mxu0
        %8846 = vmatprep.mubr.f32.mxu0 %v7780
        %8847 = vmatmul.mubr.f32.gmra.mrb[0].mxu0 %v7779
        %v8848 = vpop.f32.mrb[0].mxu0
        %v8849 = vadd.f32 %v8574, %v8848
        %v8850 = vpop.f32.mrb[0].mxu0
        %8851 = vmatprep.mubr.f32.mxu0 %v7788
        %8852 = vmatmul.mubr.f32.gmra.mrb[0].mxu0 %v7787
        %v8853 = vpop.f32.mrb[0].mxu0
        %v8854 = vadd.f32 %v8579, %v8853
        %v8855 = vpop.f32.mrb[0].mxu0
        %8856 = vmatprep.mubr.f32.mxu0 %v7796
        %8857 = vmatmul.mubr.f32.gmra.mrb[0].mxu0 %v7795
        %v8858 = vpop.f32.mrb[0].mxu0
        %v8859 = vadd.f32 %v8584, %v8858
        %v8860 = vpop.f32.mrb[0].mxu0
        %8861 = vmatprep.mubr.f32.mxu0 %v7804
        %8862 = vmatmul.mubr.f32.gmra.mrb[0].mxu0 %v7803
        %v8863 = vpop.f32.mrb[0].mxu0
        %v8864 = vadd.f32 %v8589, %v8863
        %v8865 = vpop.f32.mrb[0].mxu0
        %8866 = vmatprep.mubr.f32.mxu0 %v7812
        %8867 = vmatmul.mubr.f32.gmra.mrb[0].mxu0 %v7811
        %v8868 = vpop.f32.mrb[0].mxu0
        %v8869 = vadd.f32 %v8594, %v8868
        %v8870 = vpop.f32.mrb[0].mxu0
        %8871 = vmatprep.mubr.f32.mxu0 %v7820
        %8872 = vmatmul.mubr.f32.gmra.mrb[0].mxu0 %v7819
        %v8873 = vpop.f32.mrb[0].mxu0
        %v8874 = vadd.f32 %v8599, %v8873
        %v8875 = vpop.f32.mrb[0].mxu0
        %8876 = vmatprep.mubr.f32.mxu0 %v7828
        %8877 = vmatmul.mubr.f32.gmra.mrb[0].mxu0 %v7827
        %v8878 = vpop.f32.mrb[0].mxu0
        %v8879 = vadd.f32 %v8604, %v8878
        %v8880 = vpop.f32.mrb[0].mxu0
        %8881 = vmatprep.mubr.f32.mxu0 %v7836
        %8882 = vmatmul.mubr.f32.gmra.mrb[0].mxu0 %v7835
        %v8883 = vpop.f32.mrb[0].mxu0
        %v8884 = vadd.f32 %v8609, %v8883
        %v8885 = vpop.f32.mrb[0].mxu0
        %8886 = vmatprep.mubr.f32.mxu0 %v7844
        %8887 = vmatmul.mubr.f32.gmra.mrb[0].mxu0 %v7843
        %v8888 = vpop.f32.mrb[0].mxu0
        %v8889 = vadd.f32 %v8614, %v8888
        %v8890 = vpop.f32.mrb[0].mxu0
        %8891 = vmatprep.mubr.f32.mxu0 %v7852
        %8892 = vmatmul.mubr.f32.gmra.mrb[0].mxu0 %v7851
        %v8893 = vpop.f32.mrb[0].mxu0
        %v8894 = vadd.f32 %v8619, %v8893
        %v8895 = vpop.f32.mrb[0].mxu0
        %8896 = vmatprep.mubr.f32.mxu0 %v7860
        %8897 = vmatmul.mubr.f32.gmra.mrb[0].mxu0 %v7859
        %v8898 = vpop.f32.mrb[0].mxu0
        %v8899 = vadd.f32 %v8624, %v8898
        %v8900 = vpop.f32.mrb[0].mxu0
        %8901 = vmatprep.mubr.f32.mxu0 %v7868
        %8902 = vmatmul.mubr.f32.gmra.mrb[0].mxu0 %v7867
        %v8903 = vpop.f32.mrb[0].mxu0
        %v8904 = vadd.f32 %v8629, %v8903
        %v8905 = vpop.f32.mrb[0].mxu0
        %8906 = vmatprep.mubr.f32.mxu0 %v7876
        %8907 = vmatmul.mubr.f32.gmra.mrb[0].mxu0 %v7875
        %v8908 = vpop.f32.mrb[0].mxu0
        %v8909 = vadd.f32 %v8634, %v8908
        %v8910 = vpop.f32.mrb[0].mxu0
        %8911 = vmatprep.mubr.f32.mxu0 %v7884
        %8912 = vmatmul.mubr.f32.gmra.mrb[0].mxu0 %v7883
        %v8913 = vpop.f32.mrb[0].mxu0
        %v8914 = vadd.f32 %v8639, %v8913
        %v8915 = vpop.f32.mrb[0].mxu0
        %8916 = vmatprep.mubr.f32.mxu0 %v7892
        %8917 = vmatmul.mubr.f32.gmra.mrb[0].mxu0 %v7891
        %v8918 = vpop.f32.mrb[0].mxu0
        %v8919 = vadd.f32 %v8644, %v8918
        %v8920 = vpop.f32.mrb[0].mxu0
        %8921 = vmatprep.mubr.f32.mxu0 %v7900
        %8922 = vmatmul.mubr.f32.gmra.mrb[0].mxu0 %v7899
        %v8923 = vpop.f32.mrb[0].mxu0
        %v8924 = vadd.f32 %v8649, %v8923
        %v8925 = vpop.f32.mrb[0].mxu0
        %8926 = vmatprep.mubr.f32.mxu0 %v7908
        %8927 = vmatmul.mubr.f32.gmra.mrb[0].mxu0 %v7907
        %v8928 = vpop.f32.mrb[0].mxu0
        %v8929 = vadd.f32 %v8654, %v8928
        %v8930 = vpop.f32.mrb[0].mxu0
        %8931 = vmatprep.mubr.f32.mxu0 %v7916
        %8932 = vmatmul.mubr.f32.gmra.mrb[0].mxu0 %v7915
        %v8933 = vpop.f32.mrb[0].mxu0
        %v8934 = vadd.f32 %v8659, %v8933
        %v8935 = vpop.f32.mrb[0].mxu0
        %8936 = vmatprep.mubr.f32.mxu0 %v7924
        %8937 = vmatmul.mubr.f32.gmra.mrb[0].mxu0 %v7923
        %v8938 = vpop.f32.mrb[0].mxu0
        %v8939 = vadd.f32 %v8664, %v8938
        %v8940 = vpop.f32.mrb[0].mxu0
        %8941 = vmatprep.mubr.f32.mxu0 %v7932
        %8942 = vmatmul.mubr.f32.gmra.mrb[0].mxu0 %v7931
        %v8943 = vpop.f32.mrb[0].mxu0
        %v8944 = vadd.f32 %v8669, %v8943
        %v8945 = vpop.f32.mrb[0].mxu0
        %8946 = vmatprep.mubr.f32.mxu0 %v7940
        %8947 = vmatmul.mubr.f32.gmra.mrb[0].mxu0 %v7939
        %v8948 = vpop.f32.mrb[0].mxu0
        %v8949 = vadd.f32 %v8674, %v8948
        %v8950 = vpop.f32.mrb[0].mxu0
        %8951 = vmatprep.mubr.f32.mxu0 %v7948
        %8952 = vmatmul.mubr.f32.gmra.mrb[0].mxu0 %v7947
        %v8953 = vpop.f32.mrb[0].mxu0
        %v8954 = vadd.f32 %v8679, %v8953
        %v8955 = vpop.f32.mrb[0].mxu0
        %8956 = vmatprep.mubr.f32.mxu0 %v7956
        %8957 = vmatmul.mubr.f32.gmra.mrb[0].mxu0 %v7955
        %v8958 = vpop.f32.mrb[0].mxu0
        %v8959 = vadd.f32 %v8684, %v8958
        %v8960 = vpop.f32.mrb[0].mxu0
        %8961 = vmatprep.mubr.f32.mxu0 %v7964
        %8962 = vmatmul.mubr.f32.gmra.mrb[0].mxu0 %v7963
        %v8963 = vpop.f32.mrb[0].mxu0
        %v8964 = vadd.f32 %v8689, %v8963
        %v8965 = vpop.f32.mrb[0].mxu0
        %8966 = vmatprep.mubr.f32.mxu0 %v7972
        %8967 = vmatmul.mubr.f32.gmra.mrb[0].mxu0 %v7971
        %v8968 = vpop.f32.mrb[0].mxu0
        %v8969 = vadd.f32 %v8694, %v8968
        %v8970 = vpop.f32.mrb[0].mxu0
        %8971 = vmatprep.mubr.f32.mxu0 %v7980
        %8972 = vmatmul.mubr.f32.gmra.mrb[0].mxu0 %v7979
        %v8973 = vpop.f32.mrb[0].mxu0
        %v8974 = vadd.f32 %v8699, %v8973
        %v8975 = vpop.f32.mrb[0].mxu0
        %8976 = vmatprep.mubr.f32.mxu0 %v7988
        %8977 = vmatmul.mubr.f32.gmra.mrb[0].mxu0 %v7987
        %v8978 = vpop.f32.mrb[0].mxu0
        %v8979 = vadd.f32 %v8704, %v8978
        %v8980 = vpop.f32.mrb[0].mxu0
        %8981 = vmatprep.mubr.f32.mxu0 %v7996
        %8982 = vmatmul.mubr.f32.gmra.mrb[0].mxu0 %v7995
        %v8983 = vpop.f32.mrb[0].mxu0
        %v8984 = vadd.f32 %v8709, %v8983
        %v8985 = vpop.f32.mrb[0].mxu0
        %8986 = vmatprep.mubr.f32.mxu0 %v8004
        %8987 = vmatmul.mubr.f32.gmra.mrb[0].mxu0 %v8003
        %v8988 = vpop.f32.mrb[0].mxu0
        %v8989 = vadd.f32 %v8714, %v8988
        %v8990 = vpop.f32.mrb[0].mxu0
        %8991 = vmatprep.mubr.f32.mxu0 %v8012
        %8992 = vmatmul.mubr.f32.gmra.mrb[0].mxu0 %v8011
        %v8993 = vpop.f32.mrb[0].mxu0
        %v8994 = vadd.f32 %v8719, %v8993
        %v8995 = vpop.f32.mrb[0].mxu0
        %8996 = vmatprep.mubr.f32.mxu0 %v8020
        %8997 = vmatmul.mubr.f32.gmra.mrb[0].mxu0 %v8019
        %v8998 = vpop.f32.mrb[0].mxu0
        %v8999 = vadd.f32 %v8724, %v8998
        %v9000 = vpop.f32.mrb[0].mxu0
        %9001 = vmatprep.mubr.f32.mxu0 %v8028
        %9002 = vmatmul.mubr.f32.gmra.mrb[0].mxu0 %v8027
        %v9003 = vpop.f32.mrb[0].mxu0
        %v9004 = vadd.f32 %v8729, %v9003
        %v9005 = vpop.f32.mrb[0].mxu0
        %9006 = vmatprep.mubr.f32.mxu0 %v8036
        %9007 = vmatmul.mubr.f32.gmra.mrb[0].mxu0 %v8035
        %v9008 = vpop.f32.mrb[0].mxu0
        %v9009 = vadd.f32 %v8734, %v9008
        %v9010 = vpop.f32.mrb[0].mxu0
        %9011 = vmatprep.mubr.f32.mxu0 %v8044
        %9012 = vmatmul.mubr.f32.gmra.mrb[0].mxu0 %v8043
        %v9013 = vpop.f32.mrb[0].mxu0
        %v9014 = vadd.f32 %v8739, %v9013
        %v9015 = vpop.f32.mrb[0].mxu0
        %9016 = vmatprep.mubr.f32.mxu0 %v8052
        %9017 = vmatmul.mubr.f32.gmra.mrb[0].mxu0 %v8051
        %v9018 = vpop.f32.mrb[0].mxu0
        %v9019 = vadd.f32 %v8744, %v9018
        %v9020 = vpop.f32.mrb[0].mxu0
        %9021 = vmatprep.mubr.f32.mxu0 %v8060
        %9022 = vmatmul.mubr.f32.gmra.mrb[0].mxu0 %v8059
        %v9023 = vpop.f32.mrb[0].mxu0
        %v9024 = vadd.f32 %v8749, %v9023
        %v9025 = vpop.f32.mrb[0].mxu0
        %9026 = vmatprep.mubr.f32.mxu0 %v8068
        %9027 = vmatmul.mubr.f32.gmra.mrb[0].mxu0 %v8067
        %v9028 = vpop.f32.mrb[0].mxu0
        %v9029 = vadd.f32 %v8754, %v9028
        %v9030 = vpop.f32.mrb[0].mxu0
        %9031 = vmatprep.mubr.f32.mxu0 %v8076
        %9032 = vmatmul.mubr.f32.gmra.mrb[0].mxu0 %v8075
        %v9033 = vpop.f32.mrb[0].mxu0
        %v9034 = vadd.f32 %v8759, %v9033
        %v9035 = vpop.f32.mrb[0].mxu0
        %9036 = vmatprep.mubr.f32.mxu0 %v8084
        %9037 = vmatmul.mubr.f32.gmra.mrb[0].mxu0 %v8083
        %v9038 = vpop.f32.mrb[0].mxu0
        %v9039 = vadd.f32 %v8764, %v9038
        %v9040 = vpop.f32.mrb[0].mxu0
        %9041 = vmatprep.mubr.f32.mxu0 %v8092
        %9042 = vmatmul.mubr.f32.gmra.mrb[0].mxu0 %v8091
        %v9043 = vpop.f32.mrb[0].mxu0
        %v9044 = vadd.f32 %v8769, %v9043
        %v9045 = vpop.f32.mrb[0].mxu0
        %9046 = vdwg.mxu0
        %9047 = vmatprep.subr.mxu0 0.0
        %9048 = vmatpush1.msra.mxu0 %v7652
        %9049 = vmatprep.subr.mxu0 0.0
        %9050 = vmatpush1.msra.mxu0 %v7654
        %9051 = vmatprep.subr.mxu0 0.0
        %9052 = vmatpush1.msra.mxu0 %v7656
        %9053 = vmatprep.subr.mxu0 0.0
        %9054 = vmatpush1.msra.mxu0 %v7658
        %9055 = vmatprep.subr.mxu0 0.0
        %9056 = vmatpush1.msra.mxu0 %v7685
        %9057 = vmatprep.subr.mxu0 0.0
        %9058 = vmatpush1.msra.mxu0 %v7687
        %9059 = vmatprep.subr.mxu0 0.0
        %9060 = vmatpush1.msra.mxu0 %v7689
        %9061 = vmatprep.subr.mxu0 0.0
        %9062 = vmatpush1.msra.mxu0 %v7691
        %9063 = vmatprep.subr.mxu0 0.0
        %9064 = vmatpush1.msra.mxu0 %v7693
        %9065 = vmatprep.subr.mxu0 0.0
        %9066 = vmatpush1.msra.mxu0 %v7695
        %9067 = vmatprep.subr.mxu0 0.0
        %9068 = vmatpush1.msra.mxu0 %v7697
        %9069 = vmatprep.subr.mxu0 0.0
        %9070 = vmatpush1.msra.mxu0 %v7699
        %9071 = vmatprep.subr.mxu0 0.0
        %9072 = vmatpush1.msra.mxu0 %v7701
        %9073 = vmatprep.subr.mxu0 0.0
        %9074 = vmatpush1.msra.mxu0 %v7703
        %9075 = vmatprep.subr.mxu0 0.0
        %9076 = vmatpush1.msra.mxu0 %v7705
        %9077 = vmatprep.subr.mxu0 0.0
        %9078 = vmatpush1.msra.mxu0 %v7707
        %9079 = vmatprep.subr.mxu0 0.0
        %9080 = vmatpush1.msra.mxu0 %v7709
        %9081 = vmatprep.subr.mxu0 0.0
        %9082 = vmatpush1.msra.mxu0 %v7711
        %9083 = vmatprep.subr.mxu0 0.0
        %9084 = vmatpush1.msra.mxu0 %v7713
        %9085 = vmatprep.subr.mxu0 0.0
        %9086 = vmatpush1.msra.mxu0 %v7715
        %9087 = vmatprep.subr.mxu0 0.0
        %9088 = vmatpush1.msra.mxu0 %v7717
        %9089 = vmatprep.subr.mxu0 0.0
        %9090 = vmatpush1.msra.mxu0 %v7719
        %9091 = vmatprep.subr.mxu0 0.0
        %9092 = vmatpush1.msra.mxu0 %v7721
        %9093 = vmatprep.subr.mxu0 0.0
        %9094 = vmatpush1.msra.mxu0 %v7723
        %9095 = vmatprep.subr.mxu0 0.0
        %9096 = vmatpush1.msra.mxu0 %v7725
        %9097 = vmatprep.subr.mxu0 0.0
        %9098 = vmatpush1.msra.mxu0 %v7727
        %9099 = vmatprep.subr.mxu0 0.0
        %9100 = vmatpush1.msra.mxu0 %v7729
        %9101 = vmatprep.subr.mxu0 0.0
        %9102 = vmatpush1.msra.mxu0 %v7731
        %9103 = vmatprep.subr.mxu0 0.0
        %9104 = vmatpush1.msra.mxu0 %v7733
        %9105 = vmatprep.subr.mxu0 0.0
        %9106 = vmatpush1.msra.mxu0 0.0
        %9107 = vmatprep.subr.mxu0 0.0
        %9108 = vmatpush1.msra.mxu0 0.0
        %9109 = vmatprep.subr.mxu0 0.0
        %9110 = vmatpush1.msra.mxu0 0.0
        %9111 = vmatprep.mubr.f32.mxu0 %v8097
        %9112 = vmatmul.mubr.f32.gmra.mrb[0].mxu0 %v7765
        %v9113 = vpop.f32.mrb[0].mxu0
        %v9114 = vadd.f32 %v8839, %v9113
        %v9115 = vpop.f32.mrb[0].mxu0
        %9116 = vmatprep.mubr.f32.mxu0 %v8100
        %9117 = vmatmul.mubr.f32.gmra.mrb[0].mxu0 %v7773
        %v9118 = vpop.f32.mrb[0].mxu0
        %v9119 = vadd.f32 %v8844, %v9118
        %v9120 = vpop.f32.mrb[0].mxu0
        %9121 = vmatprep.mubr.f32.mxu0 %v8103
        %9122 = vmatmul.mubr.f32.gmra.mrb[0].mxu0 %v7781
        %v9123 = vpop.f32.mrb[0].mxu0
        %v9124 = vadd.f32 %v8849, %v9123
        %v9125 = vpop.f32.mrb[0].mxu0
        %9126 = vmatprep.mubr.f32.mxu0 %v8106
        %9127 = vmatmul.mubr.f32.gmra.mrb[0].mxu0 %v7789
        %v9128 = vpop.f32.mrb[0].mxu0
        %v9129 = vadd.f32 %v8854, %v9128
        %v9130 = vpop.f32.mrb[0].mxu0
        %9131 = vmatprep.mubr.f32.mxu0 %v8109
        %9132 = vmatmul.mubr.f32.gmra.mrb[0].mxu0 %v7797
        %v9133 = vpop.f32.mrb[0].mxu0
        %v9134 = vadd.f32 %v8859, %v9133
        %v9135 = vpop.f32.mrb[0].mxu0
        %9136 = vmatprep.mubr.f32.mxu0 %v8112
        %9137 = vmatmul.mubr.f32.gmra.mrb[0].mxu0 %v7805
        %v9138 = vpop.f32.mrb[0].mxu0
        %v9139 = vadd.f32 %v8864, %v9138
        %v9140 = vpop.f32.mrb[0].mxu0
        %9141 = vmatprep.mubr.f32.mxu0 %v8115
        %9142 = vmatmul.mubr.f32.gmra.mrb[0].mxu0 %v7813
        %v9143 = vpop.f32.mrb[0].mxu0
        %v9144 = vadd.f32 %v8869, %v9143
        %v9145 = vpop.f32.mrb[0].mxu0
        %9146 = vmatprep.mubr.f32.mxu0 %v8118
        %9147 = vmatmul.mubr.f32.gmra.mrb[0].mxu0 %v7821
        %v9148 = vpop.f32.mrb[0].mxu0
        %v9149 = vadd.f32 %v8874, %v9148
        %v9150 = vpop.f32.mrb[0].mxu0
        %9151 = vmatprep.mubr.f32.mxu0 %v8121
        %9152 = vmatmul.mubr.f32.gmra.mrb[0].mxu0 %v7829
        %v9153 = vpop.f32.mrb[0].mxu0
        %v9154 = vadd.f32 %v8879, %v9153
        %v9155 = vpop.f32.mrb[0].mxu0
        %9156 = vmatprep.mubr.f32.mxu0 %v8124
        %9157 = vmatmul.mubr.f32.gmra.mrb[0].mxu0 %v7837
        %v9158 = vpop.f32.mrb[0].mxu0
        %v9159 = vadd.f32 %v8884, %v9158
        %v9160 = vpop.f32.mrb[0].mxu0
        %9161 = vmatprep.mubr.f32.mxu0 %v8127
        %9162 = vmatmul.mubr.f32.gmra.mrb[0].mxu0 %v7845
        %v9163 = vpop.f32.mrb[0].mxu0
        %v9164 = vadd.f32 %v8889, %v9163
        %v9165 = vpop.f32.mrb[0].mxu0
        %9166 = vmatprep.mubr.f32.mxu0 %v8130
        %9167 = vmatmul.mubr.f32.gmra.mrb[0].mxu0 %v7853
        %v9168 = vpop.f32.mrb[0].mxu0
        %v9169 = vadd.f32 %v8894, %v9168
        %v9170 = vpop.f32.mrb[0].mxu0
        %9171 = vmatprep.mubr.f32.mxu0 %v8133
        %9172 = vmatmul.mubr.f32.gmra.mrb[0].mxu0 %v7861
        %v9173 = vpop.f32.mrb[0].mxu0
        %v9174 = vadd.f32 %v8899, %v9173
        %v9175 = vpop.f32.mrb[0].mxu0
        %9176 = vmatprep.mubr.f32.mxu0 %v8136
        %9177 = vmatmul.mubr.f32.gmra.mrb[0].mxu0 %v7869
        %v9178 = vpop.f32.mrb[0].mxu0
        %v9179 = vadd.f32 %v8904, %v9178
        %v9180 = vpop.f32.mrb[0].mxu0
        %9181 = vmatprep.mubr.f32.mxu0 %v8139
        %9182 = vmatmul.mubr.f32.gmra.mrb[0].mxu0 %v7877
        %v9183 = vpop.f32.mrb[0].mxu0
        %v9184 = vadd.f32 %v8909, %v9183
        %v9185 = vpop.f32.mrb[0].mxu0
        %9186 = vmatprep.mubr.f32.mxu0 %v8142
        %9187 = vmatmul.mubr.f32.gmra.mrb[0].mxu0 %v7885
        %v9188 = vpop.f32.mrb[0].mxu0
        %v9189 = vadd.f32 %v8914, %v9188
        %v9190 = vpop.f32.mrb[0].mxu0
        %9191 = vmatprep.mubr.f32.mxu0 %v8145
        %9192 = vmatmul.mubr.f32.gmra.mrb[0].mxu0 %v7893
        %v9193 = vpop.f32.mrb[0].mxu0
        %v9194 = vadd.f32 %v8919, %v9193
        %v9195 = vpop.f32.mrb[0].mxu0
        %9196 = vmatprep.mubr.f32.mxu0 %v8148
        %9197 = vmatmul.mubr.f32.gmra.mrb[0].mxu0 %v7901
        %v9198 = vpop.f32.mrb[0].mxu0
        %v9199 = vadd.f32 %v8924, %v9198
        %v9200 = vpop.f32.mrb[0].mxu0
        %9201 = vmatprep.mubr.f32.mxu0 %v8151
        %9202 = vmatmul.mubr.f32.gmra.mrb[0].mxu0 %v7909
        %v9203 = vpop.f32.mrb[0].mxu0
        %v9204 = vadd.f32 %v8929, %v9203
        %v9205 = vpop.f32.mrb[0].mxu0
        %9206 = vmatprep.mubr.f32.mxu0 %v8154
        %9207 = vmatmul.mubr.f32.gmra.mrb[0].mxu0 %v7917
        %v9208 = vpop.f32.mrb[0].mxu0
        %v9209 = vadd.f32 %v8934, %v9208
        %v9210 = vpop.f32.mrb[0].mxu0
        %9211 = vmatprep.mubr.f32.mxu0 %v8157
        %9212 = vmatmul.mubr.f32.gmra.mrb[0].mxu0 %v7925
        %v9213 = vpop.f32.mrb[0].mxu0
        %v9214 = vadd.f32 %v8939, %v9213
        %v9215 = vpop.f32.mrb[0].mxu0
        %9216 = vmatprep.mubr.f32.mxu0 %v8160
        %9217 = vmatmul.mubr.f32.gmra.mrb[0].mxu0 %v7933
        %v9218 = vpop.f32.mrb[0].mxu0
        %v9219 = vadd.f32 %v8944, %v9218
        %v9220 = vpop.f32.mrb[0].mxu0
        %9221 = vmatprep.mubr.f32.mxu0 %v8163
        %9222 = vmatmul.mubr.f32.gmra.mrb[0].mxu0 %v7941
        %v9223 = vpop.f32.mrb[0].mxu0
        %v9224 = vadd.f32 %v8949, %v9223
        %v9225 = vpop.f32.mrb[0].mxu0
        %9226 = vmatprep.mubr.f32.mxu0 %v8166
        %9227 = vmatmul.mubr.f32.gmra.mrb[0].mxu0 %v7949
        %v9228 = vpop.f32.mrb[0].mxu0
        %v9229 = vadd.f32 %v8954, %v9228
        %v9230 = vpop.f32.mrb[0].mxu0
        %9231 = vmatprep.mubr.f32.mxu0 %v8169
        %9232 = vmatmul.mubr.f32.gmra.mrb[0].mxu0 %v7957
        %v9233 = vpop.f32.mrb[0].mxu0
        %v9234 = vadd.f32 %v8959, %v9233
        %v9235 = vpop.f32.mrb[0].mxu0
        %9236 = vmatprep.mubr.f32.mxu0 %v8172
        %9237 = vmatmul.mubr.f32.gmra.mrb[0].mxu0 %v7965
        %v9238 = vpop.f32.mrb[0].mxu0
        %v9239 = vadd.f32 %v8964, %v9238
        %v9240 = vpop.f32.mrb[0].mxu0
        %9241 = vmatprep.mubr.f32.mxu0 %v8175
        %9242 = vmatmul.mubr.f32.gmra.mrb[0].mxu0 %v7973
        %v9243 = vpop.f32.mrb[0].mxu0
        %v9244 = vadd.f32 %v8969, %v9243
        %v9245 = vpop.f32.mrb[0].mxu0
        %9246 = vmatprep.mubr.f32.mxu0 %v8178
        %9247 = vmatmul.mubr.f32.gmra.mrb[0].mxu0 %v7981
        %v9248 = vpop.f32.mrb[0].mxu0
        %v9249 = vadd.f32 %v8974, %v9248
        %v9250 = vpop.f32.mrb[0].mxu0
        %9251 = vmatprep.mubr.f32.mxu0 %v8181
        %9252 = vmatmul.mubr.f32.gmra.mrb[0].mxu0 %v7989
        %v9253 = vpop.f32.mrb[0].mxu0
        %v9254 = vadd.f32 %v8979, %v9253
        %v9255 = vpop.f32.mrb[0].mxu0
        %9256 = vmatprep.mubr.f32.mxu0 %v8184
        %9257 = vmatmul.mubr.f32.gmra.mrb[0].mxu0 %v7997
        %v9258 = vpop.f32.mrb[0].mxu0
        %v9259 = vadd.f32 %v8984, %v9258
        %v9260 = vpop.f32.mrb[0].mxu0
        %9261 = vmatprep.mubr.f32.mxu0 %v8187
        %9262 = vmatmul.mubr.f32.gmra.mrb[0].mxu0 %v8005
        %v9263 = vpop.f32.mrb[0].mxu0
        %v9264 = vadd.f32 %v8989, %v9263
        %v9265 = vpop.f32.mrb[0].mxu0
        %9266 = vmatprep.mubr.f32.mxu0 %v8190
        %9267 = vmatmul.mubr.f32.gmra.mrb[0].mxu0 %v8013
        %v9268 = vpop.f32.mrb[0].mxu0
        %v9269 = vadd.f32 %v8994, %v9268
        %v9270 = vpop.f32.mrb[0].mxu0
        %9271 = vmatprep.mubr.f32.mxu0 %v8193
        %9272 = vmatmul.mubr.f32.gmra.mrb[0].mxu0 %v8021
        %v9273 = vpop.f32.mrb[0].mxu0
        %v9274 = vadd.f32 %v8999, %v9273
        %v9275 = vpop.f32.mrb[0].mxu0
        %9276 = vmatprep.mubr.f32.mxu0 %v8196
        %9277 = vmatmul.mubr.f32.gmra.mrb[0].mxu0 %v8029
        %v9278 = vpop.f32.mrb[0].mxu0
        %v9279 = vadd.f32 %v9004, %v9278
        %v9280 = vpop.f32.mrb[0].mxu0
        %9281 = vmatprep.mubr.f32.mxu0 %v8199
        %9282 = vmatmul.mubr.f32.gmra.mrb[0].mxu0 %v8037
        %v9283 = vpop.f32.mrb[0].mxu0
        %v9284 = vadd.f32 %v9009, %v9283
        %v9285 = vpop.f32.mrb[0].mxu0
        %9286 = vmatprep.mubr.f32.mxu0 %v8202
        %9287 = vmatmul.mubr.f32.gmra.mrb[0].mxu0 %v8045
        %v9288 = vpop.f32.mrb[0].mxu0
        %v9289 = vadd.f32 %v9014, %v9288
        %v9290 = vpop.f32.mrb[0].mxu0
        %9291 = vmatprep.mubr.f32.mxu0 %v8205
        %9292 = vmatmul.mubr.f32.gmra.mrb[0].mxu0 %v8053
        %v9293 = vpop.f32.mrb[0].mxu0
        %v9294 = vadd.f32 %v9019, %v9293
        %v9295 = vpop.f32.mrb[0].mxu0
        %9296 = vmatprep.mubr.f32.mxu0 %v8208
        %9297 = vmatmul.mubr.f32.gmra.mrb[0].mxu0 %v8061
        %v9298 = vpop.f32.mrb[0].mxu0
        %v9299 = vadd.f32 %v9024, %v9298
        %v9300 = vpop.f32.mrb[0].mxu0
        %9301 = vmatprep.mubr.f32.mxu0 %v8211
        %9302 = vmatmul.mubr.f32.gmra.mrb[0].mxu0 %v8069
        %v9303 = vpop.f32.mrb[0].mxu0
        %v9304 = vadd.f32 %v9029, %v9303
        %v9305 = vpop.f32.mrb[0].mxu0
        %9306 = vmatprep.mubr.f32.mxu0 %v8214
        %9307 = vmatmul.mubr.f32.gmra.mrb[0].mxu0 %v8077
        %v9308 = vpop.f32.mrb[0].mxu0
        %v9309 = vadd.f32 %v9034, %v9308
        %v9310 = vpop.f32.mrb[0].mxu0
        %9311 = vmatprep.mubr.f32.mxu0 %v8217
        %9312 = vmatmul.mubr.f32.gmra.mrb[0].mxu0 %v8085
        %v9313 = vpop.f32.mrb[0].mxu0
        %v9314 = vadd.f32 %v9039, %v9313
        %v9315 = vpop.f32.mrb[0].mxu0
        %9316 = vmatprep.mubr.f32.mxu0 %v8220
        %9317 = vmatmul.mubr.f32.gmra.mrb[0].mxu0 %v8093
        %v9318 = vpop.f32.mrb[0].mxu0
        %v9319 = vadd.f32 %v9044, %v9318
        %v9320 = vpop.f32.mrb[0].mxu0
        %9321 = vdwg.mxu0
        %v9322 = vld [vmem:[%s18] sm:$0xff]
        %v9323 = vld [vmem:[%s18 + $0x8] sm:$0xff]
        %v9324 = vld [vmem:[%s18 + $0x10] sm:$0xff]
        %v9325 = vld [vmem:[%s18 + $0x18] sm:$0xff]
        %v9326 = vld [vmem:[%s18 + $0x20] sm:$0xff]
        %v9327 = vld [vmem:[%s18 + $0x28] sm:$0xff]
        %v9328 = vld [vmem:[%s18 + $0x30] sm:$0xff]
        %v9329 = vld [vmem:[%s18 + $0x38] sm:$0xff]
        %v9330 = vld [vmem:[%s18 + $0x40] sm:$0xff]
        %v9331 = vld [vmem:[%s18 + $0x48] sm:$0xff]
        %v9332 = vld [vmem:[%s18 + $0x50] sm:$0xff]
        %v9333 = vld [vmem:[%s18 + $0x58] sm:$0xff]
        %v9334 = vld [vmem:[%s18 + $0x60] sm:$0xff]
        %v9335 = vld [vmem:[%s18 + $0x68] sm:$0xff]
        %v9336 = vld [vmem:[%s18 + $0x70] sm:$0xff]
        %v9337 = vld [vmem:[%s18 + $0x78] sm:$0xff]
        %v9338 = vld [vmem:[%s18 + $0x80] sm:$0xff]
        %v9339 = vld [vmem:[%s18 + $0x88] sm:$0xff]
        %v9340 = vld [vmem:[%s18 + $0x90] sm:$0xff]
        %v9341 = vld [vmem:[%s18 + $0x98] sm:$0xff]
        %v9342 = vld [vmem:[%s18 + $0xa0] sm:$0xff]
        %v9343 = vld [vmem:[%s18 + $0xa8] sm:$0xff]
        %v9344 = vld [vmem:[%s18 + $0xb0] sm:$0xff]
        %v9345 = vld [vmem:[%s18 + $0xb8] sm:$0xff]
        %v9346 = vld [vmem:[%s18 + $0xc0] sm:$0xff]
        %v9347 = vld [vmem:[%s18 + $0xc8] sm:$0xff]
        %v9348 = vld [vmem:[%s18 + $0xd0] sm:$0xff]
        %v9349 = vld [vmem:[%s18 + $0xd8] sm:$0xff]
        %v9350 = vld [vmem:[%s18 + $0xe0] sm:$0xff]
        %v9351 = vld [vmem:[%s18 + $0xe8] sm:$0xff]
        %v9352 = vld [vmem:[%s18 + $0xf0] sm:$0xff]
        %v9353 = vld [vmem:[%s18 + $0xf8] sm:$0xff]
        %v9354 = vld [vmem:[%s18 + $0x100] sm:$0xff]
        %v9355 = vld [vmem:[%s18 + $0x108] sm:$0xff]
        %v9356 = vld [vmem:[%s18 + $0x110] sm:$0xff]
        %v9357 = vld [vmem:[%s18 + $0x118] sm:$0xff]
        %v9358 = vld [vmem:[%s18 + $0x120] sm:$0xff]
        %v9359 = vld [vmem:[%s18 + $0x128] sm:$0xff]
        %v9360 = vld [vmem:[%s18 + $0x130] sm:$0xff]
        %v9361 = vld [vmem:[%s18 + $0x138] sm:$0xff]
        %v9362 = vld [vmem:[%s18 + $0x140] sm:$0xff]
        %v9363 = vld [vmem:[%s18 + $0x148] sm:$0x3]
        %9365 = vset.pattern.permute.xlu0 0
        %9366 = vperm.xlu0 %9365, %v9322
        %v9367 = vpop.permute.xlu0 %9366
        %9370 = vset.pattern.permute.xlu0 0
        %9371 = vperm.xlu0 %9370, %v9323
        %v9372 = vpop.permute.xlu0 %9371
        %9375 = vset.pattern.permute.xlu0 0
        %9376 = vperm.xlu0 %9375, %v9324
        %v9377 = vpop.permute.xlu0 %9376
        %9380 = vset.pattern.permute.xlu0 0
        %9381 = vperm.xlu0 %9380, %v9325
        %v9382 = vpop.permute.xlu0 %9381
        %9385 = vset.pattern.permute.xlu0 0
        %9386 = vperm.xlu0 %9385, %v9326
        %v9387 = vpop.permute.xlu0 %9386
        %9390 = vset.pattern.permute.xlu0 0
        %9391 = vperm.xlu0 %9390, %v9327
        %v9392 = vpop.permute.xlu0 %9391
        %9395 = vset.pattern.permute.xlu0 0
        %9396 = vperm.xlu0 %9395, %v9328
        %v9397 = vpop.permute.xlu0 %9396
        %9400 = vset.pattern.permute.xlu0 0
        %9401 = vperm.xlu0 %9400, %v9329
        %v9402 = vpop.permute.xlu0 %9401
        %9405 = vset.pattern.permute.xlu0 0
        %9406 = vperm.xlu0 %9405, %v9330
        %v9407 = vpop.permute.xlu0 %9406
        %9410 = vset.pattern.permute.xlu0 0
        %9411 = vperm.xlu0 %9410, %v9331
        %v9412 = vpop.permute.xlu0 %9411
        %9415 = vset.pattern.permute.xlu0 0
        %9416 = vperm.xlu0 %9415, %v9332
        %v9417 = vpop.permute.xlu0 %9416
        %9420 = vset.pattern.permute.xlu0 0
        %9421 = vperm.xlu0 %9420, %v9333
        %v9422 = vpop.permute.xlu0 %9421
        %9425 = vset.pattern.permute.xlu0 0
        %9426 = vperm.xlu0 %9425, %v9334
        %v9427 = vpop.permute.xlu0 %9426
        %9430 = vset.pattern.permute.xlu0 0
        %9431 = vperm.xlu0 %9430, %v9335
        %v9432 = vpop.permute.xlu0 %9431
        %9435 = vset.pattern.permute.xlu0 0
        %9436 = vperm.xlu0 %9435, %v9336
        %v9437 = vpop.permute.xlu0 %9436
        %9440 = vset.pattern.permute.xlu0 0
        %9441 = vperm.xlu0 %9440, %v9337
        %v9442 = vpop.permute.xlu0 %9441
        %9445 = vset.pattern.permute.xlu0 0
        %9446 = vperm.xlu0 %9445, %v9338
        %v9447 = vpop.permute.xlu0 %9446
        %9450 = vset.pattern.permute.xlu0 0
        %9451 = vperm.xlu0 %9450, %v9339
        %v9452 = vpop.permute.xlu0 %9451
        %9455 = vset.pattern.permute.xlu0 0
        %9456 = vperm.xlu0 %9455, %v9340
        %v9457 = vpop.permute.xlu0 %9456
        %9460 = vset.pattern.permute.xlu0 0
        %9461 = vperm.xlu0 %9460, %v9341
        %v9462 = vpop.permute.xlu0 %9461
        %9465 = vset.pattern.permute.xlu0 0
        %9466 = vperm.xlu0 %9465, %v9342
        %v9467 = vpop.permute.xlu0 %9466
        %9470 = vset.pattern.permute.xlu0 0
        %9471 = vperm.xlu0 %9470, %v9343
        %v9472 = vpop.permute.xlu0 %9471
        %9475 = vset.pattern.permute.xlu0 0
        %9476 = vperm.xlu0 %9475, %v9344
        %v9477 = vpop.permute.xlu0 %9476
        %9480 = vset.pattern.permute.xlu0 0
        %9481 = vperm.xlu0 %9480, %v9345
        %v9482 = vpop.permute.xlu0 %9481
        %9485 = vset.pattern.permute.xlu0 0
        %9486 = vperm.xlu0 %9485, %v9346
        %v9487 = vpop.permute.xlu0 %9486
        %9490 = vset.pattern.permute.xlu0 0
        %9491 = vperm.xlu0 %9490, %v9347
        %v9492 = vpop.permute.xlu0 %9491
        %9495 = vset.pattern.permute.xlu0 0
        %9496 = vperm.xlu0 %9495, %v9348
        %v9497 = vpop.permute.xlu0 %9496
        %9500 = vset.pattern.permute.xlu0 0
        %9501 = vperm.xlu0 %9500, %v9349
        %v9502 = vpop.permute.xlu0 %9501
        %9505 = vset.pattern.permute.xlu0 0
        %9506 = vperm.xlu0 %9505, %v9350
        %v9507 = vpop.permute.xlu0 %9506
        %9510 = vset.pattern.permute.xlu0 0
        %9511 = vperm.xlu0 %9510, %v9351
        %v9512 = vpop.permute.xlu0 %9511
        %9515 = vset.pattern.permute.xlu0 0
        %9516 = vperm.xlu0 %9515, %v9352
        %v9517 = vpop.permute.xlu0 %9516
        %9520 = vset.pattern.permute.xlu0 0
        %9521 = vperm.xlu0 %9520, %v9353
        %v9522 = vpop.permute.xlu0 %9521
        %9525 = vset.pattern.permute.xlu0 0
        %9526 = vperm.xlu0 %9525, %v9354
        %v9527 = vpop.permute.xlu0 %9526
        %9530 = vset.pattern.permute.xlu0 0
        %9531 = vperm.xlu0 %9530, %v9355
        %v9532 = vpop.permute.xlu0 %9531
        %9535 = vset.pattern.permute.xlu0 0
        %9536 = vperm.xlu0 %9535, %v9356
        %v9537 = vpop.permute.xlu0 %9536
        %9540 = vset.pattern.permute.xlu0 0
        %9541 = vperm.xlu0 %9540, %v9357
        %v9542 = vpop.permute.xlu0 %9541
        %9545 = vset.pattern.permute.xlu0 0
        %9546 = vperm.xlu0 %9545, %v9358
        %v9547 = vpop.permute.xlu0 %9546
        %9550 = vset.pattern.permute.xlu0 0
        %9551 = vperm.xlu0 %9550, %v9359
        %v9552 = vpop.permute.xlu0 %9551
        %9555 = vset.pattern.permute.xlu0 0
        %9556 = vperm.xlu0 %9555, %v9360
        %v9557 = vpop.permute.xlu0 %9556
        %9560 = vset.pattern.permute.xlu0 0
        %9561 = vperm.xlu0 %9560, %v9361
        %v9562 = vpop.permute.xlu0 %9561
        %9565 = vset.pattern.permute.xlu0 0
        %9566 = vperm.xlu0 %9565, %v9362
        %v9567 = vpop.permute.xlu0 %9566
        %9570 = vset.pattern.permute.xlu0 0
        %9571 = vperm.xlu0 %9570, %v9363
        %v9572 = vpop.permute.xlu0 %9571
        %v9574 = vmul.f32 %v9114, %v9367
        %v9575 = vmul.f32 %v9119, %v9372
        %v9576 = vmul.f32 %v9124, %v9377
        %v9577 = vmul.f32 %v9129, %v9382
        %v9578 = vmul.f32 %v9134, %v9387
        %v9579 = vmul.f32 %v9139, %v9392
        %v9580 = vmul.f32 %v9144, %v9397
        %v9581 = vmul.f32 %v9149, %v9402
        %v9582 = vmul.f32 %v9154, %v9407
        %v9583 = vmul.f32 %v9159, %v9412
        %v9584 = vmul.f32 %v9164, %v9417
        %v9585 = vmul.f32 %v9169, %v9422
        %v9586 = vmul.f32 %v9174, %v9427
        %v9587 = vmul.f32 %v9179, %v9432
        %v9588 = vmul.f32 %v9184, %v9437
        %v9589 = vmul.f32 %v9189, %v9442
        %v9590 = vmul.f32 %v9194, %v9447
        %v9591 = vmul.f32 %v9199, %v9452
        %v9592 = vmul.f32 %v9204, %v9457
        %v9593 = vmul.f32 %v9209, %v9462
        %v9594 = vmul.f32 %v9214, %v9467
        %v9595 = vmul.f32 %v9219, %v9472
        %v9596 = vmul.f32 %v9224, %v9477
        %v9597 = vmul.f32 %v9229, %v9482
        %v9598 = vmul.f32 %v9234, %v9487
        %v9599 = vmul.f32 %v9239, %v9492
        %v9600 = vmul.f32 %v9244, %v9497
        %v9601 = vmul.f32 %v9249, %v9502
        %v9602 = vmul.f32 %v9254, %v9507
        %v9603 = vmul.f32 %v9259, %v9512
        %v9604 = vmul.f32 %v9264, %v9517
        %v9605 = vmul.f32 %v9269, %v9522
        %v9606 = vmul.f32 %v9274, %v9527
        %v9607 = vmul.f32 %v9279, %v9532
        %v9608 = vmul.f32 %v9284, %v9537
        %v9609 = vmul.f32 %v9289, %v9542
        %v9610 = vmul.f32 %v9294, %v9547
        %v9611 = vmul.f32 %v9299, %v9552
        %v9612 = vmul.f32 %v9304, %v9557
        %v9613 = vmul.f32 %v9309, %v9562
        %v9614 = vmul.f32 %v9314, %v9567
        %v9615 = vmul.f32 %v9319, %v9572
        %v9616 = vld [vmem:[%s19] sm:$0xff]
        %v9617 = vld [vmem:[%s19 + $0x8] sm:$0xff]
        %v9618 = vld [vmem:[%s19 + $0x10] sm:$0xff]
        %v9619 = vld [vmem:[%s19 + $0x18] sm:$0xff]
        %v9620 = vld [vmem:[%s19 + $0x20] sm:$0xff]
        %v9621 = vld [vmem:[%s19 + $0x28] sm:$0xff]
        %v9622 = vld [vmem:[%s19 + $0x30] sm:$0xff]
        %v9623 = vld [vmem:[%s19 + $0x38] sm:$0xff]
        %v9624 = vld [vmem:[%s19 + $0x40] sm:$0xff]
        %v9625 = vld [vmem:[%s19 + $0x48] sm:$0xff]
        %v9626 = vld [vmem:[%s19 + $0x50] sm:$0xff]
        %v9627 = vld [vmem:[%s19 + $0x58] sm:$0xff]
        %v9628 = vld [vmem:[%s19 + $0x60] sm:$0xff]
        %v9629 = vld [vmem:[%s19 + $0x68] sm:$0xff]
        %v9630 = vld [vmem:[%s19 + $0x70] sm:$0xff]
        %v9631 = vld [vmem:[%s19 + $0x78] sm:$0xff]
        %v9632 = vld [vmem:[%s19 + $0x80] sm:$0xff]
        %v9633 = vld [vmem:[%s19 + $0x88] sm:$0xff]
        %v9634 = vld [vmem:[%s19 + $0x90] sm:$0xff]
        %v9635 = vld [vmem:[%s19 + $0x98] sm:$0xff]
        %v9636 = vld [vmem:[%s19 + $0xa0] sm:$0xff]
        %v9637 = vld [vmem:[%s19 + $0xa8] sm:$0xff]
        %v9638 = vld [vmem:[%s19 + $0xb0] sm:$0xff]
        %v9639 = vld [vmem:[%s19 + $0xb8] sm:$0xff]
        %v9640 = vld [vmem:[%s19 + $0xc0] sm:$0xff]
        %v9641 = vld [vmem:[%s19 + $0xc8] sm:$0xff]
        %v9642 = vld [vmem:[%s19 + $0xd0] sm:$0xff]
        %v9643 = vld [vmem:[%s19 + $0xd8] sm:$0xff]
        %v9644 = vld [vmem:[%s19 + $0xe0] sm:$0xff]
        %v9645 = vld [vmem:[%s19 + $0xe8] sm:$0xff]
        %v9646 = vld [vmem:[%s19 + $0xf0] sm:$0xff]
        %v9647 = vld [vmem:[%s19 + $0xf8] sm:$0xff]
        %v9648 = vld [vmem:[%s19 + $0x100] sm:$0xff]
        %v9649 = vld [vmem:[%s19 + $0x108] sm:$0xff]
        %v9650 = vld [vmem:[%s19 + $0x110] sm:$0xff]
        %v9651 = vld [vmem:[%s19 + $0x118] sm:$0xff]
        %v9652 = vld [vmem:[%s19 + $0x120] sm:$0xff]
        %v9653 = vld [vmem:[%s19 + $0x128] sm:$0xff]
        %v9654 = vld [vmem:[%s19 + $0x130] sm:$0xff]
        %v9655 = vld [vmem:[%s19 + $0x138] sm:$0xff]
        %v9656 = vld [vmem:[%s19 + $0x140] sm:$0xff]
        %v9657 = vld [vmem:[%s19 + $0x148] sm:$0x3]
        %9659 = vset.pattern.permute.xlu0 0
        %9660 = vperm.xlu0 %9659, %v9616
        %v9661 = vpop.permute.xlu0 %9660
        %9664 = vset.pattern.permute.xlu0 0
        %9665 = vperm.xlu0 %9664, %v9617
        %v9666 = vpop.permute.xlu0 %9665
        %9669 = vset.pattern.permute.xlu0 0
        %9670 = vperm.xlu0 %9669, %v9618
        %v9671 = vpop.permute.xlu0 %9670
        %9674 = vset.pattern.permute.xlu0 0
        %9675 = vperm.xlu0 %9674, %v9619
        %v9676 = vpop.permute.xlu0 %9675
        %9679 = vset.pattern.permute.xlu0 0
        %9680 = vperm.xlu0 %9679, %v9620
        %v9681 = vpop.permute.xlu0 %9680
        %9684 = vset.pattern.permute.xlu0 0
        %9685 = vperm.xlu0 %9684, %v9621
        %v9686 = vpop.permute.xlu0 %9685
        %9689 = vset.pattern.permute.xlu0 0
        %9690 = vperm.xlu0 %9689, %v9622
        %v9691 = vpop.permute.xlu0 %9690
        %9694 = vset.pattern.permute.xlu0 0
        %9695 = vperm.xlu0 %9694, %v9623
        %v9696 = vpop.permute.xlu0 %9695
        %9699 = vset.pattern.permute.xlu0 0
        %9700 = vperm.xlu0 %9699, %v9624
        %v9701 = vpop.permute.xlu0 %9700
        %9704 = vset.pattern.permute.xlu0 0
        %9705 = vperm.xlu0 %9704, %v9625
        %v9706 = vpop.permute.xlu0 %9705
        %9709 = vset.pattern.permute.xlu0 0
        %9710 = vperm.xlu0 %9709, %v9626
        %v9711 = vpop.permute.xlu0 %9710
        %9714 = vset.pattern.permute.xlu0 0
        %9715 = vperm.xlu0 %9714, %v9627
        %v9716 = vpop.permute.xlu0 %9715
        %9719 = vset.pattern.permute.xlu0 0
        %9720 = vperm.xlu0 %9719, %v9628
        %v9721 = vpop.permute.xlu0 %9720
        %9724 = vset.pattern.permute.xlu0 0
        %9725 = vperm.xlu0 %9724, %v9629
        %v9726 = vpop.permute.xlu0 %9725
        %9729 = vset.pattern.permute.xlu0 0
        %9730 = vperm.xlu0 %9729, %v9630
        %v9731 = vpop.permute.xlu0 %9730
        %9734 = vset.pattern.permute.xlu0 0
        %9735 = vperm.xlu0 %9734, %v9631
        %v9736 = vpop.permute.xlu0 %9735
        %9739 = vset.pattern.permute.xlu0 0
        %9740 = vperm.xlu0 %9739, %v9632
        %v9741 = vpop.permute.xlu0 %9740
        %9744 = vset.pattern.permute.xlu0 0
        %9745 = vperm.xlu0 %9744, %v9633
        %v9746 = vpop.permute.xlu0 %9745
        %9749 = vset.pattern.permute.xlu0 0
        %9750 = vperm.xlu0 %9749, %v9634
        %v9751 = vpop.permute.xlu0 %9750
        %9754 = vset.pattern.permute.xlu0 0
        %9755 = vperm.xlu0 %9754, %v9635
        %v9756 = vpop.permute.xlu0 %9755
        %9759 = vset.pattern.permute.xlu0 0
        %9760 = vperm.xlu0 %9759, %v9636
        %v9761 = vpop.permute.xlu0 %9760
        %9764 = vset.pattern.permute.xlu0 0
        %9765 = vperm.xlu0 %9764, %v9637
        %v9766 = vpop.permute.xlu0 %9765
        %9769 = vset.pattern.permute.xlu0 0
        %9770 = vperm.xlu0 %9769, %v9638
        %v9771 = vpop.permute.xlu0 %9770
        %9774 = vset.pattern.permute.xlu0 0
        %9775 = vperm.xlu0 %9774, %v9639
        %v9776 = vpop.permute.xlu0 %9775
        %9779 = vset.pattern.permute.xlu0 0
        %9780 = vperm.xlu0 %9779, %v9640
        %v9781 = vpop.permute.xlu0 %9780
        %9784 = vset.pattern.permute.xlu0 0
        %9785 = vperm.xlu0 %9784, %v9641
        %v9786 = vpop.permute.xlu0 %9785
        %9789 = vset.pattern.permute.xlu0 0
        %9790 = vperm.xlu0 %9789, %v9642
        %v9791 = vpop.permute.xlu0 %9790
        %9794 = vset.pattern.permute.xlu0 0
        %9795 = vperm.xlu0 %9794, %v9643
        %v9796 = vpop.permute.xlu0 %9795
        %9799 = vset.pattern.permute.xlu0 0
        %9800 = vperm.xlu0 %9799, %v9644
        %v9801 = vpop.permute.xlu0 %9800
        %9804 = vset.pattern.permute.xlu0 0
        %9805 = vperm.xlu0 %9804, %v9645
        %v9806 = vpop.permute.xlu0 %9805
        %9809 = vset.pattern.permute.xlu0 0
        %9810 = vperm.xlu0 %9809, %v9646
        %v9811 = vpop.permute.xlu0 %9810
        %9814 = vset.pattern.permute.xlu0 0
        %9815 = vperm.xlu0 %9814, %v9647
        %v9816 = vpop.permute.xlu0 %9815
        %9819 = vset.pattern.permute.xlu0 0
        %9820 = vperm.xlu0 %9819, %v9648
        %v9821 = vpop.permute.xlu0 %9820
        %9824 = vset.pattern.permute.xlu0 0
        %9825 = vperm.xlu0 %9824, %v9649
        %v9826 = vpop.permute.xlu0 %9825
        %9829 = vset.pattern.permute.xlu0 0
        %9830 = vperm.xlu0 %9829, %v9650
        %v9831 = vpop.permute.xlu0 %9830
        %9834 = vset.pattern.permute.xlu0 0
        %9835 = vperm.xlu0 %9834, %v9651
        %v9836 = vpop.permute.xlu0 %9835
        %9839 = vset.pattern.permute.xlu0 0
        %9840 = vperm.xlu0 %9839, %v9652
        %v9841 = vpop.permute.xlu0 %9840
        %9844 = vset.pattern.permute.xlu0 0
        %9845 = vperm.xlu0 %9844, %v9653
        %v9846 = vpop.permute.xlu0 %9845
        %9849 = vset.pattern.permute.xlu0 0
        %9850 = vperm.xlu0 %9849, %v9654
        %v9851 = vpop.permute.xlu0 %9850
        %9854 = vset.pattern.permute.xlu0 0
        %9855 = vperm.xlu0 %9854, %v9655
        %v9856 = vpop.permute.xlu0 %9855
        %9859 = vset.pattern.permute.xlu0 0
        %9860 = vperm.xlu0 %9859, %v9656
        %v9861 = vpop.permute.xlu0 %9860
        %9864 = vset.pattern.permute.xlu0 0
        %9865 = vperm.xlu0 %9864, %v9657
        %v9866 = vpop.permute.xlu0 %9865
        %v9868 = vadd.f32 %v9574, %v9661
        %v9869 = vadd.f32 %v9575, %v9666
        %v9870 = vadd.f32 %v9576, %v9671
        %v9871 = vadd.f32 %v9577, %v9676
        %v9872 = vadd.f32 %v9578, %v9681
        %v9873 = vadd.f32 %v9579, %v9686
        %v9874 = vadd.f32 %v9580, %v9691
        %v9875 = vadd.f32 %v9581, %v9696
        %v9876 = vadd.f32 %v9582, %v9701
        %v9877 = vadd.f32 %v9583, %v9706
        %v9878 = vadd.f32 %v9584, %v9711
        %v9879 = vadd.f32 %v9585, %v9716
        %v9880 = vadd.f32 %v9586, %v9721
        %v9881 = vadd.f32 %v9587, %v9726
        %v9882 = vadd.f32 %v9588, %v9731
        %v9883 = vadd.f32 %v9589, %v9736
        %v9884 = vadd.f32 %v9590, %v9741
        %v9885 = vadd.f32 %v9591, %v9746
        %v9886 = vadd.f32 %v9592, %v9751
        %v9887 = vadd.f32 %v9593, %v9756
        %v9888 = vadd.f32 %v9594, %v9761
        %v9889 = vadd.f32 %v9595, %v9766
        %v9890 = vadd.f32 %v9596, %v9771
        %v9891 = vadd.f32 %v9597, %v9776
        %v9892 = vadd.f32 %v9598, %v9781
        %v9893 = vadd.f32 %v9599, %v9786
        %v9894 = vadd.f32 %v9600, %v9791
        %v9895 = vadd.f32 %v9601, %v9796
        %v9896 = vadd.f32 %v9602, %v9801
        %v9897 = vadd.f32 %v9603, %v9806
        %v9898 = vadd.f32 %v9604, %v9811
        %v9899 = vadd.f32 %v9605, %v9816
        %v9900 = vadd.f32 %v9606, %v9821
        %v9901 = vadd.f32 %v9607, %v9826
        %v9902 = vadd.f32 %v9608, %v9831
        %v9903 = vadd.f32 %v9609, %v9836
        %v9904 = vadd.f32 %v9610, %v9841
        %v9905 = vadd.f32 %v9611, %v9846
        %v9906 = vadd.f32 %v9612, %v9851
        %v9907 = vadd.f32 %v9613, %v9856
        %v9908 = vadd.f32 %v9614, %v9861
        %v9909 = vadd.f32 %v9615, %v9866
        %vm9910 = vcmp.gt.f32.partialorder %v9868, 0.0
        %vm9911 = vcmp.gt.f32.partialorder %v9869, 0.0
        %vm9912 = vcmp.gt.f32.partialorder %v9870, 0.0
        %vm9913 = vcmp.gt.f32.partialorder %v9871, 0.0
        %vm9914 = vcmp.gt.f32.partialorder %v9872, 0.0
        %vm9915 = vcmp.gt.f32.partialorder %v9873, 0.0
        %vm9916 = vcmp.gt.f32.partialorder %v9874, 0.0
        %vm9917 = vcmp.gt.f32.partialorder %v9875, 0.0
        %vm9918 = vcmp.gt.f32.partialorder %v9876, 0.0
        %vm9919 = vcmp.gt.f32.partialorder %v9877, 0.0
        %vm9920 = vcmp.gt.f32.partialorder %v9878, 0.0
        %vm9921 = vcmp.gt.f32.partialorder %v9879, 0.0
        %vm9922 = vcmp.gt.f32.partialorder %v9880, 0.0
        %vm9923 = vcmp.gt.f32.partialorder %v9881, 0.0
        %vm9924 = vcmp.gt.f32.partialorder %v9882, 0.0
        %vm9925 = vcmp.gt.f32.partialorder %v9883, 0.0
        %vm9926 = vcmp.gt.f32.partialorder %v9884, 0.0
        %vm9927 = vcmp.gt.f32.partialorder %v9885, 0.0
        %vm9928 = vcmp.gt.f32.partialorder %v9886, 0.0
        %vm9929 = vcmp.gt.f32.partialorder %v9887, 0.0
        %vm9930 = vcmp.gt.f32.partialorder %v9888, 0.0
        %vm9931 = vcmp.gt.f32.partialorder %v9889, 0.0
        %vm9932 = vcmp.gt.f32.partialorder %v9890, 0.0
        %vm9933 = vcmp.gt.f32.partialorder %v9891, 0.0
        %vm9934 = vcmp.gt.f32.partialorder %v9892, 0.0
        %vm9935 = vcmp.gt.f32.partialorder %v9893, 0.0
        %vm9936 = vcmp.gt.f32.partialorder %v9894, 0.0
        %vm9937 = vcmp.gt.f32.partialorder %v9895, 0.0
        %vm9938 = vcmp.gt.f32.partialorder %v9896, 0.0
        %vm9939 = vcmp.gt.f32.partialorder %v9897, 0.0
        %vm9940 = vcmp.gt.f32.partialorder %v9898, 0.0
        %vm9941 = vcmp.gt.f32.partialorder %v9899, 0.0
        %vm9942 = vcmp.gt.f32.partialorder %v9900, 0.0
        %vm9943 = vcmp.gt.f32.partialorder %v9901, 0.0
        %vm9944 = vcmp.gt.f32.partialorder %v9902, 0.0
        %vm9945 = vcmp.gt.f32.partialorder %v9903, 0.0
        %vm9946 = vcmp.gt.f32.partialorder %v9904, 0.0
        %vm9947 = vcmp.gt.f32.partialorder %v9905, 0.0
        %vm9948 = vcmp.gt.f32.partialorder %v9906, 0.0
        %vm9949 = vcmp.gt.f32.partialorder %v9907, 0.0
        %vm9950 = vcmp.gt.f32.partialorder %v9908, 0.0
        %vm9951 = vcmp.gt.f32.partialorder %v9909, 0.0
        %v9952 = vmul.f32 %v9868, 0.0
        %v9953 = vmul.f32 %v9869, 0.0
        %v9954 = vmul.f32 %v9870, 0.0
        %v9955 = vmul.f32 %v9871, 0.0
        %v9956 = vmul.f32 %v9872, 0.0
        %v9957 = vmul.f32 %v9873, 0.0
        %v9958 = vmul.f32 %v9874, 0.0
        %v9959 = vmul.f32 %v9875, 0.0
        %v9960 = vmul.f32 %v9876, 0.0
        %v9961 = vmul.f32 %v9877, 0.0
        %v9962 = vmul.f32 %v9878, 0.0
        %v9963 = vmul.f32 %v9879, 0.0
        %v9964 = vmul.f32 %v9880, 0.0
        %v9965 = vmul.f32 %v9881, 0.0
        %v9966 = vmul.f32 %v9882, 0.0
        %v9967 = vmul.f32 %v9883, 0.0
        %v9968 = vmul.f32 %v9884, 0.0
        %v9969 = vmul.f32 %v9885, 0.0
        %v9970 = vmul.f32 %v9886, 0.0
        %v9971 = vmul.f32 %v9887, 0.0
        %v9972 = vmul.f32 %v9888, 0.0
        %v9973 = vmul.f32 %v9889, 0.0
        %v9974 = vmul.f32 %v9890, 0.0
        %v9975 = vmul.f32 %v9891, 0.0
        %v9976 = vmul.f32 %v9892, 0.0
        %v9977 = vmul.f32 %v9893, 0.0
        %v9978 = vmul.f32 %v9894, 0.0
        %v9979 = vmul.f32 %v9895, 0.0
        %v9980 = vmul.f32 %v9896, 0.0
        %v9981 = vmul.f32 %v9897, 0.0
        %v9982 = vmul.f32 %v9898, 0.0
        %v9983 = vmul.f32 %v9899, 0.0
        %v9984 = vmul.f32 %v9900, 0.0
        %v9985 = vmul.f32 %v9901, 0.0
        %v9986 = vmul.f32 %v9902, 0.0
        %v9987 = vmul.f32 %v9903, 0.0
        %v9988 = vmul.f32 %v9904, 0.0
        %v9989 = vmul.f32 %v9905, 0.0
        %v9990 = vmul.f32 %v9906, 0.0
        %v9991 = vmul.f32 %v9907, 0.0
        %v9992 = vmul.f32 %v9908, 0.0
        %v9993 = vmul.f32 %v9909, 0.0
        %v9994 = vsel %vm9910, %v9868, %v9952
        %v9995 = vsel %vm9911, %v9869, %v9953
        %v9996 = vsel %vm9912, %v9870, %v9954
        %v9997 = vsel %vm9913, %v9871, %v9955
        %v9998 = vsel %vm9914, %v9872, %v9956
        %v9999 = vsel %vm9915, %v9873, %v9957
        %v10000 = vsel %vm9916, %v9874, %v9958
        %v10001 = vsel %vm9917, %v9875, %v9959
        %v10002 = vsel %vm9918, %v9876, %v9960
        %v10003 = vsel %vm9919, %v9877, %v9961
        %v10004 = vsel %vm9920, %v9878, %v9962
        %v10005 = vsel %vm9921, %v9879, %v9963
        %v10006 = vsel %vm9922, %v9880, %v9964
        %v10007 = vsel %vm9923, %v9881, %v9965
        %v10008 = vsel %vm9924, %v9882, %v9966
        %v10009 = vsel %vm9925, %v9883, %v9967
        %v10010 = vsel %vm9926, %v9884, %v9968
        %v10011 = vsel %vm9927, %v9885, %v9969
        %v10012 = vsel %vm9928, %v9886, %v9970
        %v10013 = vsel %vm9929, %v9887, %v9971
        %v10014 = vsel %vm9930, %v9888, %v9972
        %v10015 = vsel %vm9931, %v9889, %v9973
        %v10016 = vsel %vm9932, %v9890, %v9974
        %v10017 = vsel %vm9933, %v9891, %v9975
        %v10018 = vsel %vm9934, %v9892, %v9976
        %v10019 = vsel %vm9935, %v9893, %v9977
        %v10020 = vsel %vm9936, %v9894, %v9978
        %v10021 = vsel %vm9937, %v9895, %v9979
        %v10022 = vsel %vm9938, %v9896, %v9980
        %v10023 = vsel %vm9939, %v9897, %v9981
        %v10024 = vsel %vm9940, %v9898, %v9982
        %v10025 = vsel %vm9941, %v9899, %v9983
        %v10026 = vsel %vm9942, %v9900, %v9984
        %v10027 = vsel %vm9943, %v9901, %v9985
        %v10028 = vsel %vm9944, %v9902, %v9986
        %v10029 = vsel %vm9945, %v9903, %v9987
        %v10030 = vsel %vm9946, %v9904, %v9988
        %v10031 = vsel %vm9947, %v9905, %v9989
        %v10032 = vsel %vm9948, %v9906, %v9990
        %v10033 = vsel %vm9949, %v9907, %v9991
        %v10034 = vsel %vm9950, %v9908, %v9992
        %v10035 = vsel %vm9951, %v9909, %v9993
        %10078 = vrot.lane.b32.xlu0 %v9994, 127
        %v10079 = vpop.permute.xlu0 %10078
        %10080 = vrot.lane.b32.xlu0 %v9995, 127
        %v10081 = vpop.permute.xlu0 %10080
        %10082 = vrot.lane.b32.xlu0 %v9996, 127
        %v10083 = vpop.permute.xlu0 %10082
        %10084 = vrot.lane.b32.xlu0 %v9997, 127
        %v10085 = vpop.permute.xlu0 %10084
        %10086 = vrot.lane.b32.xlu0 %v9998, 127
        %v10087 = vpop.permute.xlu0 %10086
        %10088 = vrot.lane.b32.xlu0 %v9999, 127
        %v10089 = vpop.permute.xlu0 %10088
        %10090 = vrot.lane.b32.xlu0 %v10000, 127
        %v10091 = vpop.permute.xlu0 %10090
        %10092 = vrot.lane.b32.xlu0 %v10001, 127
        %v10093 = vpop.permute.xlu0 %10092
        %10094 = vrot.lane.b32.xlu0 %v10002, 127
        %v10095 = vpop.permute.xlu0 %10094
        %10096 = vrot.lane.b32.xlu0 %v10003, 127
        %v10097 = vpop.permute.xlu0 %10096
        %10098 = vrot.lane.b32.xlu0 %v10004, 127
        %v10099 = vpop.permute.xlu0 %10098
        %10100 = vrot.lane.b32.xlu0 %v10005, 127
        %v10101 = vpop.permute.xlu0 %10100
        %10102 = vrot.lane.b32.xlu0 %v10006, 127
        %v10103 = vpop.permute.xlu0 %10102
        %10104 = vrot.lane.b32.xlu0 %v10007, 127
        %v10105 = vpop.permute.xlu0 %10104
        %10106 = vrot.lane.b32.xlu0 %v10008, 127
        %v10107 = vpop.permute.xlu0 %10106
        %10108 = vrot.lane.b32.xlu0 %v10009, 127
        %v10109 = vpop.permute.xlu0 %10108
        %10110 = vrot.lane.b32.xlu0 %v10010, 127
        %v10111 = vpop.permute.xlu0 %10110
        %10112 = vrot.lane.b32.xlu0 %v10011, 127
        %v10113 = vpop.permute.xlu0 %10112
        %10114 = vrot.lane.b32.xlu0 %v10012, 127
        %v10115 = vpop.permute.xlu0 %10114
        %10116 = vrot.lane.b32.xlu0 %v10013, 127
        %v10117 = vpop.permute.xlu0 %10116
        %10118 = vrot.lane.b32.xlu0 %v10014, 127
        %v10119 = vpop.permute.xlu0 %10118
        %10120 = vrot.lane.b32.xlu0 %v10015, 127
        %v10121 = vpop.permute.xlu0 %10120
        %10122 = vrot.lane.b32.xlu0 %v10016, 127
        %v10123 = vpop.permute.xlu0 %10122
        %10124 = vrot.lane.b32.xlu0 %v10017, 127
        %v10125 = vpop.permute.xlu0 %10124
        %10126 = vrot.lane.b32.xlu0 %v10018, 127
        %v10127 = vpop.permute.xlu0 %10126
        %10128 = vrot.lane.b32.xlu0 %v10019, 127
        %v10129 = vpop.permute.xlu0 %10128
        %10130 = vrot.lane.b32.xlu0 %v10020, 127
        %v10131 = vpop.permute.xlu0 %10130
        %10132 = vrot.lane.b32.xlu0 %v10021, 127
        %v10133 = vpop.permute.xlu0 %10132
        %10134 = vrot.lane.b32.xlu0 %v10022, 127
        %v10135 = vpop.permute.xlu0 %10134
        %10136 = vrot.lane.b32.xlu0 %v10023, 127
        %v10137 = vpop.permute.xlu0 %10136
        %10138 = vrot.lane.b32.xlu0 %v10024, 127
        %v10139 = vpop.permute.xlu0 %10138
        %10140 = vrot.lane.b32.xlu0 %v10025, 127
        %v10141 = vpop.permute.xlu0 %10140
        %10142 = vrot.lane.b32.xlu0 %v10026, 127
        %v10143 = vpop.permute.xlu0 %10142
        %10144 = vrot.lane.b32.xlu0 %v10027, 127
        %v10145 = vpop.permute.xlu0 %10144
        %10146 = vrot.lane.b32.xlu0 %v10028, 127
        %v10147 = vpop.permute.xlu0 %10146
        %10148 = vrot.lane.b32.xlu0 %v10029, 127
        %v10149 = vpop.permute.xlu0 %10148
        %10150 = vrot.lane.b32.xlu0 %v10030, 127
        %v10151 = vpop.permute.xlu0 %10150
        %10152 = vrot.lane.b32.xlu0 %v10031, 127
        %v10153 = vpop.permute.xlu0 %10152
        %10154 = vrot.lane.b32.xlu0 %v10032, 127
        %v10155 = vpop.permute.xlu0 %10154
        %10156 = vrot.lane.b32.xlu0 %v10033, 127
        %v10157 = vpop.permute.xlu0 %10156
        %10158 = vrot.lane.b32.xlu0 %v10034, 127
        %v10159 = vpop.permute.xlu0 %10158
        %10160 = vrot.lane.b32.xlu0 %v10035, 127
        %v10161 = vpop.permute.xlu0 %10160
        %v10204 = vmax.f32 %v9994, %v10079
        %v10205 = vmax.f32 %v9995, %v10081
        %v10206 = vmax.f32 %v9996, %v10083
        %v10207 = vmax.f32 %v9997, %v10085
        %v10208 = vmax.f32 %v9998, %v10087
        %v10209 = vmax.f32 %v9999, %v10089
        %v10210 = vmax.f32 %v10000, %v10091
        %v10211 = vmax.f32 %v10001, %v10093
        %v10212 = vmax.f32 %v10002, %v10095
        %v10213 = vmax.f32 %v10003, %v10097
        %v10214 = vmax.f32 %v10004, %v10099
        %v10215 = vmax.f32 %v10005, %v10101
        %v10216 = vmax.f32 %v10006, %v10103
        %v10217 = vmax.f32 %v10007, %v10105
        %v10218 = vmax.f32 %v10008, %v10107
        %v10219 = vmax.f32 %v10009, %v10109
        %v10220 = vmax.f32 %v10010, %v10111
        %v10221 = vmax.f32 %v10011, %v10113
        %v10222 = vmax.f32 %v10012, %v10115
        %v10223 = vmax.f32 %v10013, %v10117
        %v10224 = vmax.f32 %v10014, %v10119
        %v10225 = vmax.f32 %v10015, %v10121
        %v10226 = vmax.f32 %v10016, %v10123
        %v10227 = vmax.f32 %v10017, %v10125
        %v10228 = vmax.f32 %v10018, %v10127
        %v10229 = vmax.f32 %v10019, %v10129
        %v10230 = vmax.f32 %v10020, %v10131
        %v10231 = vmax.f32 %v10021, %v10133
        %v10232 = vmax.f32 %v10022, %v10135
        %v10233 = vmax.f32 %v10023, %v10137
        %v10234 = vmax.f32 %v10024, %v10139
        %v10235 = vmax.f32 %v10025, %v10141
        %v10236 = vmax.f32 %v10026, %v10143
        %v10237 = vmax.f32 %v10027, %v10145
        %v10238 = vmax.f32 %v10028, %v10147
        %v10239 = vmax.f32 %v10029, %v10149
        %v10240 = vmax.f32 %v10030, %v10151
        %v10241 = vmax.f32 %v10031, %v10153
        %v10242 = vmax.f32 %v10032, %v10155
        %v10243 = vmax.f32 %v10033, %v10157
        %v10244 = vmax.f32 %v10034, %v10159
        %v10245 = vmax.f32 %v10035, %v10161
        %v10246 = vld [vmem:[%s20] sm:$0xff]
        %v10247 = vld [vmem:[%s20 + $0x8] sm:$0xff]
        %v10248 = vld [vmem:[%s20 + $0x10] sm:$0xff]
        %v10249 = vld [vmem:[%s20 + $0x18] sm:$0xff]
        %v10250 = vld [vmem:[%s20 + $0x20] sm:$0x3f]
        %vm10251 = vcmask 310272
        %v10253 = vsel %vm10251, %v10204, 0
        %v10256 = vsel %vm10251, %v10205, 0
        %v10259 = vsel %vm10251, %v10206, 0
        %v10262 = vsel %vm10251, %v10207, 0
        %v10265 = vsel %vm10251, %v10208, 0
        %v10268 = vsel %vm10251, %v10209, 0
        %v10271 = vsel %vm10251, %v10210, 0
        %v10274 = vsel %vm10251, %v10211, 0
        %v10277 = vsel %vm10251, %v10212, 0
        %v10280 = vsel %vm10251, %v10213, 0
        %v10283 = vsel %vm10251, %v10214, 0
        %v10286 = vsel %vm10251, %v10215, 0
        %v10289 = vsel %vm10251, %v10216, 0
        %v10292 = vsel %vm10251, %v10217, 0
        %v10295 = vsel %vm10251, %v10218, 0
        %v10298 = vsel %vm10251, %v10219, 0
        %v10301 = vsel %vm10251, %v10220, 0
        %v10304 = vsel %vm10251, %v10221, 0
        %v10307 = vsel %vm10251, %v10222, 0
        %v10310 = vsel %vm10251, %v10223, 0
        %v10313 = vsel %vm10251, %v10224, 0
        %v10316 = vsel %vm10251, %v10225, 0
        %v10319 = vsel %vm10251, %v10226, 0
        %v10322 = vsel %vm10251, %v10227, 0
        %v10325 = vsel %vm10251, %v10228, 0
        %v10328 = vsel %vm10251, %v10229, 0
        %v10331 = vsel %vm10251, %v10230, 0
        %v10334 = vsel %vm10251, %v10231, 0
        %v10337 = vsel %vm10251, %v10232, 0
        %v10340 = vsel %vm10251, %v10233, 0
        %v10343 = vsel %vm10251, %v10234, 0
        %v10346 = vsel %vm10251, %v10235, 0
        %v10349 = vsel %vm10251, %v10236, 0
        %v10352 = vsel %vm10251, %v10237, 0
        %v10355 = vsel %vm10251, %v10238, 0
        %v10358 = vsel %vm10251, %v10239, 0
        %v10361 = vsel %vm10251, %v10240, 0
        %v10364 = vsel %vm10251, %v10241, 0
        %v10367 = vsel %vm10251, %v10242, 0
        %v10370 = vsel %vm10251, %v10243, 0
        %v10373 = vsel %vm10251, %v10244, 0
        %v10376 = vsel %vm10251, %v10245, 0
        %v10379 = vsel %vm4884, %v10250, 0
        %10381 = vmatprep.subr.mxu0 0.0
        %10382 = vmatpush1.msra.mxu0 %v10246
        %10383 = vmatprep.subr.mxu0 0.0
        %10384 = vmatpush1.msra.mxu0 %v10247
        %10385 = vmatprep.subr.mxu0 0.0
        %10386 = vmatpush1.msra.mxu0 %v10248
        %10387 = vmatprep.subr.mxu0 0.0
        %10388 = vmatpush1.msra.mxu0 %v10249
        %10389 = vmatprep.subr.mxu0 0.0
        %10390 = vmatpush1.msra.mxu0 %v10379
        %10391 = vmatprep.subr.mxu0 0.0
        %10392 = vmatpush1.msra.mxu0 0.0
        %10393 = vmatprep.subr.mxu0 0.0
        %10394 = vmatpush1.msra.mxu0 0.0
        %10395 = vmatprep.subr.mxu0 0.0
        %10396 = vmatpush1.msra.mxu0 0.0
        %10397 = vmatprep.subr.mxu0 0.0
        %10398 = vmatpush1.msra.mxu0 0.0
        %10399 = vmatprep.subr.mxu0 0.0
        %10400 = vmatpush1.msra.mxu0 0.0
        %10401 = vmatprep.subr.mxu0 0.0
        %10402 = vmatpush1.msra.mxu0 0.0
        %10403 = vmatprep.subr.mxu0 0.0
        %10404 = vmatpush1.msra.mxu0 0.0
        %10405 = vmatprep.subr.mxu0 0.0
        %10406 = vmatpush1.msra.mxu0 0.0
        %10407 = vmatprep.subr.mxu0 0.0
        %10408 = vmatpush1.msra.mxu0 0.0
        %10409 = vmatprep.subr.mxu0 0.0
        %10410 = vmatpush1.msra.mxu0 0.0
        %10411 = vmatprep.subr.mxu0 0.0
        %10412 = vmatpush1.msra.mxu0 0.0
        %10413 = vmatprep.subr.mxu0 0.0
        %10414 = vmatpush1.msra.mxu0 0.0
        %10415 = vmatprep.subr.mxu0 0.0
        %10416 = vmatpush1.msra.mxu0 0.0
        %10417 = vmatprep.subr.mxu0 0.0
        %10418 = vmatpush1.msra.mxu0 0.0
        %10419 = vmatprep.subr.mxu0 0.0
        %10420 = vmatpush1.msra.mxu0 0.0
        %10421 = vmatprep.subr.mxu0 0.0
        %10422 = vmatpush1.msra.mxu0 0.0
        %10423 = vmatprep.subr.mxu0 0.0
        %10424 = vmatpush1.msra.mxu0 0.0
        %10425 = vmatprep.subr.mxu0 0.0
        %10426 = vmatpush1.msra.mxu0 0.0
        %10427 = vmatprep.subr.mxu0 0.0
        %10428 = vmatpush1.msra.mxu0 0.0
        %10429 = vmatprep.subr.mxu0 0.0
        %10430 = vmatpush1.msra.mxu0 0.0
        %10431 = vmatprep.subr.mxu0 0.0
        %10432 = vmatpush1.msra.mxu0 0.0
        %10433 = vmatprep.subr.mxu0 0.0
        %10434 = vmatpush1.msra.mxu0 0.0
        %10435 = vmatprep.subr.mxu0 0.0
        %10436 = vmatpush1.msra.mxu0 0.0
        %10437 = vmatprep.subr.mxu0 0.0
        %10438 = vmatpush1.msra.mxu0 0.0
        %10439 = vmatprep.subr.mxu0 0.0
        %10440 = vmatpush1.msra.mxu0 0.0
        %10441 = vmatprep.subr.mxu0 0.0
        %10442 = vmatpush1.msra.mxu0 0.0
        %10443 = vmatprep.subr.mxu0 0.0
        %10444 = vmatpush1.msra.mxu0 0.0
        %10445 = vmatprep.mubr.f32.mxu0 0.0
        %10446 = vmatmul.mubr.f32.gmra.mrb[0].mxu0 %v10253
        %v10447 = vpop.f32.mrb[0].mxu0
        %v10448 = vadd.f32 0.0, %v10447
        %v10449 = vpop.f32.mrb[0].mxu0
        %10450 = vmatprep.mubr.f32.mxu0 0.0
        %10451 = vmatmul.mubr.f32.gmra.mrb[0].mxu0 %v10256
        %v10452 = vpop.f32.mrb[0].mxu0
        %v10453 = vadd.f32 0.0, %v10452
        %v10454 = vpop.f32.mrb[0].mxu0
        %10455 = vmatprep.mubr.f32.mxu0 0.0
        %10456 = vmatmul.mubr.f32.gmra.mrb[0].mxu0 %v10259
        %v10457 = vpop.f32.mrb[0].mxu0
        %v10458 = vadd.f32 0.0, %v10457
        %v10459 = vpop.f32.mrb[0].mxu0
        %10460 = vmatprep.mubr.f32.mxu0 0.0
        %10461 = vmatmul.mubr.f32.gmra.mrb[0].mxu0 %v10262
        %v10462 = vpop.f32.mrb[0].mxu0
        %v10463 = vadd.f32 0.0, %v10462
        %v10464 = vpop.f32.mrb[0].mxu0
        %10465 = vmatprep.mubr.f32.mxu0 0.0
        %10466 = vmatmul.mubr.f32.gmra.mrb[0].mxu0 %v10265
        %v10467 = vpop.f32.mrb[0].mxu0
        %v10468 = vadd.f32 0.0, %v10467
        %v10469 = vpop.f32.mrb[0].mxu0
        %10470 = vmatprep.mubr.f32.mxu0 0.0
        %10471 = vmatmul.mubr.f32.gmra.mrb[0].mxu0 %v10268
        %v10472 = vpop.f32.mrb[0].mxu0
        %v10473 = vadd.f32 0.0, %v10472
        %v10474 = vpop.f32.mrb[0].mxu0
        %10475 = vmatprep.mubr.f32.mxu0 0.0
        %10476 = vmatmul.mubr.f32.gmra.mrb[0].mxu0 %v10271
        %v10477 = vpop.f32.mrb[0].mxu0
        %v10478 = vadd.f32 0.0, %v10477
        %v10479 = vpop.f32.mrb[0].mxu0
        %10480 = vmatprep.mubr.f32.mxu0 0.0
        %10481 = vmatmul.mubr.f32.gmra.mrb[0].mxu0 %v10274
        %v10482 = vpop.f32.mrb[0].mxu0
        %v10483 = vadd.f32 0.0, %v10482
        %v10484 = vpop.f32.mrb[0].mxu0
        %10485 = vmatprep.mubr.f32.mxu0 0.0
        %10486 = vmatmul.mubr.f32.gmra.mrb[0].mxu0 %v10277
        %v10487 = vpop.f32.mrb[0].mxu0
        %v10488 = vadd.f32 0.0, %v10487
        %v10489 = vpop.f32.mrb[0].mxu0
        %10490 = vmatprep.mubr.f32.mxu0 0.0
        %10491 = vmatmul.mubr.f32.gmra.mrb[0].mxu0 %v10280
        %v10492 = vpop.f32.mrb[0].mxu0
        %v10493 = vadd.f32 0.0, %v10492
        %v10494 = vpop.f32.mrb[0].mxu0
        %10495 = vmatprep.mubr.f32.mxu0 0.0
        %10496 = vmatmul.mubr.f32.gmra.mrb[0].mxu0 %v10283
        %v10497 = vpop.f32.mrb[0].mxu0
        %v10498 = vadd.f32 0.0, %v10497
        %v10499 = vpop.f32.mrb[0].mxu0
        %10500 = vmatprep.mubr.f32.mxu0 0.0
        %10501 = vmatmul.mubr.f32.gmra.mrb[0].mxu0 %v10286
        %v10502 = vpop.f32.mrb[0].mxu0
        %v10503 = vadd.f32 0.0, %v10502
        %v10504 = vpop.f32.mrb[0].mxu0
        %10505 = vmatprep.mubr.f32.mxu0 0.0
        %10506 = vmatmul.mubr.f32.gmra.mrb[0].mxu0 %v10289
        %v10507 = vpop.f32.mrb[0].mxu0
        %v10508 = vadd.f32 0.0, %v10507
        %v10509 = vpop.f32.mrb[0].mxu0
        %10510 = vmatprep.mubr.f32.mxu0 0.0
        %10511 = vmatmul.mubr.f32.gmra.mrb[0].mxu0 %v10292
        %v10512 = vpop.f32.mrb[0].mxu0
        %v10513 = vadd.f32 0.0, %v10512
        %v10514 = vpop.f32.mrb[0].mxu0
        %10515 = vmatprep.mubr.f32.mxu0 0.0
        %10516 = vmatmul.mubr.f32.gmra.mrb[0].mxu0 %v10295
        %v10517 = vpop.f32.mrb[0].mxu0
        %v10518 = vadd.f32 0.0, %v10517
        %v10519 = vpop.f32.mrb[0].mxu0
        %10520 = vmatprep.mubr.f32.mxu0 0.0
        %10521 = vmatmul.mubr.f32.gmra.mrb[0].mxu0 %v10298
        %v10522 = vpop.f32.mrb[0].mxu0
        %v10523 = vadd.f32 0.0, %v10522
        %v10524 = vpop.f32.mrb[0].mxu0
        %10525 = vmatprep.mubr.f32.mxu0 0.0
        %10526 = vmatmul.mubr.f32.gmra.mrb[0].mxu0 %v10301
        %v10527 = vpop.f32.mrb[0].mxu0
        %v10528 = vadd.f32 0.0, %v10527
        %v10529 = vpop.f32.mrb[0].mxu0
        %10530 = vmatprep.mubr.f32.mxu0 0.0
        %10531 = vmatmul.mubr.f32.gmra.mrb[0].mxu0 %v10304
        %v10532 = vpop.f32.mrb[0].mxu0
        %v10533 = vadd.f32 0.0, %v10532
        %v10534 = vpop.f32.mrb[0].mxu0
        %10535 = vmatprep.mubr.f32.mxu0 0.0
        %10536 = vmatmul.mubr.f32.gmra.mrb[0].mxu0 %v10307
        %v10537 = vpop.f32.mrb[0].mxu0
        %v10538 = vadd.f32 0.0, %v10537
        %v10539 = vpop.f32.mrb[0].mxu0
        %10540 = vmatprep.mubr.f32.mxu0 0.0
        %10541 = vmatmul.mubr.f32.gmra.mrb[0].mxu0 %v10310
        %v10542 = vpop.f32.mrb[0].mxu0
        %v10543 = vadd.f32 0.0, %v10542
        %v10544 = vpop.f32.mrb[0].mxu0
        %10545 = vmatprep.mubr.f32.mxu0 0.0
        %10546 = vmatmul.mubr.f32.gmra.mrb[0].mxu0 %v10313
        %v10547 = vpop.f32.mrb[0].mxu0
        %v10548 = vadd.f32 0.0, %v10547
        %v10549 = vpop.f32.mrb[0].mxu0
        %10550 = vmatprep.mubr.f32.mxu0 0.0
        %10551 = vmatmul.mubr.f32.gmra.mrb[0].mxu0 %v10316
        %v10552 = vpop.f32.mrb[0].mxu0
        %v10553 = vadd.f32 0.0, %v10552
        %v10554 = vpop.f32.mrb[0].mxu0
        %10555 = vmatprep.mubr.f32.mxu0 0.0
        %10556 = vmatmul.mubr.f32.gmra.mrb[0].mxu0 %v10319
        %v10557 = vpop.f32.mrb[0].mxu0
        %v10558 = vadd.f32 0.0, %v10557
        %v10559 = vpop.f32.mrb[0].mxu0
        %10560 = vmatprep.mubr.f32.mxu0 0.0
        %10561 = vmatmul.mubr.f32.gmra.mrb[0].mxu0 %v10322
        %v10562 = vpop.f32.mrb[0].mxu0
        %v10563 = vadd.f32 0.0, %v10562
        %v10564 = vpop.f32.mrb[0].mxu0
        %10565 = vmatprep.mubr.f32.mxu0 0.0
        %10566 = vmatmul.mubr.f32.gmra.mrb[0].mxu0 %v10325
        %v10567 = vpop.f32.mrb[0].mxu0
        %v10568 = vadd.f32 0.0, %v10567
        %v10569 = vpop.f32.mrb[0].mxu0
        %10570 = vmatprep.mubr.f32.mxu0 0.0
        %10571 = vmatmul.mubr.f32.gmra.mrb[0].mxu0 %v10328
        %v10572 = vpop.f32.mrb[0].mxu0
        %v10573 = vadd.f32 0.0, %v10572
        %v10574 = vpop.f32.mrb[0].mxu0
        %10575 = vmatprep.mubr.f32.mxu0 0.0
        %10576 = vmatmul.mubr.f32.gmra.mrb[0].mxu0 %v10331
        %v10577 = vpop.f32.mrb[0].mxu0
        %v10578 = vadd.f32 0.0, %v10577
        %v10579 = vpop.f32.mrb[0].mxu0
        %10580 = vmatprep.mubr.f32.mxu0 0.0
        %10581 = vmatmul.mubr.f32.gmra.mrb[0].mxu0 %v10334
        %v10582 = vpop.f32.mrb[0].mxu0
        %v10583 = vadd.f32 0.0, %v10582
        %v10584 = vpop.f32.mrb[0].mxu0
        %10585 = vmatprep.mubr.f32.mxu0 0.0
        %10586 = vmatmul.mubr.f32.gmra.mrb[0].mxu0 %v10337
        %v10587 = vpop.f32.mrb[0].mxu0
        %v10588 = vadd.f32 0.0, %v10587
        %v10589 = vpop.f32.mrb[0].mxu0
        %10590 = vmatprep.mubr.f32.mxu0 0.0
        %10591 = vmatmul.mubr.f32.gmra.mrb[0].mxu0 %v10340
        %v10592 = vpop.f32.mrb[0].mxu0
        %v10593 = vadd.f32 0.0, %v10592
        %v10594 = vpop.f32.mrb[0].mxu0
        %10595 = vmatprep.mubr.f32.mxu0 0.0
        %10596 = vmatmul.mubr.f32.gmra.mrb[0].mxu0 %v10343
        %v10597 = vpop.f32.mrb[0].mxu0
        %v10598 = vadd.f32 0.0, %v10597
        %v10599 = vpop.f32.mrb[0].mxu0
        %10600 = vmatprep.mubr.f32.mxu0 0.0
        %10601 = vmatmul.mubr.f32.gmra.mrb[0].mxu0 %v10346
        %v10602 = vpop.f32.mrb[0].mxu0
        %v10603 = vadd.f32 0.0, %v10602
        %v10604 = vpop.f32.mrb[0].mxu0
        %10605 = vmatprep.mubr.f32.mxu0 0.0
        %10606 = vmatmul.mubr.f32.gmra.mrb[0].mxu0 %v10349
        %v10607 = vpop.f32.mrb[0].mxu0
        %v10608 = vadd.f32 0.0, %v10607
        %v10609 = vpop.f32.mrb[0].mxu0
        %10610 = vmatprep.mubr.f32.mxu0 0.0
        %10611 = vmatmul.mubr.f32.gmra.mrb[0].mxu0 %v10352
        %v10612 = vpop.f32.mrb[0].mxu0
        %v10613 = vadd.f32 0.0, %v10612
        %v10614 = vpop.f32.mrb[0].mxu0
        %10615 = vmatprep.mubr.f32.mxu0 0.0
        %10616 = vmatmul.mubr.f32.gmra.mrb[0].mxu0 %v10355
        %v10617 = vpop.f32.mrb[0].mxu0
        %v10618 = vadd.f32 0.0, %v10617
        %v10619 = vpop.f32.mrb[0].mxu0
        %10620 = vmatprep.mubr.f32.mxu0 0.0
        %10621 = vmatmul.mubr.f32.gmra.mrb[0].mxu0 %v10358
        %v10622 = vpop.f32.mrb[0].mxu0
        %v10623 = vadd.f32 0.0, %v10622
        %v10624 = vpop.f32.mrb[0].mxu0
        %10625 = vmatprep.mubr.f32.mxu0 0.0
        %10626 = vmatmul.mubr.f32.gmra.mrb[0].mxu0 %v10361
        %v10627 = vpop.f32.mrb[0].mxu0
        %v10628 = vadd.f32 0.0, %v10627
        %v10629 = vpop.f32.mrb[0].mxu0
        %10630 = vmatprep.mubr.f32.mxu0 0.0
        %10631 = vmatmul.mubr.f32.gmra.mrb[0].mxu0 %v10364
        %v10632 = vpop.f32.mrb[0].mxu0
        %v10633 = vadd.f32 0.0, %v10632
        %v10634 = vpop.f32.mrb[0].mxu0
        %10635 = vmatprep.mubr.f32.mxu0 0.0
        %10636 = vmatmul.mubr.f32.gmra.mrb[0].mxu0 %v10367
        %v10637 = vpop.f32.mrb[0].mxu0
        %v10638 = vadd.f32 0.0, %v10637
        %v10639 = vpop.f32.mrb[0].mxu0
        %10640 = vmatprep.mubr.f32.mxu0 0.0
        %10641 = vmatmul.mubr.f32.gmra.mrb[0].mxu0 %v10370
        %v10642 = vpop.f32.mrb[0].mxu0
        %v10643 = vadd.f32 0.0, %v10642
        %v10644 = vpop.f32.mrb[0].mxu0
        %10645 = vmatprep.mubr.f32.mxu0 0.0
        %10646 = vmatmul.mubr.f32.gmra.mrb[0].mxu0 %v10373
        %v10647 = vpop.f32.mrb[0].mxu0
        %v10648 = vadd.f32 0.0, %v10647
        %v10649 = vpop.f32.mrb[0].mxu0
        %10650 = vmatprep.mubr.f32.mxu0 0.0
        %10651 = vmatmul.mubr.f32.gmra.mrb[0].mxu0 %v10376
        %v10652 = vpop.f32.mrb[0].mxu0
        %v10653 = vadd.f32 0.0, %v10652
        %v10654 = vpop.f32.mrb[0].mxu0
        %10655 = vdwg.mxu0
        %v10656 = vld [vmem:[%s21] sm:$0xff]
        %v10657 = vld [vmem:[%s21 + $0x8] sm:$0xff]
        %v10658 = vld [vmem:[%s21 + $0x10] sm:$0xff]
        %v10659 = vld [vmem:[%s21 + $0x18] sm:$0xff]
        %v10660 = vld [vmem:[%s21 + $0x20] sm:$0xff]
        %v10661 = vld [vmem:[%s21 + $0x28] sm:$0xff]
        %v10662 = vld [vmem:[%s21 + $0x30] sm:$0xff]
        %v10663 = vld [vmem:[%s21 + $0x38] sm:$0xff]
        %v10664 = vld [vmem:[%s21 + $0x40] sm:$0xff]
        %v10665 = vld [vmem:[%s21 + $0x48] sm:$0xff]
        %v10666 = vld [vmem:[%s21 + $0x50] sm:$0xff]
        %v10667 = vld [vmem:[%s21 + $0x58] sm:$0xff]
        %v10668 = vld [vmem:[%s21 + $0x60] sm:$0xff]
        %v10669 = vld [vmem:[%s21 + $0x68] sm:$0xff]
        %v10670 = vld [vmem:[%s21 + $0x70] sm:$0xff]
        %v10671 = vld [vmem:[%s21 + $0x78] sm:$0xff]
        %v10672 = vld [vmem:[%s21 + $0x80] sm:$0xff]
        %v10673 = vld [vmem:[%s21 + $0x88] sm:$0xff]
        %v10674 = vld [vmem:[%s21 + $0x90] sm:$0xff]
        %v10675 = vld [vmem:[%s21 + $0x98] sm:$0xff]
        %v10676 = vld [vmem:[%s21 + $0xa0] sm:$0xff]
        %v10677 = vld [vmem:[%s21 + $0xa8] sm:$0xff]
        %v10678 = vld [vmem:[%s21 + $0xb0] sm:$0xff]
        %v10679 = vld [vmem:[%s21 + $0xb8] sm:$0xff]
        %v10680 = vld [vmem:[%s21 + $0xc0] sm:$0xff]
        %v10681 = vld [vmem:[%s21 + $0xc8] sm:$0xff]
        %v10682 = vld [vmem:[%s21 + $0xd0] sm:$0xff]
        %v10683 = vld [vmem:[%s21 + $0xd8] sm:$0xff]
        %v10684 = vld [vmem:[%s21 + $0xe0] sm:$0xff]
        %v10685 = vld [vmem:[%s21 + $0xe8] sm:$0xff]
        %v10686 = vld [vmem:[%s21 + $0xf0] sm:$0xff]
        %v10687 = vld [vmem:[%s21 + $0xf8] sm:$0xff]
        %v10688 = vld [vmem:[%s21 + $0x100] sm:$0xff]
        %v10689 = vld [vmem:[%s21 + $0x108] sm:$0xff]
        %v10690 = vld [vmem:[%s21 + $0x110] sm:$0xff]
        %v10691 = vld [vmem:[%s21 + $0x118] sm:$0xff]
        %v10692 = vld [vmem:[%s21 + $0x120] sm:$0xff]
        %v10693 = vld [vmem:[%s21 + $0x128] sm:$0xff]
        %v10694 = vld [vmem:[%s21 + $0x130] sm:$0xff]
        %v10695 = vld [vmem:[%s21 + $0x138] sm:$0xff]
        %v10696 = vld [vmem:[%s21 + $0x140] sm:$0xff]
        %v10697 = vld [vmem:[%s21 + $0x148] sm:$0x3]
        %v10698 = vmul.f32 %v10656, %v10448
        %v10699 = vmul.f32 %v10657, %v10453
        %v10700 = vmul.f32 %v10658, %v10458
        %v10701 = vmul.f32 %v10659, %v10463
        %v10702 = vmul.f32 %v10660, %v10468
        %v10703 = vmul.f32 %v10661, %v10473
        %v10704 = vmul.f32 %v10662, %v10478
        %v10705 = vmul.f32 %v10663, %v10483
        %v10706 = vmul.f32 %v10664, %v10488
        %v10707 = vmul.f32 %v10665, %v10493
        %v10708 = vmul.f32 %v10666, %v10498
        %v10709 = vmul.f32 %v10667, %v10503
        %v10710 = vmul.f32 %v10668, %v10508
        %v10711 = vmul.f32 %v10669, %v10513
        %v10712 = vmul.f32 %v10670, %v10518
        %v10713 = vmul.f32 %v10671, %v10523
        %v10714 = vmul.f32 %v10672, %v10528
        %v10715 = vmul.f32 %v10673, %v10533
        %v10716 = vmul.f32 %v10674, %v10538
        %v10717 = vmul.f32 %v10675, %v10543
        %v10718 = vmul.f32 %v10676, %v10548
        %v10719 = vmul.f32 %v10677, %v10553
        %v10720 = vmul.f32 %v10678, %v10558
        %v10721 = vmul.f32 %v10679, %v10563
        %v10722 = vmul.f32 %v10680, %v10568
        %v10723 = vmul.f32 %v10681, %v10573
        %v10724 = vmul.f32 %v10682, %v10578
        %v10725 = vmul.f32 %v10683, %v10583
        %v10726 = vmul.f32 %v10684, %v10588
        %v10727 = vmul.f32 %v10685, %v10593
        %v10728 = vmul.f32 %v10686, %v10598
        %v10729 = vmul.f32 %v10687, %v10603
        %v10730 = vmul.f32 %v10688, %v10608
        %v10731 = vmul.f32 %v10689, %v10613
        %v10732 = vmul.f32 %v10690, %v10618
        %v10733 = vmul.f32 %v10691, %v10623
        %v10734 = vmul.f32 %v10692, %v10628
        %v10735 = vmul.f32 %v10693, %v10633
        %v10736 = vmul.f32 %v10694, %v10638
        %v10737 = vmul.f32 %v10695, %v10643
        %v10738 = vmul.f32 %v10696, %v10648
        %v10739 = vmul.f32 %v10697, %v10653
        %vm10740 = vcmask 154624
        %v10741 = vsel %vm10740, %v10698, 0.0
        %10742 = vadd.xlane.f32.xlu0 %v10741
        %v10743 = vpop.xlane.xlu0 %10742
        %v10744 = vsel %vm10740, %v10699, 0.0
        %10745 = vadd.xlane.f32.xlu0 %v10744
        %v10746 = vpop.xlane.xlu0 %10745
        %v10747 = vsel %vm10740, %v10700, 0.0
        %10748 = vadd.xlane.f32.xlu0 %v10747
        %v10749 = vpop.xlane.xlu0 %10748
        %v10750 = vsel %vm10740, %v10701, 0.0
        %10751 = vadd.xlane.f32.xlu0 %v10750
        %v10752 = vpop.xlane.xlu0 %10751
        %v10753 = vsel %vm10740, %v10702, 0.0
        %10754 = vadd.xlane.f32.xlu0 %v10753
        %v10755 = vpop.xlane.xlu0 %10754
        %v10756 = vsel %vm10740, %v10703, 0.0
        %10757 = vadd.xlane.f32.xlu0 %v10756
        %v10758 = vpop.xlane.xlu0 %10757
        %v10759 = vsel %vm10740, %v10704, 0.0
        %10760 = vadd.xlane.f32.xlu0 %v10759
        %v10761 = vpop.xlane.xlu0 %10760
        %v10762 = vsel %vm10740, %v10705, 0.0
        %10763 = vadd.xlane.f32.xlu0 %v10762
        %v10764 = vpop.xlane.xlu0 %10763
        %v10765 = vsel %vm10740, %v10706, 0.0
        %10766 = vadd.xlane.f32.xlu0 %v10765
        %v10767 = vpop.xlane.xlu0 %10766
        %v10768 = vsel %vm10740, %v10707, 0.0
        %10769 = vadd.xlane.f32.xlu0 %v10768
        %v10770 = vpop.xlane.xlu0 %10769
        %v10771 = vsel %vm10740, %v10708, 0.0
        %10772 = vadd.xlane.f32.xlu0 %v10771
        %v10773 = vpop.xlane.xlu0 %10772
        %v10774 = vsel %vm10740, %v10709, 0.0
        %10775 = vadd.xlane.f32.xlu0 %v10774
        %v10776 = vpop.xlane.xlu0 %10775
        %v10777 = vsel %vm10740, %v10710, 0.0
        %10778 = vadd.xlane.f32.xlu0 %v10777
        %v10779 = vpop.xlane.xlu0 %10778
        %v10780 = vsel %vm10740, %v10711, 0.0
        %10781 = vadd.xlane.f32.xlu0 %v10780
        %v10782 = vpop.xlane.xlu0 %10781
        %v10783 = vsel %vm10740, %v10712, 0.0
        %10784 = vadd.xlane.f32.xlu0 %v10783
        %v10785 = vpop.xlane.xlu0 %10784
        %v10786 = vsel %vm10740, %v10713, 0.0
        %10787 = vadd.xlane.f32.xlu0 %v10786
        %v10788 = vpop.xlane.xlu0 %10787
        %v10789 = vsel %vm10740, %v10714, 0.0
        %10790 = vadd.xlane.f32.xlu0 %v10789
        %v10791 = vpop.xlane.xlu0 %10790
        %v10792 = vsel %vm10740, %v10715, 0.0
        %10793 = vadd.xlane.f32.xlu0 %v10792
        %v10794 = vpop.xlane.xlu0 %10793
        %v10795 = vsel %vm10740, %v10716, 0.0
        %10796 = vadd.xlane.f32.xlu0 %v10795
        %v10797 = vpop.xlane.xlu0 %10796
        %v10798 = vsel %vm10740, %v10717, 0.0
        %10799 = vadd.xlane.f32.xlu0 %v10798
        %v10800 = vpop.xlane.xlu0 %10799
        %v10801 = vsel %vm10740, %v10718, 0.0
        %10802 = vadd.xlane.f32.xlu0 %v10801
        %v10803 = vpop.xlane.xlu0 %10802
        %v10804 = vsel %vm10740, %v10719, 0.0
        %10805 = vadd.xlane.f32.xlu0 %v10804
        %v10806 = vpop.xlane.xlu0 %10805
        %v10807 = vsel %vm10740, %v10720, 0.0
        %10808 = vadd.xlane.f32.xlu0 %v10807
        %v10809 = vpop.xlane.xlu0 %10808
        %v10810 = vsel %vm10740, %v10721, 0.0
        %10811 = vadd.xlane.f32.xlu0 %v10810
        %v10812 = vpop.xlane.xlu0 %10811
        %v10813 = vsel %vm10740, %v10722, 0.0
        %10814 = vadd.xlane.f32.xlu0 %v10813
        %v10815 = vpop.xlane.xlu0 %10814
        %v10816 = vsel %vm10740, %v10723, 0.0
        %10817 = vadd.xlane.f32.xlu0 %v10816
        %v10818 = vpop.xlane.xlu0 %10817
        %v10819 = vsel %vm10740, %v10724, 0.0
        %10820 = vadd.xlane.f32.xlu0 %v10819
        %v10821 = vpop.xlane.xlu0 %10820
        %v10822 = vsel %vm10740, %v10725, 0.0
        %10823 = vadd.xlane.f32.xlu0 %v10822
        %v10824 = vpop.xlane.xlu0 %10823
        %v10825 = vsel %vm10740, %v10726, 0.0
        %10826 = vadd.xlane.f32.xlu0 %v10825
        %v10827 = vpop.xlane.xlu0 %10826
        %v10828 = vsel %vm10740, %v10727, 0.0
        %10829 = vadd.xlane.f32.xlu0 %v10828
        %v10830 = vpop.xlane.xlu0 %10829
        %v10831 = vsel %vm10740, %v10728, 0.0
        %10832 = vadd.xlane.f32.xlu0 %v10831
        %v10833 = vpop.xlane.xlu0 %10832
        %v10834 = vsel %vm10740, %v10729, 0.0
        %10835 = vadd.xlane.f32.xlu0 %v10834
        %v10836 = vpop.xlane.xlu0 %10835
        %v10837 = vsel %vm10740, %v10730, 0.0
        %10838 = vadd.xlane.f32.xlu0 %v10837
        %v10839 = vpop.xlane.xlu0 %10838
        %v10840 = vsel %vm10740, %v10731, 0.0
        %10841 = vadd.xlane.f32.xlu0 %v10840
        %v10842 = vpop.xlane.xlu0 %10841
        %v10843 = vsel %vm10740, %v10732, 0.0
        %10844 = vadd.xlane.f32.xlu0 %v10843
        %v10845 = vpop.xlane.xlu0 %10844
        %v10846 = vsel %vm10740, %v10733, 0.0
        %10847 = vadd.xlane.f32.xlu0 %v10846
        %v10848 = vpop.xlane.xlu0 %10847
        %v10849 = vsel %vm10740, %v10734, 0.0
        %10850 = vadd.xlane.f32.xlu0 %v10849
        %v10851 = vpop.xlane.xlu0 %10850
        %v10852 = vsel %vm10740, %v10735, 0.0
        %10853 = vadd.xlane.f32.xlu0 %v10852
        %v10854 = vpop.xlane.xlu0 %10853
        %v10855 = vsel %vm10740, %v10736, 0.0
        %10856 = vadd.xlane.f32.xlu0 %v10855
        %v10857 = vpop.xlane.xlu0 %10856
        %v10858 = vsel %vm10740, %v10737, 0.0
        %10859 = vadd.xlane.f32.xlu0 %v10858
        %v10860 = vpop.xlane.xlu0 %10859
        %v10861 = vsel %vm10740, %v10738, 0.0
        %10862 = vadd.xlane.f32.xlu0 %v10861
        %v10863 = vpop.xlane.xlu0 %10862
        %vm10864 = vcmask 148480
        %v10865 = vsel %vm10864, %v10739, 0.0
        %10866 = vadd.xlane.f32.xlu0 %v10865
        %v10867 = vpop.xlane.xlu0 %10866
        %v10868 = vadd.f32 %v10743, %v10746
        %v10869 = vadd.f32 %v10868, %v10749
        %v10870 = vadd.f32 %v10869, %v10752
        %v10871 = vadd.f32 %v10870, %v10755
        %v10872 = vadd.f32 %v10871, %v10758
        %v10873 = vadd.f32 %v10872, %v10761
        %v10874 = vadd.f32 %v10873, %v10764
        %v10875 = vadd.f32 %v10874, %v10767
        %v10876 = vadd.f32 %v10875, %v10770
        %v10877 = vadd.f32 %v10876, %v10773
        %v10878 = vadd.f32 %v10877, %v10776
        %v10879 = vadd.f32 %v10878, %v10779
        %v10880 = vadd.f32 %v10879, %v10782
        %v10881 = vadd.f32 %v10880, %v10785
        %v10882 = vadd.f32 %v10881, %v10788
        %v10883 = vadd.f32 %v10882, %v10791
        %v10884 = vadd.f32 %v10883, %v10794
        %v10885 = vadd.f32 %v10884, %v10797
        %v10886 = vadd.f32 %v10885, %v10800
        %v10887 = vadd.f32 %v10886, %v10803
        %v10888 = vadd.f32 %v10887, %v10806
        %v10889 = vadd.f32 %v10888, %v10809
        %v10890 = vadd.f32 %v10889, %v10812
        %v10891 = vadd.f32 %v10890, %v10815
        %v10892 = vadd.f32 %v10891, %v10818
        %v10893 = vadd.f32 %v10892, %v10821
        %v10894 = vadd.f32 %v10893, %v10824
        %v10895 = vadd.f32 %v10894, %v10827
        %v10896 = vadd.f32 %v10895, %v10830
        %v10897 = vadd.f32 %v10896, %v10833
        %v10898 = vadd.f32 %v10897, %v10836
        %v10899 = vadd.f32 %v10898, %v10839
        %v10900 = vadd.f32 %v10899, %v10842
        %v10901 = vadd.f32 %v10900, %v10845
        %v10902 = vadd.f32 %v10901, %v10848
        %v10903 = vadd.f32 %v10902, %v10851
        %v10904 = vadd.f32 %v10903, %v10854
        %v10905 = vadd.f32 %v10904, %v10857
        %v10906 = vadd.f32 %v10905, %v10860
        %v10907 = vadd.f32 %v10906, %v10863
        %v10908 = vsel %vm3635, %v10867, 0.0
        %v10909 = vadd.f32 %v10907, %v10908
        %v10910 = vrot.slane %v10909, 4
        %v10911 = vadd.f32 %v10909, %v10910
        %v10912 = vrot.slane %v10911, 2
        %v10913 = vadd.f32 %v10911, %v10912
        %v10914 = vrot.slane %v10913, 1
        %v10915 = vadd.f32 %v10913, %v10914
        %s10916 = scalar_lea.vmem %s21, 336
        %v10917 = vld [vmem:[%s10916] sm:$0xff]
        %v10918 = vld [vmem:[%s10916 + $0x8] sm:$0xff]
        %v10919 = vld [vmem:[%s10916 + $0x10] sm:$0xff]
        %v10920 = vld [vmem:[%s10916 + $0x18] sm:$0xff]
        %v10921 = vld [vmem:[%s10916 + $0x20] sm:$0xff]
        %v10922 = vld [vmem:[%s10916 + $0x28] sm:$0xff]
        %v10923 = vld [vmem:[%s10916 + $0x30] sm:$0xff]
        %v10924 = vld [vmem:[%s10916 + $0x38] sm:$0xff]
        %v10925 = vld [vmem:[%s10916 + $0x40] sm:$0xff]
        %v10926 = vld [vmem:[%s10916 + $0x48] sm:$0xff]
        %v10927 = vld [vmem:[%s10916 + $0x50] sm:$0xff]
        %v10928 = vld [vmem:[%s10916 + $0x58] sm:$0xff]
        %v10929 = vld [vmem:[%s10916 + $0x60] sm:$0xff]
        %v10930 = vld [vmem:[%s10916 + $0x68] sm:$0xff]
        %v10931 = vld [vmem:[%s10916 + $0x70] sm:$0xff]
        %v10932 = vld [vmem:[%s10916 + $0x78] sm:$0xff]
        %v10933 = vld [vmem:[%s10916 + $0x80] sm:$0xff]
        %v10934 = vld [vmem:[%s10916 + $0x88] sm:$0xff]
        %v10935 = vld [vmem:[%s10916 + $0x90] sm:$0xff]
        %v10936 = vld [vmem:[%s10916 + $0x98] sm:$0xff]
        %v10937 = vld [vmem:[%s10916 + $0xa0] sm:$0xff]
        %v10938 = vld [vmem:[%s10916 + $0xa8] sm:$0xff]
        %v10939 = vld [vmem:[%s10916 + $0xb0] sm:$0xff]
        %v10940 = vld [vmem:[%s10916 + $0xb8] sm:$0xff]
        %v10941 = vld [vmem:[%s10916 + $0xc0] sm:$0xff]
        %v10942 = vld [vmem:[%s10916 + $0xc8] sm:$0xff]
        %v10943 = vld [vmem:[%s10916 + $0xd0] sm:$0xff]
        %v10944 = vld [vmem:[%s10916 + $0xd8] sm:$0xff]
        %v10945 = vld [vmem:[%s10916 + $0xe0] sm:$0xff]
        %v10946 = vld [vmem:[%s10916 + $0xe8] sm:$0xff]
        %v10947 = vld [vmem:[%s10916 + $0xf0] sm:$0xff]
        %v10948 = vld [vmem:[%s10916 + $0xf8] sm:$0xff]
        %v10949 = vld [vmem:[%s10916 + $0x100] sm:$0xff]
        %v10950 = vld [vmem:[%s10916 + $0x108] sm:$0xff]
        %v10951 = vld [vmem:[%s10916 + $0x110] sm:$0xff]
        %v10952 = vld [vmem:[%s10916 + $0x118] sm:$0xff]
        %v10953 = vld [vmem:[%s10916 + $0x120] sm:$0xff]
        %v10954 = vld [vmem:[%s10916 + $0x128] sm:$0xff]
        %v10955 = vld [vmem:[%s10916 + $0x130] sm:$0xff]
        %v10956 = vld [vmem:[%s10916 + $0x138] sm:$0xff]
        %v10957 = vld [vmem:[%s10916 + $0x140] sm:$0xff]
        %v10958 = vld [vmem:[%s10916 + $0x148] sm:$0x3]
        %v10959 = vmul.f32 %v10917, %v10448
        %v10960 = vmul.f32 %v10918, %v10453
        %v10961 = vmul.f32 %v10919, %v10458
        %v10962 = vmul.f32 %v10920, %v10463
        %v10963 = vmul.f32 %v10921, %v10468
        %v10964 = vmul.f32 %v10922, %v10473
        %v10965 = vmul.f32 %v10923, %v10478
        %v10966 = vmul.f32 %v10924, %v10483
        %v10967 = vmul.f32 %v10925, %v10488
        %v10968 = vmul.f32 %v10926, %v10493
        %v10969 = vmul.f32 %v10927, %v10498
        %v10970 = vmul.f32 %v10928, %v10503
        %v10971 = vmul.f32 %v10929, %v10508
        %v10972 = vmul.f32 %v10930, %v10513
        %v10973 = vmul.f32 %v10931, %v10518
        %v10974 = vmul.f32 %v10932, %v10523
        %v10975 = vmul.f32 %v10933, %v10528
        %v10976 = vmul.f32 %v10934, %v10533
        %v10977 = vmul.f32 %v10935, %v10538
        %v10978 = vmul.f32 %v10936, %v10543
        %v10979 = vmul.f32 %v10937, %v10548
        %v10980 = vmul.f32 %v10938, %v10553
        %v10981 = vmul.f32 %v10939, %v10558
        %v10982 = vmul.f32 %v10940, %v10563
        %v10983 = vmul.f32 %v10941, %v10568
        %v10984 = vmul.f32 %v10942, %v10573
        %v10985 = vmul.f32 %v10943, %v10578
        %v10986 = vmul.f32 %v10944, %v10583
        %v10987 = vmul.f32 %v10945, %v10588
        %v10988 = vmul.f32 %v10946, %v10593
        %v10989 = vmul.f32 %v10947, %v10598
        %v10990 = vmul.f32 %v10948, %v10603
        %v10991 = vmul.f32 %v10949, %v10608
        %v10992 = vmul.f32 %v10950, %v10613
        %v10993 = vmul.f32 %v10951, %v10618
        %v10994 = vmul.f32 %v10952, %v10623
        %v10995 = vmul.f32 %v10953, %v10628
        %v10996 = vmul.f32 %v10954, %v10633
        %v10997 = vmul.f32 %v10955, %v10638
        %v10998 = vmul.f32 %v10956, %v10643
        %v10999 = vmul.f32 %v10957, %v10648
        %v11000 = vmul.f32 %v10958, %v10653
        %v11001 = vsel %vm10740, %v10959, 0.0
        %11002 = vadd.xlane.f32.xlu0 %v11001
        %v11003 = vpop.xlane.xlu0 %11002
        %v11004 = vsel %vm10740, %v10960, 0.0
        %11005 = vadd.xlane.f32.xlu0 %v11004
        %v11006 = vpop.xlane.xlu0 %11005
        %v11007 = vsel %vm10740, %v10961, 0.0
        %11008 = vadd.xlane.f32.xlu0 %v11007
        %v11009 = vpop.xlane.xlu0 %11008
        %v11010 = vsel %vm10740, %v10962, 0.0
        %11011 = vadd.xlane.f32.xlu0 %v11010
        %v11012 = vpop.xlane.xlu0 %11011
        %v11013 = vsel %vm10740, %v10963, 0.0
        %11014 = vadd.xlane.f32.xlu0 %v11013
        %v11015 = vpop.xlane.xlu0 %11014
        %v11016 = vsel %vm10740, %v10964, 0.0
        %11017 = vadd.xlane.f32.xlu0 %v11016
        %v11018 = vpop.xlane.xlu0 %11017
        %v11019 = vsel %vm10740, %v10965, 0.0
        %11020 = vadd.xlane.f32.xlu0 %v11019
        %v11021 = vpop.xlane.xlu0 %11020
        %v11022 = vsel %vm10740, %v10966, 0.0
        %11023 = vadd.xlane.f32.xlu0 %v11022
        %v11024 = vpop.xlane.xlu0 %11023
        %v11025 = vsel %vm10740, %v10967, 0.0
        %11026 = vadd.xlane.f32.xlu0 %v11025
        %v11027 = vpop.xlane.xlu0 %11026
        %v11028 = vsel %vm10740, %v10968, 0.0
        %11029 = vadd.xlane.f32.xlu0 %v11028
        %v11030 = vpop.xlane.xlu0 %11029
        %v11031 = vsel %vm10740, %v10969, 0.0
        %11032 = vadd.xlane.f32.xlu0 %v11031
        %v11033 = vpop.xlane.xlu0 %11032
        %v11034 = vsel %vm10740, %v10970, 0.0
        %11035 = vadd.xlane.f32.xlu0 %v11034
        %v11036 = vpop.xlane.xlu0 %11035
        %v11037 = vsel %vm10740, %v10971, 0.0
        %11038 = vadd.xlane.f32.xlu0 %v11037
        %v11039 = vpop.xlane.xlu0 %11038
        %v11040 = vsel %vm10740, %v10972, 0.0
        %11041 = vadd.xlane.f32.xlu0 %v11040
        %v11042 = vpop.xlane.xlu0 %11041
        %v11043 = vsel %vm10740, %v10973, 0.0
        %11044 = vadd.xlane.f32.xlu0 %v11043
        %v11045 = vpop.xlane.xlu0 %11044
        %v11046 = vsel %vm10740, %v10974, 0.0
        %11047 = vadd.xlane.f32.xlu0 %v11046
        %v11048 = vpop.xlane.xlu0 %11047
        %v11049 = vsel %vm10740, %v10975, 0.0
        %11050 = vadd.xlane.f32.xlu0 %v11049
        %v11051 = vpop.xlane.xlu0 %11050
        %v11052 = vsel %vm10740, %v10976, 0.0
        %11053 = vadd.xlane.f32.xlu0 %v11052
        %v11054 = vpop.xlane.xlu0 %11053
        %v11055 = vsel %vm10740, %v10977, 0.0
        %11056 = vadd.xlane.f32.xlu0 %v11055
        %v11057 = vpop.xlane.xlu0 %11056
        %v11058 = vsel %vm10740, %v10978, 0.0
        %11059 = vadd.xlane.f32.xlu0 %v11058
        %v11060 = vpop.xlane.xlu0 %11059
        %v11061 = vsel %vm10740, %v10979, 0.0
        %11062 = vadd.xlane.f32.xlu0 %v11061
        %v11063 = vpop.xlane.xlu0 %11062
        %v11064 = vsel %vm10740, %v10980, 0.0
        %11065 = vadd.xlane.f32.xlu0 %v11064
        %v11066 = vpop.xlane.xlu0 %11065
        %v11067 = vsel %vm10740, %v10981, 0.0
        %11068 = vadd.xlane.f32.xlu0 %v11067
        %v11069 = vpop.xlane.xlu0 %11068
        %v11070 = vsel %vm10740, %v10982, 0.0
        %11071 = vadd.xlane.f32.xlu0 %v11070
        %v11072 = vpop.xlane.xlu0 %11071
        %v11073 = vsel %vm10740, %v10983, 0.0
        %11074 = vadd.xlane.f32.xlu0 %v11073
        %v11075 = vpop.xlane.xlu0 %11074
        %v11076 = vsel %vm10740, %v10984, 0.0
        %11077 = vadd.xlane.f32.xlu0 %v11076
        %v11078 = vpop.xlane.xlu0 %11077
        %v11079 = vsel %vm10740, %v10985, 0.0
        %11080 = vadd.xlane.f32.xlu0 %v11079
        %v11081 = vpop.xlane.xlu0 %11080
        %v11082 = vsel %vm10740, %v10986, 0.0
        %11083 = vadd.xlane.f32.xlu0 %v11082
        %v11084 = vpop.xlane.xlu0 %11083
        %v11085 = vsel %vm10740, %v10987, 0.0
        %11086 = vadd.xlane.f32.xlu0 %v11085
        %v11087 = vpop.xlane.xlu0 %11086
        %v11088 = vsel %vm10740, %v10988, 0.0
        %11089 = vadd.xlane.f32.xlu0 %v11088
        %v11090 = vpop.xlane.xlu0 %11089
        %v11091 = vsel %vm10740, %v10989, 0.0
        %11092 = vadd.xlane.f32.xlu0 %v11091
        %v11093 = vpop.xlane.xlu0 %11092
        %v11094 = vsel %vm10740, %v10990, 0.0
        %11095 = vadd.xlane.f32.xlu0 %v11094
        %v11096 = vpop.xlane.xlu0 %11095
        %v11097 = vsel %vm10740, %v10991, 0.0
        %11098 = vadd.xlane.f32.xlu0 %v11097
        %v11099 = vpop.xlane.xlu0 %11098
        %v11100 = vsel %vm10740, %v10992, 0.0
        %11101 = vadd.xlane.f32.xlu0 %v11100
        %v11102 = vpop.xlane.xlu0 %11101
        %v11103 = vsel %vm10740, %v10993, 0.0
        %11104 = vadd.xlane.f32.xlu0 %v11103
        %v11105 = vpop.xlane.xlu0 %11104
        %v11106 = vsel %vm10740, %v10994, 0.0
        %11107 = vadd.xlane.f32.xlu0 %v11106
        %v11108 = vpop.xlane.xlu0 %11107
        %v11109 = vsel %vm10740, %v10995, 0.0
        %11110 = vadd.xlane.f32.xlu0 %v11109
        %v11111 = vpop.xlane.xlu0 %11110
        %v11112 = vsel %vm10740, %v10996, 0.0
        %11113 = vadd.xlane.f32.xlu0 %v11112
        %v11114 = vpop.xlane.xlu0 %11113
        %v11115 = vsel %vm10740, %v10997, 0.0
        %11116 = vadd.xlane.f32.xlu0 %v11115
        %v11117 = vpop.xlane.xlu0 %11116
        %v11118 = vsel %vm10740, %v10998, 0.0
        %11119 = vadd.xlane.f32.xlu0 %v11118
        %v11120 = vpop.xlane.xlu0 %11119
        %v11121 = vsel %vm10740, %v10999, 0.0
        %11122 = vadd.xlane.f32.xlu0 %v11121
        %v11123 = vpop.xlane.xlu0 %11122
        %v11124 = vsel %vm10864, %v11000, 0.0
        %11125 = vadd.xlane.f32.xlu0 %v11124
        %v11126 = vpop.xlane.xlu0 %11125
        %v11127 = vadd.f32 %v11003, %v11006
        %v11128 = vadd.f32 %v11127, %v11009
        %v11129 = vadd.f32 %v11128, %v11012
        %v11130 = vadd.f32 %v11129, %v11015
        %v11131 = vadd.f32 %v11130, %v11018
        %v11132 = vadd.f32 %v11131, %v11021
        %v11133 = vadd.f32 %v11132, %v11024
        %v11134 = vadd.f32 %v11133, %v11027
        %v11135 = vadd.f32 %v11134, %v11030
        %v11136 = vadd.f32 %v11135, %v11033
        %v11137 = vadd.f32 %v11136, %v11036
        %v11138 = vadd.f32 %v11137, %v11039
        %v11139 = vadd.f32 %v11138, %v11042
        %v11140 = vadd.f32 %v11139, %v11045
        %v11141 = vadd.f32 %v11140, %v11048
        %v11142 = vadd.f32 %v11141, %v11051
        %v11143 = vadd.f32 %v11142, %v11054
        %v11144 = vadd.f32 %v11143, %v11057
        %v11145 = vadd.f32 %v11144, %v11060
        %v11146 = vadd.f32 %v11145, %v11063
        %v11147 = vadd.f32 %v11146, %v11066
        %v11148 = vadd.f32 %v11147, %v11069
        %v11149 = vadd.f32 %v11148, %v11072
        %v11150 = vadd.f32 %v11149, %v11075
        %v11151 = vadd.f32 %v11150, %v11078
        %v11152 = vadd.f32 %v11151, %v11081
        %v11153 = vadd.f32 %v11152, %v11084
        %v11154 = vadd.f32 %v11153, %v11087
        %v11155 = vadd.f32 %v11154, %v11090
        %v11156 = vadd.f32 %v11155, %v11093
        %v11157 = vadd.f32 %v11156, %v11096
        %v11158 = vadd.f32 %v11157, %v11099
        %v11159 = vadd.f32 %v11158, %v11102
        %v11160 = vadd.f32 %v11159, %v11105
        %v11161 = vadd.f32 %v11160, %v11108
        %v11162 = vadd.f32 %v11161, %v11111
        %v11163 = vadd.f32 %v11162, %v11114
        %v11164 = vadd.f32 %v11163, %v11117
        %v11165 = vadd.f32 %v11164, %v11120
        %v11166 = vadd.f32 %v11165, %v11123
        %v11167 = vsel %vm3635, %v11126, 0.0
        %v11168 = vadd.f32 %v11166, %v11167
        %v11169 = vrot.slane %v11168, 4
        %v11170 = vadd.f32 %v11168, %v11169
        %v11171 = vrot.slane %v11170, 2
        %v11172 = vadd.f32 %v11170, %v11171
        %v11173 = vrot.slane %v11172, 1
        %v11174 = vadd.f32 %v11172, %v11173
        %vm11175 = vcmask 7168
        %v11176 = vsel %vm11175, %v10915, %v11174
        %v11177 = vld [vmem:[%s22] sm:$0x1]
        %v11178 = vadd.f32 %v11176, %v11177
        %vm11179 = vcmask 8192
        %11180 = vst.msk [vmem:[%s754] sm:$0x1] %vm11179, %v11178
        %s11181 = sand.u32 %s537, 1
        %s11182 = scalar_lea.sflag [#allocation4], %s11181
        %s11183 = sand.u32 %s537, 1
        %s11184 = scalar_lea.vmem [#allocation8], %s11183
        // Predicated region
        $region125: #{deepconvnet_forward.1} parent=111 // pred_check
          %p11185 = pneg %p547
        $region126: #{deepconvnet_forward.1} parent=111 // pred_check_branch
          %11187 = sbr.rel (%p11185) target = $region128
        $region127: #{deepconvnet_forward.1} parent=111 // pred_region
          %s11189 = ssub.s32 16, 16
          %11190 = vsyncadd %s11182, %s11189
          %s11191 = smul.addr %s41, 16
          %s11192 = scalar_lea.hbm %s23, %s11191
          %s11194 = sshll.u32 %s11184, 4
          %s11195 = int_to_ptr.vmem [resolvable:$true] %s11194
          %11197 = dma.vmem_to_hbm [thread:$0]  %s11195, 16, %s11192, %s11182
        $region128: #{deepconvnet_forward.1} parent=111 // pred_fallthru
          _
      $region112: #{deepconvnet_forward.1} parent=5 // pred_fallthru
        _
      %p11198 = scmp.le.s32.totalorder 2, %s36
      // Predicated region
      $region129: #{deepconvnet_forward.1} parent=5 // pred_check
        %p11199 = pneg %p11198
      $region130: #{deepconvnet_forward.1} parent=5 // pred_check_branch
        %11201 = sbr.rel (%p11199) target = $region132
      $region131: #{deepconvnet_forward.1} parent=5 // pred_region
        %s11202 = ssub.s32 %s36, 2
        // Predicated region
        $region133: #{deepconvnet_forward.1} parent=131 // pred_check
          %p11203 = pneg %p553
        $region134: #{deepconvnet_forward.1} parent=131 // pred_check_branch
          %11205 = sbr.rel (%p11203) target = $region136
        $region135: #{deepconvnet_forward.1} parent=131 // pred_region
          %s11206 = sand.u32 %s538, 1
          %s11207 = scalar_lea.sflag [#allocation4], %s11206
          %s11208 = sand.u32 %s538, 1
          %s11209 = scalar_lea.vmem [#allocation8], %s11208
          %11210 = dma.done %s11207, 16
        $region136: #{deepconvnet_forward.1} parent=131 // pred_fallthru
          _
      $region132: #{deepconvnet_forward.1} parent=5 // pred_fallthru
        _
    $region6: #{deepconvnet_forward.1} parent=1 // loop_footer
      %s40 = sadd.s32 1, %s36
    $region7: #{deepconvnet_forward.1} parent=1 // loop_footer_branch
      %35 = sbr.rel target = $region3
    $region8: #{deepconvnet_forward.1} parent=1 // loop_exit
      _
    %11211 = vsyncpa [#allocation3], 1
    %s11212 = scalar_lea.sflag [#allocation3], 1
    %11213 = vsyncpa %s11212, 1
    %11214 = vsyncpa [#allocation6], 1
    %11215 = vsyncpa [#allocation4], 1
    %s11216 = scalar_lea.sflag [#allocation4], 1
    %11217 = vsyncpa %s11216, 1

</llo_original>
